<compile_context>
chip_gen: v7x
topology: tpu7x:2x2x1
jax: 0.10.0
libtpu: 0.0.40
codegen_flags: <defaults>
</compile_context>

<pallas_src>
import functools

import jax
import jax.numpy as jnp
from jax.experimental import pallas as pl
from jax.experimental.pallas import tpu as pltpu

_EPS = 1e-5
_LANES = 128


def _round_up(x, m):
    return ((x + m - 1) // m) * m


# ----------------------------------------------------------------------------------------------
# Kernels
# ----------------------------------------------------------------------------------------------
def _conv3x3_stats_kernel(x_ref, w_ref, scale_ref, shift_ref,      # inputs
                          out_ref, stats_ref,                      # outputs
                          *scratch,                                # VMEM scratch (fused path)
                          fuse_input_bn_relu, compute_dtype):
    """3x3 / stride-1 conv on one (batch, row-tile) block + per-channel partial BN stats.

    x_ref    : (1, 1, TH+2, W+2, Cin_p)  zero-padded input row-tile (with halo rows)
    w_ref    : (3, 3, Cin_p, Cout_p)     conv weights (HWIO, channel-padded)
    scale_ref: (1, 1, Cin_p)             previous layer's folded BN scale (fused prologue)
    shift_ref: (1, 1, Cin_p)             previous layer's folded BN shift
    out_ref  : (1, TH*W, Cout_p)         raw (pre-BN) conv output, lane-dense; doubles as the
                                         f32 accumulator for the 9 taps
    stats_ref: (1, 1, 2, Cout_p)         per-tile [sum, sum_of_squares] over rows
    scratch  : (TH+2, W+2, Cin_p)        activated-input buffer (only when fused prologue on)
    """
    _, _, th2, wp2, cin_p = x_ref.shape
    th, tw = th2 - 2, wp2 - 2

    if fuse_input_bn_relu:
        xact_ref = scratch[0]
        # Apply previous layer's BatchNorm + ReLU on the fly (intermediate was stored pre-BN),
        # then restore the conv zero-padding halo that the affine transform would corrupt.
        xin = x_ref[0, 0]
        xact_ref[...] = jnp.maximum(
            xin * scale_ref[...] + shift_ref[...], 0.0).astype(xact_ref.dtype)

        zcol = jnp.zeros((th2, 1, cin_p), xact_ref.dtype)
        xact_ref[:, 0:1, :] = zcol
        xact_ref[:, tw + 1:tw + 2, :] = zcol
        zrow = jnp.zeros((1, wp2, cin_p), xact_ref.dtype)

        @pl.when(pl.program_id(1) == 0)
        def _():
            xact_ref[0:1, :, :] = zrow

        @pl.when(pl.program_id(1) == pl.num_programs(1) - 1)
        def _():
            xact_ref[th + 1:th + 2, :, :] = zrow

    def tap_dot(ky, kx):
        if fuse_input_bn_relu:
            win = scratch[0][ky:ky + th, kx:kx + tw, :]
        else:
            win = x_ref[0, 0, ky:ky + th, kx:kx + tw, :]
        # Channel dim is 128-padded, so this reshape leaves the lane dim intact (cheap).
        win2d = win.reshape(th * tw, cin_p).astype(compute_dtype)
        return jnp.dot(win2d, w_ref[ky, kx], preferred_element_type=jnp.float32)

    # 3x3 conv as 9 shifted-window matmuls, accumulated directly in the f32 output block.
    taps = [(ky, kx) for ky in range(3) for kx in range(3)]
    out_ref[0] = tap_dot(*taps[0])
    for ky, kx in taps[1:-1]:
        out_ref[0] += tap_dot(ky, kx)
    a = out_ref[0] + tap_dot(*taps[-1])
    out_ref[0] = a

    # Partial per-channel statistics for this layer's training-mode BatchNorm
    # (single lane-dense (2, Cout_p) store).
    stats_ref[0, 0, :, :] = jnp.concatenate(
        [jnp.sum(a, axis=0, keepdims=True),
         jnp.sum(a * a, axis=0, keepdims=True)], axis=0)


def _bn_relu_kernel(x_ref, scale_ref, shift_ref, out_ref):
    """Folded BatchNorm (scale/shift) + ReLU, lane-dense elementwise pass."""
    out_ref[...] = jnp.maximum(x_ref[...] * scale_ref[...] + shift_ref[...], 0.0)


# ----------------------------------------------------------------------------------------------
# pallas_call wrappers
# ----------------------------------------------------------------------------------------------
def _conv3x3_with_stats(x_tiles, w_hwio, scale, shift, *, fuse_input_bn_relu, use_bf16_mxu):
    n, t, th2, wp2, cin_p = x_tiles.shape
    row_tile, img_w = th2 - 2, wp2 - 2
    cout_p = w_hwio.shape[-1]
    block_rows = row_tile * img_w
    compute_dtype = jnp.bfloat16 if use_bf16_mxu else jnp.float32

    kernel = functools.partial(_conv3x3_stats_kernel,
                               fuse_input_bn_relu=fuse_input_bn_relu,
                               compute_dtype=compute_dtype)

    scratch_shapes = []
    if fuse_input_bn_relu:
        scratch_shapes.append(pltpu.VMEM((th2, wp2, cin_p), compute_dtype))

    grid_spec = pltpu.PrefetchScalarGridSpec(
        num_scalar_prefetch=0,
        grid=(n, t),
        in_specs=[
            pl.BlockSpec((1, 1, th2, wp2, cin_p), lambda ni, ti: (ni, ti, 0, 0, 0)),
            pl.BlockSpec((3, 3, cin_p, cout_p), lambda ni, ti: (0, 0, 0, 0)),
            pl.BlockSpec((1, 1, cin_p), lambda ni, ti: (0, 0, 0)),
            pl.BlockSpec((1, 1, cin_p), lambda ni, ti: (0, 0, 0)),
        ],
        out_specs=[
            pl.BlockSpec((1, block_rows, cout_p), lambda ni, ti: (ni, ti, 0)),
            pl.BlockSpec((1, 1, 2, cout_p), lambda ni, ti: (ni, ti, 0, 0)),
        ],
        scratch_shapes=scratch_shapes,
    )
    return pl.pallas_call(
        kernel,
        out_shape=(
            jax.ShapeDtypeStruct((n, t * block_rows, cout_p), jnp.float32),
            jax.ShapeDtypeStruct((n, t, 2, cout_p), jnp.float32),
        ),
        grid_spec=grid_spec,
        compiler_params=pltpu.CompilerParams(
            dimension_semantics=("parallel", "parallel"),
            vmem_limit_bytes=32 * 1024 * 1024,
        ),
    )(x_tiles, w_hwio.astype(compute_dtype), scale, shift)


def _bn_relu(y_flat, scale, shift, *, block_rows):
    n, hw, cp = y_flat.shape
    t = hw // block_rows
    grid_spec = pltpu.PrefetchScalarGridSpec(
        num_scalar_prefetch=0,
        grid=(n, t),
        in_specs=[
            pl.BlockSpec((1, block_rows, cp), lambda ni, ti: (ni, ti, 0)),
            pl.BlockSpec((1, 1, cp), lambda ni, ti: (0, 0, 0)),
            pl.BlockSpec((1, 1, cp), lambda ni, ti: (0, 0, 0)),
        ],
        out_specs=pl.BlockSpec((1, block_rows, cp), lambda ni, ti: (ni, ti, 0)),
    )
    return pl.pallas_call(
        _bn_relu_kernel,
        out_shape=jax.ShapeDtypeStruct((n, hw, cp), jnp.float32),
        grid_spec=grid_spec,
        compiler_params=pltpu.CompilerParams(
            dimension_semantics=("parallel", "parallel"),
            vmem_limit_bytes=32 * 1024 * 1024,
        ),
    )(y_flat, scale, shift)


# ----------------------------------------------------------------------------------------------
# JAX glue (padding, tiling, BN finalize)
# ----------------------------------------------------------------------------------------------
def _pad_last(a, target):
    pad = target - a.shape[-1]
    if pad == 0:
        return a
    return jnp.pad(a, [(0, 0)] * (a.ndim - 1) + [(0, pad)])


def _pad_weight(w, cin_p, cout_p):
    return jnp.pad(w, ((0, 0), (0, 0), (0, cin_p - w.shape[2]), (0, cout_p - w.shape[3])))


def _build_row_tiles(x_pad, row_tile):
    """(N, H+2, W+2, C) zero-padded image -> (N, T, row_tile+2, W+2, C) halo'd row tiles."""
    n, hp2, wp2, c = x_pad.shape
    h = hp2 - 2
    t = h // row_tile
    tiles = [x_pad[:, i * row_tile:i * row_tile + row_tile + 2] for i in range(t)]
    return jnp.stack(tiles, axis=1)


def _bn_scale_shift(stats, gamma_p, beta_p, count):
    """Fold training-mode BatchNorm (biased variance, eps=1e-5) into one scale + shift."""
    s = jnp.sum(stats, axis=(0, 1))                       # (2, Cp)
    mean = s[0] / count
    var = jnp.maximum(s[1] / count - mean * mean, 0.0)    # clamp tiny f32 cancellation
    scale = gamma_p * jax.lax.rsqrt(var + _EPS)
    shift = beta_p - mean * scale
    cp = gamma_p.shape[0]
    return scale.reshape(1, 1, cp), shift.reshape(1, 1, cp)


def _auto_row_tile(h, w, cp, budget_bytes=4 * 1024 * 1024):
    """Largest divisor of H whose per-tile live VMEM (rough, incl. double-buffering) fits."""
    per_row = (w + 2) * cp * 4 * 4
    best = 1
    for cand in range(1, h + 1):
        if h % cand == 0 and cand * per_row <= budget_bytes:
            best = cand
    return best


# ----------------------------------------------------------------------------------------------
# EncoderBlock forward
# ----------------------------------------------------------------------------------------------
def _encoder_block_impl(x_nchw, params, row_tile=None, use_bf16_mxu=False):
    (w1, b1, g1, be1), (w2, b2, g2, be2) = params
    # Conv bias is a per-channel constant: it cancels exactly in training-mode BN's mean
    # subtraction, so it is dropped (zero change to the forward output).
    del b1, b2

    n, cin, h, w = x_nchw.shape
    cout = w1.shape[-1]
    cin_p = _round_up(cin, _LANES)
    cout_p = _round_up(cout, _LANES)

    th = row_tile if row_tile is not None else _auto_row_tile(h, w, cout_p)
    if h % th != 0:
        raise ValueError(f"row_tile={th} must divide H={h}")

    x = jnp.transpose(x_nchw, (0, 2, 3, 1)).astype(jnp.float32)   # NCHW -> NHWC
    x = _pad_last(x, cin_p)                                       # lane-dense channels

    w1p = _pad_weight(w1.astype(jnp.float32), cin_p, cout_p)
    w2p = _pad_weight(w2.astype(jnp.float32), cout_p, cout_p)
    g1p, be1p = _pad_last(g1.astype(jnp.float32), cout_p), _pad_last(be1.astype(jnp.float32), cout_p)
    g2p, be2p = _pad_last(g2.astype(jnp.float32), cout_p), _pad_last(be2.astype(jnp.float32), cout_p)

    ident = jnp.ones((1, 1, cin_p), jnp.float32)
    zero = jnp.zeros((1, 1, cin_p), jnp.float32)

    # --- conv1 (+ per-tile BN1 partial stats) ---
    x_tiles = _build_row_tiles(jnp.pad(x, ((0, 0), (1, 1), (1, 1), (0, 0))), th)
    y1, st1 = _conv3x3_with_stats(x_tiles, w1p, ident, zero,
                                  fuse_input_bn_relu=False, use_bf16_mxu=use_bf16_mxu)
    scale1, shift1 = _bn_scale_shift(st1, g1p, be1p, n * h * w)

    # --- conv2 with BN1 + ReLU1 fused into its input prologue (+ BN2 partial stats) ---
    y1_img = y1.reshape(n, h, w, cout_p)
    y1_tiles = _build_row_tiles(jnp.pad(y1_img, ((0, 0), (1, 1), (1, 1), (0, 0))), th)
    y2, st2 = _conv3x3_with_stats(y1_tiles, w2p, scale1, shift1,
                                  fuse_input_bn_relu=True, use_bf16_mxu=use_bf16_mxu)
    scale2, shift2 = _bn_scale_shift(st2, g2p, be2p, n * h * w)

    # --- final BN2 + ReLU2 ---
    y = _bn_relu(y2, scale2, shift2, block_rows=th * w)
    y = y.reshape(n, h, w, cout_p)[..., :cout]
    return jnp.transpose(y, (0, 3, 1, 2))                         # NHWC -> NCHW


encoder_block = jax.jit(_encoder_block_impl, static_argnames=("row_tile", "use_bf16_mxu"))


# ----------------------------------------------------------------------------------------------
# Pure-JAX reference (for correctness check)
# ----------------------------------------------------------------------------------------------
def _ref_basic_conv(x_nhwc, w, b, gamma, beta):
    out = jax.lax.conv_general_dilated(
        x_nhwc, w, window_strides=(1, 1), padding="SAME",
        dimension_numbers=("NHWC", "HWIO", "NHWC"),
    ) + b
    mean = out.mean(axis=(0, 1, 2), keepdims=True)
    var = ((out - mean) ** 2).mean(axis=(0, 1, 2), keepdims=True)
    out = (out - mean) * jax.lax.rsqrt(var + _EPS) * gamma + beta
    return jnp.maximum(out, 0.0)


def _ref_encoder_block(x_nchw, params):
    (w1, b1, g1, be1), (w2, b2, g2, be2) = params
    x = jnp.transpose(x_nchw, (0, 2, 3, 1))
    x = _ref_basic_conv(x, w1, b1, g1, be1)
    x = _ref_basic_conv(x, w2, b2, g2, be2)
    return jnp.transpose(x, (0, 3, 1, 2))


if __name__ == "__main__":
    key = jax.random.PRNGKey(0)
    ks = jax.random.split(key, 9)

    N, ch_in, ch_out, H, W = 2, 4, 8, 16, 16

    w1 = 0.1 * jax.random.normal(ks[1], (3, 3, ch_in, ch_out), jnp.float32)   # HWIO
    b1 = 0.1 * jax.random.normal(ks[2], (ch_out,), jnp.float32)
    g1 = 1.0 + 0.1 * jax.random.normal(ks[3], (ch_out,), jnp.float32)
    be1 = 0.1 * jax.random.normal(ks[4], (ch_out,), jnp.float32)

    w2 = 0.1 * jax.random.normal(ks[5], (3, 3, ch_out, ch_out), jnp.float32)
    b2 = 0.1 * jax.random.normal(ks[6], (ch_out,), jnp.float32)
    g2 = 1.0 + 0.1 * jax.random.normal(ks[7], (ch_out,), jnp.float32)
    be2 = 0.1 * jax.random.normal(ks[8], (ch_out,), jnp.float32)

    params = ((w1, b1, g1, be1), (w2, b2, g2, be2))
    x = jax.random.normal(ks[0], (N, ch_in, H, W), jnp.float32)   # NCHW, like PyTorch

    # row_tile=8 -> 2 row tiles per image: exercises the (batch, row-tile) grid and the
    # fused-prologue halo handling with multiple tiles.
    y = encoder_block(x, params, row_tile=8)
    y = jax.block_until_ready(y)

    y_ref = _ref_encoder_block(x, params)
    assert y.shape == (N, ch_out, H, W)
    assert jnp.allclose(y, y_ref, atol=5e-4, rtol=5e-4), float(jnp.max(jnp.abs(y - y_ref)))

    print("KERNEL_OK")
</pallas_src>

<mosaic_0001>
module attributes {stable_mosaic.version = 11 : i64} {
  func.func @_conv3x3_stats_kernel(%arg0: i32, %arg1: i32, %arg2: memref<1x1x10x18x128xf32, #tpu.memory_space<vmem>>, %arg3: memref<3x3x128x128xf32, #tpu.memory_space<vmem>>, %arg4: memref<1x1x128xf32, #tpu.memory_space<vmem>>, %arg5: memref<1x1x128xf32, #tpu.memory_space<vmem>>, %arg6: memref<1x128x128xf32, #tpu.memory_space<vmem>>, %arg7: memref<1x1x2x128xf32, #tpu.memory_space<vmem>>) attributes {dimension_semantics = [#tpu.dimension_semantics<parallel>, #tpu.dimension_semantics<parallel>], iteration_bounds = array<i64: 2, 2>, scalar_prefetch = 0 : i64, scratch_operands = 0 : i64, tpu.core_type = #tpu.core_type<tc>, window_params = [{transform_indices = @transform_0, window_bounds = array<i64: 1, 1, 10, 18, 128>}, {pipeline_mode = #tpu.pipeline_mode<synchronous>, transform_indices = @transform_1, window_bounds = array<i64: 3, 3, 128, 128>}, {pipeline_mode = #tpu.pipeline_mode<synchronous>, transform_indices = @transform_2, window_bounds = array<i64: 1, 1, 128>}, {pipeline_mode = #tpu.pipeline_mode<synchronous>, transform_indices = @transform_3, window_bounds = array<i64: 1, 1, 128>}, {transform_indices = @transform_4, window_bounds = array<i64: 1, 128, 128>}, {transform_indices = @transform_5, window_bounds = array<i64: 1, 1, 2, 128>}]} {
    %c0 = arith.constant 0 : index
    %c0_0 = arith.constant 0 : index
    %c0_1 = arith.constant 0 : index
    %c0_2 = arith.constant 0 : index
    %c0_3 = arith.constant 0 : index
    %0 = vector.load %arg2[%c0, %c0_0, %c0_1, %c0_2, %c0_3] : memref<1x1x10x18x128xf32, #tpu.memory_space<vmem>>, vector<1x1x8x16x128xf32>
    %1 = vector.shape_cast %0 : vector<1x1x8x16x128xf32> to vector<8x16x128xf32>
    %2 = vector.shape_cast %1 : vector<8x16x128xf32> to vector<128x128xf32>
    %c0_4 = arith.constant 0 : index
    %c0_5 = arith.constant 0 : index
    %c0_6 = arith.constant 0 : index
    %c0_7 = arith.constant 0 : index
    %3 = vector.load %arg3[%c0_4, %c0_5, %c0_6, %c0_7] : memref<3x3x128x128xf32, #tpu.memory_space<vmem>>, vector<1x1x128x128xf32>
    %4 = vector.shape_cast %3 : vector<1x1x128x128xf32> to vector<128x128xf32>
    %cst = arith.constant dense<0.000000e+00> : vector<128x128xf32>
    %5 = tpu.matmul %2, %4, %cst {dimension_numbers = #tpu.dot_dimension_numbers<[1], [0], [0], [1], [0, 0, 1, 1], [], []>} : vector<128x128xf32>, vector<128x128xf32>, vector<128x128xf32> -> vector<128x128xf32>
    %c0_8 = arith.constant 0 : index
    %c0_9 = arith.constant 0 : index
    %c0_10 = arith.constant 0 : index
    %6 = vector.load %arg6[%c0_8, %c0_9, %c0_10] : memref<1x128x128xf32, #tpu.memory_space<vmem>>, vector<1x128x128xf32>
    %7 = vector.shape_cast %6 : vector<1x128x128xf32> to vector<128x128xf32>
    %8 = vector.shape_cast %5 : vector<128x128xf32> to vector<1x128x128xf32>
    tpu.vector_store %arg6[%c0_8, %c0_9, %c0_10], %8 {strides = array<i32>} : memref<1x128x128xf32, #tpu.memory_space<vmem>>, vector<1x128x128xf32>,
    %c0_11 = arith.constant 0 : index
    %c0_12 = arith.constant 0 : index
    %c0_13 = arith.constant 0 : index
    %9 = vector.load %arg6[%c0_11, %c0_12, %c0_13] : memref<1x128x128xf32, #tpu.memory_space<vmem>>, vector<1x128x128xf32>
    %10 = vector.shape_cast %9 : vector<1x128x128xf32> to vector<128x128xf32>
    %c0_14 = arith.constant 0 : index
    %c0_15 = arith.constant 0 : index
    %c0_16 = arith.constant 0 : index
    %c1 = arith.constant 1 : index
    %c0_17 = arith.constant 0 : index
    %11 = vector.load %arg2[%c0_14, %c0_15, %c0_16, %c1, %c0_17] : memref<1x1x10x18x128xf32, #tpu.memory_space<vmem>>, vector<1x1x8x16x128xf32>
    %12 = vector.shape_cast %11 : vector<1x1x8x16x128xf32> to vector<8x16x128xf32>
    %13 = vector.shape_cast %12 : vector<8x16x128xf32> to vector<128x128xf32>
    %c0_18 = arith.constant 0 : index
    %c1_19 = arith.constant 1 : index
    %c0_20 = arith.constant 0 : index
    %c0_21 = arith.constant 0 : index
    %14 = vector.load %arg3[%c0_18, %c1_19, %c0_20, %c0_21] : memref<3x3x128x128xf32, #tpu.memory_space<vmem>>, vector<1x1x128x128xf32>
    %15 = vector.shape_cast %14 : vector<1x1x128x128xf32> to vector<128x128xf32>
    %cst_22 = arith.constant dense<0.000000e+00> : vector<128x128xf32>
    %16 = tpu.matmul %13, %15, %cst_22 {dimension_numbers = #tpu.dot_dimension_numbers<[1], [0], [0], [1], [0, 0, 1, 1], [], []>} : vector<128x128xf32>, vector<128x128xf32>, vector<128x128xf32> -> vector<128x128xf32>
    %17 = arith.addf %10, %16 : vector<128x128xf32>
    %c0_23 = arith.constant 0 : index
    %c0_24 = arith.constant 0 : index
    %c0_25 = arith.constant 0 : index
    %18 = vector.load %arg6[%c0_23, %c0_24, %c0_25] : memref<1x128x128xf32, #tpu.memory_space<vmem>>, vector<1x128x128xf32>
    %19 = vector.shape_cast %18 : vector<1x128x128xf32> to vector<128x128xf32>
    %20 = vector.shape_cast %17 : vector<128x128xf32> to vector<1x128x128xf32>
    tpu.vector_store %arg6[%c0_23, %c0_24, %c0_25], %20 {strides = array<i32>} : memref<1x128x128xf32, #tpu.memory_space<vmem>>, vector<1x128x128xf32>,
    %c0_26 = arith.constant 0 : index
    %c0_27 = arith.constant 0 : index
    %c0_28 = arith.constant 0 : index
    %21 = vector.load %arg6[%c0_26, %c0_27, %c0_28] : memref<1x128x128xf32, #tpu.memory_space<vmem>>, vector<1x128x128xf32>
    %22 = vector.shape_cast %21 : vector<1x128x128xf32> to vector<128x128xf32>
    %c0_29 = arith.constant 0 : index
    %c0_30 = arith.constant 0 : index
    %c0_31 = arith.constant 0 : index
    %c2 = arith.constant 2 : index
    %c0_32 = arith.constant 0 : index
    %23 = vector.load %arg2[%c0_29, %c0_30, %c0_31, %c2, %c0_32] : memref<1x1x10x18x128xf32, #tpu.memory_space<vmem>>, vector<1x1x8x16x128xf32>
    %24 = vector.shape_cast %23 : vector<1x1x8x16x128xf32> to vector<8x16x128xf32>
    %25 = vector.shape_cast %24 : vector<8x16x128xf32> to vector<128x128xf32>
    %c0_33 = arith.constant 0 : index
    %c2_34 = arith.constant 2 : index
    %c0_35 = arith.constant 0 : index
    %c0_36 = arith.constant 0 : index
    %26 = vector.load %arg3[%c0_33, %c2_34, %c0_35, %c0_36] : memref<3x3x128x128xf32, #tpu.memory_space<vmem>>, vector<1x1x128x128xf32>
    %27 = vector.shape_cast %26 : vector<1x1x128x128xf32> to vector<128x128xf32>
    %cst_37 = arith.constant dense<0.000000e+00> : vector<128x128xf32>
    %28 = tpu.matmul %25, %27, %cst_37 {dimension_numbers = #tpu.dot_dimension_numbers<[1], [0], [0], [1], [0, 0, 1, 1], [], []>} : vector<128x128xf32>, vector<128x128xf32>, vector<128x128xf32> -> vector<128x128xf32>
    %29 = arith.addf %22, %28 : vector<128x128xf32>
    %c0_38 = arith.constant 0 : index
    %c0_39 = arith.constant 0 : index
    %c0_40 = arith.constant 0 : index
    %30 = vector.load %arg6[%c0_38, %c0_39, %c0_40] : memref<1x128x128xf32, #tpu.memory_space<vmem>>, vector<1x128x128xf32>
    %31 = vector.shape_cast %30 : vector<1x128x128xf32> to vector<128x128xf32>
    %32 = vector.shape_cast %29 : vector<128x128xf32> to vector<1x128x128xf32>
    tpu.vector_store %arg6[%c0_38, %c0_39, %c0_40], %32 {strides = array<i32>} : memref<1x128x128xf32, #tpu.memory_space<vmem>>, vector<1x128x128xf32>,
    %c0_41 = arith.constant 0 : index
    %c0_42 = arith.constant 0 : index
    %c0_43 = arith.constant 0 : index
    %33 = vector.load %arg6[%c0_41, %c0_42, %c0_43] : memref<1x128x128xf32, #tpu.memory_space<vmem>>, vector<1x128x128xf32>
    %34 = vector.shape_cast %33 : vector<1x128x128xf32> to vector<128x128xf32>
    %c0_44 = arith.constant 0 : index
    %c0_45 = arith.constant 0 : index
    %c1_46 = arith.constant 1 : index
    %c0_47 = arith.constant 0 : index
    %c0_48 = arith.constant 0 : index
    %35 = vector.load %arg2[%c0_44, %c0_45, %c1_46, %c0_47, %c0_48] : memref<1x1x10x18x128xf32, #tpu.memory_space<vmem>>, vector<1x1x8x16x128xf32>
    %36 = vector.shape_cast %35 : vector<1x1x8x16x128xf32> to vector<8x16x128xf32>
    %37 = vector.shape_cast %36 : vector<8x16x128xf32> to vector<128x128xf32>
    %c1_49 = arith.constant 1 : index
    %c0_50 = arith.constant 0 : index
    %c0_51 = arith.constant 0 : index
    %c0_52 = arith.constant 0 : index
    %38 = vector.load %arg3[%c1_49, %c0_50, %c0_51, %c0_52] : memref<3x3x128x128xf32, #tpu.memory_space<vmem>>, vector<1x1x128x128xf32>
    %39 = vector.shape_cast %38 : vector<1x1x128x128xf32> to vector<128x128xf32>
    %cst_53 = arith.constant dense<0.000000e+00> : vector<128x128xf32>
    %40 = tpu.matmul %37, %39, %cst_53 {dimension_numbers = #tpu.dot_dimension_numbers<[1], [0], [0], [1], [0, 0, 1, 1], [], []>} : vector<128x128xf32>, vector<128x128xf32>, vector<128x128xf32> -> vector<128x128xf32>
    %41 = arith.addf %34, %40 : vector<128x128xf32>
    %c0_54 = arith.constant 0 : index
    %c0_55 = arith.constant 0 : index
    %c0_56 = arith.constant 0 : index
    %42 = vector.load %arg6[%c0_54, %c0_55, %c0_56] : memref<1x128x128xf32, #tpu.memory_space<vmem>>, vector<1x128x128xf32>
    %43 = vector.shape_cast %42 : vector<1x128x128xf32> to vector<128x128xf32>
    %44 = vector.shape_cast %41 : vector<128x128xf32> to vector<1x128x128xf32>
    tpu.vector_store %arg6[%c0_54, %c0_55, %c0_56], %44 {strides = array<i32>} : memref<1x128x128xf32, #tpu.memory_space<vmem>>, vector<1x128x128xf32>,
    %c0_57 = arith.constant 0 : index
    %c0_58 = arith.constant 0 : index
    %c0_59 = arith.constant 0 : index
    %45 = vector.load %arg6[%c0_57, %c0_58, %c0_59] : memref<1x128x128xf32, #tpu.memory_space<vmem>>, vector<1x128x128xf32>
    %46 = vector.shape_cast %45 : vector<1x128x128xf32> to vector<128x128xf32>
    %c0_60 = arith.constant 0 : index
    %c0_61 = arith.constant 0 : index
    %c1_62 = arith.constant 1 : index
    %c1_63 = arith.constant 1 : index
    %c0_64 = arith.constant 0 : index
    %47 = vector.load %arg2[%c0_60, %c0_61, %c1_62, %c1_63, %c0_64] : memref<1x1x10x18x128xf32, #tpu.memory_space<vmem>>, vector<1x1x8x16x128xf32>
    %48 = vector.shape_cast %47 : vector<1x1x8x16x128xf32> to vector<8x16x128xf32>
    %49 = vector.shape_cast %48 : vector<8x16x128xf32> to vector<128x128xf32>
    %c1_65 = arith.constant 1 : index
    %c1_66 = arith.constant 1 : index
    %c0_67 = arith.constant 0 : index
    %c0_68 = arith.constant 0 : index
    %50 = vector.load %arg3[%c1_65, %c1_66, %c0_67, %c0_68] : memref<3x3x128x128xf32, #tpu.memory_space<vmem>>, vector<1x1x128x128xf32>
    %51 = vector.shape_cast %50 : vector<1x1x128x128xf32> to vector<128x128xf32>
    %cst_69 = arith.constant dense<0.000000e+00> : vector<128x128xf32>
    %52 = tpu.matmul %49, %51, %cst_69 {dimension_numbers = #tpu.dot_dimension_numbers<[1], [0], [0], [1], [0, 0, 1, 1], [], []>} : vector<128x128xf32>, vector<128x128xf32>, vector<128x128xf32> -> vector<128x128xf32>
    %53 = arith.addf %46, %52 : vector<128x128xf32>
    %c0_70 = arith.constant 0 : index
    %c0_71 = arith.constant 0 : index
    %c0_72 = arith.constant 0 : index
    %54 = vector.load %arg6[%c0_70, %c0_71, %c0_72] : memref<1x128x128xf32, #tpu.memory_space<vmem>>, vector<1x128x128xf32>
    %55 = vector.shape_cast %54 : vector<1x128x128xf32> to vector<128x128xf32>
    %56 = vector.shape_cast %53 : vector<128x128xf32> to vector<1x128x128xf32>
    tpu.vector_store %arg6[%c0_70, %c0_71, %c0_72], %56 {strides = array<i32>} : memref<1x128x128xf32, #tpu.memory_space<vmem>>, vector<1x128x128xf32>,
    %c0_73 = arith.constant 0 : index
    %c0_74 = arith.constant 0 : index
    %c0_75 = arith.constant 0 : index
    %57 = vector.load %arg6[%c0_73, %c0_74, %c0_75] : memref<1x128x128xf32, #tpu.memory_space<vmem>>, vector<1x128x128xf32>
    %58 = vector.shape_cast %57 : vector<1x128x128xf32> to vector<128x128xf32>
    %c0_76 = arith.constant 0 : index
    %c0_77 = arith.constant 0 : index
    %c1_78 = arith.constant 1 : index
    %c2_79 = arith.constant 2 : index
    %c0_80 = arith.constant 0 : index
    %59 = vector.load %arg2[%c0_76, %c0_77, %c1_78, %c2_79, %c0_80] : memref<1x1x10x18x128xf32, #tpu.memory_space<vmem>>, vector<1x1x8x16x128xf32>
    %60 = vector.shape_cast %59 : vector<1x1x8x16x128xf32> to vector<8x16x128xf32>
    %61 = vector.shape_cast %60 : vector<8x16x128xf32> to vector<128x128xf32>
    %c1_81 = arith.constant 1 : index
    %c2_82 = arith.constant 2 : index
    %c0_83 = arith.constant 0 : index
    %c0_84 = arith.constant 0 : index
    %62 = vector.load %arg3[%c1_81, %c2_82, %c0_83, %c0_84] : memref<3x3x128x128xf32, #tpu.memory_space<vmem>>, vector<1x1x128x128xf32>
    %63 = vector.shape_cast %62 : vector<1x1x128x128xf32> to vector<128x128xf32>
    %cst_85 = arith.constant dense<0.000000e+00> : vector<128x128xf32>
    %64 = tpu.matmul %61, %63, %cst_85 {dimension_numbers = #tpu.dot_dimension_numbers<[1], [0], [0], [1], [0, 0, 1, 1], [], []>} : vector<128x128xf32>, vector<128x128xf32>, vector<128x128xf32> -> vector<128x128xf32>
    %65 = arith.addf %58, %64 : vector<128x128xf32>
    %c0_86 = arith.constant 0 : index
    %c0_87 = arith.constant 0 : index
    %c0_88 = arith.constant 0 : index
    %66 = vector.load %arg6[%c0_86, %c0_87, %c0_88] : memref<1x128x128xf32, #tpu.memory_space<vmem>>, vector<1x128x128xf32>
    %67 = vector.shape_cast %66 : vector<1x128x128xf32> to vector<128x128xf32>
    %68 = vector.shape_cast %65 : vector<128x128xf32> to vector<1x128x128xf32>
    tpu.vector_store %arg6[%c0_86, %c0_87, %c0_88], %68 {strides = array<i32>} : memref<1x128x128xf32, #tpu.memory_space<vmem>>, vector<1x128x128xf32>,
    %c0_89 = arith.constant 0 : index
    %c0_90 = arith.constant 0 : index
    %c0_91 = arith.constant 0 : index
    %69 = vector.load %arg6[%c0_89, %c0_90, %c0_91] : memref<1x128x128xf32, #tpu.memory_space<vmem>>, vector<1x128x128xf32>
    %70 = vector.shape_cast %69 : vector<1x128x128xf32> to vector<128x128xf32>
    %c0_92 = arith.constant 0 : index
    %c0_93 = arith.constant 0 : index
    %c2_94 = arith.constant 2 : index
    %c0_95 = arith.constant 0 : index
    %c0_96 = arith.constant 0 : index
    %71 = vector.load %arg2[%c0_92, %c0_93, %c2_94, %c0_95, %c0_96] : memref<1x1x10x18x128xf32, #tpu.memory_space<vmem>>, vector<1x1x8x16x128xf32>
    %72 = vector.shape_cast %71 : vector<1x1x8x16x128xf32> to vector<8x16x128xf32>
    %73 = vector.shape_cast %72 : vector<8x16x128xf32> to vector<128x128xf32>
    %c2_97 = arith.constant 2 : index
    %c0_98 = arith.constant 0 : index
    %c0_99 = arith.constant 0 : index
    %c0_100 = arith.constant 0 : index
    %74 = vector.load %arg3[%c2_97, %c0_98, %c0_99, %c0_100] : memref<3x3x128x128xf32, #tpu.memory_space<vmem>>, vector<1x1x128x128xf32>
    %75 = vector.shape_cast %74 : vector<1x1x128x128xf32> to vector<128x128xf32>
    %cst_101 = arith.constant dense<0.000000e+00> : vector<128x128xf32>
    %76 = tpu.matmul %73, %75, %cst_101 {dimension_numbers = #tpu.dot_dimension_numbers<[1], [0], [0], [1], [0, 0, 1, 1], [], []>} : vector<128x128xf32>, vector<128x128xf32>, vector<128x128xf32> -> vector<128x128xf32>
    %77 = arith.addf %70, %76 : vector<128x128xf32>
    %c0_102 = arith.constant 0 : index
    %c0_103 = arith.constant 0 : index
    %c0_104 = arith.constant 0 : index
    %78 = vector.load %arg6[%c0_102, %c0_103, %c0_104] : memref<1x128x128xf32, #tpu.memory_space<vmem>>, vector<1x128x128xf32>
    %79 = vector.shape_cast %78 : vector<1x128x128xf32> to vector<128x128xf32>
    %80 = vector.shape_cast %77 : vector<128x128xf32> to vector<1x128x128xf32>
    tpu.vector_store %arg6[%c0_102, %c0_103, %c0_104], %80 {strides = array<i32>} : memref<1x128x128xf32, #tpu.memory_space<vmem>>, vector<1x128x128xf32>,
    %c0_105 = arith.constant 0 : index
    %c0_106 = arith.constant 0 : index
    %c0_107 = arith.constant 0 : index
    %81 = vector.load %arg6[%c0_105, %c0_106, %c0_107] : memref<1x128x128xf32, #tpu.memory_space<vmem>>, vector<1x128x128xf32>
    %82 = vector.shape_cast %81 : vector<1x128x128xf32> to vector<128x128xf32>
    %c0_108 = arith.constant 0 : index
    %c0_109 = arith.constant 0 : index
    %c2_110 = arith.constant 2 : index
    %c1_111 = arith.constant 1 : index
    %c0_112 = arith.constant 0 : index
    %83 = vector.load %arg2[%c0_108, %c0_109, %c2_110, %c1_111, %c0_112] : memref<1x1x10x18x128xf32, #tpu.memory_space<vmem>>, vector<1x1x8x16x128xf32>
    %84 = vector.shape_cast %83 : vector<1x1x8x16x128xf32> to vector<8x16x128xf32>
    %85 = vector.shape_cast %84 : vector<8x16x128xf32> to vector<128x128xf32>
    %c2_113 = arith.constant 2 : index
    %c1_114 = arith.constant 1 : index
    %c0_115 = arith.constant 0 : index
    %c0_116 = arith.constant 0 : index
    %86 = vector.load %arg3[%c2_113, %c1_114, %c0_115, %c0_116] : memref<3x3x128x128xf32, #tpu.memory_space<vmem>>, vector<1x1x128x128xf32>
    %87 = vector.shape_cast %86 : vector<1x1x128x128xf32> to vector<128x128xf32>
    %cst_117 = arith.constant dense<0.000000e+00> : vector<128x128xf32>
    %88 = tpu.matmul %85, %87, %cst_117 {dimension_numbers = #tpu.dot_dimension_numbers<[1], [0], [0], [1], [0, 0, 1, 1], [], []>} : vector<128x128xf32>, vector<128x128xf32>, vector<128x128xf32> -> vector<128x128xf32>
    %89 = arith.addf %82, %88 : vector<128x128xf32>
    %c0_118 = arith.constant 0 : index
    %c0_119 = arith.constant 0 : index
    %c0_120 = arith.constant 0 : index
    %90 = vector.load %arg6[%c0_118, %c0_119, %c0_120] : memref<1x128x128xf32, #tpu.memory_space<vmem>>, vector<1x128x128xf32>
    %91 = vector.shape_cast %90 : vector<1x128x128xf32> to vector<128x128xf32>
    %92 = vector.shape_cast %89 : vector<128x128xf32> to vector<1x128x128xf32>
    tpu.vector_store %arg6[%c0_118, %c0_119, %c0_120], %92 {strides = array<i32>} : memref<1x128x128xf32, #tpu.memory_space<vmem>>, vector<1x128x128xf32>,
    %c0_121 = arith.constant 0 : index
    %c0_122 = arith.constant 0 : index
    %c0_123 = arith.constant 0 : index
    %93 = vector.load %arg6[%c0_121, %c0_122, %c0_123] : memref<1x128x128xf32, #tpu.memory_space<vmem>>, vector<1x128x128xf32>
    %94 = vector.shape_cast %93 : vector<1x128x128xf32> to vector<128x128xf32>
    %c0_124 = arith.constant 0 : index
    %c0_125 = arith.constant 0 : index
    %c2_126 = arith.constant 2 : index
    %c2_127 = arith.constant 2 : index
    %c0_128 = arith.constant 0 : index
    %95 = vector.load %arg2[%c0_124, %c0_125, %c2_126, %c2_127, %c0_128] : memref<1x1x10x18x128xf32, #tpu.memory_space<vmem>>, vector<1x1x8x16x128xf32>
    %96 = vector.shape_cast %95 : vector<1x1x8x16x128xf32> to vector<8x16x128xf32>
    %97 = vector.shape_cast %96 : vector<8x16x128xf32> to vector<128x128xf32>
    %c2_129 = arith.constant 2 : index
    %c2_130 = arith.constant 2 : index
    %c0_131 = arith.constant 0 : index
    %c0_132 = arith.constant 0 : index
    %98 = vector.load %arg3[%c2_129, %c2_130, %c0_131, %c0_132] : memref<3x3x128x128xf32, #tpu.memory_space<vmem>>, vector<1x1x128x128xf32>
    %99 = vector.shape_cast %98 : vector<1x1x128x128xf32> to vector<128x128xf32>
    %cst_133 = arith.constant dense<0.000000e+00> : vector<128x128xf32>
    %100 = tpu.matmul %97, %99, %cst_133 {dimension_numbers = #tpu.dot_dimension_numbers<[1], [0], [0], [1], [0, 0, 1, 1], [], []>} : vector<128x128xf32>, vector<128x128xf32>, vector<128x128xf32> -> vector<128x128xf32>
    %101 = arith.addf %94, %100 : vector<128x128xf32>
    %c0_134 = arith.constant 0 : index
    %c0_135 = arith.constant 0 : index
    %c0_136 = arith.constant 0 : index
    %102 = vector.load %arg6[%c0_134, %c0_135, %c0_136] : memref<1x128x128xf32, #tpu.memory_space<vmem>>, vector<1x128x128xf32>
    %103 = vector.shape_cast %102 : vector<1x128x128xf32> to vector<128x128xf32>
    %104 = vector.shape_cast %101 : vector<128x128xf32> to vector<1x128x128xf32>
    tpu.vector_store %arg6[%c0_134, %c0_135, %c0_136], %104 {strides = array<i32>} : memref<1x128x128xf32, #tpu.memory_space<vmem>>, vector<1x128x128xf32>,
    %cst_137 = arith.constant dense<0.000000e+00> : vector<128xf32>
    %105 = vector.multi_reduction <add>, %101, %cst_137 [0] : vector<128x128xf32> to vector<128xf32>
    %106 = vector.shape_cast %105 : vector<128xf32> to vector<1x128xf32>
    %107 = arith.mulf %101, %101 : vector<128x128xf32>
    %cst_138 = arith.constant dense<0.000000e+00> : vector<128xf32>
    %108 = vector.multi_reduction <add>, %107, %cst_138 [0] : vector<128x128xf32> to vector<128xf32>
    %109 = vector.shape_cast %108 : vector<128xf32> to vector<1x128xf32>
    %110 = tpu.concatenate %106, %109 in 0 : vector<1x128xf32>, vector<1x128xf32> -> vector<2x128xf32>
    %c0_139 = arith.constant 0 : index
    %c0_140 = arith.constant 0 : index
    %c0_141 = arith.constant 0 : index
    %c0_142 = arith.constant 0 : index
    %111 = vector.load %arg7[%c0_139, %c0_140, %c0_141, %c0_142] : memref<1x1x2x128xf32, #tpu.memory_space<vmem>>, vector<1x1x2x128xf32>
    %112 = vector.shape_cast %111 : vector<1x1x2x128xf32> to vector<2x128xf32>
    %113 = vector.shape_cast %110 : vector<2x128xf32> to vector<1x1x2x128xf32>
    tpu.vector_store %arg7[%c0_139, %c0_140, %c0_141, %c0_142], %113 {strides = array<i32>} : memref<1x1x2x128xf32, #tpu.memory_space<vmem>>, vector<1x1x2x128xf32>,
    return
  }
  func.func @transform_0(%arg0: i32, %arg1: i32) -> (i32, i32, i32, i32, i32) {
    %c0_i32 = arith.constant 0 : i32
    %c0_i32_0 = arith.constant 0 : i32
    %c0_i32_1 = arith.constant 0 : i32
    %c0_i32_2 = arith.constant 0 : i32
    return %arg0, %arg1, %c0_i32, %c0_i32_0, %c0_i32_1 : i32, i32, i32, i32, i32
  }
  func.func @transform_1(%arg0: i32, %arg1: i32) -> (i32, i32, i32, i32) {
    %c0_i32 = arith.constant 0 : i32
    %c0_i32_0 = arith.constant 0 : i32
    %c0_i32_1 = arith.constant 0 : i32
    %c0_i32_2 = arith.constant 0 : i32
    %c0_i32_3 = arith.constant 0 : i32
    return %c0_i32, %c0_i32_0, %c0_i32_1, %c0_i32_2 : i32, i32, i32, i32
  }
  func.func @transform_2(%arg0: i32, %arg1: i32) -> (i32, i32, i32) {
    %c0_i32 = arith.constant 0 : i32
    %c0_i32_0 = arith.constant 0 : i32
    %c0_i32_1 = arith.constant 0 : i32
    %c0_i32_2 = arith.constant 0 : i32
    return %c0_i32, %c0_i32_0, %c0_i32_1 : i32, i32, i32
  }
  func.func @transform_3(%arg0: i32, %arg1: i32) -> (i32, i32, i32) {
    %c0_i32 = arith.constant 0 : i32
    %c0_i32_0 = arith.constant 0 : i32
    %c0_i32_1 = arith.constant 0 : i32
    %c0_i32_2 = arith.constant 0 : i32
    return %c0_i32, %c0_i32_0, %c0_i32_1 : i32, i32, i32
  }
  func.func @transform_4(%arg0: i32, %arg1: i32) -> (i32, i32, i32) {
    %c0_i32 = arith.constant 0 : i32
    %c0_i32_0 = arith.constant 0 : i32
    return %arg0, %arg1, %c0_i32 : i32, i32, i32
  }
  func.func @transform_5(%arg0: i32, %arg1: i32) -> (i32, i32, i32, i32) {
    %c0_i32 = arith.constant 0 : i32
    %c0_i32_0 = arith.constant 0 : i32
    %c0_i32_1 = arith.constant 0 : i32
    return %arg0, %arg1, %c0_i32, %c0_i32_0 : i32, i32, i32, i32
  }
}

module attributes {stable_mosaic.version = 11 : i64} {
  func.func @_conv3x3_stats_kernel(%arg0: i32, %arg1: i32, %arg2: memref<1x1x10x18x128xf32, #tpu.memory_space<vmem>>, %arg3: memref<3x3x128x128xf32, #tpu.memory_space<vmem>>, %arg4: memref<1x1x128xf32, #tpu.memory_space<vmem>>, %arg5: memref<1x1x128xf32, #tpu.memory_space<vmem>>, %arg6: memref<1x128x128xf32, #tpu.memory_space<vmem>>, %arg7: memref<1x1x2x128xf32, #tpu.memory_space<vmem>>, %arg8: memref<10x18x128xf32, #tpu.memory_space<vmem>>) attributes {dimension_semantics = [#tpu.dimension_semantics<parallel>, #tpu.dimension_semantics<parallel>], iteration_bounds = array<i64: 2, 2>, scalar_prefetch = 0 : i64, scratch_operands = 1 : i64, tpu.core_type = #tpu.core_type<tc>, window_params = [{transform_indices = @transform_0, window_bounds = array<i64: 1, 1, 10, 18, 128>}, {pipeline_mode = #tpu.pipeline_mode<synchronous>, transform_indices = @transform_1, window_bounds = array<i64: 3, 3, 128, 128>}, {pipeline_mode = #tpu.pipeline_mode<synchronous>, transform_indices = @transform_2, window_bounds = array<i64: 1, 1, 128>}, {pipeline_mode = #tpu.pipeline_mode<synchronous>, transform_indices = @transform_3, window_bounds = array<i64: 1, 1, 128>}, {transform_indices = @transform_4, window_bounds = array<i64: 1, 128, 128>}, {transform_indices = @transform_5, window_bounds = array<i64: 1, 1, 2, 128>}]} {
    %c0 = arith.constant 0 : index
    %c0_0 = arith.constant 0 : index
    %c0_1 = arith.constant 0 : index
    %c0_2 = arith.constant 0 : index
    %c0_3 = arith.constant 0 : index
    %0 = vector.load %arg2[%c0, %c0_0, %c0_1, %c0_2, %c0_3] : memref<1x1x10x18x128xf32, #tpu.memory_space<vmem>>, vector<1x1x10x18x128xf32>
    %1 = vector.shape_cast %0 : vector<1x1x10x18x128xf32> to vector<10x18x128xf32>
    %c0_4 = arith.constant 0 : index
    %c0_5 = arith.constant 0 : index
    %c0_6 = arith.constant 0 : index
    %2 = vector.load %arg4[%c0_4, %c0_5, %c0_6] : memref<1x1x128xf32, #tpu.memory_space<vmem>>, vector<1x1x128xf32>
    %3 = vector.broadcast %2 : vector<1x1x128xf32> to vector<10x18x128xf32>
    %4 = arith.mulf %1, %3 : vector<10x18x128xf32>
    %c0_7 = arith.constant 0 : index
    %c0_8 = arith.constant 0 : index
    %c0_9 = arith.constant 0 : index
    %5 = vector.load %arg5[%c0_7, %c0_8, %c0_9] : memref<1x1x128xf32, #tpu.memory_space<vmem>>, vector<1x1x128xf32>
    %6 = vector.broadcast %5 : vector<1x1x128xf32> to vector<10x18x128xf32>
    %7 = arith.addf %4, %6 : vector<10x18x128xf32>
    %cst = arith.constant 0.000000e+00 : f32
    %8 = vector.broadcast %cst : f32 to vector<10x18x128xf32>
    %9 = arith.maximumf %7, %8 : vector<10x18x128xf32>
    %c0_10 = arith.constant 0 : index
    %c0_11 = arith.constant 0 : index
    %c0_12 = arith.constant 0 : index
    %10 = vector.load %arg8[%c0_10, %c0_11, %c0_12] : memref<10x18x128xf32, #tpu.memory_space<vmem>>, vector<10x18x128xf32>
    tpu.vector_store %arg8[%c0_10, %c0_11, %c0_12], %9 {strides = array<i32>} : memref<10x18x128xf32, #tpu.memory_space<vmem>>, vector<10x18x128xf32>,
    %cst_13 = arith.constant 0.000000e+00 : f32
    %11 = vector.broadcast %cst_13 : f32 to vector<10x1x128xf32>
    %c0_14 = arith.constant 0 : index
    %c0_15 = arith.constant 0 : index
    %c0_16 = arith.constant 0 : index
    %12 = vector.load %arg8[%c0_14, %c0_15, %c0_16] : memref<10x18x128xf32, #tpu.memory_space<vmem>>, vector<10x1x128xf32>
    tpu.vector_store %arg8[%c0_14, %c0_15, %c0_16], %11 {strides = array<i32>} : memref<10x18x128xf32, #tpu.memory_space<vmem>>, vector<10x1x128xf32>,
    %c0_17 = arith.constant 0 : index
    %c17 = arith.constant 17 : index
    %c0_18 = arith.constant 0 : index
    %13 = vector.load %arg8[%c0_17, %c17, %c0_18] : memref<10x18x128xf32, #tpu.memory_space<vmem>>, vector<10x1x128xf32>
    tpu.vector_store %arg8[%c0_17, %c17, %c0_18], %11 {strides = array<i32>} : memref<10x18x128xf32, #tpu.memory_space<vmem>>, vector<10x1x128xf32>,
    %cst_19 = arith.constant 0.000000e+00 : f32
    %14 = vector.broadcast %cst_19 : f32 to vector<1x18x128xf32>
    %c0_i32 = arith.constant 0 : i32
    %15 = arith.cmpi eq, %arg1, %c0_i32 : i32
    %16 = arith.extui %15 : i1 to i32
    %c0_i32_20 = arith.constant 0 : i32
    %17 = arith.cmpi ne, %16, %c0_i32_20 : i32
    scf.if %17 {
      %c0_149 = arith.constant 0 : index
      %c0_150 = arith.constant 0 : index
      %c0_151 = arith.constant 0 : index
      %126 = vector.load %arg8[%c0_149, %c0_150, %c0_151] : memref<10x18x128xf32, #tpu.memory_space<vmem>>, vector<1x18x128xf32>
      tpu.vector_store %arg8[%c0_149, %c0_150, %c0_151], %14 {strides = array<i32>} : memref<10x18x128xf32, #tpu.memory_space<vmem>>, vector<1x18x128xf32>,
    } else {
    }
    %c1_i32 = arith.constant 1 : i32
    %18 = arith.cmpi eq, %arg1, %c1_i32 : i32
    %19 = arith.extui %18 : i1 to i32
    %c0_i32_21 = arith.constant 0 : i32
    %20 = arith.cmpi ne, %19, %c0_i32_21 : i32
    scf.if %20 {
      %c9 = arith.constant 9 : index
      %c0_149 = arith.constant 0 : index
      %c0_150 = arith.constant 0 : index
      %126 = vector.load %arg8[%c9, %c0_149, %c0_150] : memref<10x18x128xf32, #tpu.memory_space<vmem>>, vector<1x18x128xf32>
      tpu.vector_store %arg8[%c9, %c0_149, %c0_150], %14 {strides = array<i32>} : memref<10x18x128xf32, #tpu.memory_space<vmem>>, vector<1x18x128xf32>,
    } else {
    }
    %c0_22 = arith.constant 0 : index
    %c0_23 = arith.constant 0 : index
    %c0_24 = arith.constant 0 : index
    %21 = vector.load %arg8[%c0_22, %c0_23, %c0_24] : memref<10x18x128xf32, #tpu.memory_space<vmem>>, vector<8x16x128xf32>
    %22 = vector.shape_cast %21 : vector<8x16x128xf32> to vector<128x128xf32>
    %c0_25 = arith.constant 0 : index
    %c0_26 = arith.constant 0 : index
    %c0_27 = arith.constant 0 : index
    %c0_28 = arith.constant 0 : index
    %23 = vector.load %arg3[%c0_25, %c0_26, %c0_27, %c0_28] : memref<3x3x128x128xf32, #tpu.memory_space<vmem>>, vector<1x1x128x128xf32>
    %24 = vector.shape_cast %23 : vector<1x1x128x128xf32> to vector<128x128xf32>
    %cst_29 = arith.constant dense<0.000000e+00> : vector<128x128xf32>
    %25 = tpu.matmul %22, %24, %cst_29 {dimension_numbers = #tpu.dot_dimension_numbers<[1], [0], [0], [1], [0, 0, 1, 1], [], []>} : vector<128x128xf32>, vector<128x128xf32>, vector<128x128xf32> -> vector<128x128xf32>
    %c0_30 = arith.constant 0 : index
    %c0_31 = arith.constant 0 : index
    %c0_32 = arith.constant 0 : index
    %26 = vector.load %arg6[%c0_30, %c0_31, %c0_32] : memref<1x128x128xf32, #tpu.memory_space<vmem>>, vector<1x128x128xf32>
    %27 = vector.shape_cast %26 : vector<1x128x128xf32> to vector<128x128xf32>
    %28 = vector.shape_cast %25 : vector<128x128xf32> to vector<1x128x128xf32>
    tpu.vector_store %arg6[%c0_30, %c0_31, %c0_32], %28 {strides = array<i32>} : memref<1x128x128xf32, #tpu.memory_space<vmem>>, vector<1x128x128xf32>,
    %c0_33 = arith.constant 0 : index
    %c0_34 = arith.constant 0 : index
    %c0_35 = arith.constant 0 : index
    %29 = vector.load %arg6[%c0_33, %c0_34, %c0_35] : memref<1x128x128xf32, #tpu.memory_space<vmem>>, vector<1x128x128xf32>
    %30 = vector.shape_cast %29 : vector<1x128x128xf32> to vector<128x128xf32>
    %c0_36 = arith.constant 0 : index
    %c1 = arith.constant 1 : index
    %c0_37 = arith.constant 0 : index
    %31 = vector.load %arg8[%c0_36, %c1, %c0_37] : memref<10x18x128xf32, #tpu.memory_space<vmem>>, vector<8x16x128xf32>
    %32 = vector.shape_cast %31 : vector<8x16x128xf32> to vector<128x128xf32>
    %c0_38 = arith.constant 0 : index
    %c1_39 = arith.constant 1 : index
    %c0_40 = arith.constant 0 : index
    %c0_41 = arith.constant 0 : index
    %33 = vector.load %arg3[%c0_38, %c1_39, %c0_40, %c0_41] : memref<3x3x128x128xf32, #tpu.memory_space<vmem>>, vector<1x1x128x128xf32>
    %34 = vector.shape_cast %33 : vector<1x1x128x128xf32> to vector<128x128xf32>
    %cst_42 = arith.constant dense<0.000000e+00> : vector<128x128xf32>
    %35 = tpu.matmul %32, %34, %cst_42 {dimension_numbers = #tpu.dot_dimension_numbers<[1], [0], [0], [1], [0, 0, 1, 1], [], []>} : vector<128x128xf32>, vector<128x128xf32>, vector<128x128xf32> -> vector<128x128xf32>
    %36 = arith.addf %30, %35 : vector<128x128xf32>
    %c0_43 = arith.constant 0 : index
    %c0_44 = arith.constant 0 : index
    %c0_45 = arith.constant 0 : index
    %37 = vector.load %arg6[%c0_43, %c0_44, %c0_45] : memref<1x128x128xf32, #tpu.memory_space<vmem>>, vector<1x128x128xf32>
    %38 = vector.shape_cast %37 : vector<1x128x128xf32> to vector<128x128xf32>
    %39 = vector.shape_cast %36 : vector<128x128xf32> to vector<1x128x128xf32>
    tpu.vector_store %arg6[%c0_43, %c0_44, %c0_45], %39 {strides = array<i32>} : memref<1x128x128xf32, #tpu.memory_space<vmem>>, vector<1x128x128xf32>,
    %c0_46 = arith.constant 0 : index
    %c0_47 = arith.constant 0 : index
    %c0_48 = arith.constant 0 : index
    %40 = vector.load %arg6[%c0_46, %c0_47, %c0_48] : memref<1x128x128xf32, #tpu.memory_space<vmem>>, vector<1x128x128xf32>
    %41 = vector.shape_cast %40 : vector<1x128x128xf32> to vector<128x128xf32>
    %c0_49 = arith.constant 0 : index
    %c2 = arith.constant 2 : index
    %c0_50 = arith.constant 0 : index
    %42 = vector.load %arg8[%c0_49, %c2, %c0_50] : memref<10x18x128xf32, #tpu.memory_space<vmem>>, vector<8x16x128xf32>
    %43 = vector.shape_cast %42 : vector<8x16x128xf32> to vector<128x128xf32>
    %c0_51 = arith.constant 0 : index
    %c2_52 = arith.constant 2 : index
    %c0_53 = arith.constant 0 : index
    %c0_54 = arith.constant 0 : index
    %44 = vector.load %arg3[%c0_51, %c2_52, %c0_53, %c0_54] : memref<3x3x128x128xf32, #tpu.memory_space<vmem>>, vector<1x1x128x128xf32>
    %45 = vector.shape_cast %44 : vector<1x1x128x128xf32> to vector<128x128xf32>
    %cst_55 = arith.constant dense<0.000000e+00> : vector<128x128xf32>
    %46 = tpu.matmul %43, %45, %cst_55 {dimension_numbers = #tpu.dot_dimension_numbers<[1], [0], [0], [1], [0, 0, 1, 1], [], []>} : vector<128x128xf32>, vector<128x128xf32>, vector<128x128xf32> -> vector<128x128xf32>
    %47 = arith.addf %41, %46 : vector<128x128xf32>
    %c0_56 = arith.constant 0 : index
    %c0_57 = arith.constant 0 : index
    %c0_58 = arith.constant 0 : index
    %48 = vector.load %arg6[%c0_56, %c0_57, %c0_58] : memref<1x128x128xf32, #tpu.memory_space<vmem>>, vector<1x128x128xf32>
    %49 = vector.shape_cast %48 : vector<1x128x128xf32> to vector<128x128xf32>
    %50 = vector.shape_cast %47 : vector<128x128xf32> to vector<1x128x128xf32>
    tpu.vector_store %arg6[%c0_56, %c0_57, %c0_58], %50 {strides = array<i32>} : memref<1x128x128xf32, #tpu.memory_space<vmem>>, vector<1x128x128xf32>,
    %c0_59 = arith.constant 0 : index
    %c0_60 = arith.constant 0 : index
    %c0_61 = arith.constant 0 : index
    %51 = vector.load %arg6[%c0_59, %c0_60, %c0_61] : memref<1x128x128xf32, #tpu.memory_space<vmem>>, vector<1x128x128xf32>
    %52 = vector.shape_cast %51 : vector<1x128x128xf32> to vector<128x128xf32>
    %c1_62 = arith.constant 1 : index
    %c0_63 = arith.constant 0 : index
    %c0_64 = arith.constant 0 : index
    %53 = vector.load %arg8[%c1_62, %c0_63, %c0_64] : memref<10x18x128xf32, #tpu.memory_space<vmem>>, vector<8x16x128xf32>
    %54 = vector.shape_cast %53 : vector<8x16x128xf32> to vector<128x128xf32>
    %c1_65 = arith.constant 1 : index
    %c0_66 = arith.constant 0 : index
    %c0_67 = arith.constant 0 : index
    %c0_68 = arith.constant 0 : index
    %55 = vector.load %arg3[%c1_65, %c0_66, %c0_67, %c0_68] : memref<3x3x128x128xf32, #tpu.memory_space<vmem>>, vector<1x1x128x128xf32>
    %56 = vector.shape_cast %55 : vector<1x1x128x128xf32> to vector<128x128xf32>
    %cst_69 = arith.constant dense<0.000000e+00> : vector<128x128xf32>
    %57 = tpu.matmul %54, %56, %cst_69 {dimension_numbers = #tpu.dot_dimension_numbers<[1], [0], [0], [1], [0, 0, 1, 1], [], []>} : vector<128x128xf32>, vector<128x128xf32>, vector<128x128xf32> -> vector<128x128xf32>
    %58 = arith.addf %52, %57 : vector<128x128xf32>
    %c0_70 = arith.constant 0 : index
    %c0_71 = arith.constant 0 : index
    %c0_72 = arith.constant 0 : index
    %59 = vector.load %arg6[%c0_70, %c0_71, %c0_72] : memref<1x128x128xf32, #tpu.memory_space<vmem>>, vector<1x128x128xf32>
    %60 = vector.shape_cast %59 : vector<1x128x128xf32> to vector<128x128xf32>
    %61 = vector.shape_cast %58 : vector<128x128xf32> to vector<1x128x128xf32>
    tpu.vector_store %arg6[%c0_70, %c0_71, %c0_72], %61 {strides = array<i32>} : memref<1x128x128xf32, #tpu.memory_space<vmem>>, vector<1x128x128xf32>,
    %c0_73 = arith.constant 0 : index
    %c0_74 = arith.constant 0 : index
    %c0_75 = arith.constant 0 : index
    %62 = vector.load %arg6[%c0_73, %c0_74, %c0_75] : memref<1x128x128xf32, #tpu.memory_space<vmem>>, vector<1x128x128xf32>
    %63 = vector.shape_cast %62 : vector<1x128x128xf32> to vector<128x128xf32>
    %c1_76 = arith.constant 1 : index
    %c1_77 = arith.constant 1 : index
    %c0_78 = arith.constant 0 : index
    %64 = vector.load %arg8[%c1_76, %c1_77, %c0_78] : memref<10x18x128xf32, #tpu.memory_space<vmem>>, vector<8x16x128xf32>
    %65 = vector.shape_cast %64 : vector<8x16x128xf32> to vector<128x128xf32>
    %c1_79 = arith.constant 1 : index
    %c1_80 = arith.constant 1 : index
    %c0_81 = arith.constant 0 : index
    %c0_82 = arith.constant 0 : index
    %66 = vector.load %arg3[%c1_79, %c1_80, %c0_81, %c0_82] : memref<3x3x128x128xf32, #tpu.memory_space<vmem>>, vector<1x1x128x128xf32>
    %67 = vector.shape_cast %66 : vector<1x1x128x128xf32> to vector<128x128xf32>
    %cst_83 = arith.constant dense<0.000000e+00> : vector<128x128xf32>
    %68 = tpu.matmul %65, %67, %cst_83 {dimension_numbers = #tpu.dot_dimension_numbers<[1], [0], [0], [1], [0, 0, 1, 1], [], []>} : vector<128x128xf32>, vector<128x128xf32>, vector<128x128xf32> -> vector<128x128xf32>
    %69 = arith.addf %63, %68 : vector<128x128xf32>
    %c0_84 = arith.constant 0 : index
    %c0_85 = arith.constant 0 : index
    %c0_86 = arith.constant 0 : index
    %70 = vector.load %arg6[%c0_84, %c0_85, %c0_86] : memref<1x128x128xf32, #tpu.memory_space<vmem>>, vector<1x128x128xf32>
    %71 = vector.shape_cast %70 : vector<1x128x128xf32> to vector<128x128xf32>
    %72 = vector.shape_cast %69 : vector<128x128xf32> to vector<1x128x128xf32>
    tpu.vector_store %arg6[%c0_84, %c0_85, %c0_86], %72 {strides = array<i32>} : memref<1x128x128xf32, #tpu.memory_space<vmem>>, vector<1x128x128xf32>,
    %c0_87 = arith.constant 0 : index
    %c0_88 = arith.constant 0 : index
    %c0_89 = arith.constant 0 : index
    %73 = vector.load %arg6[%c0_87, %c0_88, %c0_89] : memref<1x128x128xf32, #tpu.memory_space<vmem>>, vector<1x128x128xf32>
    %74 = vector.shape_cast %73 : vector<1x128x128xf32> to vector<128x128xf32>
    %c1_90 = arith.constant 1 : index
    %c2_91 = arith.constant 2 : index
    %c0_92 = arith.constant 0 : index
    %75 = vector.load %arg8[%c1_90, %c2_91, %c0_92] : memref<10x18x128xf32, #tpu.memory_space<vmem>>, vector<8x16x128xf32>
    %76 = vector.shape_cast %75 : vector<8x16x128xf32> to vector<128x128xf32>
    %c1_93 = arith.constant 1 : index
    %c2_94 = arith.constant 2 : index
    %c0_95 = arith.constant 0 : index
    %c0_96 = arith.constant 0 : index
    %77 = vector.load %arg3[%c1_93, %c2_94, %c0_95, %c0_96] : memref<3x3x128x128xf32, #tpu.memory_space<vmem>>, vector<1x1x128x128xf32>
    %78 = vector.shape_cast %77 : vector<1x1x128x128xf32> to vector<128x128xf32>
    %cst_97 = arith.constant dense<0.000000e+00> : vector<128x128xf32>
    %79 = tpu.matmul %76, %78, %cst_97 {dimension_numbers = #tpu.dot_dimension_numbers<[1], [0], [0], [1], [0, 0, 1, 1], [], []>} : vector<128x128xf32>, vector<128x128xf32>, vector<128x128xf32> -> vector<128x128xf32>
    %80 = arith.addf %74, %79 : vector<128x128xf32>
    %c0_98 = arith.constant 0 : index
    %c0_99 = arith.constant 0 : index
    %c0_100 = arith.constant 0 : index
    %81 = vector.load %arg6[%c0_98, %c0_99, %c0_100] : memref<1x128x128xf32, #tpu.memory_space<vmem>>, vector<1x128x128xf32>
    %82 = vector.shape_cast %81 : vector<1x128x128xf32> to vector<128x128xf32>
    %83 = vector.shape_cast %80 : vector<128x128xf32> to vector<1x128x128xf32>
    tpu.vector_store %arg6[%c0_98, %c0_99, %c0_100], %83 {strides = array<i32>} : memref<1x128x128xf32, #tpu.memory_space<vmem>>, vector<1x128x128xf32>,
    %c0_101 = arith.constant 0 : index
    %c0_102 = arith.constant 0 : index
    %c0_103 = arith.constant 0 : index
    %84 = vector.load %arg6[%c0_101, %c0_102, %c0_103] : memref<1x128x128xf32, #tpu.memory_space<vmem>>, vector<1x128x128xf32>
    %85 = vector.shape_cast %84 : vector<1x128x128xf32> to vector<128x128xf32>
    %c2_104 = arith.constant 2 : index
    %c0_105 = arith.constant 0 : index
    %c0_106 = arith.constant 0 : index
    %86 = vector.load %arg8[%c2_104, %c0_105, %c0_106] : memref<10x18x128xf32, #tpu.memory_space<vmem>>, vector<8x16x128xf32>
    %87 = vector.shape_cast %86 : vector<8x16x128xf32> to vector<128x128xf32>
    %c2_107 = arith.constant 2 : index
    %c0_108 = arith.constant 0 : index
    %c0_109 = arith.constant 0 : index
    %c0_110 = arith.constant 0 : index
    %88 = vector.load %arg3[%c2_107, %c0_108, %c0_109, %c0_110] : memref<3x3x128x128xf32, #tpu.memory_space<vmem>>, vector<1x1x128x128xf32>
    %89 = vector.shape_cast %88 : vector<1x1x128x128xf32> to vector<128x128xf32>
    %cst_111 = arith.constant dense<0.000000e+00> : vector<128x128xf32>
    %90 = tpu.matmul %87, %89, %cst_111 {dimension_numbers = #tpu.dot_dimension_numbers<[1], [0], [0], [1], [0, 0, 1, 1], [], []>} : vector<128x128xf32>, vector<128x128xf32>, vector<128x128xf32> -> vector<128x128xf32>
    %91 = arith.addf %85, %90 : vector<128x128xf32>
    %c0_112 = arith.constant 0 : index
    %c0_113 = arith.constant 0 : index
    %c0_114 = arith.constant 0 : index
    %92 = vector.load %arg6[%c0_112, %c0_113, %c0_114] : memref<1x128x128xf32, #tpu.memory_space<vmem>>, vector<1x128x128xf32>
    %93 = vector.shape_cast %92 : vector<1x128x128xf32> to vector<128x128xf32>
    %94 = vector.shape_cast %91 : vector<128x128xf32> to vector<1x128x128xf32>
    tpu.vector_store %arg6[%c0_112, %c0_113, %c0_114], %94 {strides = array<i32>} : memref<1x128x128xf32, #tpu.memory_space<vmem>>, vector<1x128x128xf32>,
    %c0_115 = arith.constant 0 : index
    %c0_116 = arith.constant 0 : index
    %c0_117 = arith.constant 0 : index
    %95 = vector.load %arg6[%c0_115, %c0_116, %c0_117] : memref<1x128x128xf32, #tpu.memory_space<vmem>>, vector<1x128x128xf32>
    %96 = vector.shape_cast %95 : vector<1x128x128xf32> to vector<128x128xf32>
    %c2_118 = arith.constant 2 : index
    %c1_119 = arith.constant 1 : index
    %c0_120 = arith.constant 0 : index
    %97 = vector.load %arg8[%c2_118, %c1_119, %c0_120] : memref<10x18x128xf32, #tpu.memory_space<vmem>>, vector<8x16x128xf32>
    %98 = vector.shape_cast %97 : vector<8x16x128xf32> to vector<128x128xf32>
    %c2_121 = arith.constant 2 : index
    %c1_122 = arith.constant 1 : index
    %c0_123 = arith.constant 0 : index
    %c0_124 = arith.constant 0 : index
    %99 = vector.load %arg3[%c2_121, %c1_122, %c0_123, %c0_124] : memref<3x3x128x128xf32, #tpu.memory_space<vmem>>, vector<1x1x128x128xf32>
    %100 = vector.shape_cast %99 : vector<1x1x128x128xf32> to vector<128x128xf32>
    %cst_125 = arith.constant dense<0.000000e+00> : vector<128x128xf32>
    %101 = tpu.matmul %98, %100, %cst_125 {dimension_numbers = #tpu.dot_dimension_numbers<[1], [0], [0], [1], [0, 0, 1, 1], [], []>} : vector<128x128xf32>, vector<128x128xf32>, vector<128x128xf32> -> vector<128x128xf32>
    %102 = arith.addf %96, %101 : vector<128x128xf32>
    %c0_126 = arith.constant 0 : index
    %c0_127 = arith.constant 0 : index
    %c0_128 = arith.constant 0 : index
    %103 = vector.load %arg6[%c0_126, %c0_127, %c0_128] : memref<1x128x128xf32, #tpu.memory_space<vmem>>, vector<1x128x128xf32>
    %104 = vector.shape_cast %103 : vector<1x128x128xf32> to vector<128x128xf32>
    %105 = vector.shape_cast %102 : vector<128x128xf32> to vector<1x128x128xf32>
    tpu.vector_store %arg6[%c0_126, %c0_127, %c0_128], %105 {strides = array<i32>} : memref<1x128x128xf32, #tpu.memory_space<vmem>>, vector<1x128x128xf32>,
    %c0_129 = arith.constant 0 : index
    %c0_130 = arith.constant 0 : index
    %c0_131 = arith.constant 0 : index
    %106 = vector.load %arg6[%c0_129, %c0_130, %c0_131] : memref<1x128x128xf32, #tpu.memory_space<vmem>>, vector<1x128x128xf32>
    %107 = vector.shape_cast %106 : vector<1x128x128xf32> to vector<128x128xf32>
    %c2_132 = arith.constant 2 : index
    %c2_133 = arith.constant 2 : index
    %c0_134 = arith.constant 0 : index
    %108 = vector.load %arg8[%c2_132, %c2_133, %c0_134] : memref<10x18x128xf32, #tpu.memory_space<vmem>>, vector<8x16x128xf32>
    %109 = vector.shape_cast %108 : vector<8x16x128xf32> to vector<128x128xf32>
    %c2_135 = arith.constant 2 : index
    %c2_136 = arith.constant 2 : index
    %c0_137 = arith.constant 0 : index
    %c0_138 = arith.constant 0 : index
    %110 = vector.load %arg3[%c2_135, %c2_136, %c0_137, %c0_138] : memref<3x3x128x128xf32, #tpu.memory_space<vmem>>, vector<1x1x128x128xf32>
    %111 = vector.shape_cast %110 : vector<1x1x128x128xf32> to vector<128x128xf32>
    %cst_139 = arith.constant dense<0.000000e+00> : vector<128x128xf32>
    %112 = tpu.matmul %109, %111, %cst_139 {dimension_numbers = #tpu.dot_dimension_numbers<[1], [0], [0], [1], [0, 0, 1, 1], [], []>} : vector<128x128xf32>, vector<128x128xf32>, vector<128x128xf32> -> vector<128x128xf32>
    %113 = arith.addf %107, %112 : vector<128x128xf32>
    %c0_140 = arith.constant 0 : index
    %c0_141 = arith.constant 0 : index
    %c0_142 = arith.constant 0 : index
    %114 = vector.load %arg6[%c0_140, %c0_141, %c0_142] : memref<1x128x128xf32, #tpu.memory_space<vmem>>, vector<1x128x128xf32>
    %115 = vector.shape_cast %114 : vector<1x128x128xf32> to vector<128x128xf32>
    %116 = vector.shape_cast %113 : vector<128x128xf32> to vector<1x128x128xf32>
    tpu.vector_store %arg6[%c0_140, %c0_141, %c0_142], %116 {strides = array<i32>} : memref<1x128x128xf32, #tpu.memory_space<vmem>>, vector<1x128x128xf32>,
    %cst_143 = arith.constant dense<0.000000e+00> : vector<128xf32>
    %117 = vector.multi_reduction <add>, %113, %cst_143 [0] : vector<128x128xf32> to vector<128xf32>
    %118 = vector.shape_cast %117 : vector<128xf32> to vector<1x128xf32>
    %119 = arith.mulf %113, %113 : vector<128x128xf32>
    %cst_144 = arith.constant dense<0.000000e+00> : vector<128xf32>
    %120 = vector.multi_reduction <add>, %119, %cst_144 [0] : vector<128x128xf32> to vector<128xf32>
    %121 = vector.shape_cast %120 : vector<128xf32> to vector<1x128xf32>
    %122 = tpu.concatenate %118, %121 in 0 : vector<1x128xf32>, vector<1x128xf32> -> vector<2x128xf32>
    %c0_145 = arith.constant 0 : index
    %c0_146 = arith.constant 0 : index
    %c0_147 = arith.constant 0 : index
    %c0_148 = arith.constant 0 : index
    %123 = vector.load %arg7[%c0_145, %c0_146, %c0_147, %c0_148] : memref<1x1x2x128xf32, #tpu.memory_space<vmem>>, vector<1x1x2x128xf32>
    %124 = vector.shape_cast %123 : vector<1x1x2x128xf32> to vector<2x128xf32>
    %125 = vector.shape_cast %122 : vector<2x128xf32> to vector<1x1x2x128xf32>
    tpu.vector_store %arg7[%c0_145, %c0_146, %c0_147, %c0_148], %125 {strides = array<i32>} : memref<1x1x2x128xf32, #tpu.memory_space<vmem>>, vector<1x1x2x128xf32>,
    return
  }
  func.func @transform_0(%arg0: i32, %arg1: i32) -> (i32, i32, i32, i32, i32) {
    %c0_i32 = arith.constant 0 : i32
    %c0_i32_0 = arith.constant 0 : i32
    %c0_i32_1 = arith.constant 0 : i32
    %c0_i32_2 = arith.constant 0 : i32
    return %arg0, %arg1, %c0_i32, %c0_i32_0, %c0_i32_1 : i32, i32, i32, i32, i32
  }
  func.func @transform_1(%arg0: i32, %arg1: i32) -> (i32, i32, i32, i32) {
    %c0_i32 = arith.constant 0 : i32
    %c0_i32_0 = arith.constant 0 : i32
    %c0_i32_1 = arith.constant 0 : i32
    %c0_i32_2 = arith.constant 0 : i32
    %c0_i32_3 = arith.constant 0 : i32
    return %c0_i32, %c0_i32_0, %c0_i32_1, %c0_i32_2 : i32, i32, i32, i32
  }
  func.func @transform_2(%arg0: i32, %arg1: i32) -> (i32, i32, i32) {
    %c0_i32 = arith.constant 0 : i32
    %c0_i32_0 = arith.constant 0 : i32
    %c0_i32_1 = arith.constant 0 : i32
    %c0_i32_2 = arith.constant 0 : i32
    return %c0_i32, %c0_i32_0, %c0_i32_1 : i32, i32, i32
  }
  func.func @transform_3(%arg0: i32, %arg1: i32) -> (i32, i32, i32) {
    %c0_i32 = arith.constant 0 : i32
    %c0_i32_0 = arith.constant 0 : i32
    %c0_i32_1 = arith.constant 0 : i32
    %c0_i32_2 = arith.constant 0 : i32
    return %c0_i32, %c0_i32_0, %c0_i32_1 : i32, i32, i32
  }
  func.func @transform_4(%arg0: i32, %arg1: i32) -> (i32, i32, i32) {
    %c0_i32 = arith.constant 0 : i32
    %c0_i32_0 = arith.constant 0 : i32
    return %arg0, %arg1, %c0_i32 : i32, i32, i32
  }
  func.func @transform_5(%arg0: i32, %arg1: i32) -> (i32, i32, i32, i32) {
    %c0_i32 = arith.constant 0 : i32
    %c0_i32_0 = arith.constant 0 : i32
    %c0_i32_1 = arith.constant 0 : i32
    return %arg0, %arg1, %c0_i32, %c0_i32_0 : i32, i32, i32, i32
  }
}

module attributes {stable_mosaic.version = 11 : i64} {
  func.func @_bn_relu_kernel(%arg0: i32, %arg1: i32, %arg2: memref<1x128x128xf32, #tpu.memory_space<vmem>>, %arg3: memref<1x1x128xf32, #tpu.memory_space<vmem>>, %arg4: memref<1x1x128xf32, #tpu.memory_space<vmem>>, %arg5: memref<1x128x128xf32, #tpu.memory_space<vmem>>) attributes {dimension_semantics = [#tpu.dimension_semantics<parallel>, #tpu.dimension_semantics<parallel>], iteration_bounds = array<i64: 2, 2>, scalar_prefetch = 0 : i64, scratch_operands = 0 : i64, tpu.core_type = #tpu.core_type<tc>, window_params = [{transform_indices = @transform_0, window_bounds = array<i64: 1, 128, 128>}, {pipeline_mode = #tpu.pipeline_mode<synchronous>, transform_indices = @transform_1, window_bounds = array<i64: 1, 1, 128>}, {pipeline_mode = #tpu.pipeline_mode<synchronous>, transform_indices = @transform_2, window_bounds = array<i64: 1, 1, 128>}, {transform_indices = @transform_3, window_bounds = array<i64: 1, 128, 128>}]} {
    %c0 = arith.constant 0 : index
    %c0_0 = arith.constant 0 : index
    %c0_1 = arith.constant 0 : index
    %0 = vector.load %arg2[%c0, %c0_0, %c0_1] : memref<1x128x128xf32, #tpu.memory_space<vmem>>, vector<1x128x128xf32>
    %c0_2 = arith.constant 0 : index
    %c0_3 = arith.constant 0 : index
    %c0_4 = arith.constant 0 : index
    %1 = vector.load %arg3[%c0_2, %c0_3, %c0_4] : memref<1x1x128xf32, #tpu.memory_space<vmem>>, vector<1x1x128xf32>
    %2 = vector.broadcast %1 : vector<1x1x128xf32> to vector<1x128x128xf32>
    %3 = arith.mulf %0, %2 : vector<1x128x128xf32>
    %c0_5 = arith.constant 0 : index
    %c0_6 = arith.constant 0 : index
    %c0_7 = arith.constant 0 : index
    %4 = vector.load %arg4[%c0_5, %c0_6, %c0_7] : memref<1x1x128xf32, #tpu.memory_space<vmem>>, vector<1x1x128xf32>
    %5 = vector.broadcast %4 : vector<1x1x128xf32> to vector<1x128x128xf32>
    %6 = arith.addf %3, %5 : vector<1x128x128xf32>
    %cst = arith.constant 0.000000e+00 : f32
    %7 = vector.broadcast %cst : f32 to vector<1x128x128xf32>
    %8 = arith.maximumf %6, %7 : vector<1x128x128xf32>
    %c0_8 = arith.constant 0 : index
    %c0_9 = arith.constant 0 : index
    %c0_10 = arith.constant 0 : index
    %9 = vector.load %arg5[%c0_8, %c0_9, %c0_10] : memref<1x128x128xf32, #tpu.memory_space<vmem>>, vector<1x128x128xf32>
    tpu.vector_store %arg5[%c0_8, %c0_9, %c0_10], %8 {strides = array<i32>} : memref<1x128x128xf32, #tpu.memory_space<vmem>>, vector<1x128x128xf32>,
    return
  }
  func.func @transform_0(%arg0: i32, %arg1: i32) -> (i32, i32, i32) {
    %c0_i32 = arith.constant 0 : i32
    %c0_i32_0 = arith.constant 0 : i32
    return %arg0, %arg1, %c0_i32 : i32, i32, i32
  }
  func.func @transform_1(%arg0: i32, %arg1: i32) -> (i32, i32, i32) {
    %c0_i32 = arith.constant 0 : i32
    %c0_i32_0 = arith.constant 0 : i32
    %c0_i32_1 = arith.constant 0 : i32
    %c0_i32_2 = arith.constant 0 : i32
    return %c0_i32, %c0_i32_0, %c0_i32_1 : i32, i32, i32
  }
  func.func @transform_2(%arg0: i32, %arg1: i32) -> (i32, i32, i32) {
    %c0_i32 = arith.constant 0 : i32
    %c0_i32_0 = arith.constant 0 : i32
    %c0_i32_1 = arith.constant 0 : i32
    %c0_i32_2 = arith.constant 0 : i32
    return %c0_i32, %c0_i32_0, %c0_i32_1 : i32, i32, i32
  }
  func.func @transform_3(%arg0: i32, %arg1: i32) -> (i32, i32, i32) {
    %c0_i32 = arith.constant 0 : i32
    %c0_i32_0 = arith.constant 0 : i32
    return %arg0, %arg1, %c0_i32 : i32, i32, i32
  }
}

</mosaic_0001>

<llo_original>
// kernel: _encoder_block_impl.5
$region0: #{_encoder_block_impl.5}
  #allocation0 [shape = 'u32[]', space=smem, size = 0x4, offset = 0x4, fixed_abs, tag = 'smem constant byte address 0x4 - core index']
  #allocation1 [shape = 'u32[144,128]{1,0:T(1,128)}', space=vmem, size = 0x12000, scoped, tag = 'internal scratch']
  %s0 = inlined_call_operand.vmem [shape: f32[2,256,128], index: 0, kind: input, shape index: {}]
  %s1 = inlined_call_operand.vmem [shape: f32[1,1,128], index: 1, kind: input, shape index: {}]
  %s2 = inlined_call_operand.vmem [shape: f32[1,1,128], index: 2, kind: input, shape index: {}]
  %s3 = inlined_call_operand.vmem [shape: f32[2,256,128], index: 3, kind: output, shape index: {}]
  %s4 = sld [smem:[#allocation0]]
  $region45: #{_encoder_block_impl.5} parent=0
    _
  %s6 = ssub.s32 1, %s4
  %s7 = scalar_select 0, %s6, %s4
  loop: start=0, step=1, limit=6
  $region2: #{_encoder_block_impl.5} parent=0 // loop_pre_header
    _
  $region3: #{_encoder_block_impl.5} parent=0 // loop_header
    %s9 = sphi 0, %s13
    %p10 = scmp.ge.s32.totalorder %s9, 6
    %s16 = sphi 0, %s28
    %s17 = sphi 0, %s24
    %s18 = sphi 0, %s16
    %s19 = sphi 0, %s17
    %s20 = sphi 0, %s18
    %s21 = sphi 0, %s19
    %s33 = sphi 0, %s35
    %s36 = sphi 0, %s33
    %s37 = sphi 0, %s36
    %s53 = sphi 0, %s37
    %s57 = sphi 0, %s57
    %s59 = sphi 0, %s57
    %s60 = sphi 0, %s59
    %s74 = sphi 0, %s60
    %s78 = sphi 0, %s78
    %s80 = sphi 0, %s78
    %s81 = sphi 0, %s80
    %s95 = sphi 0, %s81
    %s103 = sphi 0, %s105
    %s106 = sphi 0, %s103
    %s107 = sphi 0, %s106
    %s123 = sphi 0, %s107
  $region4: #{_encoder_block_impl.5} parent=0 // loop_header_branch
    %12 = sbr.rel (%p10) target = $region8
  $region5: #{_encoder_block_impl.5} parent=0 // loop_body
    %s14 = ssub.s32 %s9, 1
    %s15 = ssub.s32 %s9, 2
    %s22 = sadd.s32 1, %s17
    %p23 = scmp.ge.s32.totalorder %s22, 2
    %s24 = scalar_select %p23, 0, %s22
    %s25 = sadd.s32 1, %s16
    %s26 = scalar_select %p23, %s25, %s16
    %p27 = scmp.ge.s32.totalorder %s26, 2
    %s28 = scalar_select %p27, 0, %s26
    %s29 = ssub.s32 %s16, %s28
    %s30 = ssub.s32 %s17, %s24
    %s31 = sor.u32 %s29, %s30
    %p32 = scmp.eq.s32.totalorder %s31, 0
    %s34 = sadd.s32 %s33, 1
    %s35 = scalar_select %p32, %s33, %s34
    %p38 = pneg %p32
    %p39 = scmp.eq.s32.totalorder %s9, 3
    %p40 = por %p38, %p39
    %p41 = scmp.ne.s32.totalorder %s33, %s36
    %p42 = scmp.eq.s32.totalorder %s9, 0
    %p43 = por %p41, %p42
    %p44 = scmp.ne.s32.totalorder %s33, %s36
    %p45 = scmp.eq.s32.totalorder %s14, 3
    %p46 = por %p44, %p45
    %p47 = scmp.ne.s32.totalorder %s36, %s37
    %p48 = scmp.eq.s32.totalorder %s14, 0
    %p49 = por %p47, %p48
    %p50 = scmp.ne.s32.totalorder %s36, %s37
    %p51 = scmp.eq.s32.totalorder %s15, 3
    %p52 = por %p50, %p51
    %p54 = scmp.ne.s32.totalorder %s37, %s53
    %p55 = scmp.eq.s32.totalorder %s15, 0
    %p56 = por %p54, %p55
    %s58 = sadd.s32 %s57, 1
    %p61 = scmp.eq.s32.totalorder %s9, 3
    %p62 = scmp.ne.s32.totalorder %s57, %s59
    %p63 = scmp.eq.s32.totalorder %s9, 0
    %p64 = por %p62, %p63
    %p65 = scmp.ne.s32.totalorder %s57, %s59
    %p66 = scmp.eq.s32.totalorder %s14, 3
    %p67 = por %p65, %p66
    %p68 = scmp.ne.s32.totalorder %s59, %s60
    %p69 = scmp.eq.s32.totalorder %s14, 0
    %p70 = por %p68, %p69
    %p71 = scmp.ne.s32.totalorder %s59, %s60
    %p72 = scmp.eq.s32.totalorder %s15, 3
    %p73 = por %p71, %p72
    %p75 = scmp.ne.s32.totalorder %s60, %s74
    %p76 = scmp.eq.s32.totalorder %s15, 0
    %p77 = por %p75, %p76
    %s79 = sadd.s32 %s78, 1
    %p82 = scmp.eq.s32.totalorder %s9, 3
    %p83 = scmp.ne.s32.totalorder %s78, %s80
    %p84 = scmp.eq.s32.totalorder %s9, 0
    %p85 = por %p83, %p84
    %p86 = scmp.ne.s32.totalorder %s78, %s80
    %p87 = scmp.eq.s32.totalorder %s14, 3
    %p88 = por %p86, %p87
    %p89 = scmp.ne.s32.totalorder %s80, %s81
    %p90 = scmp.eq.s32.totalorder %s14, 0
    %p91 = por %p89, %p90
    %p92 = scmp.ne.s32.totalorder %s80, %s81
    %p93 = scmp.eq.s32.totalorder %s15, 3
    %p94 = por %p92, %p93
    %p96 = scmp.ne.s32.totalorder %s81, %s95
    %p97 = scmp.eq.s32.totalorder %s15, 0
    %p98 = por %p96, %p97
    %s99 = ssub.s32 %s16, %s28
    %s100 = ssub.s32 %s17, %s24
    %s101 = sor.u32 %s99, %s100
    %p102 = scmp.eq.s32.totalorder %s101, 0
    %s104 = sadd.s32 %s103, 1
    %s105 = scalar_select %p102, %s103, %s104
    %p108 = pneg %p102
    %p109 = scmp.eq.s32.totalorder %s9, 3
    %p110 = por %p108, %p109
    %p111 = scmp.ne.s32.totalorder %s103, %s106
    %p112 = scmp.eq.s32.totalorder %s9, 0
    %p113 = por %p111, %p112
    %p114 = scmp.ne.s32.totalorder %s103, %s106
    %p115 = scmp.eq.s32.totalorder %s14, 3
    %p116 = por %p114, %p115
    %p117 = scmp.ne.s32.totalorder %s106, %s107
    %p118 = scmp.eq.s32.totalorder %s14, 0
    %p119 = por %p117, %p118
    %p120 = scmp.ne.s32.totalorder %s106, %s107
    %p121 = scmp.eq.s32.totalorder %s15, 3
    %p122 = por %p120, %p121
    %p124 = scmp.ne.s32.totalorder %s107, %s123
    %p125 = scmp.eq.s32.totalorder %s15, 0
    %p126 = por %p124, %p125
    %p127 = scmp.le.s32.totalorder 1, %s9
    %p128 = scmp.lt.s32.totalorder %s9, 5
    %p129 = pnand %p127, %p128
    %p130 = pneg %p129
    // Predicated region
    $region9: #{_encoder_block_impl.5} parent=5 // pred_check
      _
    $region10: #{_encoder_block_impl.5} parent=5 // pred_check_branch
      %132 = sbr.rel (%p129) target = $region12
    $region11: #{_encoder_block_impl.5} parent=5 // pred_region
      %s133 = ssub.s32 %s9, 1
      // Predicated region
      $region13: #{_encoder_block_impl.5} parent=11 // pred_check
        %p134 = pneg %p70
      $region14: #{_encoder_block_impl.5} parent=11 // pred_check_branch
        %136 = sbr.rel (%p134) target = $region16
      $region15: #{_encoder_block_impl.5} parent=11 // pred_region
        _
      $region16: #{_encoder_block_impl.5} parent=11 // pred_fallthru
        _
      // Predicated region
      $region17: #{_encoder_block_impl.5} parent=11 // pred_check
        %p137 = pneg %p91
      $region18: #{_encoder_block_impl.5} parent=11 // pred_check_branch
        %139 = sbr.rel (%p137) target = $region20
      $region19: #{_encoder_block_impl.5} parent=11 // pred_region
        _
      $region20: #{_encoder_block_impl.5} parent=11 // pred_fallthru
        _
    $region12: #{_encoder_block_impl.5} parent=5 // pred_fallthru
      _
    %p140 = scmp.lt.s32.totalorder %s9, 4
    // Predicated region
    $region21: #{_encoder_block_impl.5} parent=5 // pred_check
      %p141 = pneg %p140
    $region22: #{_encoder_block_impl.5} parent=5 // pred_check_branch
      %143 = sbr.rel (%p141) target = $region24
    $region23: #{_encoder_block_impl.5} parent=5 // pred_region
      // Predicated region
      $region25: #{_encoder_block_impl.5} parent=23 // pred_check
        %p144 = pneg %p43
      $region26: #{_encoder_block_impl.5} parent=23 // pred_check_branch
        %146 = sbr.rel (%p144) target = $region28
      $region27: #{_encoder_block_impl.5} parent=23 // pred_region
        %s147 = smul.u32 16, %s17
        %p148 = scmp.lt.s32.totalorder %s16, 1
        %s149 = scalar_select %p148, %s16, 1
        %p150 = scmp.lt.s32.totalorder %s147, 31
        %s151 = scalar_select %p150, %s147, 31
        %s152 = smul.addr %s149, 32
        %s153 = sadd.s32 %s151, %s152
        %s154 = smul.addr %s153, 8
        %s155 = scalar_lea.vmem %s0, %s154
        %s156 = smul.u32 16, %s17
      $region28: #{_encoder_block_impl.5} parent=23 // pred_fallthru
        _
    $region24: #{_encoder_block_impl.5} parent=5 // pred_fallthru
      _
    %p157 = scmp.le.s32.totalorder 1, %s9
    %p158 = scmp.lt.s32.totalorder %s9, 5
    %p159 = pnand %p157, %p158
    %p160 = pneg %p159
    // Predicated region
    $region29: #{_encoder_block_impl.5} parent=5 // pred_check
      _
    $region30: #{_encoder_block_impl.5} parent=5 // pred_check_branch
      %162 = sbr.rel (%p159) target = $region32
    $region31: #{_encoder_block_impl.5} parent=5 // pred_region
      %s163 = ssub.s32 %s9, 1
      %s164 = smul.u32 16, %s19
      %p165 = scmp.lt.s32.totalorder %s18, 1
      %s166 = scalar_select %p165, %s18, 1
      %p167 = scmp.lt.s32.totalorder %s164, 31
      %s168 = scalar_select %p167, %s164, 31
      %s169 = smul.addr %s166, 32
      %s170 = sadd.s32 %s168, %s169
      %s171 = smul.addr %s170, 8
      %s172 = scalar_lea.vmem %s0, %s171
      %p173 = pneg %p49
      %p174 = pneg %p46
      %p175 = pneg %p70
      %p176 = pneg %p67
      %p177 = pneg %p91
      %p178 = pneg %p88
      %p179 = pneg %p119
      %p180 = pneg %p116
      %s181 = smul.u32 16, %s19
      %p182 = scmp.lt.s32.totalorder %s18, 1
      %s183 = scalar_select %p182, %s18, 1
      %p184 = scmp.lt.s32.totalorder %s181, 31
      %s185 = scalar_select %p184, %s181, 31
      %s186 = smul.addr %s183, 32
      %s187 = sadd.s32 %s185, %s186
      %s188 = smul.addr %s187, 8
      %s189 = scalar_lea.vmem %s3, %s188
      %s190 = smul.u32 16, %s19
      %p191 = scmp.lt.s32.totalorder %s18, 1
      %s192 = scalar_select %p191, %s18, 1
      %p193 = scmp.lt.s32.totalorder %s190, 31
      %s194 = scalar_select %p193, %s190, 31
      %s195 = smul.addr %s192, 32
      %s196 = sadd.s32 %s194, %s195
      %s197 = smul.addr %s196, 8
      %s198 = scalar_lea.vmem %s0, %s197
      %s199 = smul.u32 16, %s19
      %s200 = smul.u32 16, %s19
      %p201 = scmp.lt.s32.totalorder %s18, 1
      %s202 = scalar_select %p201, %s18, 1
      %p203 = scmp.lt.s32.totalorder %s200, 31
      %s204 = scalar_select %p203, %s200, 31
      %s205 = smul.addr %s202, 32
      %s206 = sadd.s32 %s204, %s205
      %s207 = smul.addr %s206, 8
      %s208 = scalar_lea.vmem %s3, %s207
      %s209 = smul.u32 16, %s19
      %v210 = vld [vmem:[%s198] sm:$0xff]
      %v211 = vld [vmem:[%s198 + $0x8] sm:$0xff]
      %v212 = vld [vmem:[%s198 + $0x10] sm:$0xff]
      %v213 = vld [vmem:[%s198 + $0x18] sm:$0xff]
      %v214 = vld [vmem:[%s198 + $0x20] sm:$0xff]
      %v215 = vld [vmem:[%s198 + $0x28] sm:$0xff]
      %v216 = vld [vmem:[%s198 + $0x30] sm:$0xff]
      %v217 = vld [vmem:[%s198 + $0x38] sm:$0xff]
      %v218 = vld [vmem:[%s198 + $0x40] sm:$0xff]
      %v219 = vld [vmem:[%s198 + $0x48] sm:$0xff]
      %v220 = vld [vmem:[%s198 + $0x50] sm:$0xff]
      %v221 = vld [vmem:[%s198 + $0x58] sm:$0xff]
      %v222 = vld [vmem:[%s198 + $0x60] sm:$0xff]
      %v223 = vld [vmem:[%s198 + $0x68] sm:$0xff]
      %v224 = vld [vmem:[%s198 + $0x70] sm:$0xff]
      %v225 = vld [vmem:[%s198 + $0x78] sm:$0xff]
      %v226 = vld [vmem:[%s1] sm:$0x1]
      %v228 = vlaneseq
      %v229 = vshrl.u32 %v228, 7
      %v230 = vsub.s32 0, %v229
      %v231 = vrot.slane %v226, %v230
      %v233 = vmul.f32 %v210, %v231
      %v234 = vmul.f32 %v211, %v231
      %v235 = vmul.f32 %v212, %v231
      %v236 = vmul.f32 %v213, %v231
      %v237 = vmul.f32 %v214, %v231
      %v238 = vmul.f32 %v215, %v231
      %v239 = vmul.f32 %v216, %v231
      %v240 = vmul.f32 %v217, %v231
      %v241 = vmul.f32 %v218, %v231
      %v242 = vmul.f32 %v219, %v231
      %v243 = vmul.f32 %v220, %v231
      %v244 = vmul.f32 %v221, %v231
      %v245 = vmul.f32 %v222, %v231
      %v246 = vmul.f32 %v223, %v231
      %v247 = vmul.f32 %v224, %v231
      %v248 = vmul.f32 %v225, %v231
      %v249 = vld [vmem:[%s2] sm:$0x1]
      %v251 = vlaneseq
      %v252 = vshrl.u32 %v251, 7
      %v253 = vsub.s32 0, %v252
      %v254 = vrot.slane %v249, %v253
      %v256 = vadd.f32 %v233, %v254
      %v257 = vadd.f32 %v234, %v254
      %v258 = vadd.f32 %v235, %v254
      %v259 = vadd.f32 %v236, %v254
      %v260 = vadd.f32 %v237, %v254
      %v261 = vadd.f32 %v238, %v254
      %v262 = vadd.f32 %v239, %v254
      %v263 = vadd.f32 %v240, %v254
      %v264 = vadd.f32 %v241, %v254
      %v265 = vadd.f32 %v242, %v254
      %v266 = vadd.f32 %v243, %v254
      %v267 = vadd.f32 %v244, %v254
      %v268 = vadd.f32 %v245, %v254
      %v269 = vadd.f32 %v246, %v254
      %v270 = vadd.f32 %v247, %v254
      %v271 = vadd.f32 %v248, %v254
      %v272 = vmax.f32 %v256, 0.0
      %v273 = vmax.f32 %v257, 0.0
      %v274 = vmax.f32 %v258, 0.0
      %v275 = vmax.f32 %v259, 0.0
      %v276 = vmax.f32 %v260, 0.0
      %v277 = vmax.f32 %v261, 0.0
      %v278 = vmax.f32 %v262, 0.0
      %v279 = vmax.f32 %v263, 0.0
      %v280 = vmax.f32 %v264, 0.0
      %v281 = vmax.f32 %v265, 0.0
      %v282 = vmax.f32 %v266, 0.0
      %v283 = vmax.f32 %v267, 0.0
      %v284 = vmax.f32 %v268, 0.0
      %v285 = vmax.f32 %v269, 0.0
      %v286 = vmax.f32 %v270, 0.0
      %v287 = vmax.f32 %v271, 0.0
      %288 = vst [vmem:[%s208] sm:$0xff] %v272
      %289 = vst [vmem:[%s208 + $0x8] sm:$0xff] %v273
      %290 = vst [vmem:[%s208 + $0x10] sm:$0xff] %v274
      %291 = vst [vmem:[%s208 + $0x18] sm:$0xff] %v275
      %292 = vst [vmem:[%s208 + $0x20] sm:$0xff] %v276
      %293 = vst [vmem:[%s208 + $0x28] sm:$0xff] %v277
      %294 = vst [vmem:[%s208 + $0x30] sm:$0xff] %v278
      %295 = vst [vmem:[%s208 + $0x38] sm:$0xff] %v279
      %296 = vst [vmem:[%s208 + $0x40] sm:$0xff] %v280
      %297 = vst [vmem:[%s208 + $0x48] sm:$0xff] %v281
      %298 = vst [vmem:[%s208 + $0x50] sm:$0xff] %v282
      %299 = vst [vmem:[%s208 + $0x58] sm:$0xff] %v283
      %300 = vst [vmem:[%s208 + $0x60] sm:$0xff] %v284
      %301 = vst [vmem:[%s208 + $0x68] sm:$0xff] %v285
      %302 = vst [vmem:[%s208 + $0x70] sm:$0xff] %v286
      %303 = vst [vmem:[%s208 + $0x78] sm:$0xff] %v287
      %s304 = smul.u32 16, %s19
      %p305 = scmp.lt.s32.totalorder %s18, 1
      %s306 = scalar_select %p305, %s18, 1
      %p307 = scmp.lt.s32.totalorder %s304, 31
      %s308 = scalar_select %p307, %s304, 31
      %s309 = smul.addr %s306, 32
      %s310 = sadd.s32 %s308, %s309
      %s311 = smul.addr %s310, 8
      %s312 = scalar_lea.vmem %s3, %s311
      // Predicated region
      $region33: #{_encoder_block_impl.5} parent=31 // pred_check
        %p313 = pneg %p116
      $region34: #{_encoder_block_impl.5} parent=31 // pred_check_branch
        %315 = sbr.rel (%p313) target = $region36
      $region35: #{_encoder_block_impl.5} parent=31 // pred_region
        %s316 = smul.u32 16, %s19
      $region36: #{_encoder_block_impl.5} parent=31 // pred_fallthru
        _
    $region32: #{_encoder_block_impl.5} parent=5 // pred_fallthru
      _
    %p317 = scmp.le.s32.totalorder 2, %s9
    // Predicated region
    $region37: #{_encoder_block_impl.5} parent=5 // pred_check
      %p318 = pneg %p317
    $region38: #{_encoder_block_impl.5} parent=5 // pred_check_branch
      %320 = sbr.rel (%p318) target = $region40
    $region39: #{_encoder_block_impl.5} parent=5 // pred_region
      %s321 = ssub.s32 %s9, 2
      // Predicated region
      $region41: #{_encoder_block_impl.5} parent=39 // pred_check
        %p322 = pneg %p122
      $region42: #{_encoder_block_impl.5} parent=39 // pred_check_branch
        %324 = sbr.rel (%p322) target = $region44
      $region43: #{_encoder_block_impl.5} parent=39 // pred_region
        %s325 = smul.u32 16, %s21
        %p326 = scmp.lt.s32.totalorder %s20, 1
        %s327 = scalar_select %p326, %s20, 1
        %p328 = scmp.lt.s32.totalorder %s325, 31
        %s329 = scalar_select %p328, %s325, 31
        %s330 = smul.addr %s327, 32
        %s331 = sadd.s32 %s329, %s330
        %s332 = smul.addr %s331, 8
        %s333 = scalar_lea.vmem %s3, %s332
      $region44: #{_encoder_block_impl.5} parent=39 // pred_fallthru
        _
    $region40: #{_encoder_block_impl.5} parent=5 // pred_fallthru
      _
  $region6: #{_encoder_block_impl.5} parent=0 // loop_footer
    %s13 = sadd.s32 1, %s9
  $region7: #{_encoder_block_impl.5} parent=0 // loop_footer_branch
    %8 = sbr.rel target = $region3
  $region8: #{_encoder_block_impl.5} parent=0 // loop_exit
    _

// kernel: _encoder_block_impl.3
$region0: #{_encoder_block_impl.3}
  #allocation0 [shape = 'u32[]', space=smem, size = 0x4, offset = 0x4, fixed_abs, tag = 'smem constant byte address 0x4 - core index']
  #allocation1 [shape = 'u32[144,128]{1,0:T(1,128)}', space=vmem, size = 0x12000, scoped, tag = 'internal scratch']
  %s0 = inlined_call_operand.vmem [shape: f32[2,2,10,18,128], index: 0, kind: input, shape index: {}]
  %s1 = inlined_call_operand.vmem [shape: f32[3,3,128,128], index: 1, kind: input, shape index: {}]
  %s2 = inlined_call_operand.vmem [shape: f32[1,1,128], index: 2, kind: input, shape index: {}]
  %s3 = inlined_call_operand.vmem [shape: f32[1,1,128], index: 3, kind: input, shape index: {}]
  %s4 = inlined_call_operand.vmem [shape: f32[2,256,128], index: 4, kind: output, shape index: {0}]
  %s5 = inlined_call_operand.vmem [shape: f32[2,2,2,128], index: 5, kind: output, shape index: {1}]
  %6 = xla_tuple %s4, %s5
  %s7 = sld [smem:[#allocation0]]
  $region57: #{_encoder_block_impl.3} parent=0
    _
  %s9 = ssub.s32 1, %s7
  %s10 = scalar_select 0, %s9, %s7
  loop: start=0, step=1, limit=6
  $region2: #{_encoder_block_impl.3} parent=0 // loop_pre_header
    _
  $region3: #{_encoder_block_impl.3} parent=0 // loop_header
    %s12 = sphi 0, %s16
    %p13 = scmp.ge.s32.totalorder %s12, 6
    %s19 = sphi 0, %s31
    %s20 = sphi 0, %s27
    %s21 = sphi 0, %s19
    %s22 = sphi 0, %s20
    %s23 = sphi 0, %s21
    %s24 = sphi 0, %s22
    %s36 = sphi 0, %s38
    %s39 = sphi 0, %s36
    %s40 = sphi 0, %s39
    %s56 = sphi 0, %s40
    %s60 = sphi 0, %s60
    %s62 = sphi 0, %s60
    %s63 = sphi 0, %s62
    %s77 = sphi 0, %s63
    %s81 = sphi 0, %s81
    %s83 = sphi 0, %s81
    %s84 = sphi 0, %s83
    %s98 = sphi 0, %s84
    %s102 = sphi 0, %s102
    %s104 = sphi 0, %s102
    %s105 = sphi 0, %s104
    %s119 = sphi 0, %s105
    %s127 = sphi 0, %s129
    %s130 = sphi 0, %s127
    %s131 = sphi 0, %s130
    %s147 = sphi 0, %s131
    %s155 = sphi 0, %s157
    %s158 = sphi 0, %s155
    %s159 = sphi 0, %s158
    %s175 = sphi 0, %s159
  $region4: #{_encoder_block_impl.3} parent=0 // loop_header_branch
    %15 = sbr.rel (%p13) target = $region8
  $region5: #{_encoder_block_impl.3} parent=0 // loop_body
    %s17 = ssub.s32 %s12, 1
    %s18 = ssub.s32 %s12, 2
    %s25 = sadd.s32 1, %s20
    %p26 = scmp.ge.s32.totalorder %s25, 2
    %s27 = scalar_select %p26, 0, %s25
    %s28 = sadd.s32 1, %s19
    %s29 = scalar_select %p26, %s28, %s19
    %p30 = scmp.ge.s32.totalorder %s29, 2
    %s31 = scalar_select %p30, 0, %s29
    %s32 = ssub.s32 %s19, %s31
    %s33 = ssub.s32 %s20, %s27
    %s34 = sor.u32 %s32, %s33
    %p35 = scmp.eq.s32.totalorder %s34, 0
    %s37 = sadd.s32 %s36, 1
    %s38 = scalar_select %p35, %s36, %s37
    %p41 = pneg %p35
    %p42 = scmp.eq.s32.totalorder %s12, 3
    %p43 = por %p41, %p42
    %p44 = scmp.ne.s32.totalorder %s36, %s39
    %p45 = scmp.eq.s32.totalorder %s12, 0
    %p46 = por %p44, %p45
    %p47 = scmp.ne.s32.totalorder %s36, %s39
    %p48 = scmp.eq.s32.totalorder %s17, 3
    %p49 = por %p47, %p48
    %p50 = scmp.ne.s32.totalorder %s39, %s40
    %p51 = scmp.eq.s32.totalorder %s17, 0
    %p52 = por %p50, %p51
    %p53 = scmp.ne.s32.totalorder %s39, %s40
    %p54 = scmp.eq.s32.totalorder %s18, 3
    %p55 = por %p53, %p54
    %p57 = scmp.ne.s32.totalorder %s40, %s56
    %p58 = scmp.eq.s32.totalorder %s18, 0
    %p59 = por %p57, %p58
    %s61 = sadd.s32 %s60, 1
    %p64 = scmp.eq.s32.totalorder %s12, 3
    %p65 = scmp.ne.s32.totalorder %s60, %s62
    %p66 = scmp.eq.s32.totalorder %s12, 0
    %p67 = por %p65, %p66
    %p68 = scmp.ne.s32.totalorder %s60, %s62
    %p69 = scmp.eq.s32.totalorder %s17, 3
    %p70 = por %p68, %p69
    %p71 = scmp.ne.s32.totalorder %s62, %s63
    %p72 = scmp.eq.s32.totalorder %s17, 0
    %p73 = por %p71, %p72
    %p74 = scmp.ne.s32.totalorder %s62, %s63
    %p75 = scmp.eq.s32.totalorder %s18, 3
    %p76 = por %p74, %p75
    %p78 = scmp.ne.s32.totalorder %s63, %s77
    %p79 = scmp.eq.s32.totalorder %s18, 0
    %p80 = por %p78, %p79
    %s82 = sadd.s32 %s81, 1
    %p85 = scmp.eq.s32.totalorder %s12, 3
    %p86 = scmp.ne.s32.totalorder %s81, %s83
    %p87 = scmp.eq.s32.totalorder %s12, 0
    %p88 = por %p86, %p87
    %p89 = scmp.ne.s32.totalorder %s81, %s83
    %p90 = scmp.eq.s32.totalorder %s17, 3
    %p91 = por %p89, %p90
    %p92 = scmp.ne.s32.totalorder %s83, %s84
    %p93 = scmp.eq.s32.totalorder %s17, 0
    %p94 = por %p92, %p93
    %p95 = scmp.ne.s32.totalorder %s83, %s84
    %p96 = scmp.eq.s32.totalorder %s18, 3
    %p97 = por %p95, %p96
    %p99 = scmp.ne.s32.totalorder %s84, %s98
    %p100 = scmp.eq.s32.totalorder %s18, 0
    %p101 = por %p99, %p100
    %s103 = sadd.s32 %s102, 1
    %p106 = scmp.eq.s32.totalorder %s12, 3
    %p107 = scmp.ne.s32.totalorder %s102, %s104
    %p108 = scmp.eq.s32.totalorder %s12, 0
    %p109 = por %p107, %p108
    %p110 = scmp.ne.s32.totalorder %s102, %s104
    %p111 = scmp.eq.s32.totalorder %s17, 3
    %p112 = por %p110, %p111
    %p113 = scmp.ne.s32.totalorder %s104, %s105
    %p114 = scmp.eq.s32.totalorder %s17, 0
    %p115 = por %p113, %p114
    %p116 = scmp.ne.s32.totalorder %s104, %s105
    %p117 = scmp.eq.s32.totalorder %s18, 3
    %p118 = por %p116, %p117
    %p120 = scmp.ne.s32.totalorder %s105, %s119
    %p121 = scmp.eq.s32.totalorder %s18, 0
    %p122 = por %p120, %p121
    %s123 = ssub.s32 %s19, %s31
    %s124 = ssub.s32 %s20, %s27
    %s125 = sor.u32 %s123, %s124
    %p126 = scmp.eq.s32.totalorder %s125, 0
    %s128 = sadd.s32 %s127, 1
    %s129 = scalar_select %p126, %s127, %s128
    %p132 = pneg %p126
    %p133 = scmp.eq.s32.totalorder %s12, 3
    %p134 = por %p132, %p133
    %p135 = scmp.ne.s32.totalorder %s127, %s130
    %p136 = scmp.eq.s32.totalorder %s12, 0
    %p137 = por %p135, %p136
    %p138 = scmp.ne.s32.totalorder %s127, %s130
    %p139 = scmp.eq.s32.totalorder %s17, 3
    %p140 = por %p138, %p139
    %p141 = scmp.ne.s32.totalorder %s130, %s131
    %p142 = scmp.eq.s32.totalorder %s17, 0
    %p143 = por %p141, %p142
    %p144 = scmp.ne.s32.totalorder %s130, %s131
    %p145 = scmp.eq.s32.totalorder %s18, 3
    %p146 = por %p144, %p145
    %p148 = scmp.ne.s32.totalorder %s131, %s147
    %p149 = scmp.eq.s32.totalorder %s18, 0
    %p150 = por %p148, %p149
    %s151 = ssub.s32 %s19, %s31
    %s152 = ssub.s32 %s20, %s27
    %s153 = sor.u32 %s151, %s152
    %p154 = scmp.eq.s32.totalorder %s153, 0
    %s156 = sadd.s32 %s155, 1
    %s157 = scalar_select %p154, %s155, %s156
    %p160 = pneg %p154
    %p161 = scmp.eq.s32.totalorder %s12, 3
    %p162 = por %p160, %p161
    %p163 = scmp.ne.s32.totalorder %s155, %s158
    %p164 = scmp.eq.s32.totalorder %s12, 0
    %p165 = por %p163, %p164
    %p166 = scmp.ne.s32.totalorder %s155, %s158
    %p167 = scmp.eq.s32.totalorder %s17, 3
    %p168 = por %p166, %p167
    %p169 = scmp.ne.s32.totalorder %s158, %s159
    %p170 = scmp.eq.s32.totalorder %s17, 0
    %p171 = por %p169, %p170
    %p172 = scmp.ne.s32.totalorder %s158, %s159
    %p173 = scmp.eq.s32.totalorder %s18, 3
    %p174 = por %p172, %p173
    %p176 = scmp.ne.s32.totalorder %s159, %s175
    %p177 = scmp.eq.s32.totalorder %s18, 0
    %p178 = por %p176, %p177
    %p179 = scmp.le.s32.totalorder 1, %s12
    %p180 = scmp.lt.s32.totalorder %s12, 5
    %p181 = pnand %p179, %p180
    %p182 = pneg %p181
    // Predicated region
    $region9: #{_encoder_block_impl.3} parent=5 // pred_check
      _
    $region10: #{_encoder_block_impl.3} parent=5 // pred_check_branch
      %184 = sbr.rel (%p181) target = $region12
    $region11: #{_encoder_block_impl.3} parent=5 // pred_region
      %s185 = ssub.s32 %s12, 1
      // Predicated region
      $region13: #{_encoder_block_impl.3} parent=11 // pred_check
        %p186 = pneg %p73
      $region14: #{_encoder_block_impl.3} parent=11 // pred_check_branch
        %188 = sbr.rel (%p186) target = $region16
      $region15: #{_encoder_block_impl.3} parent=11 // pred_region
        _
      $region16: #{_encoder_block_impl.3} parent=11 // pred_fallthru
        _
      // Predicated region
      $region17: #{_encoder_block_impl.3} parent=11 // pred_check
        %p189 = pneg %p94
      $region18: #{_encoder_block_impl.3} parent=11 // pred_check_branch
        %191 = sbr.rel (%p189) target = $region20
      $region19: #{_encoder_block_impl.3} parent=11 // pred_region
        _
      $region20: #{_encoder_block_impl.3} parent=11 // pred_fallthru
        _
      // Predicated region
      $region21: #{_encoder_block_impl.3} parent=11 // pred_check
        %p192 = pneg %p115
      $region22: #{_encoder_block_impl.3} parent=11 // pred_check_branch
        %194 = sbr.rel (%p192) target = $region24
      $region23: #{_encoder_block_impl.3} parent=11 // pred_region
        _
      $region24: #{_encoder_block_impl.3} parent=11 // pred_fallthru
        _
    $region12: #{_encoder_block_impl.3} parent=5 // pred_fallthru
      _
    %p195 = scmp.lt.s32.totalorder %s12, 4
    // Predicated region
    $region25: #{_encoder_block_impl.3} parent=5 // pred_check
      %p196 = pneg %p195
    $region26: #{_encoder_block_impl.3} parent=5 // pred_check_branch
      %198 = sbr.rel (%p196) target = $region28
    $region27: #{_encoder_block_impl.3} parent=5 // pred_region
      // Predicated region
      $region29: #{_encoder_block_impl.3} parent=27 // pred_check
        %p199 = pneg %p46
      $region30: #{_encoder_block_impl.3} parent=27 // pred_check_branch
        %201 = sbr.rel (%p199) target = $region32
      $region31: #{_encoder_block_impl.3} parent=27 // pred_region
        %p202 = scmp.lt.s32.totalorder %s19, 1
        %s203 = scalar_select %p202, %s19, 1
        %p204 = scmp.lt.s32.totalorder %s20, 1
        %s205 = scalar_select %p204, %s20, 1
        %s206 = smul.addr %s205, 30
        %s207 = smul.addr %s203, 60
        %s208 = sadd.s32 %s206, %s207
        %s209 = smul.addr %s208, 8
        %s210 = scalar_lea.vmem %s0, %s209
      $region32: #{_encoder_block_impl.3} parent=27 // pred_fallthru
        _
    $region28: #{_encoder_block_impl.3} parent=5 // pred_fallthru
      _
    %p211 = scmp.le.s32.totalorder 1, %s12
    %p212 = scmp.lt.s32.totalorder %s12, 5
    %p213 = pnand %p211, %p212
    %p214 = pneg %p213
    // Predicated region
    $region33: #{_encoder_block_impl.3} parent=5 // pred_check
      _
    $region34: #{_encoder_block_impl.3} parent=5 // pred_check_branch
      %216 = sbr.rel (%p213) target = $region36
    $region35: #{_encoder_block_impl.3} parent=5 // pred_region
      %s217 = ssub.s32 %s12, 1
      %p218 = scmp.lt.s32.totalorder %s21, 1
      %s219 = scalar_select %p218, %s21, 1
      %p220 = scmp.lt.s32.totalorder %s22, 1
      %s221 = scalar_select %p220, %s22, 1
      %s222 = smul.addr %s221, 30
      %s223 = smul.addr %s219, 60
      %s224 = sadd.s32 %s222, %s223
      %s225 = smul.addr %s224, 8
      %s226 = scalar_lea.vmem %s0, %s225
      %p227 = pneg %p52
      %p228 = pneg %p49
      %p229 = pneg %p73
      %p230 = pneg %p70
      %p231 = pneg %p94
      %p232 = pneg %p91
      %p233 = pneg %p115
      %p234 = pneg %p112
      %p235 = pneg %p143
      %p236 = pneg %p140
      %s237 = smul.u32 16, %s22
      %p238 = scmp.lt.s32.totalorder %s21, 1
      %s239 = scalar_select %p238, %s21, 1
      %p240 = scmp.lt.s32.totalorder %s237, 31
      %s241 = scalar_select %p240, %s237, 31
      %s242 = smul.addr %s239, 32
      %s243 = sadd.s32 %s241, %s242
      %s244 = smul.addr %s243, 8
      %s245 = scalar_lea.vmem %s4, %s244
      %p246 = pneg %p171
      %p247 = pneg %p168
      %p248 = scmp.lt.s32.totalorder %s21, 1
      %s249 = scalar_select %p248, %s21, 1
      %p250 = scmp.lt.s32.totalorder %s22, 1
      %s251 = scalar_select %p250, %s22, 1
      %s252 = smul.addr %s249, 2
      %s253 = sadd.s32 %s251, %s252
      %s254 = smul.addr %s253, 2
      %s255 = scalar_lea.vmem %s5, %s254
      %p256 = scmp.lt.s32.totalorder %s21, 1
      %s257 = scalar_select %p256, %s21, 1
      %p258 = scmp.lt.s32.totalorder %s22, 1
      %s259 = scalar_select %p258, %s22, 1
      %s260 = smul.addr %s259, 30
      %s261 = smul.addr %s257, 60
      %s262 = sadd.s32 %s260, %s261
      %s263 = smul.addr %s262, 8
      %s264 = scalar_lea.vmem %s0, %s263
      %s265 = smul.u32 16, %s22
      %p266 = scmp.lt.s32.totalorder %s21, 1
      %s267 = scalar_select %p266, %s21, 1
      %p268 = scmp.lt.s32.totalorder %s265, 31
      %s269 = scalar_select %p268, %s265, 31
      %s270 = smul.addr %s267, 32
      %s271 = sadd.s32 %s269, %s270
      %s272 = smul.addr %s271, 8
      %s273 = scalar_lea.vmem %s4, %s272
      %s274 = smul.u32 16, %s22
      %p275 = scmp.lt.s32.totalorder %s21, 1
      %s276 = scalar_select %p275, %s21, 1
      %p277 = scmp.lt.s32.totalorder %s22, 1
      %s278 = scalar_select %p277, %s22, 1
      %s279 = smul.addr %s276, 2
      %s280 = sadd.s32 %s278, %s279
      %s281 = smul.addr %s280, 2
      %s282 = scalar_lea.vmem %s5, %s281
      %v283 = vld [vmem:[%s264] sm:$0xff]
      %v284 = vld [vmem:[%s264 + $0x8] sm:$0xff]
      %v285 = vld [vmem:[%s264 + $0x18] sm:$0xff]
      %v286 = vld [vmem:[%s264 + $0x20] sm:$0xff]
      %v287 = vld [vmem:[%s264 + $0x30] sm:$0xff]
      %v288 = vld [vmem:[%s264 + $0x38] sm:$0xff]
      %v289 = vld [vmem:[%s264 + $0x48] sm:$0xff]
      %v290 = vld [vmem:[%s264 + $0x50] sm:$0xff]
      %v291 = vld [vmem:[%s264 + $0x60] sm:$0xff]
      %v292 = vld [vmem:[%s264 + $0x68] sm:$0xff]
      %v293 = vld [vmem:[%s264 + $0x78] sm:$0xff]
      %v294 = vld [vmem:[%s264 + $0x80] sm:$0xff]
      %v295 = vld [vmem:[%s264 + $0x90] sm:$0xff]
      %v296 = vld [vmem:[%s264 + $0x98] sm:$0xff]
      %v297 = vld [vmem:[%s264 + $0xa8] sm:$0xff]
      %v298 = vld [vmem:[%s264 + $0xb0] sm:$0xff]
      %v299 = vld [vmem:[%s1] sm:$0xff]
      %v300 = vld [vmem:[%s1 + $0x8] sm:$0xff]
      %v301 = vld [vmem:[%s1 + $0x10] sm:$0xff]
      %v302 = vld [vmem:[%s1 + $0x18] sm:$0xff]
      %v303 = vld [vmem:[%s1 + $0x20] sm:$0xff]
      %v304 = vld [vmem:[%s1 + $0x28] sm:$0xff]
      %v305 = vld [vmem:[%s1 + $0x30] sm:$0xff]
      %v306 = vld [vmem:[%s1 + $0x38] sm:$0xff]
      %v307 = vld [vmem:[%s1 + $0x40] sm:$0xff]
      %v308 = vld [vmem:[%s1 + $0x48] sm:$0xff]
      %v309 = vld [vmem:[%s1 + $0x50] sm:$0xff]
      %v310 = vld [vmem:[%s1 + $0x58] sm:$0xff]
      %v311 = vld [vmem:[%s1 + $0x60] sm:$0xff]
      %v312 = vld [vmem:[%s1 + $0x68] sm:$0xff]
      %v313 = vld [vmem:[%s1 + $0x70] sm:$0xff]
      %v314 = vld [vmem:[%s1 + $0x78] sm:$0xff]
      %315 = vmatprep.subr.mxu0 0.0
      %316 = vmatpush1.msra.mxu0 %v299
      %317 = vmatprep.subr.mxu0 0.0
      %318 = vmatpush1.msra.mxu0 %v300
      %319 = vmatprep.subr.mxu0 0.0
      %320 = vmatpush1.msra.mxu0 %v301
      %321 = vmatprep.subr.mxu0 0.0
      %322 = vmatpush1.msra.mxu0 %v302
      %323 = vmatprep.subr.mxu0 0.0
      %324 = vmatpush1.msra.mxu0 %v303
      %325 = vmatprep.subr.mxu0 0.0
      %326 = vmatpush1.msra.mxu0 %v304
      %327 = vmatprep.subr.mxu0 0.0
      %328 = vmatpush1.msra.mxu0 %v305
      %329 = vmatprep.subr.mxu0 0.0
      %330 = vmatpush1.msra.mxu0 %v306
      %331 = vmatprep.subr.mxu0 0.0
      %332 = vmatpush1.msra.mxu0 %v307
      %333 = vmatprep.subr.mxu0 0.0
      %334 = vmatpush1.msra.mxu0 %v308
      %335 = vmatprep.subr.mxu0 0.0
      %336 = vmatpush1.msra.mxu0 %v309
      %337 = vmatprep.subr.mxu0 0.0
      %338 = vmatpush1.msra.mxu0 %v310
      %339 = vmatprep.subr.mxu0 0.0
      %340 = vmatpush1.msra.mxu0 %v311
      %341 = vmatprep.subr.mxu0 0.0
      %342 = vmatpush1.msra.mxu0 %v312
      %343 = vmatprep.subr.mxu0 0.0
      %344 = vmatpush1.msra.mxu0 %v313
      %345 = vmatprep.subr.mxu0 0.0
      %346 = vmatpush1.msra.mxu0 %v314
      %347 = vmatprep.subr.mxu0 0.0
      %348 = vmatpush1.msra.mxu0 0.0
      %349 = vmatprep.subr.mxu0 0.0
      %350 = vmatpush1.msra.mxu0 0.0
      %351 = vmatprep.subr.mxu0 0.0
      %352 = vmatpush1.msra.mxu0 0.0
      %353 = vmatprep.subr.mxu0 0.0
      %354 = vmatpush1.msra.mxu0 0.0
      %355 = vmatprep.subr.mxu0 0.0
      %356 = vmatpush1.msra.mxu0 0.0
      %357 = vmatprep.subr.mxu0 0.0
      %358 = vmatpush1.msra.mxu0 0.0
      %359 = vmatprep.subr.mxu0 0.0
      %360 = vmatpush1.msra.mxu0 0.0
      %361 = vmatprep.subr.mxu0 0.0
      %362 = vmatpush1.msra.mxu0 0.0
      %363 = vmatprep.subr.mxu0 0.0
      %364 = vmatpush1.msra.mxu0 0.0
      %365 = vmatprep.subr.mxu0 0.0
      %366 = vmatpush1.msra.mxu0 0.0
      %367 = vmatprep.subr.mxu0 0.0
      %368 = vmatpush1.msra.mxu0 0.0
      %369 = vmatprep.subr.mxu0 0.0
      %370 = vmatpush1.msra.mxu0 0.0
      %371 = vmatprep.subr.mxu0 0.0
      %372 = vmatpush1.msra.mxu0 0.0
      %373 = vmatprep.subr.mxu0 0.0
      %374 = vmatpush1.msra.mxu0 0.0
      %375 = vmatprep.subr.mxu0 0.0
      %376 = vmatpush1.msra.mxu0 0.0
      %377 = vmatprep.subr.mxu0 0.0
      %378 = vmatpush1.msra.mxu0 0.0
      %379 = vmatprep.mubr.f32.mxu0 0.0
      %380 = vmatmul.mubr.f32.gmra.mrb[0].mxu0 %v283
      %v381 = vpop.f32.mrb[0].mxu0
      %v382 = vadd.f32 0.0, %v381
      %v383 = vpop.f32.mrb[0].mxu0
      %384 = vmatprep.mubr.f32.mxu0 0.0
      %385 = vmatmul.mubr.f32.gmra.mrb[0].mxu0 %v284
      %v386 = vpop.f32.mrb[0].mxu0
      %v387 = vadd.f32 0.0, %v386
      %v388 = vpop.f32.mrb[0].mxu0
      %389 = vmatprep.mubr.f32.mxu0 0.0
      %390 = vmatmul.mubr.f32.gmra.mrb[0].mxu0 %v285
      %v391 = vpop.f32.mrb[0].mxu0
      %v392 = vadd.f32 0.0, %v391
      %v393 = vpop.f32.mrb[0].mxu0
      %394 = vmatprep.mubr.f32.mxu0 0.0
      %395 = vmatmul.mubr.f32.gmra.mrb[0].mxu0 %v286
      %v396 = vpop.f32.mrb[0].mxu0
      %v397 = vadd.f32 0.0, %v396
      %v398 = vpop.f32.mrb[0].mxu0
      %399 = vmatprep.mubr.f32.mxu0 0.0
      %400 = vmatmul.mubr.f32.gmra.mrb[0].mxu0 %v287
      %v401 = vpop.f32.mrb[0].mxu0
      %v402 = vadd.f32 0.0, %v401
      %v403 = vpop.f32.mrb[0].mxu0
      %404 = vmatprep.mubr.f32.mxu0 0.0
      %405 = vmatmul.mubr.f32.gmra.mrb[0].mxu0 %v288
      %v406 = vpop.f32.mrb[0].mxu0
      %v407 = vadd.f32 0.0, %v406
      %v408 = vpop.f32.mrb[0].mxu0
      %409 = vmatprep.mubr.f32.mxu0 0.0
      %410 = vmatmul.mubr.f32.gmra.mrb[0].mxu0 %v289
      %v411 = vpop.f32.mrb[0].mxu0
      %v412 = vadd.f32 0.0, %v411
      %v413 = vpop.f32.mrb[0].mxu0
      %414 = vmatprep.mubr.f32.mxu0 0.0
      %415 = vmatmul.mubr.f32.gmra.mrb[0].mxu0 %v290
      %v416 = vpop.f32.mrb[0].mxu0
      %v417 = vadd.f32 0.0, %v416
      %v418 = vpop.f32.mrb[0].mxu0
      %419 = vmatprep.mubr.f32.mxu0 0.0
      %420 = vmatmul.mubr.f32.gmra.mrb[0].mxu0 %v291
      %v421 = vpop.f32.mrb[0].mxu0
      %v422 = vadd.f32 0.0, %v421
      %v423 = vpop.f32.mrb[0].mxu0
      %424 = vmatprep.mubr.f32.mxu0 0.0
      %425 = vmatmul.mubr.f32.gmra.mrb[0].mxu0 %v292
      %v426 = vpop.f32.mrb[0].mxu0
      %v427 = vadd.f32 0.0, %v426
      %v428 = vpop.f32.mrb[0].mxu0
      %429 = vmatprep.mubr.f32.mxu0 0.0
      %430 = vmatmul.mubr.f32.gmra.mrb[0].mxu0 %v293
      %v431 = vpop.f32.mrb[0].mxu0
      %v432 = vadd.f32 0.0, %v431
      %v433 = vpop.f32.mrb[0].mxu0
      %434 = vmatprep.mubr.f32.mxu0 0.0
      %435 = vmatmul.mubr.f32.gmra.mrb[0].mxu0 %v294
      %v436 = vpop.f32.mrb[0].mxu0
      %v437 = vadd.f32 0.0, %v436
      %v438 = vpop.f32.mrb[0].mxu0
      %439 = vmatprep.mubr.f32.mxu0 0.0
      %440 = vmatmul.mubr.f32.gmra.mrb[0].mxu0 %v295
      %v441 = vpop.f32.mrb[0].mxu0
      %v442 = vadd.f32 0.0, %v441
      %v443 = vpop.f32.mrb[0].mxu0
      %444 = vmatprep.mubr.f32.mxu0 0.0
      %445 = vmatmul.mubr.f32.gmra.mrb[0].mxu0 %v296
      %v446 = vpop.f32.mrb[0].mxu0
      %v447 = vadd.f32 0.0, %v446
      %v448 = vpop.f32.mrb[0].mxu0
      %449 = vmatprep.mubr.f32.mxu0 0.0
      %450 = vmatmul.mubr.f32.gmra.mrb[0].mxu0 %v297
      %v451 = vpop.f32.mrb[0].mxu0
      %v452 = vadd.f32 0.0, %v451
      %v453 = vpop.f32.mrb[0].mxu0
      %454 = vmatprep.mubr.f32.mxu0 0.0
      %455 = vmatmul.mubr.f32.gmra.mrb[0].mxu0 %v298
      %v456 = vpop.f32.mrb[0].mxu0
      %v457 = vadd.f32 0.0, %v456
      %v458 = vpop.f32.mrb[0].mxu0
      %459 = vdwg.mxu0
      %460 = vst [vmem:[%s273] sm:$0xff] %v382
      %461 = vst [vmem:[%s273 + $0x8] sm:$0xff] %v387
      %462 = vst [vmem:[%s273 + $0x10] sm:$0xff] %v392
      %463 = vst [vmem:[%s273 + $0x18] sm:$0xff] %v397
      %464 = vst [vmem:[%s273 + $0x20] sm:$0xff] %v402
      %465 = vst [vmem:[%s273 + $0x28] sm:$0xff] %v407
      %466 = vst [vmem:[%s273 + $0x30] sm:$0xff] %v412
      %467 = vst [vmem:[%s273 + $0x38] sm:$0xff] %v417
      %468 = vst [vmem:[%s273 + $0x40] sm:$0xff] %v422
      %469 = vst [vmem:[%s273 + $0x48] sm:$0xff] %v427
      %470 = vst [vmem:[%s273 + $0x50] sm:$0xff] %v432
      %471 = vst [vmem:[%s273 + $0x58] sm:$0xff] %v437
      %472 = vst [vmem:[%s273 + $0x60] sm:$0xff] %v442
      %473 = vst [vmem:[%s273 + $0x68] sm:$0xff] %v447
      %474 = vst [vmem:[%s273 + $0x70] sm:$0xff] %v452
      %475 = vst [vmem:[%s273 + $0x78] sm:$0xff] %v457
      %v476 = vld [vmem:[%s273] sm:$0xff]
      %v477 = vld [vmem:[%s273 + $0x8] sm:$0xff]
      %v478 = vld [vmem:[%s273 + $0x10] sm:$0xff]
      %v479 = vld [vmem:[%s273 + $0x18] sm:$0xff]
      %v480 = vld [vmem:[%s273 + $0x20] sm:$0xff]
      %v481 = vld [vmem:[%s273 + $0x28] sm:$0xff]
      %v482 = vld [vmem:[%s273 + $0x30] sm:$0xff]
      %v483 = vld [vmem:[%s273 + $0x38] sm:$0xff]
      %v484 = vld [vmem:[%s273 + $0x40] sm:$0xff]
      %v485 = vld [vmem:[%s273 + $0x48] sm:$0xff]
      %v486 = vld [vmem:[%s273 + $0x50] sm:$0xff]
      %v487 = vld [vmem:[%s273 + $0x58] sm:$0xff]
      %v488 = vld [vmem:[%s273 + $0x60] sm:$0xff]
      %v489 = vld [vmem:[%s273 + $0x68] sm:$0xff]
      %v490 = vld [vmem:[%s273 + $0x70] sm:$0xff]
      %v491 = vld [vmem:[%s273 + $0x78] sm:$0xff]
      %v492 = vld [vmem:[%s264 + $0x1] sm:$0xff]
      %v493 = vld [vmem:[%s264 + $0x9] sm:$0xff]
      %v494 = vld [vmem:[%s264 + $0x19] sm:$0xff]
      %v495 = vld [vmem:[%s264 + $0x21] sm:$0xff]
      %v496 = vld [vmem:[%s264 + $0x31] sm:$0xff]
      %v497 = vld [vmem:[%s264 + $0x39] sm:$0xff]
      %v498 = vld [vmem:[%s264 + $0x49] sm:$0xff]
      %v499 = vld [vmem:[%s264 + $0x51] sm:$0xff]
      %v500 = vld [vmem:[%s264 + $0x61] sm:$0xff]
      %v501 = vld [vmem:[%s264 + $0x69] sm:$0xff]
      %v502 = vld [vmem:[%s264 + $0x79] sm:$0xff]
      %v503 = vld [vmem:[%s264 + $0x81] sm:$0xff]
      %v504 = vld [vmem:[%s264 + $0x91] sm:$0xff]
      %v505 = vld [vmem:[%s264 + $0x99] sm:$0xff]
      %v506 = vld [vmem:[%s264 + $0xa9] sm:$0xff]
      %v507 = vld [vmem:[%s264 + $0xb1] sm:$0xff]
      %s508 = scalar_lea.vmem %s1, 128
      %v509 = vld [vmem:[%s508] sm:$0xff]
      %v510 = vld [vmem:[%s508 + $0x8] sm:$0xff]
      %v511 = vld [vmem:[%s508 + $0x10] sm:$0xff]
      %v512 = vld [vmem:[%s508 + $0x18] sm:$0xff]
      %v513 = vld [vmem:[%s508 + $0x20] sm:$0xff]
      %v514 = vld [vmem:[%s508 + $0x28] sm:$0xff]
      %v515 = vld [vmem:[%s508 + $0x30] sm:$0xff]
      %v516 = vld [vmem:[%s508 + $0x38] sm:$0xff]
      %v517 = vld [vmem:[%s508 + $0x40] sm:$0xff]
      %v518 = vld [vmem:[%s508 + $0x48] sm:$0xff]
      %v519 = vld [vmem:[%s508 + $0x50] sm:$0xff]
      %v520 = vld [vmem:[%s508 + $0x58] sm:$0xff]
      %v521 = vld [vmem:[%s508 + $0x60] sm:$0xff]
      %v522 = vld [vmem:[%s508 + $0x68] sm:$0xff]
      %v523 = vld [vmem:[%s508 + $0x70] sm:$0xff]
      %v524 = vld [vmem:[%s508 + $0x78] sm:$0xff]
      %525 = vmatprep.subr.mxu0 0.0
      %526 = vmatpush1.msra.mxu0 %v509
      %527 = vmatprep.subr.mxu0 0.0
      %528 = vmatpush1.msra.mxu0 %v510
      %529 = vmatprep.subr.mxu0 0.0
      %530 = vmatpush1.msra.mxu0 %v511
      %531 = vmatprep.subr.mxu0 0.0
      %532 = vmatpush1.msra.mxu0 %v512
      %533 = vmatprep.subr.mxu0 0.0
      %534 = vmatpush1.msra.mxu0 %v513
      %535 = vmatprep.subr.mxu0 0.0
      %536 = vmatpush1.msra.mxu0 %v514
      %537 = vmatprep.subr.mxu0 0.0
      %538 = vmatpush1.msra.mxu0 %v515
      %539 = vmatprep.subr.mxu0 0.0
      %540 = vmatpush1.msra.mxu0 %v516
      %541 = vmatprep.subr.mxu0 0.0
      %542 = vmatpush1.msra.mxu0 %v517
      %543 = vmatprep.subr.mxu0 0.0
      %544 = vmatpush1.msra.mxu0 %v518
      %545 = vmatprep.subr.mxu0 0.0
      %546 = vmatpush1.msra.mxu0 %v519
      %547 = vmatprep.subr.mxu0 0.0
      %548 = vmatpush1.msra.mxu0 %v520
      %549 = vmatprep.subr.mxu0 0.0
      %550 = vmatpush1.msra.mxu0 %v521
      %551 = vmatprep.subr.mxu0 0.0
      %552 = vmatpush1.msra.mxu0 %v522
      %553 = vmatprep.subr.mxu0 0.0
      %554 = vmatpush1.msra.mxu0 %v523
      %555 = vmatprep.subr.mxu0 0.0
      %556 = vmatpush1.msra.mxu0 %v524
      %557 = vmatprep.subr.mxu0 0.0
      %558 = vmatpush1.msra.mxu0 0.0
      %559 = vmatprep.subr.mxu0 0.0
      %560 = vmatpush1.msra.mxu0 0.0
      %561 = vmatprep.subr.mxu0 0.0
      %562 = vmatpush1.msra.mxu0 0.0
      %563 = vmatprep.subr.mxu0 0.0
      %564 = vmatpush1.msra.mxu0 0.0
      %565 = vmatprep.subr.mxu0 0.0
      %566 = vmatpush1.msra.mxu0 0.0
      %567 = vmatprep.subr.mxu0 0.0
      %568 = vmatpush1.msra.mxu0 0.0
      %569 = vmatprep.subr.mxu0 0.0
      %570 = vmatpush1.msra.mxu0 0.0
      %571 = vmatprep.subr.mxu0 0.0
      %572 = vmatpush1.msra.mxu0 0.0
      %573 = vmatprep.subr.mxu0 0.0
      %574 = vmatpush1.msra.mxu0 0.0
      %575 = vmatprep.subr.mxu0 0.0
      %576 = vmatpush1.msra.mxu0 0.0
      %577 = vmatprep.subr.mxu0 0.0
      %578 = vmatpush1.msra.mxu0 0.0
      %579 = vmatprep.subr.mxu0 0.0
      %580 = vmatpush1.msra.mxu0 0.0
      %581 = vmatprep.subr.mxu0 0.0
      %582 = vmatpush1.msra.mxu0 0.0
      %583 = vmatprep.subr.mxu0 0.0
      %584 = vmatpush1.msra.mxu0 0.0
      %585 = vmatprep.subr.mxu0 0.0
      %586 = vmatpush1.msra.mxu0 0.0
      %587 = vmatprep.subr.mxu0 0.0
      %588 = vmatpush1.msra.mxu0 0.0
      %589 = vmatprep.mubr.f32.mxu0 0.0
      %590 = vmatmul.mubr.f32.gmra.mrb[0].mxu0 %v492
      %v591 = vpop.f32.mrb[0].mxu0
      %v592 = vadd.f32 0.0, %v591
      %v593 = vpop.f32.mrb[0].mxu0
      %594 = vmatprep.mubr.f32.mxu0 0.0
      %595 = vmatmul.mubr.f32.gmra.mrb[0].mxu0 %v493
      %v596 = vpop.f32.mrb[0].mxu0
      %v597 = vadd.f32 0.0, %v596
      %v598 = vpop.f32.mrb[0].mxu0
      %599 = vmatprep.mubr.f32.mxu0 0.0
      %600 = vmatmul.mubr.f32.gmra.mrb[0].mxu0 %v494
      %v601 = vpop.f32.mrb[0].mxu0
      %v602 = vadd.f32 0.0, %v601
      %v603 = vpop.f32.mrb[0].mxu0
      %604 = vmatprep.mubr.f32.mxu0 0.0
      %605 = vmatmul.mubr.f32.gmra.mrb[0].mxu0 %v495
      %v606 = vpop.f32.mrb[0].mxu0
      %v607 = vadd.f32 0.0, %v606
      %v608 = vpop.f32.mrb[0].mxu0
      %609 = vmatprep.mubr.f32.mxu0 0.0
      %610 = vmatmul.mubr.f32.gmra.mrb[0].mxu0 %v496
      %v611 = vpop.f32.mrb[0].mxu0
      %v612 = vadd.f32 0.0, %v611
      %v613 = vpop.f32.mrb[0].mxu0
      %614 = vmatprep.mubr.f32.mxu0 0.0
      %615 = vmatmul.mubr.f32.gmra.mrb[0].mxu0 %v497
      %v616 = vpop.f32.mrb[0].mxu0
      %v617 = vadd.f32 0.0, %v616
      %v618 = vpop.f32.mrb[0].mxu0
      %619 = vmatprep.mubr.f32.mxu0 0.0
      %620 = vmatmul.mubr.f32.gmra.mrb[0].mxu0 %v498
      %v621 = vpop.f32.mrb[0].mxu0
      %v622 = vadd.f32 0.0, %v621
      %v623 = vpop.f32.mrb[0].mxu0
      %624 = vmatprep.mubr.f32.mxu0 0.0
      %625 = vmatmul.mubr.f32.gmra.mrb[0].mxu0 %v499
      %v626 = vpop.f32.mrb[0].mxu0
      %v627 = vadd.f32 0.0, %v626
      %v628 = vpop.f32.mrb[0].mxu0
      %629 = vmatprep.mubr.f32.mxu0 0.0
      %630 = vmatmul.mubr.f32.gmra.mrb[0].mxu0 %v500
      %v631 = vpop.f32.mrb[0].mxu0
      %v632 = vadd.f32 0.0, %v631
      %v633 = vpop.f32.mrb[0].mxu0
      %634 = vmatprep.mubr.f32.mxu0 0.0
      %635 = vmatmul.mubr.f32.gmra.mrb[0].mxu0 %v501
      %v636 = vpop.f32.mrb[0].mxu0
      %v637 = vadd.f32 0.0, %v636
      %v638 = vpop.f32.mrb[0].mxu0
      %639 = vmatprep.mubr.f32.mxu0 0.0
      %640 = vmatmul.mubr.f32.gmra.mrb[0].mxu0 %v502
      %v641 = vpop.f32.mrb[0].mxu0
      %v642 = vadd.f32 0.0, %v641
      %v643 = vpop.f32.mrb[0].mxu0
      %644 = vmatprep.mubr.f32.mxu0 0.0
      %645 = vmatmul.mubr.f32.gmra.mrb[0].mxu0 %v503
      %v646 = vpop.f32.mrb[0].mxu0
      %v647 = vadd.f32 0.0, %v646
      %v648 = vpop.f32.mrb[0].mxu0
      %649 = vmatprep.mubr.f32.mxu0 0.0
      %650 = vmatmul.mubr.f32.gmra.mrb[0].mxu0 %v504
      %v651 = vpop.f32.mrb[0].mxu0
      %v652 = vadd.f32 0.0, %v651
      %v653 = vpop.f32.mrb[0].mxu0
      %654 = vmatprep.mubr.f32.mxu0 0.0
      %655 = vmatmul.mubr.f32.gmra.mrb[0].mxu0 %v505
      %v656 = vpop.f32.mrb[0].mxu0
      %v657 = vadd.f32 0.0, %v656
      %v658 = vpop.f32.mrb[0].mxu0
      %659 = vmatprep.mubr.f32.mxu0 0.0
      %660 = vmatmul.mubr.f32.gmra.mrb[0].mxu0 %v506
      %v661 = vpop.f32.mrb[0].mxu0
      %v662 = vadd.f32 0.0, %v661
      %v663 = vpop.f32.mrb[0].mxu0
      %664 = vmatprep.mubr.f32.mxu0 0.0
      %665 = vmatmul.mubr.f32.gmra.mrb[0].mxu0 %v507
      %v666 = vpop.f32.mrb[0].mxu0
      %v667 = vadd.f32 0.0, %v666
      %v668 = vpop.f32.mrb[0].mxu0
      %669 = vdwg.mxu0
      %v670 = vadd.f32 %v476, %v592
      %v671 = vadd.f32 %v477, %v597
      %v672 = vadd.f32 %v478, %v602
      %v673 = vadd.f32 %v479, %v607
      %v674 = vadd.f32 %v480, %v612
      %v675 = vadd.f32 %v481, %v617
      %v676 = vadd.f32 %v482, %v622
      %v677 = vadd.f32 %v483, %v627
      %v678 = vadd.f32 %v484, %v632
      %v679 = vadd.f32 %v485, %v637
      %v680 = vadd.f32 %v486, %v642
      %v681 = vadd.f32 %v487, %v647
      %v682 = vadd.f32 %v488, %v652
      %v683 = vadd.f32 %v489, %v657
      %v684 = vadd.f32 %v490, %v662
      %v685 = vadd.f32 %v491, %v667
      %686 = vst [vmem:[%s273] sm:$0xff] %v670
      %687 = vst [vmem:[%s273 + $0x8] sm:$0xff] %v671
      %688 = vst [vmem:[%s273 + $0x10] sm:$0xff] %v672
      %689 = vst [vmem:[%s273 + $0x18] sm:$0xff] %v673
      %690 = vst [vmem:[%s273 + $0x20] sm:$0xff] %v674
      %691 = vst [vmem:[%s273 + $0x28] sm:$0xff] %v675
      %692 = vst [vmem:[%s273 + $0x30] sm:$0xff] %v676
      %693 = vst [vmem:[%s273 + $0x38] sm:$0xff] %v677
      %694 = vst [vmem:[%s273 + $0x40] sm:$0xff] %v678
      %695 = vst [vmem:[%s273 + $0x48] sm:$0xff] %v679
      %696 = vst [vmem:[%s273 + $0x50] sm:$0xff] %v680
      %697 = vst [vmem:[%s273 + $0x58] sm:$0xff] %v681
      %698 = vst [vmem:[%s273 + $0x60] sm:$0xff] %v682
      %699 = vst [vmem:[%s273 + $0x68] sm:$0xff] %v683
      %700 = vst [vmem:[%s273 + $0x70] sm:$0xff] %v684
      %701 = vst [vmem:[%s273 + $0x78] sm:$0xff] %v685
      %v702 = vld [vmem:[%s273] sm:$0xff]
      %v703 = vld [vmem:[%s273 + $0x8] sm:$0xff]
      %v704 = vld [vmem:[%s273 + $0x10] sm:$0xff]
      %v705 = vld [vmem:[%s273 + $0x18] sm:$0xff]
      %v706 = vld [vmem:[%s273 + $0x20] sm:$0xff]
      %v707 = vld [vmem:[%s273 + $0x28] sm:$0xff]
      %v708 = vld [vmem:[%s273 + $0x30] sm:$0xff]
      %v709 = vld [vmem:[%s273 + $0x38] sm:$0xff]
      %v710 = vld [vmem:[%s273 + $0x40] sm:$0xff]
      %v711 = vld [vmem:[%s273 + $0x48] sm:$0xff]
      %v712 = vld [vmem:[%s273 + $0x50] sm:$0xff]
      %v713 = vld [vmem:[%s273 + $0x58] sm:$0xff]
      %v714 = vld [vmem:[%s273 + $0x60] sm:$0xff]
      %v715 = vld [vmem:[%s273 + $0x68] sm:$0xff]
      %v716 = vld [vmem:[%s273 + $0x70] sm:$0xff]
      %v717 = vld [vmem:[%s273 + $0x78] sm:$0xff]
      %v718 = vld [vmem:[%s264 + $0x2] sm:$0xff]
      %v719 = vld [vmem:[%s264 + $0xa] sm:$0xff]
      %v720 = vld [vmem:[%s264 + $0x1a] sm:$0xff]
      %v721 = vld [vmem:[%s264 + $0x22] sm:$0xff]
      %v722 = vld [vmem:[%s264 + $0x32] sm:$0xff]
      %v723 = vld [vmem:[%s264 + $0x3a] sm:$0xff]
      %v724 = vld [vmem:[%s264 + $0x4a] sm:$0xff]
      %v725 = vld [vmem:[%s264 + $0x52] sm:$0xff]
      %v726 = vld [vmem:[%s264 + $0x62] sm:$0xff]
      %v727 = vld [vmem:[%s264 + $0x6a] sm:$0xff]
      %v728 = vld [vmem:[%s264 + $0x7a] sm:$0xff]
      %v729 = vld [vmem:[%s264 + $0x82] sm:$0xff]
      %v730 = vld [vmem:[%s264 + $0x92] sm:$0xff]
      %v731 = vld [vmem:[%s264 + $0x9a] sm:$0xff]
      %v732 = vld [vmem:[%s264 + $0xaa] sm:$0xff]
      %v733 = vld [vmem:[%s264 + $0xb2] sm:$0xff]
      %s734 = scalar_lea.vmem %s1, 256
      %v735 = vld [vmem:[%s734] sm:$0xff]
      %v736 = vld [vmem:[%s734 + $0x8] sm:$0xff]
      %v737 = vld [vmem:[%s734 + $0x10] sm:$0xff]
      %v738 = vld [vmem:[%s734 + $0x18] sm:$0xff]
      %v739 = vld [vmem:[%s734 + $0x20] sm:$0xff]
      %v740 = vld [vmem:[%s734 + $0x28] sm:$0xff]
      %v741 = vld [vmem:[%s734 + $0x30] sm:$0xff]
      %v742 = vld [vmem:[%s734 + $0x38] sm:$0xff]
      %v743 = vld [vmem:[%s734 + $0x40] sm:$0xff]
      %v744 = vld [vmem:[%s734 + $0x48] sm:$0xff]
      %v745 = vld [vmem:[%s734 + $0x50] sm:$0xff]
      %v746 = vld [vmem:[%s734 + $0x58] sm:$0xff]
      %v747 = vld [vmem:[%s734 + $0x60] sm:$0xff]
      %v748 = vld [vmem:[%s734 + $0x68] sm:$0xff]
      %v749 = vld [vmem:[%s734 + $0x70] sm:$0xff]
      %v750 = vld [vmem:[%s734 + $0x78] sm:$0xff]
      %751 = vmatprep.subr.mxu0 0.0
      %752 = vmatpush1.msra.mxu0 %v735
      %753 = vmatprep.subr.mxu0 0.0
      %754 = vmatpush1.msra.mxu0 %v736
      %755 = vmatprep.subr.mxu0 0.0
      %756 = vmatpush1.msra.mxu0 %v737
      %757 = vmatprep.subr.mxu0 0.0
      %758 = vmatpush1.msra.mxu0 %v738
      %759 = vmatprep.subr.mxu0 0.0
      %760 = vmatpush1.msra.mxu0 %v739
      %761 = vmatprep.subr.mxu0 0.0
      %762 = vmatpush1.msra.mxu0 %v740
      %763 = vmatprep.subr.mxu0 0.0
      %764 = vmatpush1.msra.mxu0 %v741
      %765 = vmatprep.subr.mxu0 0.0
      %766 = vmatpush1.msra.mxu0 %v742
      %767 = vmatprep.subr.mxu0 0.0
      %768 = vmatpush1.msra.mxu0 %v743
      %769 = vmatprep.subr.mxu0 0.0
      %770 = vmatpush1.msra.mxu0 %v744
      %771 = vmatprep.subr.mxu0 0.0
      %772 = vmatpush1.msra.mxu0 %v745
      %773 = vmatprep.subr.mxu0 0.0
      %774 = vmatpush1.msra.mxu0 %v746
      %775 = vmatprep.subr.mxu0 0.0
      %776 = vmatpush1.msra.mxu0 %v747
      %777 = vmatprep.subr.mxu0 0.0
      %778 = vmatpush1.msra.mxu0 %v748
      %779 = vmatprep.subr.mxu0 0.0
      %780 = vmatpush1.msra.mxu0 %v749
      %781 = vmatprep.subr.mxu0 0.0
      %782 = vmatpush1.msra.mxu0 %v750
      %783 = vmatprep.subr.mxu0 0.0
      %784 = vmatpush1.msra.mxu0 0.0
      %785 = vmatprep.subr.mxu0 0.0
      %786 = vmatpush1.msra.mxu0 0.0
      %787 = vmatprep.subr.mxu0 0.0
      %788 = vmatpush1.msra.mxu0 0.0
      %789 = vmatprep.subr.mxu0 0.0
      %790 = vmatpush1.msra.mxu0 0.0
      %791 = vmatprep.subr.mxu0 0.0
      %792 = vmatpush1.msra.mxu0 0.0
      %793 = vmatprep.subr.mxu0 0.0
      %794 = vmatpush1.msra.mxu0 0.0
      %795 = vmatprep.subr.mxu0 0.0
      %796 = vmatpush1.msra.mxu0 0.0
      %797 = vmatprep.subr.mxu0 0.0
      %798 = vmatpush1.msra.mxu0 0.0
      %799 = vmatprep.subr.mxu0 0.0
      %800 = vmatpush1.msra.mxu0 0.0
      %801 = vmatprep.subr.mxu0 0.0
      %802 = vmatpush1.msra.mxu0 0.0
      %803 = vmatprep.subr.mxu0 0.0
      %804 = vmatpush1.msra.mxu0 0.0
      %805 = vmatprep.subr.mxu0 0.0
      %806 = vmatpush1.msra.mxu0 0.0
      %807 = vmatprep.subr.mxu0 0.0
      %808 = vmatpush1.msra.mxu0 0.0
      %809 = vmatprep.subr.mxu0 0.0
      %810 = vmatpush1.msra.mxu0 0.0
      %811 = vmatprep.subr.mxu0 0.0
      %812 = vmatpush1.msra.mxu0 0.0
      %813 = vmatprep.subr.mxu0 0.0
      %814 = vmatpush1.msra.mxu0 0.0
      %815 = vmatprep.mubr.f32.mxu0 0.0
      %816 = vmatmul.mubr.f32.gmra.mrb[0].mxu0 %v718
      %v817 = vpop.f32.mrb[0].mxu0
      %v818 = vadd.f32 0.0, %v817
      %v819 = vpop.f32.mrb[0].mxu0
      %820 = vmatprep.mubr.f32.mxu0 0.0
      %821 = vmatmul.mubr.f32.gmra.mrb[0].mxu0 %v719
      %v822 = vpop.f32.mrb[0].mxu0
      %v823 = vadd.f32 0.0, %v822
      %v824 = vpop.f32.mrb[0].mxu0
      %825 = vmatprep.mubr.f32.mxu0 0.0
      %826 = vmatmul.mubr.f32.gmra.mrb[0].mxu0 %v720
      %v827 = vpop.f32.mrb[0].mxu0
      %v828 = vadd.f32 0.0, %v827
      %v829 = vpop.f32.mrb[0].mxu0
      %830 = vmatprep.mubr.f32.mxu0 0.0
      %831 = vmatmul.mubr.f32.gmra.mrb[0].mxu0 %v721
      %v832 = vpop.f32.mrb[0].mxu0
      %v833 = vadd.f32 0.0, %v832
      %v834 = vpop.f32.mrb[0].mxu0
      %835 = vmatprep.mubr.f32.mxu0 0.0
      %836 = vmatmul.mubr.f32.gmra.mrb[0].mxu0 %v722
      %v837 = vpop.f32.mrb[0].mxu0
      %v838 = vadd.f32 0.0, %v837
      %v839 = vpop.f32.mrb[0].mxu0
      %840 = vmatprep.mubr.f32.mxu0 0.0
      %841 = vmatmul.mubr.f32.gmra.mrb[0].mxu0 %v723
      %v842 = vpop.f32.mrb[0].mxu0
      %v843 = vadd.f32 0.0, %v842
      %v844 = vpop.f32.mrb[0].mxu0
      %845 = vmatprep.mubr.f32.mxu0 0.0
      %846 = vmatmul.mubr.f32.gmra.mrb[0].mxu0 %v724
      %v847 = vpop.f32.mrb[0].mxu0
      %v848 = vadd.f32 0.0, %v847
      %v849 = vpop.f32.mrb[0].mxu0
      %850 = vmatprep.mubr.f32.mxu0 0.0
      %851 = vmatmul.mubr.f32.gmra.mrb[0].mxu0 %v725
      %v852 = vpop.f32.mrb[0].mxu0
      %v853 = vadd.f32 0.0, %v852
      %v854 = vpop.f32.mrb[0].mxu0
      %855 = vmatprep.mubr.f32.mxu0 0.0
      %856 = vmatmul.mubr.f32.gmra.mrb[0].mxu0 %v726
      %v857 = vpop.f32.mrb[0].mxu0
      %v858 = vadd.f32 0.0, %v857
      %v859 = vpop.f32.mrb[0].mxu0
      %860 = vmatprep.mubr.f32.mxu0 0.0
      %861 = vmatmul.mubr.f32.gmra.mrb[0].mxu0 %v727
      %v862 = vpop.f32.mrb[0].mxu0
      %v863 = vadd.f32 0.0, %v862
      %v864 = vpop.f32.mrb[0].mxu0
      %865 = vmatprep.mubr.f32.mxu0 0.0
      %866 = vmatmul.mubr.f32.gmra.mrb[0].mxu0 %v728
      %v867 = vpop.f32.mrb[0].mxu0
      %v868 = vadd.f32 0.0, %v867
      %v869 = vpop.f32.mrb[0].mxu0
      %870 = vmatprep.mubr.f32.mxu0 0.0
      %871 = vmatmul.mubr.f32.gmra.mrb[0].mxu0 %v729
      %v872 = vpop.f32.mrb[0].mxu0
      %v873 = vadd.f32 0.0, %v872
      %v874 = vpop.f32.mrb[0].mxu0
      %875 = vmatprep.mubr.f32.mxu0 0.0
      %876 = vmatmul.mubr.f32.gmra.mrb[0].mxu0 %v730
      %v877 = vpop.f32.mrb[0].mxu0
      %v878 = vadd.f32 0.0, %v877
      %v879 = vpop.f32.mrb[0].mxu0
      %880 = vmatprep.mubr.f32.mxu0 0.0
      %881 = vmatmul.mubr.f32.gmra.mrb[0].mxu0 %v731
      %v882 = vpop.f32.mrb[0].mxu0
      %v883 = vadd.f32 0.0, %v882
      %v884 = vpop.f32.mrb[0].mxu0
      %885 = vmatprep.mubr.f32.mxu0 0.0
      %886 = vmatmul.mubr.f32.gmra.mrb[0].mxu0 %v732
      %v887 = vpop.f32.mrb[0].mxu0
      %v888 = vadd.f32 0.0, %v887
      %v889 = vpop.f32.mrb[0].mxu0
      %890 = vmatprep.mubr.f32.mxu0 0.0
      %891 = vmatmul.mubr.f32.gmra.mrb[0].mxu0 %v733
      %v892 = vpop.f32.mrb[0].mxu0
      %v893 = vadd.f32 0.0, %v892
      %v894 = vpop.f32.mrb[0].mxu0
      %895 = vdwg.mxu0
      %v896 = vadd.f32 %v702, %v818
      %v897 = vadd.f32 %v703, %v823
      %v898 = vadd.f32 %v704, %v828
      %v899 = vadd.f32 %v705, %v833
      %v900 = vadd.f32 %v706, %v838
      %v901 = vadd.f32 %v707, %v843
      %v902 = vadd.f32 %v708, %v848
      %v903 = vadd.f32 %v709, %v853
      %v904 = vadd.f32 %v710, %v858
      %v905 = vadd.f32 %v711, %v863
      %v906 = vadd.f32 %v712, %v868
      %v907 = vadd.f32 %v713, %v873
      %v908 = vadd.f32 %v714, %v878
      %v909 = vadd.f32 %v715, %v883
      %v910 = vadd.f32 %v716, %v888
      %v911 = vadd.f32 %v717, %v893
      %912 = vst [vmem:[%s273] sm:$0xff] %v896
      %913 = vst [vmem:[%s273 + $0x8] sm:$0xff] %v897
      %914 = vst [vmem:[%s273 + $0x10] sm:$0xff] %v898
      %915 = vst [vmem:[%s273 + $0x18] sm:$0xff] %v899
      %916 = vst [vmem:[%s273 + $0x20] sm:$0xff] %v900
      %917 = vst [vmem:[%s273 + $0x28] sm:$0xff] %v901
      %918 = vst [vmem:[%s273 + $0x30] sm:$0xff] %v902
      %919 = vst [vmem:[%s273 + $0x38] sm:$0xff] %v903
      %920 = vst [vmem:[%s273 + $0x40] sm:$0xff] %v904
      %921 = vst [vmem:[%s273 + $0x48] sm:$0xff] %v905
      %922 = vst [vmem:[%s273 + $0x50] sm:$0xff] %v906
      %923 = vst [vmem:[%s273 + $0x58] sm:$0xff] %v907
      %924 = vst [vmem:[%s273 + $0x60] sm:$0xff] %v908
      %925 = vst [vmem:[%s273 + $0x68] sm:$0xff] %v909
      %926 = vst [vmem:[%s273 + $0x70] sm:$0xff] %v910
      %927 = vst [vmem:[%s273 + $0x78] sm:$0xff] %v911
      %v928 = vld [vmem:[%s273] sm:$0xff]
      %v929 = vld [vmem:[%s273 + $0x8] sm:$0xff]
      %v930 = vld [vmem:[%s273 + $0x10] sm:$0xff]
      %v931 = vld [vmem:[%s273 + $0x18] sm:$0xff]
      %v932 = vld [vmem:[%s273 + $0x20] sm:$0xff]
      %v933 = vld [vmem:[%s273 + $0x28] sm:$0xff]
      %v934 = vld [vmem:[%s273 + $0x30] sm:$0xff]
      %v935 = vld [vmem:[%s273 + $0x38] sm:$0xff]
      %v936 = vld [vmem:[%s273 + $0x40] sm:$0xff]
      %v937 = vld [vmem:[%s273 + $0x48] sm:$0xff]
      %v938 = vld [vmem:[%s273 + $0x50] sm:$0xff]
      %v939 = vld [vmem:[%s273 + $0x58] sm:$0xff]
      %v940 = vld [vmem:[%s273 + $0x60] sm:$0xff]
      %v941 = vld [vmem:[%s273 + $0x68] sm:$0xff]
      %v942 = vld [vmem:[%s273 + $0x70] sm:$0xff]
      %v943 = vld [vmem:[%s273 + $0x78] sm:$0xff]
      %s944 = scalar_lea.vmem %s264, 24
      %v945 = vld [vmem:[%s944] sm:$0xff]
      %v946 = vld [vmem:[%s944 + $0x8] sm:$0xff]
      %v947 = vld [vmem:[%s944 + $0x18] sm:$0xff]
      %v948 = vld [vmem:[%s944 + $0x20] sm:$0xff]
      %v949 = vld [vmem:[%s944 + $0x30] sm:$0xff]
      %v950 = vld [vmem:[%s944 + $0x38] sm:$0xff]
      %v951 = vld [vmem:[%s944 + $0x48] sm:$0xff]
      %v952 = vld [vmem:[%s944 + $0x50] sm:$0xff]
      %v953 = vld [vmem:[%s944 + $0x60] sm:$0xff]
      %v954 = vld [vmem:[%s944 + $0x68] sm:$0xff]
      %v955 = vld [vmem:[%s944 + $0x78] sm:$0xff]
      %v956 = vld [vmem:[%s944 + $0x80] sm:$0xff]
      %v957 = vld [vmem:[%s944 + $0x90] sm:$0xff]
      %v958 = vld [vmem:[%s944 + $0x98] sm:$0xff]
      %v959 = vld [vmem:[%s944 + $0xa8] sm:$0xff]
      %v960 = vld [vmem:[%s944 + $0xb0] sm:$0xff]
      %s961 = scalar_lea.vmem %s1, 384
      %v962 = vld [vmem:[%s961] sm:$0xff]
      %v963 = vld [vmem:[%s961 + $0x8] sm:$0xff]
      %v964 = vld [vmem:[%s961 + $0x10] sm:$0xff]
      %v965 = vld [vmem:[%s961 + $0x18] sm:$0xff]
      %v966 = vld [vmem:[%s961 + $0x20] sm:$0xff]
      %v967 = vld [vmem:[%s961 + $0x28] sm:$0xff]
      %v968 = vld [vmem:[%s961 + $0x30] sm:$0xff]
      %v969 = vld [vmem:[%s961 + $0x38] sm:$0xff]
      %v970 = vld [vmem:[%s961 + $0x40] sm:$0xff]
      %v971 = vld [vmem:[%s961 + $0x48] sm:$0xff]
      %v972 = vld [vmem:[%s961 + $0x50] sm:$0xff]
      %v973 = vld [vmem:[%s961 + $0x58] sm:$0xff]
      %v974 = vld [vmem:[%s961 + $0x60] sm:$0xff]
      %v975 = vld [vmem:[%s961 + $0x68] sm:$0xff]
      %v976 = vld [vmem:[%s961 + $0x70] sm:$0xff]
      %v977 = vld [vmem:[%s961 + $0x78] sm:$0xff]
      %978 = vmatprep.subr.mxu0 0.0
      %979 = vmatpush1.msra.mxu0 %v962
      %980 = vmatprep.subr.mxu0 0.0
      %981 = vmatpush1.msra.mxu0 %v963
      %982 = vmatprep.subr.mxu0 0.0
      %983 = vmatpush1.msra.mxu0 %v964
      %984 = vmatprep.subr.mxu0 0.0
      %985 = vmatpush1.msra.mxu0 %v965
      %986 = vmatprep.subr.mxu0 0.0
      %987 = vmatpush1.msra.mxu0 %v966
      %988 = vmatprep.subr.mxu0 0.0
      %989 = vmatpush1.msra.mxu0 %v967
      %990 = vmatprep.subr.mxu0 0.0
      %991 = vmatpush1.msra.mxu0 %v968
      %992 = vmatprep.subr.mxu0 0.0
      %993 = vmatpush1.msra.mxu0 %v969
      %994 = vmatprep.subr.mxu0 0.0
      %995 = vmatpush1.msra.mxu0 %v970
      %996 = vmatprep.subr.mxu0 0.0
      %997 = vmatpush1.msra.mxu0 %v971
      %998 = vmatprep.subr.mxu0 0.0
      %999 = vmatpush1.msra.mxu0 %v972
      %1000 = vmatprep.subr.mxu0 0.0
      %1001 = vmatpush1.msra.mxu0 %v973
      %1002 = vmatprep.subr.mxu0 0.0
      %1003 = vmatpush1.msra.mxu0 %v974
      %1004 = vmatprep.subr.mxu0 0.0
      %1005 = vmatpush1.msra.mxu0 %v975
      %1006 = vmatprep.subr.mxu0 0.0
      %1007 = vmatpush1.msra.mxu0 %v976
      %1008 = vmatprep.subr.mxu0 0.0
      %1009 = vmatpush1.msra.mxu0 %v977
      %1010 = vmatprep.subr.mxu0 0.0
      %1011 = vmatpush1.msra.mxu0 0.0
      %1012 = vmatprep.subr.mxu0 0.0
      %1013 = vmatpush1.msra.mxu0 0.0
      %1014 = vmatprep.subr.mxu0 0.0
      %1015 = vmatpush1.msra.mxu0 0.0
      %1016 = vmatprep.subr.mxu0 0.0
      %1017 = vmatpush1.msra.mxu0 0.0
      %1018 = vmatprep.subr.mxu0 0.0
      %1019 = vmatpush1.msra.mxu0 0.0
      %1020 = vmatprep.subr.mxu0 0.0
      %1021 = vmatpush1.msra.mxu0 0.0
      %1022 = vmatprep.subr.mxu0 0.0
      %1023 = vmatpush1.msra.mxu0 0.0
      %1024 = vmatprep.subr.mxu0 0.0
      %1025 = vmatpush1.msra.mxu0 0.0
      %1026 = vmatprep.subr.mxu0 0.0
      %1027 = vmatpush1.msra.mxu0 0.0
      %1028 = vmatprep.subr.mxu0 0.0
      %1029 = vmatpush1.msra.mxu0 0.0
      %1030 = vmatprep.subr.mxu0 0.0
      %1031 = vmatpush1.msra.mxu0 0.0
      %1032 = vmatprep.subr.mxu0 0.0
      %1033 = vmatpush1.msra.mxu0 0.0
      %1034 = vmatprep.subr.mxu0 0.0
      %1035 = vmatpush1.msra.mxu0 0.0
      %1036 = vmatprep.subr.mxu0 0.0
      %1037 = vmatpush1.msra.mxu0 0.0
      %1038 = vmatprep.subr.mxu0 0.0
      %1039 = vmatpush1.msra.mxu0 0.0
      %1040 = vmatprep.subr.mxu0 0.0
      %1041 = vmatpush1.msra.mxu0 0.0
      %1042 = vmatprep.mubr.f32.mxu0 0.0
      %1043 = vmatmul.mubr.f32.gmra.mrb[0].mxu0 %v945
      %v1044 = vpop.f32.mrb[0].mxu0
      %v1045 = vadd.f32 0.0, %v1044
      %v1046 = vpop.f32.mrb[0].mxu0
      %1047 = vmatprep.mubr.f32.mxu0 0.0
      %1048 = vmatmul.mubr.f32.gmra.mrb[0].mxu0 %v946
      %v1049 = vpop.f32.mrb[0].mxu0
      %v1050 = vadd.f32 0.0, %v1049
      %v1051 = vpop.f32.mrb[0].mxu0
      %1052 = vmatprep.mubr.f32.mxu0 0.0
      %1053 = vmatmul.mubr.f32.gmra.mrb[0].mxu0 %v947
      %v1054 = vpop.f32.mrb[0].mxu0
      %v1055 = vadd.f32 0.0, %v1054
      %v1056 = vpop.f32.mrb[0].mxu0
      %1057 = vmatprep.mubr.f32.mxu0 0.0
      %1058 = vmatmul.mubr.f32.gmra.mrb[0].mxu0 %v948
      %v1059 = vpop.f32.mrb[0].mxu0
      %v1060 = vadd.f32 0.0, %v1059
      %v1061 = vpop.f32.mrb[0].mxu0
      %1062 = vmatprep.mubr.f32.mxu0 0.0
      %1063 = vmatmul.mubr.f32.gmra.mrb[0].mxu0 %v949
      %v1064 = vpop.f32.mrb[0].mxu0
      %v1065 = vadd.f32 0.0, %v1064
      %v1066 = vpop.f32.mrb[0].mxu0
      %1067 = vmatprep.mubr.f32.mxu0 0.0
      %1068 = vmatmul.mubr.f32.gmra.mrb[0].mxu0 %v950
      %v1069 = vpop.f32.mrb[0].mxu0
      %v1070 = vadd.f32 0.0, %v1069
      %v1071 = vpop.f32.mrb[0].mxu0
      %1072 = vmatprep.mubr.f32.mxu0 0.0
      %1073 = vmatmul.mubr.f32.gmra.mrb[0].mxu0 %v951
      %v1074 = vpop.f32.mrb[0].mxu0
      %v1075 = vadd.f32 0.0, %v1074
      %v1076 = vpop.f32.mrb[0].mxu0
      %1077 = vmatprep.mubr.f32.mxu0 0.0
      %1078 = vmatmul.mubr.f32.gmra.mrb[0].mxu0 %v952
      %v1079 = vpop.f32.mrb[0].mxu0
      %v1080 = vadd.f32 0.0, %v1079
      %v1081 = vpop.f32.mrb[0].mxu0
      %1082 = vmatprep.mubr.f32.mxu0 0.0
      %1083 = vmatmul.mubr.f32.gmra.mrb[0].mxu0 %v953
      %v1084 = vpop.f32.mrb[0].mxu0
      %v1085 = vadd.f32 0.0, %v1084
      %v1086 = vpop.f32.mrb[0].mxu0
      %1087 = vmatprep.mubr.f32.mxu0 0.0
      %1088 = vmatmul.mubr.f32.gmra.mrb[0].mxu0 %v954
      %v1089 = vpop.f32.mrb[0].mxu0
      %v1090 = vadd.f32 0.0, %v1089
      %v1091 = vpop.f32.mrb[0].mxu0
      %1092 = vmatprep.mubr.f32.mxu0 0.0
      %1093 = vmatmul.mubr.f32.gmra.mrb[0].mxu0 %v955
      %v1094 = vpop.f32.mrb[0].mxu0
      %v1095 = vadd.f32 0.0, %v1094
      %v1096 = vpop.f32.mrb[0].mxu0
      %1097 = vmatprep.mubr.f32.mxu0 0.0
      %1098 = vmatmul.mubr.f32.gmra.mrb[0].mxu0 %v956
      %v1099 = vpop.f32.mrb[0].mxu0
      %v1100 = vadd.f32 0.0, %v1099
      %v1101 = vpop.f32.mrb[0].mxu0
      %1102 = vmatprep.mubr.f32.mxu0 0.0
      %1103 = vmatmul.mubr.f32.gmra.mrb[0].mxu0 %v957
      %v1104 = vpop.f32.mrb[0].mxu0
      %v1105 = vadd.f32 0.0, %v1104
      %v1106 = vpop.f32.mrb[0].mxu0
      %1107 = vmatprep.mubr.f32.mxu0 0.0
      %1108 = vmatmul.mubr.f32.gmra.mrb[0].mxu0 %v958
      %v1109 = vpop.f32.mrb[0].mxu0
      %v1110 = vadd.f32 0.0, %v1109
      %v1111 = vpop.f32.mrb[0].mxu0
      %1112 = vmatprep.mubr.f32.mxu0 0.0
      %1113 = vmatmul.mubr.f32.gmra.mrb[0].mxu0 %v959
      %v1114 = vpop.f32.mrb[0].mxu0
      %v1115 = vadd.f32 0.0, %v1114
      %v1116 = vpop.f32.mrb[0].mxu0
      %1117 = vmatprep.mubr.f32.mxu0 0.0
      %1118 = vmatmul.mubr.f32.gmra.mrb[0].mxu0 %v960
      %v1119 = vpop.f32.mrb[0].mxu0
      %v1120 = vadd.f32 0.0, %v1119
      %v1121 = vpop.f32.mrb[0].mxu0
      %1122 = vdwg.mxu0
      %v1123 = vadd.f32 %v928, %v1045
      %v1124 = vadd.f32 %v929, %v1050
      %v1125 = vadd.f32 %v930, %v1055
      %v1126 = vadd.f32 %v931, %v1060
      %v1127 = vadd.f32 %v932, %v1065
      %v1128 = vadd.f32 %v933, %v1070
      %v1129 = vadd.f32 %v934, %v1075
      %v1130 = vadd.f32 %v935, %v1080
      %v1131 = vadd.f32 %v936, %v1085
      %v1132 = vadd.f32 %v937, %v1090
      %v1133 = vadd.f32 %v938, %v1095
      %v1134 = vadd.f32 %v939, %v1100
      %v1135 = vadd.f32 %v940, %v1105
      %v1136 = vadd.f32 %v941, %v1110
      %v1137 = vadd.f32 %v942, %v1115
      %v1138 = vadd.f32 %v943, %v1120
      %1139 = vst [vmem:[%s273] sm:$0xff] %v1123
      %1140 = vst [vmem:[%s273 + $0x8] sm:$0xff] %v1124
      %1141 = vst [vmem:[%s273 + $0x10] sm:$0xff] %v1125
      %1142 = vst [vmem:[%s273 + $0x18] sm:$0xff] %v1126
      %1143 = vst [vmem:[%s273 + $0x20] sm:$0xff] %v1127
      %1144 = vst [vmem:[%s273 + $0x28] sm:$0xff] %v1128
      %1145 = vst [vmem:[%s273 + $0x30] sm:$0xff] %v1129
      %1146 = vst [vmem:[%s273 + $0x38] sm:$0xff] %v1130
      %1147 = vst [vmem:[%s273 + $0x40] sm:$0xff] %v1131
      %1148 = vst [vmem:[%s273 + $0x48] sm:$0xff] %v1132
      %1149 = vst [vmem:[%s273 + $0x50] sm:$0xff] %v1133
      %1150 = vst [vmem:[%s273 + $0x58] sm:$0xff] %v1134
      %1151 = vst [vmem:[%s273 + $0x60] sm:$0xff] %v1135
      %1152 = vst [vmem:[%s273 + $0x68] sm:$0xff] %v1136
      %1153 = vst [vmem:[%s273 + $0x70] sm:$0xff] %v1137
      %1154 = vst [vmem:[%s273 + $0x78] sm:$0xff] %v1138
      %v1155 = vld [vmem:[%s273] sm:$0xff]
      %v1156 = vld [vmem:[%s273 + $0x8] sm:$0xff]
      %v1157 = vld [vmem:[%s273 + $0x10] sm:$0xff]
      %v1158 = vld [vmem:[%s273 + $0x18] sm:$0xff]
      %v1159 = vld [vmem:[%s273 + $0x20] sm:$0xff]
      %v1160 = vld [vmem:[%s273 + $0x28] sm:$0xff]
      %v1161 = vld [vmem:[%s273 + $0x30] sm:$0xff]
      %v1162 = vld [vmem:[%s273 + $0x38] sm:$0xff]
      %v1163 = vld [vmem:[%s273 + $0x40] sm:$0xff]
      %v1164 = vld [vmem:[%s273 + $0x48] sm:$0xff]
      %v1165 = vld [vmem:[%s273 + $0x50] sm:$0xff]
      %v1166 = vld [vmem:[%s273 + $0x58] sm:$0xff]
      %v1167 = vld [vmem:[%s273 + $0x60] sm:$0xff]
      %v1168 = vld [vmem:[%s273 + $0x68] sm:$0xff]
      %v1169 = vld [vmem:[%s273 + $0x70] sm:$0xff]
      %v1170 = vld [vmem:[%s273 + $0x78] sm:$0xff]
      %v1171 = vld [vmem:[%s944 + $0x1] sm:$0xff]
      %v1172 = vld [vmem:[%s944 + $0x9] sm:$0xff]
      %v1173 = vld [vmem:[%s944 + $0x19] sm:$0xff]
      %v1174 = vld [vmem:[%s944 + $0x21] sm:$0xff]
      %v1175 = vld [vmem:[%s944 + $0x31] sm:$0xff]
      %v1176 = vld [vmem:[%s944 + $0x39] sm:$0xff]
      %v1177 = vld [vmem:[%s944 + $0x49] sm:$0xff]
      %v1178 = vld [vmem:[%s944 + $0x51] sm:$0xff]
      %v1179 = vld [vmem:[%s944 + $0x61] sm:$0xff]
      %v1180 = vld [vmem:[%s944 + $0x69] sm:$0xff]
      %v1181 = vld [vmem:[%s944 + $0x79] sm:$0xff]
      %v1182 = vld [vmem:[%s944 + $0x81] sm:$0xff]
      %v1183 = vld [vmem:[%s944 + $0x91] sm:$0xff]
      %v1184 = vld [vmem:[%s944 + $0x99] sm:$0xff]
      %v1185 = vld [vmem:[%s944 + $0xa9] sm:$0xff]
      %v1186 = vld [vmem:[%s944 + $0xb1] sm:$0xff]
      %s1187 = scalar_lea.vmem %s1, 512
      %v1188 = vld [vmem:[%s1187] sm:$0xff]
      %v1189 = vld [vmem:[%s1187 + $0x8] sm:$0xff]
      %v1190 = vld [vmem:[%s1187 + $0x10] sm:$0xff]
      %v1191 = vld [vmem:[%s1187 + $0x18] sm:$0xff]
      %v1192 = vld [vmem:[%s1187 + $0x20] sm:$0xff]
      %v1193 = vld [vmem:[%s1187 + $0x28] sm:$0xff]
      %v1194 = vld [vmem:[%s1187 + $0x30] sm:$0xff]
      %v1195 = vld [vmem:[%s1187 + $0x38] sm:$0xff]
      %v1196 = vld [vmem:[%s1187 + $0x40] sm:$0xff]
      %v1197 = vld [vmem:[%s1187 + $0x48] sm:$0xff]
      %v1198 = vld [vmem:[%s1187 + $0x50] sm:$0xff]
      %v1199 = vld [vmem:[%s1187 + $0x58] sm:$0xff]
      %v1200 = vld [vmem:[%s1187 + $0x60] sm:$0xff]
      %v1201 = vld [vmem:[%s1187 + $0x68] sm:$0xff]
      %v1202 = vld [vmem:[%s1187 + $0x70] sm:$0xff]
      %v1203 = vld [vmem:[%s1187 + $0x78] sm:$0xff]
      %1204 = vmatprep.subr.mxu0 0.0
      %1205 = vmatpush1.msra.mxu0 %v1188
      %1206 = vmatprep.subr.mxu0 0.0
      %1207 = vmatpush1.msra.mxu0 %v1189
      %1208 = vmatprep.subr.mxu0 0.0
      %1209 = vmatpush1.msra.mxu0 %v1190
      %1210 = vmatprep.subr.mxu0 0.0
      %1211 = vmatpush1.msra.mxu0 %v1191
      %1212 = vmatprep.subr.mxu0 0.0
      %1213 = vmatpush1.msra.mxu0 %v1192
      %1214 = vmatprep.subr.mxu0 0.0
      %1215 = vmatpush1.msra.mxu0 %v1193
      %1216 = vmatprep.subr.mxu0 0.0
      %1217 = vmatpush1.msra.mxu0 %v1194
      %1218 = vmatprep.subr.mxu0 0.0
      %1219 = vmatpush1.msra.mxu0 %v1195
      %1220 = vmatprep.subr.mxu0 0.0
      %1221 = vmatpush1.msra.mxu0 %v1196
      %1222 = vmatprep.subr.mxu0 0.0
      %1223 = vmatpush1.msra.mxu0 %v1197
      %1224 = vmatprep.subr.mxu0 0.0
      %1225 = vmatpush1.msra.mxu0 %v1198
      %1226 = vmatprep.subr.mxu0 0.0
      %1227 = vmatpush1.msra.mxu0 %v1199
      %1228 = vmatprep.subr.mxu0 0.0
      %1229 = vmatpush1.msra.mxu0 %v1200
      %1230 = vmatprep.subr.mxu0 0.0
      %1231 = vmatpush1.msra.mxu0 %v1201
      %1232 = vmatprep.subr.mxu0 0.0
      %1233 = vmatpush1.msra.mxu0 %v1202
      %1234 = vmatprep.subr.mxu0 0.0
      %1235 = vmatpush1.msra.mxu0 %v1203
      %1236 = vmatprep.subr.mxu0 0.0
      %1237 = vmatpush1.msra.mxu0 0.0
      %1238 = vmatprep.subr.mxu0 0.0
      %1239 = vmatpush1.msra.mxu0 0.0
      %1240 = vmatprep.subr.mxu0 0.0
      %1241 = vmatpush1.msra.mxu0 0.0
      %1242 = vmatprep.subr.mxu0 0.0
      %1243 = vmatpush1.msra.mxu0 0.0
      %1244 = vmatprep.subr.mxu0 0.0
      %1245 = vmatpush1.msra.mxu0 0.0
      %1246 = vmatprep.subr.mxu0 0.0
      %1247 = vmatpush1.msra.mxu0 0.0
      %1248 = vmatprep.subr.mxu0 0.0
      %1249 = vmatpush1.msra.mxu0 0.0
      %1250 = vmatprep.subr.mxu0 0.0
      %1251 = vmatpush1.msra.mxu0 0.0
      %1252 = vmatprep.subr.mxu0 0.0
      %1253 = vmatpush1.msra.mxu0 0.0
      %1254 = vmatprep.subr.mxu0 0.0
      %1255 = vmatpush1.msra.mxu0 0.0
      %1256 = vmatprep.subr.mxu0 0.0
      %1257 = vmatpush1.msra.mxu0 0.0
      %1258 = vmatprep.subr.mxu0 0.0
      %1259 = vmatpush1.msra.mxu0 0.0
      %1260 = vmatprep.subr.mxu0 0.0
      %1261 = vmatpush1.msra.mxu0 0.0
      %1262 = vmatprep.subr.mxu0 0.0
      %1263 = vmatpush1.msra.mxu0 0.0
      %1264 = vmatprep.subr.mxu0 0.0
      %1265 = vmatpush1.msra.mxu0 0.0
      %1266 = vmatprep.subr.mxu0 0.0
      %1267 = vmatpush1.msra.mxu0 0.0
      %1268 = vmatprep.mubr.f32.mxu0 0.0
      %1269 = vmatmul.mubr.f32.gmra.mrb[0].mxu0 %v1171
      %v1270 = vpop.f32.mrb[0].mxu0
      %v1271 = vadd.f32 0.0, %v1270
      %v1272 = vpop.f32.mrb[0].mxu0
      %1273 = vmatprep.mubr.f32.mxu0 0.0
      %1274 = vmatmul.mubr.f32.gmra.mrb[0].mxu0 %v1172
      %v1275 = vpop.f32.mrb[0].mxu0
      %v1276 = vadd.f32 0.0, %v1275
      %v1277 = vpop.f32.mrb[0].mxu0
      %1278 = vmatprep.mubr.f32.mxu0 0.0
      %1279 = vmatmul.mubr.f32.gmra.mrb[0].mxu0 %v1173
      %v1280 = vpop.f32.mrb[0].mxu0
      %v1281 = vadd.f32 0.0, %v1280
      %v1282 = vpop.f32.mrb[0].mxu0
      %1283 = vmatprep.mubr.f32.mxu0 0.0
      %1284 = vmatmul.mubr.f32.gmra.mrb[0].mxu0 %v1174
      %v1285 = vpop.f32.mrb[0].mxu0
      %v1286 = vadd.f32 0.0, %v1285
      %v1287 = vpop.f32.mrb[0].mxu0
      %1288 = vmatprep.mubr.f32.mxu0 0.0
      %1289 = vmatmul.mubr.f32.gmra.mrb[0].mxu0 %v1175
      %v1290 = vpop.f32.mrb[0].mxu0
      %v1291 = vadd.f32 0.0, %v1290
      %v1292 = vpop.f32.mrb[0].mxu0
      %1293 = vmatprep.mubr.f32.mxu0 0.0
      %1294 = vmatmul.mubr.f32.gmra.mrb[0].mxu0 %v1176
      %v1295 = vpop.f32.mrb[0].mxu0
      %v1296 = vadd.f32 0.0, %v1295
      %v1297 = vpop.f32.mrb[0].mxu0
      %1298 = vmatprep.mubr.f32.mxu0 0.0
      %1299 = vmatmul.mubr.f32.gmra.mrb[0].mxu0 %v1177
      %v1300 = vpop.f32.mrb[0].mxu0
      %v1301 = vadd.f32 0.0, %v1300
      %v1302 = vpop.f32.mrb[0].mxu0
      %1303 = vmatprep.mubr.f32.mxu0 0.0
      %1304 = vmatmul.mubr.f32.gmra.mrb[0].mxu0 %v1178
      %v1305 = vpop.f32.mrb[0].mxu0
      %v1306 = vadd.f32 0.0, %v1305
      %v1307 = vpop.f32.mrb[0].mxu0
      %1308 = vmatprep.mubr.f32.mxu0 0.0
      %1309 = vmatmul.mubr.f32.gmra.mrb[0].mxu0 %v1179
      %v1310 = vpop.f32.mrb[0].mxu0
      %v1311 = vadd.f32 0.0, %v1310
      %v1312 = vpop.f32.mrb[0].mxu0
      %1313 = vmatprep.mubr.f32.mxu0 0.0
      %1314 = vmatmul.mubr.f32.gmra.mrb[0].mxu0 %v1180
      %v1315 = vpop.f32.mrb[0].mxu0
      %v1316 = vadd.f32 0.0, %v1315
      %v1317 = vpop.f32.mrb[0].mxu0
      %1318 = vmatprep.mubr.f32.mxu0 0.0
      %1319 = vmatmul.mubr.f32.gmra.mrb[0].mxu0 %v1181
      %v1320 = vpop.f32.mrb[0].mxu0
      %v1321 = vadd.f32 0.0, %v1320
      %v1322 = vpop.f32.mrb[0].mxu0
      %1323 = vmatprep.mubr.f32.mxu0 0.0
      %1324 = vmatmul.mubr.f32.gmra.mrb[0].mxu0 %v1182
      %v1325 = vpop.f32.mrb[0].mxu0
      %v1326 = vadd.f32 0.0, %v1325
      %v1327 = vpop.f32.mrb[0].mxu0
      %1328 = vmatprep.mubr.f32.mxu0 0.0
      %1329 = vmatmul.mubr.f32.gmra.mrb[0].mxu0 %v1183
      %v1330 = vpop.f32.mrb[0].mxu0
      %v1331 = vadd.f32 0.0, %v1330
      %v1332 = vpop.f32.mrb[0].mxu0
      %1333 = vmatprep.mubr.f32.mxu0 0.0
      %1334 = vmatmul.mubr.f32.gmra.mrb[0].mxu0 %v1184
      %v1335 = vpop.f32.mrb[0].mxu0
      %v1336 = vadd.f32 0.0, %v1335
      %v1337 = vpop.f32.mrb[0].mxu0
      %1338 = vmatprep.mubr.f32.mxu0 0.0
      %1339 = vmatmul.mubr.f32.gmra.mrb[0].mxu0 %v1185
      %v1340 = vpop.f32.mrb[0].mxu0
      %v1341 = vadd.f32 0.0, %v1340
      %v1342 = vpop.f32.mrb[0].mxu0
      %1343 = vmatprep.mubr.f32.mxu0 0.0
      %1344 = vmatmul.mubr.f32.gmra.mrb[0].mxu0 %v1186
      %v1345 = vpop.f32.mrb[0].mxu0
      %v1346 = vadd.f32 0.0, %v1345
      %v1347 = vpop.f32.mrb[0].mxu0
      %1348 = vdwg.mxu0
      %v1349 = vadd.f32 %v1155, %v1271
      %v1350 = vadd.f32 %v1156, %v1276
      %v1351 = vadd.f32 %v1157, %v1281
      %v1352 = vadd.f32 %v1158, %v1286
      %v1353 = vadd.f32 %v1159, %v1291
      %v1354 = vadd.f32 %v1160, %v1296
      %v1355 = vadd.f32 %v1161, %v1301
      %v1356 = vadd.f32 %v1162, %v1306
      %v1357 = vadd.f32 %v1163, %v1311
      %v1358 = vadd.f32 %v1164, %v1316
      %v1359 = vadd.f32 %v1165, %v1321
      %v1360 = vadd.f32 %v1166, %v1326
      %v1361 = vadd.f32 %v1167, %v1331
      %v1362 = vadd.f32 %v1168, %v1336
      %v1363 = vadd.f32 %v1169, %v1341
      %v1364 = vadd.f32 %v1170, %v1346
      %1365 = vst [vmem:[%s273] sm:$0xff] %v1349
      %1366 = vst [vmem:[%s273 + $0x8] sm:$0xff] %v1350
      %1367 = vst [vmem:[%s273 + $0x10] sm:$0xff] %v1351
      %1368 = vst [vmem:[%s273 + $0x18] sm:$0xff] %v1352
      %1369 = vst [vmem:[%s273 + $0x20] sm:$0xff] %v1353
      %1370 = vst [vmem:[%s273 + $0x28] sm:$0xff] %v1354
      %1371 = vst [vmem:[%s273 + $0x30] sm:$0xff] %v1355
      %1372 = vst [vmem:[%s273 + $0x38] sm:$0xff] %v1356
      %1373 = vst [vmem:[%s273 + $0x40] sm:$0xff] %v1357
      %1374 = vst [vmem:[%s273 + $0x48] sm:$0xff] %v1358
      %1375 = vst [vmem:[%s273 + $0x50] sm:$0xff] %v1359
      %1376 = vst [vmem:[%s273 + $0x58] sm:$0xff] %v1360
      %1377 = vst [vmem:[%s273 + $0x60] sm:$0xff] %v1361
      %1378 = vst [vmem:[%s273 + $0x68] sm:$0xff] %v1362
      %1379 = vst [vmem:[%s273 + $0x70] sm:$0xff] %v1363
      %1380 = vst [vmem:[%s273 + $0x78] sm:$0xff] %v1364
      %v1381 = vld [vmem:[%s273] sm:$0xff]
      %v1382 = vld [vmem:[%s273 + $0x8] sm:$0xff]
      %v1383 = vld [vmem:[%s273 + $0x10] sm:$0xff]
      %v1384 = vld [vmem:[%s273 + $0x18] sm:$0xff]
      %v1385 = vld [vmem:[%s273 + $0x20] sm:$0xff]
      %v1386 = vld [vmem:[%s273 + $0x28] sm:$0xff]
      %v1387 = vld [vmem:[%s273 + $0x30] sm:$0xff]
      %v1388 = vld [vmem:[%s273 + $0x38] sm:$0xff]
      %v1389 = vld [vmem:[%s273 + $0x40] sm:$0xff]
      %v1390 = vld [vmem:[%s273 + $0x48] sm:$0xff]
      %v1391 = vld [vmem:[%s273 + $0x50] sm:$0xff]
      %v1392 = vld [vmem:[%s273 + $0x58] sm:$0xff]
      %v1393 = vld [vmem:[%s273 + $0x60] sm:$0xff]
      %v1394 = vld [vmem:[%s273 + $0x68] sm:$0xff]
      %v1395 = vld [vmem:[%s273 + $0x70] sm:$0xff]
      %v1396 = vld [vmem:[%s273 + $0x78] sm:$0xff]
      %v1397 = vld [vmem:[%s944 + $0x2] sm:$0xff]
      %v1398 = vld [vmem:[%s944 + $0xa] sm:$0xff]
      %v1399 = vld [vmem:[%s944 + $0x1a] sm:$0xff]
      %v1400 = vld [vmem:[%s944 + $0x22] sm:$0xff]
      %v1401 = vld [vmem:[%s944 + $0x32] sm:$0xff]
      %v1402 = vld [vmem:[%s944 + $0x3a] sm:$0xff]
      %v1403 = vld [vmem:[%s944 + $0x4a] sm:$0xff]
      %v1404 = vld [vmem:[%s944 + $0x52] sm:$0xff]
      %v1405 = vld [vmem:[%s944 + $0x62] sm:$0xff]
      %v1406 = vld [vmem:[%s944 + $0x6a] sm:$0xff]
      %v1407 = vld [vmem:[%s944 + $0x7a] sm:$0xff]
      %v1408 = vld [vmem:[%s944 + $0x82] sm:$0xff]
      %v1409 = vld [vmem:[%s944 + $0x92] sm:$0xff]
      %v1410 = vld [vmem:[%s944 + $0x9a] sm:$0xff]
      %v1411 = vld [vmem:[%s944 + $0xaa] sm:$0xff]
      %v1412 = vld [vmem:[%s944 + $0xb2] sm:$0xff]
      %s1413 = scalar_lea.vmem %s1, 640
      %v1414 = vld [vmem:[%s1413] sm:$0xff]
      %v1415 = vld [vmem:[%s1413 + $0x8] sm:$0xff]
      %v1416 = vld [vmem:[%s1413 + $0x10] sm:$0xff]
      %v1417 = vld [vmem:[%s1413 + $0x18] sm:$0xff]
      %v1418 = vld [vmem:[%s1413 + $0x20] sm:$0xff]
      %v1419 = vld [vmem:[%s1413 + $0x28] sm:$0xff]
      %v1420 = vld [vmem:[%s1413 + $0x30] sm:$0xff]
      %v1421 = vld [vmem:[%s1413 + $0x38] sm:$0xff]
      %v1422 = vld [vmem:[%s1413 + $0x40] sm:$0xff]
      %v1423 = vld [vmem:[%s1413 + $0x48] sm:$0xff]
      %v1424 = vld [vmem:[%s1413 + $0x50] sm:$0xff]
      %v1425 = vld [vmem:[%s1413 + $0x58] sm:$0xff]
      %v1426 = vld [vmem:[%s1413 + $0x60] sm:$0xff]
      %v1427 = vld [vmem:[%s1413 + $0x68] sm:$0xff]
      %v1428 = vld [vmem:[%s1413 + $0x70] sm:$0xff]
      %v1429 = vld [vmem:[%s1413 + $0x78] sm:$0xff]
      %1430 = vmatprep.subr.mxu0 0.0
      %1431 = vmatpush1.msra.mxu0 %v1414
      %1432 = vmatprep.subr.mxu0 0.0
      %1433 = vmatpush1.msra.mxu0 %v1415
      %1434 = vmatprep.subr.mxu0 0.0
      %1435 = vmatpush1.msra.mxu0 %v1416
      %1436 = vmatprep.subr.mxu0 0.0
      %1437 = vmatpush1.msra.mxu0 %v1417
      %1438 = vmatprep.subr.mxu0 0.0
      %1439 = vmatpush1.msra.mxu0 %v1418
      %1440 = vmatprep.subr.mxu0 0.0
      %1441 = vmatpush1.msra.mxu0 %v1419
      %1442 = vmatprep.subr.mxu0 0.0
      %1443 = vmatpush1.msra.mxu0 %v1420
      %1444 = vmatprep.subr.mxu0 0.0
      %1445 = vmatpush1.msra.mxu0 %v1421
      %1446 = vmatprep.subr.mxu0 0.0
      %1447 = vmatpush1.msra.mxu0 %v1422
      %1448 = vmatprep.subr.mxu0 0.0
      %1449 = vmatpush1.msra.mxu0 %v1423
      %1450 = vmatprep.subr.mxu0 0.0
      %1451 = vmatpush1.msra.mxu0 %v1424
      %1452 = vmatprep.subr.mxu0 0.0
      %1453 = vmatpush1.msra.mxu0 %v1425
      %1454 = vmatprep.subr.mxu0 0.0
      %1455 = vmatpush1.msra.mxu0 %v1426
      %1456 = vmatprep.subr.mxu0 0.0
      %1457 = vmatpush1.msra.mxu0 %v1427
      %1458 = vmatprep.subr.mxu0 0.0
      %1459 = vmatpush1.msra.mxu0 %v1428
      %1460 = vmatprep.subr.mxu0 0.0
      %1461 = vmatpush1.msra.mxu0 %v1429
      %1462 = vmatprep.subr.mxu0 0.0
      %1463 = vmatpush1.msra.mxu0 0.0
      %1464 = vmatprep.subr.mxu0 0.0
      %1465 = vmatpush1.msra.mxu0 0.0
      %1466 = vmatprep.subr.mxu0 0.0
      %1467 = vmatpush1.msra.mxu0 0.0
      %1468 = vmatprep.subr.mxu0 0.0
      %1469 = vmatpush1.msra.mxu0 0.0
      %1470 = vmatprep.subr.mxu0 0.0
      %1471 = vmatpush1.msra.mxu0 0.0
      %1472 = vmatprep.subr.mxu0 0.0
      %1473 = vmatpush1.msra.mxu0 0.0
      %1474 = vmatprep.subr.mxu0 0.0
      %1475 = vmatpush1.msra.mxu0 0.0
      %1476 = vmatprep.subr.mxu0 0.0
      %1477 = vmatpush1.msra.mxu0 0.0
      %1478 = vmatprep.subr.mxu0 0.0
      %1479 = vmatpush1.msra.mxu0 0.0
      %1480 = vmatprep.subr.mxu0 0.0
      %1481 = vmatpush1.msra.mxu0 0.0
      %1482 = vmatprep.subr.mxu0 0.0
      %1483 = vmatpush1.msra.mxu0 0.0
      %1484 = vmatprep.subr.mxu0 0.0
      %1485 = vmatpush1.msra.mxu0 0.0
      %1486 = vmatprep.subr.mxu0 0.0
      %1487 = vmatpush1.msra.mxu0 0.0
      %1488 = vmatprep.subr.mxu0 0.0
      %1489 = vmatpush1.msra.mxu0 0.0
      %1490 = vmatprep.subr.mxu0 0.0
      %1491 = vmatpush1.msra.mxu0 0.0
      %1492 = vmatprep.subr.mxu0 0.0
      %1493 = vmatpush1.msra.mxu0 0.0
      %1494 = vmatprep.mubr.f32.mxu0 0.0
      %1495 = vmatmul.mubr.f32.gmra.mrb[0].mxu0 %v1397
      %v1496 = vpop.f32.mrb[0].mxu0
      %v1497 = vadd.f32 0.0, %v1496
      %v1498 = vpop.f32.mrb[0].mxu0
      %1499 = vmatprep.mubr.f32.mxu0 0.0
      %1500 = vmatmul.mubr.f32.gmra.mrb[0].mxu0 %v1398
      %v1501 = vpop.f32.mrb[0].mxu0
      %v1502 = vadd.f32 0.0, %v1501
      %v1503 = vpop.f32.mrb[0].mxu0
      %1504 = vmatprep.mubr.f32.mxu0 0.0
      %1505 = vmatmul.mubr.f32.gmra.mrb[0].mxu0 %v1399
      %v1506 = vpop.f32.mrb[0].mxu0
      %v1507 = vadd.f32 0.0, %v1506
      %v1508 = vpop.f32.mrb[0].mxu0
      %1509 = vmatprep.mubr.f32.mxu0 0.0
      %1510 = vmatmul.mubr.f32.gmra.mrb[0].mxu0 %v1400
      %v1511 = vpop.f32.mrb[0].mxu0
      %v1512 = vadd.f32 0.0, %v1511
      %v1513 = vpop.f32.mrb[0].mxu0
      %1514 = vmatprep.mubr.f32.mxu0 0.0
      %1515 = vmatmul.mubr.f32.gmra.mrb[0].mxu0 %v1401
      %v1516 = vpop.f32.mrb[0].mxu0
      %v1517 = vadd.f32 0.0, %v1516
      %v1518 = vpop.f32.mrb[0].mxu0
      %1519 = vmatprep.mubr.f32.mxu0 0.0
      %1520 = vmatmul.mubr.f32.gmra.mrb[0].mxu0 %v1402
      %v1521 = vpop.f32.mrb[0].mxu0
      %v1522 = vadd.f32 0.0, %v1521
      %v1523 = vpop.f32.mrb[0].mxu0
      %1524 = vmatprep.mubr.f32.mxu0 0.0
      %1525 = vmatmul.mubr.f32.gmra.mrb[0].mxu0 %v1403
      %v1526 = vpop.f32.mrb[0].mxu0
      %v1527 = vadd.f32 0.0, %v1526
      %v1528 = vpop.f32.mrb[0].mxu0
      %1529 = vmatprep.mubr.f32.mxu0 0.0
      %1530 = vmatmul.mubr.f32.gmra.mrb[0].mxu0 %v1404
      %v1531 = vpop.f32.mrb[0].mxu0
      %v1532 = vadd.f32 0.0, %v1531
      %v1533 = vpop.f32.mrb[0].mxu0
      %1534 = vmatprep.mubr.f32.mxu0 0.0
      %1535 = vmatmul.mubr.f32.gmra.mrb[0].mxu0 %v1405
      %v1536 = vpop.f32.mrb[0].mxu0
      %v1537 = vadd.f32 0.0, %v1536
      %v1538 = vpop.f32.mrb[0].mxu0
      %1539 = vmatprep.mubr.f32.mxu0 0.0
      %1540 = vmatmul.mubr.f32.gmra.mrb[0].mxu0 %v1406
      %v1541 = vpop.f32.mrb[0].mxu0
      %v1542 = vadd.f32 0.0, %v1541
      %v1543 = vpop.f32.mrb[0].mxu0
      %1544 = vmatprep.mubr.f32.mxu0 0.0
      %1545 = vmatmul.mubr.f32.gmra.mrb[0].mxu0 %v1407
      %v1546 = vpop.f32.mrb[0].mxu0
      %v1547 = vadd.f32 0.0, %v1546
      %v1548 = vpop.f32.mrb[0].mxu0
      %1549 = vmatprep.mubr.f32.mxu0 0.0
      %1550 = vmatmul.mubr.f32.gmra.mrb[0].mxu0 %v1408
      %v1551 = vpop.f32.mrb[0].mxu0
      %v1552 = vadd.f32 0.0, %v1551
      %v1553 = vpop.f32.mrb[0].mxu0
      %1554 = vmatprep.mubr.f32.mxu0 0.0
      %1555 = vmatmul.mubr.f32.gmra.mrb[0].mxu0 %v1409
      %v1556 = vpop.f32.mrb[0].mxu0
      %v1557 = vadd.f32 0.0, %v1556
      %v1558 = vpop.f32.mrb[0].mxu0
      %1559 = vmatprep.mubr.f32.mxu0 0.0
      %1560 = vmatmul.mubr.f32.gmra.mrb[0].mxu0 %v1410
      %v1561 = vpop.f32.mrb[0].mxu0
      %v1562 = vadd.f32 0.0, %v1561
      %v1563 = vpop.f32.mrb[0].mxu0
      %1564 = vmatprep.mubr.f32.mxu0 0.0
      %1565 = vmatmul.mubr.f32.gmra.mrb[0].mxu0 %v1411
      %v1566 = vpop.f32.mrb[0].mxu0
      %v1567 = vadd.f32 0.0, %v1566
      %v1568 = vpop.f32.mrb[0].mxu0
      %1569 = vmatprep.mubr.f32.mxu0 0.0
      %1570 = vmatmul.mubr.f32.gmra.mrb[0].mxu0 %v1412
      %v1571 = vpop.f32.mrb[0].mxu0
      %v1572 = vadd.f32 0.0, %v1571
      %v1573 = vpop.f32.mrb[0].mxu0
      %1574 = vdwg.mxu0
      %v1575 = vadd.f32 %v1381, %v1497
      %v1576 = vadd.f32 %v1382, %v1502
      %v1577 = vadd.f32 %v1383, %v1507
      %v1578 = vadd.f32 %v1384, %v1512
      %v1579 = vadd.f32 %v1385, %v1517
      %v1580 = vadd.f32 %v1386, %v1522
      %v1581 = vadd.f32 %v1387, %v1527
      %v1582 = vadd.f32 %v1388, %v1532
      %v1583 = vadd.f32 %v1389, %v1537
      %v1584 = vadd.f32 %v1390, %v1542
      %v1585 = vadd.f32 %v1391, %v1547
      %v1586 = vadd.f32 %v1392, %v1552
      %v1587 = vadd.f32 %v1393, %v1557
      %v1588 = vadd.f32 %v1394, %v1562
      %v1589 = vadd.f32 %v1395, %v1567
      %v1590 = vadd.f32 %v1396, %v1572
      %1591 = vst [vmem:[%s273] sm:$0xff] %v1575
      %1592 = vst [vmem:[%s273 + $0x8] sm:$0xff] %v1576
      %1593 = vst [vmem:[%s273 + $0x10] sm:$0xff] %v1577
      %1594 = vst [vmem:[%s273 + $0x18] sm:$0xff] %v1578
      %1595 = vst [vmem:[%s273 + $0x20] sm:$0xff] %v1579
      %1596 = vst [vmem:[%s273 + $0x28] sm:$0xff] %v1580
      %1597 = vst [vmem:[%s273 + $0x30] sm:$0xff] %v1581
      %1598 = vst [vmem:[%s273 + $0x38] sm:$0xff] %v1582
      %1599 = vst [vmem:[%s273 + $0x40] sm:$0xff] %v1583
      %1600 = vst [vmem:[%s273 + $0x48] sm:$0xff] %v1584
      %1601 = vst [vmem:[%s273 + $0x50] sm:$0xff] %v1585
      %1602 = vst [vmem:[%s273 + $0x58] sm:$0xff] %v1586
      %1603 = vst [vmem:[%s273 + $0x60] sm:$0xff] %v1587
      %1604 = vst [vmem:[%s273 + $0x68] sm:$0xff] %v1588
      %1605 = vst [vmem:[%s273 + $0x70] sm:$0xff] %v1589
      %1606 = vst [vmem:[%s273 + $0x78] sm:$0xff] %v1590
      %v1607 = vld [vmem:[%s273] sm:$0xff]
      %v1608 = vld [vmem:[%s273 + $0x8] sm:$0xff]
      %v1609 = vld [vmem:[%s273 + $0x10] sm:$0xff]
      %v1610 = vld [vmem:[%s273 + $0x18] sm:$0xff]
      %v1611 = vld [vmem:[%s273 + $0x20] sm:$0xff]
      %v1612 = vld [vmem:[%s273 + $0x28] sm:$0xff]
      %v1613 = vld [vmem:[%s273 + $0x30] sm:$0xff]
      %v1614 = vld [vmem:[%s273 + $0x38] sm:$0xff]
      %v1615 = vld [vmem:[%s273 + $0x40] sm:$0xff]
      %v1616 = vld [vmem:[%s273 + $0x48] sm:$0xff]
      %v1617 = vld [vmem:[%s273 + $0x50] sm:$0xff]
      %v1618 = vld [vmem:[%s273 + $0x58] sm:$0xff]
      %v1619 = vld [vmem:[%s273 + $0x60] sm:$0xff]
      %v1620 = vld [vmem:[%s273 + $0x68] sm:$0xff]
      %v1621 = vld [vmem:[%s273 + $0x70] sm:$0xff]
      %v1622 = vld [vmem:[%s273 + $0x78] sm:$0xff]
      %s1623 = scalar_lea.vmem %s264, 48
      %v1624 = vld [vmem:[%s1623] sm:$0xff]
      %v1625 = vld [vmem:[%s1623 + $0x8] sm:$0xff]
      %v1626 = vld [vmem:[%s1623 + $0x18] sm:$0xff]
      %v1627 = vld [vmem:[%s1623 + $0x20] sm:$0xff]
      %v1628 = vld [vmem:[%s1623 + $0x30] sm:$0xff]
      %v1629 = vld [vmem:[%s1623 + $0x38] sm:$0xff]
      %v1630 = vld [vmem:[%s1623 + $0x48] sm:$0xff]
      %v1631 = vld [vmem:[%s1623 + $0x50] sm:$0xff]
      %v1632 = vld [vmem:[%s1623 + $0x60] sm:$0xff]
      %v1633 = vld [vmem:[%s1623 + $0x68] sm:$0xff]
      %v1634 = vld [vmem:[%s1623 + $0x78] sm:$0xff]
      %v1635 = vld [vmem:[%s1623 + $0x80] sm:$0xff]
      %v1636 = vld [vmem:[%s1623 + $0x90] sm:$0xff]
      %v1637 = vld [vmem:[%s1623 + $0x98] sm:$0xff]
      %v1638 = vld [vmem:[%s1623 + $0xa8] sm:$0xff]
      %v1639 = vld [vmem:[%s1623 + $0xb0] sm:$0xff]
      %s1640 = scalar_lea.vmem %s1, 768
      %v1641 = vld [vmem:[%s1640] sm:$0xff]
      %v1642 = vld [vmem:[%s1640 + $0x8] sm:$0xff]
      %v1643 = vld [vmem:[%s1640 + $0x10] sm:$0xff]
      %v1644 = vld [vmem:[%s1640 + $0x18] sm:$0xff]
      %v1645 = vld [vmem:[%s1640 + $0x20] sm:$0xff]
      %v1646 = vld [vmem:[%s1640 + $0x28] sm:$0xff]
      %v1647 = vld [vmem:[%s1640 + $0x30] sm:$0xff]
      %v1648 = vld [vmem:[%s1640 + $0x38] sm:$0xff]
      %v1649 = vld [vmem:[%s1640 + $0x40] sm:$0xff]
      %v1650 = vld [vmem:[%s1640 + $0x48] sm:$0xff]
      %v1651 = vld [vmem:[%s1640 + $0x50] sm:$0xff]
      %v1652 = vld [vmem:[%s1640 + $0x58] sm:$0xff]
      %v1653 = vld [vmem:[%s1640 + $0x60] sm:$0xff]
      %v1654 = vld [vmem:[%s1640 + $0x68] sm:$0xff]
      %v1655 = vld [vmem:[%s1640 + $0x70] sm:$0xff]
      %v1656 = vld [vmem:[%s1640 + $0x78] sm:$0xff]
      %1657 = vmatprep.subr.mxu0 0.0
      %1658 = vmatpush1.msra.mxu0 %v1641
      %1659 = vmatprep.subr.mxu0 0.0
      %1660 = vmatpush1.msra.mxu0 %v1642
      %1661 = vmatprep.subr.mxu0 0.0
      %1662 = vmatpush1.msra.mxu0 %v1643
      %1663 = vmatprep.subr.mxu0 0.0
      %1664 = vmatpush1.msra.mxu0 %v1644
      %1665 = vmatprep.subr.mxu0 0.0
      %1666 = vmatpush1.msra.mxu0 %v1645
      %1667 = vmatprep.subr.mxu0 0.0
      %1668 = vmatpush1.msra.mxu0 %v1646
      %1669 = vmatprep.subr.mxu0 0.0
      %1670 = vmatpush1.msra.mxu0 %v1647
      %1671 = vmatprep.subr.mxu0 0.0
      %1672 = vmatpush1.msra.mxu0 %v1648
      %1673 = vmatprep.subr.mxu0 0.0
      %1674 = vmatpush1.msra.mxu0 %v1649
      %1675 = vmatprep.subr.mxu0 0.0
      %1676 = vmatpush1.msra.mxu0 %v1650
      %1677 = vmatprep.subr.mxu0 0.0
      %1678 = vmatpush1.msra.mxu0 %v1651
      %1679 = vmatprep.subr.mxu0 0.0
      %1680 = vmatpush1.msra.mxu0 %v1652
      %1681 = vmatprep.subr.mxu0 0.0
      %1682 = vmatpush1.msra.mxu0 %v1653
      %1683 = vmatprep.subr.mxu0 0.0
      %1684 = vmatpush1.msra.mxu0 %v1654
      %1685 = vmatprep.subr.mxu0 0.0
      %1686 = vmatpush1.msra.mxu0 %v1655
      %1687 = vmatprep.subr.mxu0 0.0
      %1688 = vmatpush1.msra.mxu0 %v1656
      %1689 = vmatprep.subr.mxu0 0.0
      %1690 = vmatpush1.msra.mxu0 0.0
      %1691 = vmatprep.subr.mxu0 0.0
      %1692 = vmatpush1.msra.mxu0 0.0
      %1693 = vmatprep.subr.mxu0 0.0
      %1694 = vmatpush1.msra.mxu0 0.0
      %1695 = vmatprep.subr.mxu0 0.0
      %1696 = vmatpush1.msra.mxu0 0.0
      %1697 = vmatprep.subr.mxu0 0.0
      %1698 = vmatpush1.msra.mxu0 0.0
      %1699 = vmatprep.subr.mxu0 0.0
      %1700 = vmatpush1.msra.mxu0 0.0
      %1701 = vmatprep.subr.mxu0 0.0
      %1702 = vmatpush1.msra.mxu0 0.0
      %1703 = vmatprep.subr.mxu0 0.0
      %1704 = vmatpush1.msra.mxu0 0.0
      %1705 = vmatprep.subr.mxu0 0.0
      %1706 = vmatpush1.msra.mxu0 0.0
      %1707 = vmatprep.subr.mxu0 0.0
      %1708 = vmatpush1.msra.mxu0 0.0
      %1709 = vmatprep.subr.mxu0 0.0
      %1710 = vmatpush1.msra.mxu0 0.0
      %1711 = vmatprep.subr.mxu0 0.0
      %1712 = vmatpush1.msra.mxu0 0.0
      %1713 = vmatprep.subr.mxu0 0.0
      %1714 = vmatpush1.msra.mxu0 0.0
      %1715 = vmatprep.subr.mxu0 0.0
      %1716 = vmatpush1.msra.mxu0 0.0
      %1717 = vmatprep.subr.mxu0 0.0
      %1718 = vmatpush1.msra.mxu0 0.0
      %1719 = vmatprep.subr.mxu0 0.0
      %1720 = vmatpush1.msra.mxu0 0.0
      %1721 = vmatprep.mubr.f32.mxu0 0.0
      %1722 = vmatmul.mubr.f32.gmra.mrb[0].mxu0 %v1624
      %v1723 = vpop.f32.mrb[0].mxu0
      %v1724 = vadd.f32 0.0, %v1723
      %v1725 = vpop.f32.mrb[0].mxu0
      %1726 = vmatprep.mubr.f32.mxu0 0.0
      %1727 = vmatmul.mubr.f32.gmra.mrb[0].mxu0 %v1625
      %v1728 = vpop.f32.mrb[0].mxu0
      %v1729 = vadd.f32 0.0, %v1728
      %v1730 = vpop.f32.mrb[0].mxu0
      %1731 = vmatprep.mubr.f32.mxu0 0.0
      %1732 = vmatmul.mubr.f32.gmra.mrb[0].mxu0 %v1626
      %v1733 = vpop.f32.mrb[0].mxu0
      %v1734 = vadd.f32 0.0, %v1733
      %v1735 = vpop.f32.mrb[0].mxu0
      %1736 = vmatprep.mubr.f32.mxu0 0.0
      %1737 = vmatmul.mubr.f32.gmra.mrb[0].mxu0 %v1627
      %v1738 = vpop.f32.mrb[0].mxu0
      %v1739 = vadd.f32 0.0, %v1738
      %v1740 = vpop.f32.mrb[0].mxu0
      %1741 = vmatprep.mubr.f32.mxu0 0.0
      %1742 = vmatmul.mubr.f32.gmra.mrb[0].mxu0 %v1628
      %v1743 = vpop.f32.mrb[0].mxu0
      %v1744 = vadd.f32 0.0, %v1743
      %v1745 = vpop.f32.mrb[0].mxu0
      %1746 = vmatprep.mubr.f32.mxu0 0.0
      %1747 = vmatmul.mubr.f32.gmra.mrb[0].mxu0 %v1629
      %v1748 = vpop.f32.mrb[0].mxu0
      %v1749 = vadd.f32 0.0, %v1748
      %v1750 = vpop.f32.mrb[0].mxu0
      %1751 = vmatprep.mubr.f32.mxu0 0.0
      %1752 = vmatmul.mubr.f32.gmra.mrb[0].mxu0 %v1630
      %v1753 = vpop.f32.mrb[0].mxu0
      %v1754 = vadd.f32 0.0, %v1753
      %v1755 = vpop.f32.mrb[0].mxu0
      %1756 = vmatprep.mubr.f32.mxu0 0.0
      %1757 = vmatmul.mubr.f32.gmra.mrb[0].mxu0 %v1631
      %v1758 = vpop.f32.mrb[0].mxu0
      %v1759 = vadd.f32 0.0, %v1758
      %v1760 = vpop.f32.mrb[0].mxu0
      %1761 = vmatprep.mubr.f32.mxu0 0.0
      %1762 = vmatmul.mubr.f32.gmra.mrb[0].mxu0 %v1632
      %v1763 = vpop.f32.mrb[0].mxu0
      %v1764 = vadd.f32 0.0, %v1763
      %v1765 = vpop.f32.mrb[0].mxu0
      %1766 = vmatprep.mubr.f32.mxu0 0.0
      %1767 = vmatmul.mubr.f32.gmra.mrb[0].mxu0 %v1633
      %v1768 = vpop.f32.mrb[0].mxu0
      %v1769 = vadd.f32 0.0, %v1768
      %v1770 = vpop.f32.mrb[0].mxu0
      %1771 = vmatprep.mubr.f32.mxu0 0.0
      %1772 = vmatmul.mubr.f32.gmra.mrb[0].mxu0 %v1634
      %v1773 = vpop.f32.mrb[0].mxu0
      %v1774 = vadd.f32 0.0, %v1773
      %v1775 = vpop.f32.mrb[0].mxu0
      %1776 = vmatprep.mubr.f32.mxu0 0.0
      %1777 = vmatmul.mubr.f32.gmra.mrb[0].mxu0 %v1635
      %v1778 = vpop.f32.mrb[0].mxu0
      %v1779 = vadd.f32 0.0, %v1778
      %v1780 = vpop.f32.mrb[0].mxu0
      %1781 = vmatprep.mubr.f32.mxu0 0.0
      %1782 = vmatmul.mubr.f32.gmra.mrb[0].mxu0 %v1636
      %v1783 = vpop.f32.mrb[0].mxu0
      %v1784 = vadd.f32 0.0, %v1783
      %v1785 = vpop.f32.mrb[0].mxu0
      %1786 = vmatprep.mubr.f32.mxu0 0.0
      %1787 = vmatmul.mubr.f32.gmra.mrb[0].mxu0 %v1637
      %v1788 = vpop.f32.mrb[0].mxu0
      %v1789 = vadd.f32 0.0, %v1788
      %v1790 = vpop.f32.mrb[0].mxu0
      %1791 = vmatprep.mubr.f32.mxu0 0.0
      %1792 = vmatmul.mubr.f32.gmra.mrb[0].mxu0 %v1638
      %v1793 = vpop.f32.mrb[0].mxu0
      %v1794 = vadd.f32 0.0, %v1793
      %v1795 = vpop.f32.mrb[0].mxu0
      %1796 = vmatprep.mubr.f32.mxu0 0.0
      %1797 = vmatmul.mubr.f32.gmra.mrb[0].mxu0 %v1639
      %v1798 = vpop.f32.mrb[0].mxu0
      %v1799 = vadd.f32 0.0, %v1798
      %v1800 = vpop.f32.mrb[0].mxu0
      %1801 = vdwg.mxu0
      %v1802 = vadd.f32 %v1607, %v1724
      %v1803 = vadd.f32 %v1608, %v1729
      %v1804 = vadd.f32 %v1609, %v1734
      %v1805 = vadd.f32 %v1610, %v1739
      %v1806 = vadd.f32 %v1611, %v1744
      %v1807 = vadd.f32 %v1612, %v1749
      %v1808 = vadd.f32 %v1613, %v1754
      %v1809 = vadd.f32 %v1614, %v1759
      %v1810 = vadd.f32 %v1615, %v1764
      %v1811 = vadd.f32 %v1616, %v1769
      %v1812 = vadd.f32 %v1617, %v1774
      %v1813 = vadd.f32 %v1618, %v1779
      %v1814 = vadd.f32 %v1619, %v1784
      %v1815 = vadd.f32 %v1620, %v1789
      %v1816 = vadd.f32 %v1621, %v1794
      %v1817 = vadd.f32 %v1622, %v1799
      %1818 = vst [vmem:[%s273] sm:$0xff] %v1802
      %1819 = vst [vmem:[%s273 + $0x8] sm:$0xff] %v1803
      %1820 = vst [vmem:[%s273 + $0x10] sm:$0xff] %v1804
      %1821 = vst [vmem:[%s273 + $0x18] sm:$0xff] %v1805
      %1822 = vst [vmem:[%s273 + $0x20] sm:$0xff] %v1806
      %1823 = vst [vmem:[%s273 + $0x28] sm:$0xff] %v1807
      %1824 = vst [vmem:[%s273 + $0x30] sm:$0xff] %v1808
      %1825 = vst [vmem:[%s273 + $0x38] sm:$0xff] %v1809
      %1826 = vst [vmem:[%s273 + $0x40] sm:$0xff] %v1810
      %1827 = vst [vmem:[%s273 + $0x48] sm:$0xff] %v1811
      %1828 = vst [vmem:[%s273 + $0x50] sm:$0xff] %v1812
      %1829 = vst [vmem:[%s273 + $0x58] sm:$0xff] %v1813
      %1830 = vst [vmem:[%s273 + $0x60] sm:$0xff] %v1814
      %1831 = vst [vmem:[%s273 + $0x68] sm:$0xff] %v1815
      %1832 = vst [vmem:[%s273 + $0x70] sm:$0xff] %v1816
      %1833 = vst [vmem:[%s273 + $0x78] sm:$0xff] %v1817
      %v1834 = vld [vmem:[%s273] sm:$0xff]
      %v1835 = vld [vmem:[%s273 + $0x8] sm:$0xff]
      %v1836 = vld [vmem:[%s273 + $0x10] sm:$0xff]
      %v1837 = vld [vmem:[%s273 + $0x18] sm:$0xff]
      %v1838 = vld [vmem:[%s273 + $0x20] sm:$0xff]
      %v1839 = vld [vmem:[%s273 + $0x28] sm:$0xff]
      %v1840 = vld [vmem:[%s273 + $0x30] sm:$0xff]
      %v1841 = vld [vmem:[%s273 + $0x38] sm:$0xff]
      %v1842 = vld [vmem:[%s273 + $0x40] sm:$0xff]
      %v1843 = vld [vmem:[%s273 + $0x48] sm:$0xff]
      %v1844 = vld [vmem:[%s273 + $0x50] sm:$0xff]
      %v1845 = vld [vmem:[%s273 + $0x58] sm:$0xff]
      %v1846 = vld [vmem:[%s273 + $0x60] sm:$0xff]
      %v1847 = vld [vmem:[%s273 + $0x68] sm:$0xff]
      %v1848 = vld [vmem:[%s273 + $0x70] sm:$0xff]
      %v1849 = vld [vmem:[%s273 + $0x78] sm:$0xff]
      %v1850 = vld [vmem:[%s1623 + $0x1] sm:$0xff]
      %v1851 = vld [vmem:[%s1623 + $0x9] sm:$0xff]
      %v1852 = vld [vmem:[%s1623 + $0x19] sm:$0xff]
      %v1853 = vld [vmem:[%s1623 + $0x21] sm:$0xff]
      %v1854 = vld [vmem:[%s1623 + $0x31] sm:$0xff]
      %v1855 = vld [vmem:[%s1623 + $0x39] sm:$0xff]
      %v1856 = vld [vmem:[%s1623 + $0x49] sm:$0xff]
      %v1857 = vld [vmem:[%s1623 + $0x51] sm:$0xff]
      %v1858 = vld [vmem:[%s1623 + $0x61] sm:$0xff]
      %v1859 = vld [vmem:[%s1623 + $0x69] sm:$0xff]
      %v1860 = vld [vmem:[%s1623 + $0x79] sm:$0xff]
      %v1861 = vld [vmem:[%s1623 + $0x81] sm:$0xff]
      %v1862 = vld [vmem:[%s1623 + $0x91] sm:$0xff]
      %v1863 = vld [vmem:[%s1623 + $0x99] sm:$0xff]
      %v1864 = vld [vmem:[%s1623 + $0xa9] sm:$0xff]
      %v1865 = vld [vmem:[%s1623 + $0xb1] sm:$0xff]
      %s1866 = scalar_lea.vmem %s1, 896
      %v1867 = vld [vmem:[%s1866] sm:$0xff]
      %v1868 = vld [vmem:[%s1866 + $0x8] sm:$0xff]
      %v1869 = vld [vmem:[%s1866 + $0x10] sm:$0xff]
      %v1870 = vld [vmem:[%s1866 + $0x18] sm:$0xff]
      %v1871 = vld [vmem:[%s1866 + $0x20] sm:$0xff]
      %v1872 = vld [vmem:[%s1866 + $0x28] sm:$0xff]
      %v1873 = vld [vmem:[%s1866 + $0x30] sm:$0xff]
      %v1874 = vld [vmem:[%s1866 + $0x38] sm:$0xff]
      %v1875 = vld [vmem:[%s1866 + $0x40] sm:$0xff]
      %v1876 = vld [vmem:[%s1866 + $0x48] sm:$0xff]
      %v1877 = vld [vmem:[%s1866 + $0x50] sm:$0xff]
      %v1878 = vld [vmem:[%s1866 + $0x58] sm:$0xff]
      %v1879 = vld [vmem:[%s1866 + $0x60] sm:$0xff]
      %v1880 = vld [vmem:[%s1866 + $0x68] sm:$0xff]
      %v1881 = vld [vmem:[%s1866 + $0x70] sm:$0xff]
      %v1882 = vld [vmem:[%s1866 + $0x78] sm:$0xff]
      %1883 = vmatprep.subr.mxu0 0.0
      %1884 = vmatpush1.msra.mxu0 %v1867
      %1885 = vmatprep.subr.mxu0 0.0
      %1886 = vmatpush1.msra.mxu0 %v1868
      %1887 = vmatprep.subr.mxu0 0.0
      %1888 = vmatpush1.msra.mxu0 %v1869
      %1889 = vmatprep.subr.mxu0 0.0
      %1890 = vmatpush1.msra.mxu0 %v1870
      %1891 = vmatprep.subr.mxu0 0.0
      %1892 = vmatpush1.msra.mxu0 %v1871
      %1893 = vmatprep.subr.mxu0 0.0
      %1894 = vmatpush1.msra.mxu0 %v1872
      %1895 = vmatprep.subr.mxu0 0.0
      %1896 = vmatpush1.msra.mxu0 %v1873
      %1897 = vmatprep.subr.mxu0 0.0
      %1898 = vmatpush1.msra.mxu0 %v1874
      %1899 = vmatprep.subr.mxu0 0.0
      %1900 = vmatpush1.msra.mxu0 %v1875
      %1901 = vmatprep.subr.mxu0 0.0
      %1902 = vmatpush1.msra.mxu0 %v1876
      %1903 = vmatprep.subr.mxu0 0.0
      %1904 = vmatpush1.msra.mxu0 %v1877
      %1905 = vmatprep.subr.mxu0 0.0
      %1906 = vmatpush1.msra.mxu0 %v1878
      %1907 = vmatprep.subr.mxu0 0.0
      %1908 = vmatpush1.msra.mxu0 %v1879
      %1909 = vmatprep.subr.mxu0 0.0
      %1910 = vmatpush1.msra.mxu0 %v1880
      %1911 = vmatprep.subr.mxu0 0.0
      %1912 = vmatpush1.msra.mxu0 %v1881
      %1913 = vmatprep.subr.mxu0 0.0
      %1914 = vmatpush1.msra.mxu0 %v1882
      %1915 = vmatprep.subr.mxu0 0.0
      %1916 = vmatpush1.msra.mxu0 0.0
      %1917 = vmatprep.subr.mxu0 0.0
      %1918 = vmatpush1.msra.mxu0 0.0
      %1919 = vmatprep.subr.mxu0 0.0
      %1920 = vmatpush1.msra.mxu0 0.0
      %1921 = vmatprep.subr.mxu0 0.0
      %1922 = vmatpush1.msra.mxu0 0.0
      %1923 = vmatprep.subr.mxu0 0.0
      %1924 = vmatpush1.msra.mxu0 0.0
      %1925 = vmatprep.subr.mxu0 0.0
      %1926 = vmatpush1.msra.mxu0 0.0
      %1927 = vmatprep.subr.mxu0 0.0
      %1928 = vmatpush1.msra.mxu0 0.0
      %1929 = vmatprep.subr.mxu0 0.0
      %1930 = vmatpush1.msra.mxu0 0.0
      %1931 = vmatprep.subr.mxu0 0.0
      %1932 = vmatpush1.msra.mxu0 0.0
      %1933 = vmatprep.subr.mxu0 0.0
      %1934 = vmatpush1.msra.mxu0 0.0
      %1935 = vmatprep.subr.mxu0 0.0
      %1936 = vmatpush1.msra.mxu0 0.0
      %1937 = vmatprep.subr.mxu0 0.0
      %1938 = vmatpush1.msra.mxu0 0.0
      %1939 = vmatprep.subr.mxu0 0.0
      %1940 = vmatpush1.msra.mxu0 0.0
      %1941 = vmatprep.subr.mxu0 0.0
      %1942 = vmatpush1.msra.mxu0 0.0
      %1943 = vmatprep.subr.mxu0 0.0
      %1944 = vmatpush1.msra.mxu0 0.0
      %1945 = vmatprep.subr.mxu0 0.0
      %1946 = vmatpush1.msra.mxu0 0.0
      %1947 = vmatprep.mubr.f32.mxu0 0.0
      %1948 = vmatmul.mubr.f32.gmra.mrb[0].mxu0 %v1850
      %v1949 = vpop.f32.mrb[0].mxu0
      %v1950 = vadd.f32 0.0, %v1949
      %v1951 = vpop.f32.mrb[0].mxu0
      %1952 = vmatprep.mubr.f32.mxu0 0.0
      %1953 = vmatmul.mubr.f32.gmra.mrb[0].mxu0 %v1851
      %v1954 = vpop.f32.mrb[0].mxu0
      %v1955 = vadd.f32 0.0, %v1954
      %v1956 = vpop.f32.mrb[0].mxu0
      %1957 = vmatprep.mubr.f32.mxu0 0.0
      %1958 = vmatmul.mubr.f32.gmra.mrb[0].mxu0 %v1852
      %v1959 = vpop.f32.mrb[0].mxu0
      %v1960 = vadd.f32 0.0, %v1959
      %v1961 = vpop.f32.mrb[0].mxu0
      %1962 = vmatprep.mubr.f32.mxu0 0.0
      %1963 = vmatmul.mubr.f32.gmra.mrb[0].mxu0 %v1853
      %v1964 = vpop.f32.mrb[0].mxu0
      %v1965 = vadd.f32 0.0, %v1964
      %v1966 = vpop.f32.mrb[0].mxu0
      %1967 = vmatprep.mubr.f32.mxu0 0.0
      %1968 = vmatmul.mubr.f32.gmra.mrb[0].mxu0 %v1854
      %v1969 = vpop.f32.mrb[0].mxu0
      %v1970 = vadd.f32 0.0, %v1969
      %v1971 = vpop.f32.mrb[0].mxu0
      %1972 = vmatprep.mubr.f32.mxu0 0.0
      %1973 = vmatmul.mubr.f32.gmra.mrb[0].mxu0 %v1855
      %v1974 = vpop.f32.mrb[0].mxu0
      %v1975 = vadd.f32 0.0, %v1974
      %v1976 = vpop.f32.mrb[0].mxu0
      %1977 = vmatprep.mubr.f32.mxu0 0.0
      %1978 = vmatmul.mubr.f32.gmra.mrb[0].mxu0 %v1856
      %v1979 = vpop.f32.mrb[0].mxu0
      %v1980 = vadd.f32 0.0, %v1979
      %v1981 = vpop.f32.mrb[0].mxu0
      %1982 = vmatprep.mubr.f32.mxu0 0.0
      %1983 = vmatmul.mubr.f32.gmra.mrb[0].mxu0 %v1857
      %v1984 = vpop.f32.mrb[0].mxu0
      %v1985 = vadd.f32 0.0, %v1984
      %v1986 = vpop.f32.mrb[0].mxu0
      %1987 = vmatprep.mubr.f32.mxu0 0.0
      %1988 = vmatmul.mubr.f32.gmra.mrb[0].mxu0 %v1858
      %v1989 = vpop.f32.mrb[0].mxu0
      %v1990 = vadd.f32 0.0, %v1989
      %v1991 = vpop.f32.mrb[0].mxu0
      %1992 = vmatprep.mubr.f32.mxu0 0.0
      %1993 = vmatmul.mubr.f32.gmra.mrb[0].mxu0 %v1859
      %v1994 = vpop.f32.mrb[0].mxu0
      %v1995 = vadd.f32 0.0, %v1994
      %v1996 = vpop.f32.mrb[0].mxu0
      %1997 = vmatprep.mubr.f32.mxu0 0.0
      %1998 = vmatmul.mubr.f32.gmra.mrb[0].mxu0 %v1860
      %v1999 = vpop.f32.mrb[0].mxu0
      %v2000 = vadd.f32 0.0, %v1999
      %v2001 = vpop.f32.mrb[0].mxu0
      %2002 = vmatprep.mubr.f32.mxu0 0.0
      %2003 = vmatmul.mubr.f32.gmra.mrb[0].mxu0 %v1861
      %v2004 = vpop.f32.mrb[0].mxu0
      %v2005 = vadd.f32 0.0, %v2004
      %v2006 = vpop.f32.mrb[0].mxu0
      %2007 = vmatprep.mubr.f32.mxu0 0.0
      %2008 = vmatmul.mubr.f32.gmra.mrb[0].mxu0 %v1862
      %v2009 = vpop.f32.mrb[0].mxu0
      %v2010 = vadd.f32 0.0, %v2009
      %v2011 = vpop.f32.mrb[0].mxu0
      %2012 = vmatprep.mubr.f32.mxu0 0.0
      %2013 = vmatmul.mubr.f32.gmra.mrb[0].mxu0 %v1863
      %v2014 = vpop.f32.mrb[0].mxu0
      %v2015 = vadd.f32 0.0, %v2014
      %v2016 = vpop.f32.mrb[0].mxu0
      %2017 = vmatprep.mubr.f32.mxu0 0.0
      %2018 = vmatmul.mubr.f32.gmra.mrb[0].mxu0 %v1864
      %v2019 = vpop.f32.mrb[0].mxu0
      %v2020 = vadd.f32 0.0, %v2019
      %v2021 = vpop.f32.mrb[0].mxu0
      %2022 = vmatprep.mubr.f32.mxu0 0.0
      %2023 = vmatmul.mubr.f32.gmra.mrb[0].mxu0 %v1865
      %v2024 = vpop.f32.mrb[0].mxu0
      %v2025 = vadd.f32 0.0, %v2024
      %v2026 = vpop.f32.mrb[0].mxu0
      %2027 = vdwg.mxu0
      %v2028 = vadd.f32 %v1834, %v1950
      %v2029 = vadd.f32 %v1835, %v1955
      %v2030 = vadd.f32 %v1836, %v1960
      %v2031 = vadd.f32 %v1837, %v1965
      %v2032 = vadd.f32 %v1838, %v1970
      %v2033 = vadd.f32 %v1839, %v1975
      %v2034 = vadd.f32 %v1840, %v1980
      %v2035 = vadd.f32 %v1841, %v1985
      %v2036 = vadd.f32 %v1842, %v1990
      %v2037 = vadd.f32 %v1843, %v1995
      %v2038 = vadd.f32 %v1844, %v2000
      %v2039 = vadd.f32 %v1845, %v2005
      %v2040 = vadd.f32 %v1846, %v2010
      %v2041 = vadd.f32 %v1847, %v2015
      %v2042 = vadd.f32 %v1848, %v2020
      %v2043 = vadd.f32 %v1849, %v2025
      %2044 = vst [vmem:[%s273] sm:$0xff] %v2028
      %2045 = vst [vmem:[%s273 + $0x8] sm:$0xff] %v2029
      %2046 = vst [vmem:[%s273 + $0x10] sm:$0xff] %v2030
      %2047 = vst [vmem:[%s273 + $0x18] sm:$0xff] %v2031
      %2048 = vst [vmem:[%s273 + $0x20] sm:$0xff] %v2032
      %2049 = vst [vmem:[%s273 + $0x28] sm:$0xff] %v2033
      %2050 = vst [vmem:[%s273 + $0x30] sm:$0xff] %v2034
      %2051 = vst [vmem:[%s273 + $0x38] sm:$0xff] %v2035
      %2052 = vst [vmem:[%s273 + $0x40] sm:$0xff] %v2036
      %2053 = vst [vmem:[%s273 + $0x48] sm:$0xff] %v2037
      %2054 = vst [vmem:[%s273 + $0x50] sm:$0xff] %v2038
      %2055 = vst [vmem:[%s273 + $0x58] sm:$0xff] %v2039
      %2056 = vst [vmem:[%s273 + $0x60] sm:$0xff] %v2040
      %2057 = vst [vmem:[%s273 + $0x68] sm:$0xff] %v2041
      %2058 = vst [vmem:[%s273 + $0x70] sm:$0xff] %v2042
      %2059 = vst [vmem:[%s273 + $0x78] sm:$0xff] %v2043
      %v2060 = vld [vmem:[%s273] sm:$0xff]
      %v2061 = vld [vmem:[%s273 + $0x8] sm:$0xff]
      %v2062 = vld [vmem:[%s273 + $0x10] sm:$0xff]
      %v2063 = vld [vmem:[%s273 + $0x18] sm:$0xff]
      %v2064 = vld [vmem:[%s273 + $0x20] sm:$0xff]
      %v2065 = vld [vmem:[%s273 + $0x28] sm:$0xff]
      %v2066 = vld [vmem:[%s273 + $0x30] sm:$0xff]
      %v2067 = vld [vmem:[%s273 + $0x38] sm:$0xff]
      %v2068 = vld [vmem:[%s273 + $0x40] sm:$0xff]
      %v2069 = vld [vmem:[%s273 + $0x48] sm:$0xff]
      %v2070 = vld [vmem:[%s273 + $0x50] sm:$0xff]
      %v2071 = vld [vmem:[%s273 + $0x58] sm:$0xff]
      %v2072 = vld [vmem:[%s273 + $0x60] sm:$0xff]
      %v2073 = vld [vmem:[%s273 + $0x68] sm:$0xff]
      %v2074 = vld [vmem:[%s273 + $0x70] sm:$0xff]
      %v2075 = vld [vmem:[%s273 + $0x78] sm:$0xff]
      %v2076 = vld [vmem:[%s1623 + $0x2] sm:$0xff]
      %v2077 = vld [vmem:[%s1623 + $0xa] sm:$0xff]
      %v2078 = vld [vmem:[%s1623 + $0x1a] sm:$0xff]
      %v2079 = vld [vmem:[%s1623 + $0x22] sm:$0xff]
      %v2080 = vld [vmem:[%s1623 + $0x32] sm:$0xff]
      %v2081 = vld [vmem:[%s1623 + $0x3a] sm:$0xff]
      %v2082 = vld [vmem:[%s1623 + $0x4a] sm:$0xff]
      %v2083 = vld [vmem:[%s1623 + $0x52] sm:$0xff]
      %v2084 = vld [vmem:[%s1623 + $0x62] sm:$0xff]
      %v2085 = vld [vmem:[%s1623 + $0x6a] sm:$0xff]
      %v2086 = vld [vmem:[%s1623 + $0x7a] sm:$0xff]
      %v2087 = vld [vmem:[%s1623 + $0x82] sm:$0xff]
      %v2088 = vld [vmem:[%s1623 + $0x92] sm:$0xff]
      %v2089 = vld [vmem:[%s1623 + $0x9a] sm:$0xff]
      %v2090 = vld [vmem:[%s1623 + $0xaa] sm:$0xff]
      %v2091 = vld [vmem:[%s1623 + $0xb2] sm:$0xff]
      %s2092 = scalar_lea.vmem %s1, 1024
      %v2093 = vld [vmem:[%s2092] sm:$0xff]
      %v2094 = vld [vmem:[%s2092 + $0x8] sm:$0xff]
      %v2095 = vld [vmem:[%s2092 + $0x10] sm:$0xff]
      %v2096 = vld [vmem:[%s2092 + $0x18] sm:$0xff]
      %v2097 = vld [vmem:[%s2092 + $0x20] sm:$0xff]
      %v2098 = vld [vmem:[%s2092 + $0x28] sm:$0xff]
      %v2099 = vld [vmem:[%s2092 + $0x30] sm:$0xff]
      %v2100 = vld [vmem:[%s2092 + $0x38] sm:$0xff]
      %v2101 = vld [vmem:[%s2092 + $0x40] sm:$0xff]
      %v2102 = vld [vmem:[%s2092 + $0x48] sm:$0xff]
      %v2103 = vld [vmem:[%s2092 + $0x50] sm:$0xff]
      %v2104 = vld [vmem:[%s2092 + $0x58] sm:$0xff]
      %v2105 = vld [vmem:[%s2092 + $0x60] sm:$0xff]
      %v2106 = vld [vmem:[%s2092 + $0x68] sm:$0xff]
      %v2107 = vld [vmem:[%s2092 + $0x70] sm:$0xff]
      %v2108 = vld [vmem:[%s2092 + $0x78] sm:$0xff]
      %2109 = vmatprep.subr.mxu0 0.0
      %2110 = vmatpush1.msra.mxu0 %v2093
      %2111 = vmatprep.subr.mxu0 0.0
      %2112 = vmatpush1.msra.mxu0 %v2094
      %2113 = vmatprep.subr.mxu0 0.0
      %2114 = vmatpush1.msra.mxu0 %v2095
      %2115 = vmatprep.subr.mxu0 0.0
      %2116 = vmatpush1.msra.mxu0 %v2096
      %2117 = vmatprep.subr.mxu0 0.0
      %2118 = vmatpush1.msra.mxu0 %v2097
      %2119 = vmatprep.subr.mxu0 0.0
      %2120 = vmatpush1.msra.mxu0 %v2098
      %2121 = vmatprep.subr.mxu0 0.0
      %2122 = vmatpush1.msra.mxu0 %v2099
      %2123 = vmatprep.subr.mxu0 0.0
      %2124 = vmatpush1.msra.mxu0 %v2100
      %2125 = vmatprep.subr.mxu0 0.0
      %2126 = vmatpush1.msra.mxu0 %v2101
      %2127 = vmatprep.subr.mxu0 0.0
      %2128 = vmatpush1.msra.mxu0 %v2102
      %2129 = vmatprep.subr.mxu0 0.0
      %2130 = vmatpush1.msra.mxu0 %v2103
      %2131 = vmatprep.subr.mxu0 0.0
      %2132 = vmatpush1.msra.mxu0 %v2104
      %2133 = vmatprep.subr.mxu0 0.0
      %2134 = vmatpush1.msra.mxu0 %v2105
      %2135 = vmatprep.subr.mxu0 0.0
      %2136 = vmatpush1.msra.mxu0 %v2106
      %2137 = vmatprep.subr.mxu0 0.0
      %2138 = vmatpush1.msra.mxu0 %v2107
      %2139 = vmatprep.subr.mxu0 0.0
      %2140 = vmatpush1.msra.mxu0 %v2108
      %2141 = vmatprep.subr.mxu0 0.0
      %2142 = vmatpush1.msra.mxu0 0.0
      %2143 = vmatprep.subr.mxu0 0.0
      %2144 = vmatpush1.msra.mxu0 0.0
      %2145 = vmatprep.subr.mxu0 0.0
      %2146 = vmatpush1.msra.mxu0 0.0
      %2147 = vmatprep.subr.mxu0 0.0
      %2148 = vmatpush1.msra.mxu0 0.0
      %2149 = vmatprep.subr.mxu0 0.0
      %2150 = vmatpush1.msra.mxu0 0.0
      %2151 = vmatprep.subr.mxu0 0.0
      %2152 = vmatpush1.msra.mxu0 0.0
      %2153 = vmatprep.subr.mxu0 0.0
      %2154 = vmatpush1.msra.mxu0 0.0
      %2155 = vmatprep.subr.mxu0 0.0
      %2156 = vmatpush1.msra.mxu0 0.0
      %2157 = vmatprep.subr.mxu0 0.0
      %2158 = vmatpush1.msra.mxu0 0.0
      %2159 = vmatprep.subr.mxu0 0.0
      %2160 = vmatpush1.msra.mxu0 0.0
      %2161 = vmatprep.subr.mxu0 0.0
      %2162 = vmatpush1.msra.mxu0 0.0
      %2163 = vmatprep.subr.mxu0 0.0
      %2164 = vmatpush1.msra.mxu0 0.0
      %2165 = vmatprep.subr.mxu0 0.0
      %2166 = vmatpush1.msra.mxu0 0.0
      %2167 = vmatprep.subr.mxu0 0.0
      %2168 = vmatpush1.msra.mxu0 0.0
      %2169 = vmatprep.subr.mxu0 0.0
      %2170 = vmatpush1.msra.mxu0 0.0
      %2171 = vmatprep.subr.mxu0 0.0
      %2172 = vmatpush1.msra.mxu0 0.0
      %2173 = vmatprep.mubr.f32.mxu0 0.0
      %2174 = vmatmul.mubr.f32.gmra.mrb[0].mxu0 %v2076
      %v2175 = vpop.f32.mrb[0].mxu0
      %v2176 = vadd.f32 0.0, %v2175
      %v2177 = vpop.f32.mrb[0].mxu0
      %2178 = vmatprep.mubr.f32.mxu0 0.0
      %2179 = vmatmul.mubr.f32.gmra.mrb[0].mxu0 %v2077
      %v2180 = vpop.f32.mrb[0].mxu0
      %v2181 = vadd.f32 0.0, %v2180
      %v2182 = vpop.f32.mrb[0].mxu0
      %2183 = vmatprep.mubr.f32.mxu0 0.0
      %2184 = vmatmul.mubr.f32.gmra.mrb[0].mxu0 %v2078
      %v2185 = vpop.f32.mrb[0].mxu0
      %v2186 = vadd.f32 0.0, %v2185
      %v2187 = vpop.f32.mrb[0].mxu0
      %2188 = vmatprep.mubr.f32.mxu0 0.0
      %2189 = vmatmul.mubr.f32.gmra.mrb[0].mxu0 %v2079
      %v2190 = vpop.f32.mrb[0].mxu0
      %v2191 = vadd.f32 0.0, %v2190
      %v2192 = vpop.f32.mrb[0].mxu0
      %2193 = vmatprep.mubr.f32.mxu0 0.0
      %2194 = vmatmul.mubr.f32.gmra.mrb[0].mxu0 %v2080
      %v2195 = vpop.f32.mrb[0].mxu0
      %v2196 = vadd.f32 0.0, %v2195
      %v2197 = vpop.f32.mrb[0].mxu0
      %2198 = vmatprep.mubr.f32.mxu0 0.0
      %2199 = vmatmul.mubr.f32.gmra.mrb[0].mxu0 %v2081
      %v2200 = vpop.f32.mrb[0].mxu0
      %v2201 = vadd.f32 0.0, %v2200
      %v2202 = vpop.f32.mrb[0].mxu0
      %2203 = vmatprep.mubr.f32.mxu0 0.0
      %2204 = vmatmul.mubr.f32.gmra.mrb[0].mxu0 %v2082
      %v2205 = vpop.f32.mrb[0].mxu0
      %v2206 = vadd.f32 0.0, %v2205
      %v2207 = vpop.f32.mrb[0].mxu0
      %2208 = vmatprep.mubr.f32.mxu0 0.0
      %2209 = vmatmul.mubr.f32.gmra.mrb[0].mxu0 %v2083
      %v2210 = vpop.f32.mrb[0].mxu0
      %v2211 = vadd.f32 0.0, %v2210
      %v2212 = vpop.f32.mrb[0].mxu0
      %2213 = vmatprep.mubr.f32.mxu0 0.0
      %2214 = vmatmul.mubr.f32.gmra.mrb[0].mxu0 %v2084
      %v2215 = vpop.f32.mrb[0].mxu0
      %v2216 = vadd.f32 0.0, %v2215
      %v2217 = vpop.f32.mrb[0].mxu0
      %2218 = vmatprep.mubr.f32.mxu0 0.0
      %2219 = vmatmul.mubr.f32.gmra.mrb[0].mxu0 %v2085
      %v2220 = vpop.f32.mrb[0].mxu0
      %v2221 = vadd.f32 0.0, %v2220
      %v2222 = vpop.f32.mrb[0].mxu0
      %2223 = vmatprep.mubr.f32.mxu0 0.0
      %2224 = vmatmul.mubr.f32.gmra.mrb[0].mxu0 %v2086
      %v2225 = vpop.f32.mrb[0].mxu0
      %v2226 = vadd.f32 0.0, %v2225
      %v2227 = vpop.f32.mrb[0].mxu0
      %2228 = vmatprep.mubr.f32.mxu0 0.0
      %2229 = vmatmul.mubr.f32.gmra.mrb[0].mxu0 %v2087
      %v2230 = vpop.f32.mrb[0].mxu0
      %v2231 = vadd.f32 0.0, %v2230
      %v2232 = vpop.f32.mrb[0].mxu0
      %2233 = vmatprep.mubr.f32.mxu0 0.0
      %2234 = vmatmul.mubr.f32.gmra.mrb[0].mxu0 %v2088
      %v2235 = vpop.f32.mrb[0].mxu0
      %v2236 = vadd.f32 0.0, %v2235
      %v2237 = vpop.f32.mrb[0].mxu0
      %2238 = vmatprep.mubr.f32.mxu0 0.0
      %2239 = vmatmul.mubr.f32.gmra.mrb[0].mxu0 %v2089
      %v2240 = vpop.f32.mrb[0].mxu0
      %v2241 = vadd.f32 0.0, %v2240
      %v2242 = vpop.f32.mrb[0].mxu0
      %2243 = vmatprep.mubr.f32.mxu0 0.0
      %2244 = vmatmul.mubr.f32.gmra.mrb[0].mxu0 %v2090
      %v2245 = vpop.f32.mrb[0].mxu0
      %v2246 = vadd.f32 0.0, %v2245
      %v2247 = vpop.f32.mrb[0].mxu0
      %2248 = vmatprep.mubr.f32.mxu0 0.0
      %2249 = vmatmul.mubr.f32.gmra.mrb[0].mxu0 %v2091
      %v2250 = vpop.f32.mrb[0].mxu0
      %v2251 = vadd.f32 0.0, %v2250
      %v2252 = vpop.f32.mrb[0].mxu0
      %2253 = vdwg.mxu0
      %v2254 = vadd.f32 %v2060, %v2176
      %v2255 = vadd.f32 %v2061, %v2181
      %v2256 = vadd.f32 %v2062, %v2186
      %v2257 = vadd.f32 %v2063, %v2191
      %v2258 = vadd.f32 %v2064, %v2196
      %v2259 = vadd.f32 %v2065, %v2201
      %v2260 = vadd.f32 %v2066, %v2206
      %v2261 = vadd.f32 %v2067, %v2211
      %v2262 = vadd.f32 %v2068, %v2216
      %v2263 = vadd.f32 %v2069, %v2221
      %v2264 = vadd.f32 %v2070, %v2226
      %v2265 = vadd.f32 %v2071, %v2231
      %v2266 = vadd.f32 %v2072, %v2236
      %v2267 = vadd.f32 %v2073, %v2241
      %v2268 = vadd.f32 %v2074, %v2246
      %v2269 = vadd.f32 %v2075, %v2251
      %2270 = vst [vmem:[%s273] sm:$0xff] %v2254
      %2271 = vst [vmem:[%s273 + $0x8] sm:$0xff] %v2255
      %2272 = vst [vmem:[%s273 + $0x10] sm:$0xff] %v2256
      %2273 = vst [vmem:[%s273 + $0x18] sm:$0xff] %v2257
      %2274 = vst [vmem:[%s273 + $0x20] sm:$0xff] %v2258
      %2275 = vst [vmem:[%s273 + $0x28] sm:$0xff] %v2259
      %2276 = vst [vmem:[%s273 + $0x30] sm:$0xff] %v2260
      %2277 = vst [vmem:[%s273 + $0x38] sm:$0xff] %v2261
      %2278 = vst [vmem:[%s273 + $0x40] sm:$0xff] %v2262
      %2279 = vst [vmem:[%s273 + $0x48] sm:$0xff] %v2263
      %2280 = vst [vmem:[%s273 + $0x50] sm:$0xff] %v2264
      %2281 = vst [vmem:[%s273 + $0x58] sm:$0xff] %v2265
      %2282 = vst [vmem:[%s273 + $0x60] sm:$0xff] %v2266
      %2283 = vst [vmem:[%s273 + $0x68] sm:$0xff] %v2267
      %2284 = vst [vmem:[%s273 + $0x70] sm:$0xff] %v2268
      %2285 = vst [vmem:[%s273 + $0x78] sm:$0xff] %v2269
      %v2286 = vadd.f32 %v2254, %v2255
      %v2287 = vadd.f32 %v2286, %v2256
      %v2288 = vadd.f32 %v2287, %v2257
      %v2289 = vadd.f32 %v2288, %v2258
      %v2290 = vadd.f32 %v2289, %v2259
      %v2291 = vadd.f32 %v2290, %v2260
      %v2292 = vadd.f32 %v2291, %v2261
      %v2293 = vadd.f32 %v2292, %v2262
      %v2294 = vadd.f32 %v2293, %v2263
      %v2295 = vadd.f32 %v2294, %v2264
      %v2296 = vadd.f32 %v2295, %v2265
      %v2297 = vadd.f32 %v2296, %v2266
      %v2298 = vadd.f32 %v2297, %v2267
      %v2299 = vadd.f32 %v2298, %v2268
      %v2300 = vadd.f32 %v2299, %v2269
      %v2301 = vrot.slane %v2300, 4
      %v2302 = vadd.f32 %v2300, %v2301
      %v2303 = vrot.slane %v2302, 2
      %v2304 = vadd.f32 %v2302, %v2303
      %v2305 = vrot.slane %v2304, 1
      %v2306 = vadd.f32 %v2304, %v2305
      %v2307 = vmul.f32 %v2254, %v2254
      %v2308 = vmul.f32 %v2255, %v2255
      %v2309 = vmul.f32 %v2256, %v2256
      %v2310 = vmul.f32 %v2257, %v2257
      %v2311 = vmul.f32 %v2258, %v2258
      %v2312 = vmul.f32 %v2259, %v2259
      %v2313 = vmul.f32 %v2260, %v2260
      %v2314 = vmul.f32 %v2261, %v2261
      %v2315 = vmul.f32 %v2262, %v2262
      %v2316 = vmul.f32 %v2263, %v2263
      %v2317 = vmul.f32 %v2264, %v2264
      %v2318 = vmul.f32 %v2265, %v2265
      %v2319 = vmul.f32 %v2266, %v2266
      %v2320 = vmul.f32 %v2267, %v2267
      %v2321 = vmul.f32 %v2268, %v2268
      %v2322 = vmul.f32 %v2269, %v2269
      %v2323 = vadd.f32 %v2307, %v2308
      %v2324 = vadd.f32 %v2323, %v2309
      %v2325 = vadd.f32 %v2324, %v2310
      %v2326 = vadd.f32 %v2325, %v2311
      %v2327 = vadd.f32 %v2326, %v2312
      %v2328 = vadd.f32 %v2327, %v2313
      %v2329 = vadd.f32 %v2328, %v2314
      %v2330 = vadd.f32 %v2329, %v2315
      %v2331 = vadd.f32 %v2330, %v2316
      %v2332 = vadd.f32 %v2331, %v2317
      %v2333 = vadd.f32 %v2332, %v2318
      %v2334 = vadd.f32 %v2333, %v2319
      %v2335 = vadd.f32 %v2334, %v2320
      %v2336 = vadd.f32 %v2335, %v2321
      %v2337 = vadd.f32 %v2336, %v2322
      %v2338 = vrot.slane %v2337, 4
      %v2339 = vadd.f32 %v2337, %v2338
      %v2340 = vrot.slane %v2339, 2
      %v2341 = vadd.f32 %v2339, %v2340
      %v2342 = vrot.slane %v2341, 1
      %v2343 = vadd.f32 %v2341, %v2342
      %vm2344 = vcmask 1040384
      %v2345 = vsel %vm2344, %v2306, %v2343
      %2346 = vst [vmem:[%s282] sm:$0x3] %v2345
      %s2347 = smul.u32 16, %s22
      %p2348 = scmp.lt.s32.totalorder %s21, 1
      %s2349 = scalar_select %p2348, %s21, 1
      %p2350 = scmp.lt.s32.totalorder %s2347, 31
      %s2351 = scalar_select %p2350, %s2347, 31
      %s2352 = smul.addr %s2349, 32
      %s2353 = sadd.s32 %s2351, %s2352
      %s2354 = smul.addr %s2353, 8
      %s2355 = scalar_lea.vmem %s4, %s2354
      %p2356 = scmp.lt.s32.totalorder %s21, 1
      %s2357 = scalar_select %p2356, %s21, 1
      %p2358 = scmp.lt.s32.totalorder %s22, 1
      %s2359 = scalar_select %p2358, %s22, 1
      %s2360 = smul.addr %s2357, 2
      %s2361 = sadd.s32 %s2359, %s2360
      %s2362 = smul.addr %s2361, 2
      %s2363 = scalar_lea.vmem %s5, %s2362
      // Predicated region
      $region37: #{_encoder_block_impl.3} parent=35 // pred_check
        %p2364 = pneg %p140
      $region38: #{_encoder_block_impl.3} parent=35 // pred_check_branch
        %2366 = sbr.rel (%p2364) target = $region40
      $region39: #{_encoder_block_impl.3} parent=35 // pred_region
        %s2367 = smul.u32 16, %s22
      $region40: #{_encoder_block_impl.3} parent=35 // pred_fallthru
        _
      // Predicated region
      $region41: #{_encoder_block_impl.3} parent=35 // pred_check
        %p2368 = pneg %p168
      $region42: #{_encoder_block_impl.3} parent=35 // pred_check_branch
        %2370 = sbr.rel (%p2368) target = $region44
      $region43: #{_encoder_block_impl.3} parent=35 // pred_region
        _
      $region44: #{_encoder_block_impl.3} parent=35 // pred_fallthru
        _
    $region36: #{_encoder_block_impl.3} parent=5 // pred_fallthru
      _
    %p2371 = scmp.le.s32.totalorder 2, %s12
    // Predicated region
    $region45: #{_encoder_block_impl.3} parent=5 // pred_check
      %p2372 = pneg %p2371
    $region46: #{_encoder_block_impl.3} parent=5 // pred_check_branch
      %2374 = sbr.rel (%p2372) target = $region48
    $region47: #{_encoder_block_impl.3} parent=5 // pred_region
      %s2375 = ssub.s32 %s12, 2
      // Predicated region
      $region49: #{_encoder_block_impl.3} parent=47 // pred_check
        %p2376 = pneg %p146
      $region50: #{_encoder_block_impl.3} parent=47 // pred_check_branch
        %2378 = sbr.rel (%p2376) target = $region52
      $region51: #{_encoder_block_impl.3} parent=47 // pred_region
        %s2379 = smul.u32 16, %s24
        %p2380 = scmp.lt.s32.totalorder %s23, 1
        %s2381 = scalar_select %p2380, %s23, 1
        %p2382 = scmp.lt.s32.totalorder %s2379, 31
        %s2383 = scalar_select %p2382, %s2379, 31
        %s2384 = smul.addr %s2381, 32
        %s2385 = sadd.s32 %s2383, %s2384
        %s2386 = smul.addr %s2385, 8
        %s2387 = scalar_lea.vmem %s4, %s2386
      $region52: #{_encoder_block_impl.3} parent=47 // pred_fallthru
        _
      // Predicated region
      $region53: #{_encoder_block_impl.3} parent=47 // pred_check
        %p2388 = pneg %p174
      $region54: #{_encoder_block_impl.3} parent=47 // pred_check_branch
        %2390 = sbr.rel (%p2388) target = $region56
      $region55: #{_encoder_block_impl.3} parent=47 // pred_region
        %p2391 = scmp.lt.s32.totalorder %s23, 1
        %s2392 = scalar_select %p2391, %s23, 1
        %p2393 = scmp.lt.s32.totalorder %s24, 1
        %s2394 = scalar_select %p2393, %s24, 1
        %s2395 = smul.addr %s2392, 2
        %s2396 = sadd.s32 %s2394, %s2395
        %s2397 = smul.addr %s2396, 2
        %s2398 = scalar_lea.vmem %s5, %s2397
      $region56: #{_encoder_block_impl.3} parent=47 // pred_fallthru
        _
    $region48: #{_encoder_block_impl.3} parent=5 // pred_fallthru
      _
  $region6: #{_encoder_block_impl.3} parent=0 // loop_footer
    %s16 = sadd.s32 1, %s12
  $region7: #{_encoder_block_impl.3} parent=0 // loop_footer_branch
    %11 = sbr.rel target = $region3
  $region8: #{_encoder_block_impl.3} parent=0 // loop_exit
    _

// kernel: _encoder_block_impl.4
$region0: #{_encoder_block_impl.4}
  #allocation0 [shape = 'u32[]', space=smem, size = 0x4, offset = 0x4, fixed_abs, tag = 'smem constant byte address 0x4 - core index']
  #allocation1 [shape = 'u32[144,128]{1,0:T(1,128)}', space=vmem, size = 0x12000, scoped, tag = 'internal scratch']
  #allocation2 [shape = 'f32[10,18,128]{2,1,0:T(8,128)}', space=vmem, size = 0x1e000, scoped, tag = 'scratch operand']
  %s0 = inlined_call_operand.vmem [shape: f32[2,2,10,18,128], index: 0, kind: input, shape index: {}]
  %s1 = inlined_call_operand.vmem [shape: f32[3,3,128,128], index: 1, kind: input, shape index: {}]
  %s2 = inlined_call_operand.vmem [shape: f32[1,1,128], index: 2, kind: input, shape index: {}]
  %s3 = inlined_call_operand.vmem [shape: f32[1,1,128], index: 3, kind: input, shape index: {}]
  %s4 = inlined_call_operand.vmem [shape: f32[2,256,128], index: 4, kind: output, shape index: {0}]
  %s5 = inlined_call_operand.vmem [shape: f32[2,2,2,128], index: 5, kind: output, shape index: {1}]
  %6 = xla_tuple %s4, %s5
  %s7 = sld [smem:[#allocation0]]
  $region65: #{_encoder_block_impl.4} parent=0
    _
  %s9 = ssub.s32 1, %s7
  %s10 = scalar_select 0, %s9, %s7
  loop: start=0, step=1, limit=6
  $region2: #{_encoder_block_impl.4} parent=0 // loop_pre_header
    _
  $region3: #{_encoder_block_impl.4} parent=0 // loop_header
    %s12 = sphi 0, %s16
    %p13 = scmp.ge.s32.totalorder %s12, 6
    %s19 = sphi 0, %s31
    %s20 = sphi 0, %s27
    %s21 = sphi 0, %s19
    %s22 = sphi 0, %s20
    %s23 = sphi 0, %s21
    %s24 = sphi 0, %s22
    %s36 = sphi 0, %s38
    %s39 = sphi 0, %s36
    %s40 = sphi 0, %s39
    %s56 = sphi 0, %s40
    %s60 = sphi 0, %s60
    %s62 = sphi 0, %s60
    %s63 = sphi 0, %s62
    %s77 = sphi 0, %s63
    %s81 = sphi 0, %s81
    %s83 = sphi 0, %s81
    %s84 = sphi 0, %s83
    %s98 = sphi 0, %s84
    %s102 = sphi 0, %s102
    %s104 = sphi 0, %s102
    %s105 = sphi 0, %s104
    %s119 = sphi 0, %s105
    %s127 = sphi 0, %s129
    %s130 = sphi 0, %s127
    %s131 = sphi 0, %s130
    %s147 = sphi 0, %s131
    %s155 = sphi 0, %s157
    %s158 = sphi 0, %s155
    %s159 = sphi 0, %s158
    %s175 = sphi 0, %s159
  $region4: #{_encoder_block_impl.4} parent=0 // loop_header_branch
    %15 = sbr.rel (%p13) target = $region8
  $region5: #{_encoder_block_impl.4} parent=0 // loop_body
    %s17 = ssub.s32 %s12, 1
    %s18 = ssub.s32 %s12, 2
    %s25 = sadd.s32 1, %s20
    %p26 = scmp.ge.s32.totalorder %s25, 2
    %s27 = scalar_select %p26, 0, %s25
    %s28 = sadd.s32 1, %s19
    %s29 = scalar_select %p26, %s28, %s19
    %p30 = scmp.ge.s32.totalorder %s29, 2
    %s31 = scalar_select %p30, 0, %s29
    %s32 = ssub.s32 %s19, %s31
    %s33 = ssub.s32 %s20, %s27
    %s34 = sor.u32 %s32, %s33
    %p35 = scmp.eq.s32.totalorder %s34, 0
    %s37 = sadd.s32 %s36, 1
    %s38 = scalar_select %p35, %s36, %s37
    %p41 = pneg %p35
    %p42 = scmp.eq.s32.totalorder %s12, 3
    %p43 = por %p41, %p42
    %p44 = scmp.ne.s32.totalorder %s36, %s39
    %p45 = scmp.eq.s32.totalorder %s12, 0
    %p46 = por %p44, %p45
    %p47 = scmp.ne.s32.totalorder %s36, %s39
    %p48 = scmp.eq.s32.totalorder %s17, 3
    %p49 = por %p47, %p48
    %p50 = scmp.ne.s32.totalorder %s39, %s40
    %p51 = scmp.eq.s32.totalorder %s17, 0
    %p52 = por %p50, %p51
    %p53 = scmp.ne.s32.totalorder %s39, %s40
    %p54 = scmp.eq.s32.totalorder %s18, 3
    %p55 = por %p53, %p54
    %p57 = scmp.ne.s32.totalorder %s40, %s56
    %p58 = scmp.eq.s32.totalorder %s18, 0
    %p59 = por %p57, %p58
    %s61 = sadd.s32 %s60, 1
    %p64 = scmp.eq.s32.totalorder %s12, 3
    %p65 = scmp.ne.s32.totalorder %s60, %s62
    %p66 = scmp.eq.s32.totalorder %s12, 0
    %p67 = por %p65, %p66
    %p68 = scmp.ne.s32.totalorder %s60, %s62
    %p69 = scmp.eq.s32.totalorder %s17, 3
    %p70 = por %p68, %p69
    %p71 = scmp.ne.s32.totalorder %s62, %s63
    %p72 = scmp.eq.s32.totalorder %s17, 0
    %p73 = por %p71, %p72
    %p74 = scmp.ne.s32.totalorder %s62, %s63
    %p75 = scmp.eq.s32.totalorder %s18, 3
    %p76 = por %p74, %p75
    %p78 = scmp.ne.s32.totalorder %s63, %s77
    %p79 = scmp.eq.s32.totalorder %s18, 0
    %p80 = por %p78, %p79
    %s82 = sadd.s32 %s81, 1
    %p85 = scmp.eq.s32.totalorder %s12, 3
    %p86 = scmp.ne.s32.totalorder %s81, %s83
    %p87 = scmp.eq.s32.totalorder %s12, 0
    %p88 = por %p86, %p87
    %p89 = scmp.ne.s32.totalorder %s81, %s83
    %p90 = scmp.eq.s32.totalorder %s17, 3
    %p91 = por %p89, %p90
    %p92 = scmp.ne.s32.totalorder %s83, %s84
    %p93 = scmp.eq.s32.totalorder %s17, 0
    %p94 = por %p92, %p93
    %p95 = scmp.ne.s32.totalorder %s83, %s84
    %p96 = scmp.eq.s32.totalorder %s18, 3
    %p97 = por %p95, %p96
    %p99 = scmp.ne.s32.totalorder %s84, %s98
    %p100 = scmp.eq.s32.totalorder %s18, 0
    %p101 = por %p99, %p100
    %s103 = sadd.s32 %s102, 1
    %p106 = scmp.eq.s32.totalorder %s12, 3
    %p107 = scmp.ne.s32.totalorder %s102, %s104
    %p108 = scmp.eq.s32.totalorder %s12, 0
    %p109 = por %p107, %p108
    %p110 = scmp.ne.s32.totalorder %s102, %s104
    %p111 = scmp.eq.s32.totalorder %s17, 3
    %p112 = por %p110, %p111
    %p113 = scmp.ne.s32.totalorder %s104, %s105
    %p114 = scmp.eq.s32.totalorder %s17, 0
    %p115 = por %p113, %p114
    %p116 = scmp.ne.s32.totalorder %s104, %s105
    %p117 = scmp.eq.s32.totalorder %s18, 3
    %p118 = por %p116, %p117
    %p120 = scmp.ne.s32.totalorder %s105, %s119
    %p121 = scmp.eq.s32.totalorder %s18, 0
    %p122 = por %p120, %p121
    %s123 = ssub.s32 %s19, %s31
    %s124 = ssub.s32 %s20, %s27
    %s125 = sor.u32 %s123, %s124
    %p126 = scmp.eq.s32.totalorder %s125, 0
    %s128 = sadd.s32 %s127, 1
    %s129 = scalar_select %p126, %s127, %s128
    %p132 = pneg %p126
    %p133 = scmp.eq.s32.totalorder %s12, 3
    %p134 = por %p132, %p133
    %p135 = scmp.ne.s32.totalorder %s127, %s130
    %p136 = scmp.eq.s32.totalorder %s12, 0
    %p137 = por %p135, %p136
    %p138 = scmp.ne.s32.totalorder %s127, %s130
    %p139 = scmp.eq.s32.totalorder %s17, 3
    %p140 = por %p138, %p139
    %p141 = scmp.ne.s32.totalorder %s130, %s131
    %p142 = scmp.eq.s32.totalorder %s17, 0
    %p143 = por %p141, %p142
    %p144 = scmp.ne.s32.totalorder %s130, %s131
    %p145 = scmp.eq.s32.totalorder %s18, 3
    %p146 = por %p144, %p145
    %p148 = scmp.ne.s32.totalorder %s131, %s147
    %p149 = scmp.eq.s32.totalorder %s18, 0
    %p150 = por %p148, %p149
    %s151 = ssub.s32 %s19, %s31
    %s152 = ssub.s32 %s20, %s27
    %s153 = sor.u32 %s151, %s152
    %p154 = scmp.eq.s32.totalorder %s153, 0
    %s156 = sadd.s32 %s155, 1
    %s157 = scalar_select %p154, %s155, %s156
    %p160 = pneg %p154
    %p161 = scmp.eq.s32.totalorder %s12, 3
    %p162 = por %p160, %p161
    %p163 = scmp.ne.s32.totalorder %s155, %s158
    %p164 = scmp.eq.s32.totalorder %s12, 0
    %p165 = por %p163, %p164
    %p166 = scmp.ne.s32.totalorder %s155, %s158
    %p167 = scmp.eq.s32.totalorder %s17, 3
    %p168 = por %p166, %p167
    %p169 = scmp.ne.s32.totalorder %s158, %s159
    %p170 = scmp.eq.s32.totalorder %s17, 0
    %p171 = por %p169, %p170
    %p172 = scmp.ne.s32.totalorder %s158, %s159
    %p173 = scmp.eq.s32.totalorder %s18, 3
    %p174 = por %p172, %p173
    %p176 = scmp.ne.s32.totalorder %s159, %s175
    %p177 = scmp.eq.s32.totalorder %s18, 0
    %p178 = por %p176, %p177
    %p179 = scmp.le.s32.totalorder 1, %s12
    %p180 = scmp.lt.s32.totalorder %s12, 5
    %p181 = pnand %p179, %p180
    %p182 = pneg %p181
    // Predicated region
    $region9: #{_encoder_block_impl.4} parent=5 // pred_check
      _
    $region10: #{_encoder_block_impl.4} parent=5 // pred_check_branch
      %184 = sbr.rel (%p181) target = $region12
    $region11: #{_encoder_block_impl.4} parent=5 // pred_region
      %s185 = ssub.s32 %s12, 1
      // Predicated region
      $region13: #{_encoder_block_impl.4} parent=11 // pred_check
        %p186 = pneg %p73
      $region14: #{_encoder_block_impl.4} parent=11 // pred_check_branch
        %188 = sbr.rel (%p186) target = $region16
      $region15: #{_encoder_block_impl.4} parent=11 // pred_region
        _
      $region16: #{_encoder_block_impl.4} parent=11 // pred_fallthru
        _
      // Predicated region
      $region17: #{_encoder_block_impl.4} parent=11 // pred_check
        %p189 = pneg %p94
      $region18: #{_encoder_block_impl.4} parent=11 // pred_check_branch
        %191 = sbr.rel (%p189) target = $region20
      $region19: #{_encoder_block_impl.4} parent=11 // pred_region
        _
      $region20: #{_encoder_block_impl.4} parent=11 // pred_fallthru
        _
      // Predicated region
      $region21: #{_encoder_block_impl.4} parent=11 // pred_check
        %p192 = pneg %p115
      $region22: #{_encoder_block_impl.4} parent=11 // pred_check_branch
        %194 = sbr.rel (%p192) target = $region24
      $region23: #{_encoder_block_impl.4} parent=11 // pred_region
        _
      $region24: #{_encoder_block_impl.4} parent=11 // pred_fallthru
        _
    $region12: #{_encoder_block_impl.4} parent=5 // pred_fallthru
      _
    %p195 = scmp.lt.s32.totalorder %s12, 4
    // Predicated region
    $region25: #{_encoder_block_impl.4} parent=5 // pred_check
      %p196 = pneg %p195
    $region26: #{_encoder_block_impl.4} parent=5 // pred_check_branch
      %198 = sbr.rel (%p196) target = $region28
    $region27: #{_encoder_block_impl.4} parent=5 // pred_region
      // Predicated region
      $region29: #{_encoder_block_impl.4} parent=27 // pred_check
        %p199 = pneg %p46
      $region30: #{_encoder_block_impl.4} parent=27 // pred_check_branch
        %201 = sbr.rel (%p199) target = $region32
      $region31: #{_encoder_block_impl.4} parent=27 // pred_region
        %p202 = scmp.lt.s32.totalorder %s19, 1
        %s203 = scalar_select %p202, %s19, 1
        %p204 = scmp.lt.s32.totalorder %s20, 1
        %s205 = scalar_select %p204, %s20, 1
        %s206 = smul.addr %s205, 30
        %s207 = smul.addr %s203, 60
        %s208 = sadd.s32 %s206, %s207
        %s209 = smul.addr %s208, 8
        %s210 = scalar_lea.vmem %s0, %s209
      $region32: #{_encoder_block_impl.4} parent=27 // pred_fallthru
        _
    $region28: #{_encoder_block_impl.4} parent=5 // pred_fallthru
      _
    %p211 = scmp.le.s32.totalorder 1, %s12
    %p212 = scmp.lt.s32.totalorder %s12, 5
    %p213 = pnand %p211, %p212
    %p214 = pneg %p213
    // Predicated region
    $region33: #{_encoder_block_impl.4} parent=5 // pred_check
      _
    $region34: #{_encoder_block_impl.4} parent=5 // pred_check_branch
      %216 = sbr.rel (%p213) target = $region36
    $region35: #{_encoder_block_impl.4} parent=5 // pred_region
      %s217 = ssub.s32 %s12, 1
      %p218 = scmp.lt.s32.totalorder %s21, 1
      %s219 = scalar_select %p218, %s21, 1
      %p220 = scmp.lt.s32.totalorder %s22, 1
      %s221 = scalar_select %p220, %s22, 1
      %s222 = smul.addr %s221, 30
      %s223 = smul.addr %s219, 60
      %s224 = sadd.s32 %s222, %s223
      %s225 = smul.addr %s224, 8
      %s226 = scalar_lea.vmem %s0, %s225
      %p227 = pneg %p52
      %p228 = pneg %p49
      %p229 = pneg %p73
      %p230 = pneg %p70
      %p231 = pneg %p94
      %p232 = pneg %p91
      %p233 = pneg %p115
      %p234 = pneg %p112
      %p235 = pneg %p143
      %p236 = pneg %p140
      %s237 = smul.u32 16, %s22
      %p238 = scmp.lt.s32.totalorder %s21, 1
      %s239 = scalar_select %p238, %s21, 1
      %p240 = scmp.lt.s32.totalorder %s237, 31
      %s241 = scalar_select %p240, %s237, 31
      %s242 = smul.addr %s239, 32
      %s243 = sadd.s32 %s241, %s242
      %s244 = smul.addr %s243, 8
      %s245 = scalar_lea.vmem %s4, %s244
      %p246 = pneg %p171
      %p247 = pneg %p168
      %p248 = scmp.lt.s32.totalorder %s21, 1
      %s249 = scalar_select %p248, %s21, 1
      %p250 = scmp.lt.s32.totalorder %s22, 1
      %s251 = scalar_select %p250, %s22, 1
      %s252 = smul.addr %s249, 2
      %s253 = sadd.s32 %s251, %s252
      %s254 = smul.addr %s253, 2
      %s255 = scalar_lea.vmem %s5, %s254
      %p256 = scmp.lt.s32.totalorder %s21, 1
      %s257 = scalar_select %p256, %s21, 1
      %p258 = scmp.lt.s32.totalorder %s22, 1
      %s259 = scalar_select %p258, %s22, 1
      %s260 = smul.addr %s259, 30
      %s261 = smul.addr %s257, 60
      %s262 = sadd.s32 %s260, %s261
      %s263 = smul.addr %s262, 8
      %s264 = scalar_lea.vmem %s0, %s263
      %s265 = smul.u32 16, %s22
      %p266 = scmp.lt.s32.totalorder %s21, 1
      %s267 = scalar_select %p266, %s21, 1
      %p268 = scmp.lt.s32.totalorder %s265, 31
      %s269 = scalar_select %p268, %s265, 31
      %s270 = smul.addr %s267, 32
      %s271 = sadd.s32 %s269, %s270
      %s272 = smul.addr %s271, 8
      %s273 = scalar_lea.vmem %s4, %s272
      %s274 = smul.u32 16, %s22
      %p275 = scmp.lt.s32.totalorder %s21, 1
      %s276 = scalar_select %p275, %s21, 1
      %p277 = scmp.lt.s32.totalorder %s22, 1
      %s278 = scalar_select %p277, %s22, 1
      %s279 = smul.addr %s276, 2
      %s280 = sadd.s32 %s278, %s279
      %s281 = smul.addr %s280, 2
      %s282 = scalar_lea.vmem %s5, %s281
      %v283 = vld [vmem:[%s264] sm:$0xff]
      %v284 = vld [vmem:[%s264 + $0x8] sm:$0xff]
      %v285 = vld [vmem:[%s264 + $0x10] sm:$0x3]
      %v286 = vld [vmem:[%s264 + $0x18] sm:$0xff]
      %v287 = vld [vmem:[%s264 + $0x20] sm:$0xff]
      %v288 = vld [vmem:[%s264 + $0x28] sm:$0x3]
      %v289 = vld [vmem:[%s264 + $0x30] sm:$0xff]
      %v290 = vld [vmem:[%s264 + $0x38] sm:$0xff]
      %v291 = vld [vmem:[%s264 + $0x40] sm:$0x3]
      %v292 = vld [vmem:[%s264 + $0x48] sm:$0xff]
      %v293 = vld [vmem:[%s264 + $0x50] sm:$0xff]
      %v294 = vld [vmem:[%s264 + $0x58] sm:$0x3]
      %v295 = vld [vmem:[%s264 + $0x60] sm:$0xff]
      %v296 = vld [vmem:[%s264 + $0x68] sm:$0xff]
      %v297 = vld [vmem:[%s264 + $0x70] sm:$0x3]
      %v298 = vld [vmem:[%s264 + $0x78] sm:$0xff]
      %v299 = vld [vmem:[%s264 + $0x80] sm:$0xff]
      %v300 = vld [vmem:[%s264 + $0x88] sm:$0x3]
      %v301 = vld [vmem:[%s264 + $0x90] sm:$0xff]
      %v302 = vld [vmem:[%s264 + $0x98] sm:$0xff]
      %v303 = vld [vmem:[%s264 + $0xa0] sm:$0x3]
      %v304 = vld [vmem:[%s264 + $0xa8] sm:$0xff]
      %v305 = vld [vmem:[%s264 + $0xb0] sm:$0xff]
      %v306 = vld [vmem:[%s264 + $0xb8] sm:$0x3]
      %v307 = vld [vmem:[%s264 + $0xc0] sm:$0xff]
      %v308 = vld [vmem:[%s264 + $0xc8] sm:$0xff]
      %v309 = vld [vmem:[%s264 + $0xd0] sm:$0x3]
      %v310 = vld [vmem:[%s264 + $0xd8] sm:$0xff]
      %v311 = vld [vmem:[%s264 + $0xe0] sm:$0xff]
      %v312 = vld [vmem:[%s264 + $0xe8] sm:$0x3]
      %v313 = vld [vmem:[%s2] sm:$0x1]
      %v315 = vlaneseq
      %v316 = vshrl.u32 %v315, 7
      %v317 = vsub.s32 0, %v316
      %v318 = vrot.slane %v313, %v317
      %v320 = vmul.f32 %v283, %v318
      %v321 = vmul.f32 %v284, %v318
      %v322 = vmul.f32 %v285, %v318
      %v323 = vmul.f32 %v286, %v318
      %v324 = vmul.f32 %v287, %v318
      %v325 = vmul.f32 %v288, %v318
      %v326 = vmul.f32 %v289, %v318
      %v327 = vmul.f32 %v290, %v318
      %v328 = vmul.f32 %v291, %v318
      %v329 = vmul.f32 %v292, %v318
      %v330 = vmul.f32 %v293, %v318
      %v331 = vmul.f32 %v294, %v318
      %v332 = vmul.f32 %v295, %v318
      %v333 = vmul.f32 %v296, %v318
      %v334 = vmul.f32 %v297, %v318
      %v335 = vmul.f32 %v298, %v318
      %v336 = vmul.f32 %v299, %v318
      %v337 = vmul.f32 %v300, %v318
      %v338 = vmul.f32 %v301, %v318
      %v339 = vmul.f32 %v302, %v318
      %v340 = vmul.f32 %v303, %v318
      %v341 = vmul.f32 %v304, %v318
      %v342 = vmul.f32 %v305, %v318
      %v343 = vmul.f32 %v306, %v318
      %v344 = vmul.f32 %v307, %v318
      %v345 = vmul.f32 %v308, %v318
      %v346 = vmul.f32 %v309, %v318
      %v347 = vmul.f32 %v310, %v318
      %v348 = vmul.f32 %v311, %v318
      %v349 = vmul.f32 %v312, %v318
      %v350 = vld [vmem:[%s3] sm:$0x1]
      %v352 = vlaneseq
      %v353 = vshrl.u32 %v352, 7
      %v354 = vsub.s32 0, %v353
      %v355 = vrot.slane %v350, %v354
      %v357 = vadd.f32 %v320, %v355
      %v358 = vadd.f32 %v321, %v355
      %v359 = vadd.f32 %v322, %v355
      %v360 = vadd.f32 %v323, %v355
      %v361 = vadd.f32 %v324, %v355
      %v362 = vadd.f32 %v325, %v355
      %v363 = vadd.f32 %v326, %v355
      %v364 = vadd.f32 %v327, %v355
      %v365 = vadd.f32 %v328, %v355
      %v366 = vadd.f32 %v329, %v355
      %v367 = vadd.f32 %v330, %v355
      %v368 = vadd.f32 %v331, %v355
      %v369 = vadd.f32 %v332, %v355
      %v370 = vadd.f32 %v333, %v355
      %v371 = vadd.f32 %v334, %v355
      %v372 = vadd.f32 %v335, %v355
      %v373 = vadd.f32 %v336, %v355
      %v374 = vadd.f32 %v337, %v355
      %v375 = vadd.f32 %v338, %v355
      %v376 = vadd.f32 %v339, %v355
      %v377 = vadd.f32 %v340, %v355
      %v378 = vadd.f32 %v341, %v355
      %v379 = vadd.f32 %v342, %v355
      %v380 = vadd.f32 %v343, %v355
      %v381 = vadd.f32 %v344, %v355
      %v382 = vadd.f32 %v345, %v355
      %v383 = vadd.f32 %v346, %v355
      %v384 = vadd.f32 %v347, %v355
      %v385 = vadd.f32 %v348, %v355
      %v386 = vadd.f32 %v349, %v355
      %v387 = vmax.f32 %v357, 0.0
      %v388 = vmax.f32 %v358, 0.0
      %v389 = vmax.f32 %v359, 0.0
      %v390 = vmax.f32 %v360, 0.0
      %v391 = vmax.f32 %v361, 0.0
      %v392 = vmax.f32 %v362, 0.0
      %v393 = vmax.f32 %v363, 0.0
      %v394 = vmax.f32 %v364, 0.0
      %v395 = vmax.f32 %v365, 0.0
      %v396 = vmax.f32 %v366, 0.0
      %v397 = vmax.f32 %v367, 0.0
      %v398 = vmax.f32 %v368, 0.0
      %v399 = vmax.f32 %v369, 0.0
      %v400 = vmax.f32 %v370, 0.0
      %v401 = vmax.f32 %v371, 0.0
      %v402 = vmax.f32 %v372, 0.0
      %v403 = vmax.f32 %v373, 0.0
      %v404 = vmax.f32 %v374, 0.0
      %v405 = vmax.f32 %v375, 0.0
      %v406 = vmax.f32 %v376, 0.0
      %v407 = vmax.f32 %v377, 0.0
      %v408 = vmax.f32 %v378, 0.0
      %v409 = vmax.f32 %v379, 0.0
      %v410 = vmax.f32 %v380, 0.0
      %v411 = vmax.f32 %v381, 0.0
      %v412 = vmax.f32 %v382, 0.0
      %v413 = vmax.f32 %v383, 0.0
      %v414 = vmax.f32 %v384, 0.0
      %v415 = vmax.f32 %v385, 0.0
      %v416 = vmax.f32 %v386, 0.0
      %417 = vst [vmem:[#allocation2] sm:$0xff] %v387
      %418 = vst [vmem:[#allocation2 + $0x8] sm:$0xff] %v388
      %419 = vst [vmem:[#allocation2 + $0x10] sm:$0x3] %v389
      %420 = vst [vmem:[#allocation2 + $0x18] sm:$0xff] %v390
      %421 = vst [vmem:[#allocation2 + $0x20] sm:$0xff] %v391
      %422 = vst [vmem:[#allocation2 + $0x28] sm:$0x3] %v392
      %423 = vst [vmem:[#allocation2 + $0x30] sm:$0xff] %v393
      %424 = vst [vmem:[#allocation2 + $0x38] sm:$0xff] %v394
      %425 = vst [vmem:[#allocation2 + $0x40] sm:$0x3] %v395
      %426 = vst [vmem:[#allocation2 + $0x48] sm:$0xff] %v396
      %427 = vst [vmem:[#allocation2 + $0x50] sm:$0xff] %v397
      %428 = vst [vmem:[#allocation2 + $0x58] sm:$0x3] %v398
      %429 = vst [vmem:[#allocation2 + $0x60] sm:$0xff] %v399
      %430 = vst [vmem:[#allocation2 + $0x68] sm:$0xff] %v400
      %431 = vst [vmem:[#allocation2 + $0x70] sm:$0x3] %v401
      %432 = vst [vmem:[#allocation2 + $0x78] sm:$0xff] %v402
      %433 = vst [vmem:[#allocation2 + $0x80] sm:$0xff] %v403
      %434 = vst [vmem:[#allocation2 + $0x88] sm:$0x3] %v404
      %435 = vst [vmem:[#allocation2 + $0x90] sm:$0xff] %v405
      %436 = vst [vmem:[#allocation2 + $0x98] sm:$0xff] %v406
      %437 = vst [vmem:[#allocation2 + $0xa0] sm:$0x3] %v407
      %438 = vst [vmem:[#allocation2 + $0xa8] sm:$0xff] %v408
      %439 = vst [vmem:[#allocation2 + $0xb0] sm:$0xff] %v409
      %440 = vst [vmem:[#allocation2 + $0xb8] sm:$0x3] %v410
      %441 = vst [vmem:[#allocation2 + $0xc0] sm:$0xff] %v411
      %442 = vst [vmem:[#allocation2 + $0xc8] sm:$0xff] %v412
      %443 = vst [vmem:[#allocation2 + $0xd0] sm:$0x3] %v413
      %444 = vst [vmem:[#allocation2 + $0xd8] sm:$0xff] %v414
      %445 = vst [vmem:[#allocation2 + $0xe0] sm:$0xff] %v415
      %446 = vst [vmem:[#allocation2 + $0xe8] sm:$0x3] %v416
      %447 = vst [vmem:[#allocation2] sm:$0x1] 0.0
      %448 = vst [vmem:[#allocation2 + $0x18] sm:$0x1] 0.0
      %449 = vst [vmem:[#allocation2 + $0x30] sm:$0x1] 0.0
      %450 = vst [vmem:[#allocation2 + $0x48] sm:$0x1] 0.0
      %451 = vst [vmem:[#allocation2 + $0x60] sm:$0x1] 0.0
      %452 = vst [vmem:[#allocation2 + $0x78] sm:$0x1] 0.0
      %453 = vst [vmem:[#allocation2 + $0x90] sm:$0x1] 0.0
      %454 = vst [vmem:[#allocation2 + $0xa8] sm:$0x1] 0.0
      %455 = vst [vmem:[#allocation2 + $0xc0] sm:$0x1] 0.0
      %456 = vst [vmem:[#allocation2 + $0xd8] sm:$0x1] 0.0
      %457 = vst [vmem:[#allocation2 + $0x11] sm:$0x1] 0.0
      %458 = vst [vmem:[#allocation2 + $0x29] sm:$0x1] 0.0
      %459 = vst [vmem:[#allocation2 + $0x41] sm:$0x1] 0.0
      %460 = vst [vmem:[#allocation2 + $0x59] sm:$0x1] 0.0
      %461 = vst [vmem:[#allocation2 + $0x71] sm:$0x1] 0.0
      %462 = vst [vmem:[#allocation2 + $0x89] sm:$0x1] 0.0
      %463 = vst [vmem:[#allocation2 + $0xa1] sm:$0x1] 0.0
      %464 = vst [vmem:[#allocation2 + $0xb9] sm:$0x1] 0.0
      %465 = vst [vmem:[#allocation2 + $0xd1] sm:$0x1] 0.0
      %466 = vst [vmem:[#allocation2 + $0xe9] sm:$0x1] 0.0
      %p467 = scmp.eq.s32.totalorder %s22, 0
      // Predicated region
      $region37: #{_encoder_block_impl.4} parent=35 // pred_check
        %p468 = pneg %p467
      $region38: #{_encoder_block_impl.4} parent=35 // pred_check_branch
        %470 = sbr.rel (%p468) target = $region40
      $region39: #{_encoder_block_impl.4} parent=35 // pred_region
        %471 = vst [vmem:[#allocation2] sm:$0xff] 0.0
        %472 = vst [vmem:[#allocation2 + $0x8] sm:$0xff] 0.0
        %473 = vst [vmem:[#allocation2 + $0x10] sm:$0x3] 0.0
      $region40: #{_encoder_block_impl.4} parent=35 // pred_fallthru
        _
      %p474 = scmp.eq.s32.totalorder %s22, 1
      // Predicated region
      $region41: #{_encoder_block_impl.4} parent=35 // pred_check
        %p475 = pneg %p474
      $region42: #{_encoder_block_impl.4} parent=35 // pred_check_branch
        %477 = sbr.rel (%p475) target = $region44
      $region43: #{_encoder_block_impl.4} parent=35 // pred_region
        %s478 = scalar_lea.vmem [#allocation2], 216
        %479 = vst [vmem:[%s478] sm:$0xff] 0.0
        %480 = vst [vmem:[%s478 + $0x8] sm:$0xff] 0.0
        %481 = vst [vmem:[%s478 + $0x10] sm:$0x3] 0.0
      $region44: #{_encoder_block_impl.4} parent=35 // pred_fallthru
        _
      %v482 = vld [vmem:[#allocation2] sm:$0xff]
      %v483 = vld [vmem:[#allocation2 + $0x8] sm:$0xff]
      %v484 = vld [vmem:[#allocation2 + $0x18] sm:$0xff]
      %v485 = vld [vmem:[#allocation2 + $0x20] sm:$0xff]
      %v486 = vld [vmem:[#allocation2 + $0x30] sm:$0xff]
      %v487 = vld [vmem:[#allocation2 + $0x38] sm:$0xff]
      %v488 = vld [vmem:[#allocation2 + $0x48] sm:$0xff]
      %v489 = vld [vmem:[#allocation2 + $0x50] sm:$0xff]
      %v490 = vld [vmem:[#allocation2 + $0x60] sm:$0xff]
      %v491 = vld [vmem:[#allocation2 + $0x68] sm:$0xff]
      %v492 = vld [vmem:[#allocation2 + $0x78] sm:$0xff]
      %v493 = vld [vmem:[#allocation2 + $0x80] sm:$0xff]
      %v494 = vld [vmem:[#allocation2 + $0x90] sm:$0xff]
      %v495 = vld [vmem:[#allocation2 + $0x98] sm:$0xff]
      %v496 = vld [vmem:[#allocation2 + $0xa8] sm:$0xff]
      %v497 = vld [vmem:[#allocation2 + $0xb0] sm:$0xff]
      %v498 = vld [vmem:[%s1] sm:$0xff]
      %v499 = vld [vmem:[%s1 + $0x8] sm:$0xff]
      %v500 = vld [vmem:[%s1 + $0x10] sm:$0xff]
      %v501 = vld [vmem:[%s1 + $0x18] sm:$0xff]
      %v502 = vld [vmem:[%s1 + $0x20] sm:$0xff]
      %v503 = vld [vmem:[%s1 + $0x28] sm:$0xff]
      %v504 = vld [vmem:[%s1 + $0x30] sm:$0xff]
      %v505 = vld [vmem:[%s1 + $0x38] sm:$0xff]
      %v506 = vld [vmem:[%s1 + $0x40] sm:$0xff]
      %v507 = vld [vmem:[%s1 + $0x48] sm:$0xff]
      %v508 = vld [vmem:[%s1 + $0x50] sm:$0xff]
      %v509 = vld [vmem:[%s1 + $0x58] sm:$0xff]
      %v510 = vld [vmem:[%s1 + $0x60] sm:$0xff]
      %v511 = vld [vmem:[%s1 + $0x68] sm:$0xff]
      %v512 = vld [vmem:[%s1 + $0x70] sm:$0xff]
      %v513 = vld [vmem:[%s1 + $0x78] sm:$0xff]
      %514 = vmatprep.subr.mxu0 0.0
      %515 = vmatpush1.msra.mxu0 %v498
      %516 = vmatprep.subr.mxu0 0.0
      %517 = vmatpush1.msra.mxu0 %v499
      %518 = vmatprep.subr.mxu0 0.0
      %519 = vmatpush1.msra.mxu0 %v500
      %520 = vmatprep.subr.mxu0 0.0
      %521 = vmatpush1.msra.mxu0 %v501
      %522 = vmatprep.subr.mxu0 0.0
      %523 = vmatpush1.msra.mxu0 %v502
      %524 = vmatprep.subr.mxu0 0.0
      %525 = vmatpush1.msra.mxu0 %v503
      %526 = vmatprep.subr.mxu0 0.0
      %527 = vmatpush1.msra.mxu0 %v504
      %528 = vmatprep.subr.mxu0 0.0
      %529 = vmatpush1.msra.mxu0 %v505
      %530 = vmatprep.subr.mxu0 0.0
      %531 = vmatpush1.msra.mxu0 %v506
      %532 = vmatprep.subr.mxu0 0.0
      %533 = vmatpush1.msra.mxu0 %v507
      %534 = vmatprep.subr.mxu0 0.0
      %535 = vmatpush1.msra.mxu0 %v508
      %536 = vmatprep.subr.mxu0 0.0
      %537 = vmatpush1.msra.mxu0 %v509
      %538 = vmatprep.subr.mxu0 0.0
      %539 = vmatpush1.msra.mxu0 %v510
      %540 = vmatprep.subr.mxu0 0.0
      %541 = vmatpush1.msra.mxu0 %v511
      %542 = vmatprep.subr.mxu0 0.0
      %543 = vmatpush1.msra.mxu0 %v512
      %544 = vmatprep.subr.mxu0 0.0
      %545 = vmatpush1.msra.mxu0 %v513
      %546 = vmatprep.subr.mxu0 0.0
      %547 = vmatpush1.msra.mxu0 0.0
      %548 = vmatprep.subr.mxu0 0.0
      %549 = vmatpush1.msra.mxu0 0.0
      %550 = vmatprep.subr.mxu0 0.0
      %551 = vmatpush1.msra.mxu0 0.0
      %552 = vmatprep.subr.mxu0 0.0
      %553 = vmatpush1.msra.mxu0 0.0
      %554 = vmatprep.subr.mxu0 0.0
      %555 = vmatpush1.msra.mxu0 0.0
      %556 = vmatprep.subr.mxu0 0.0
      %557 = vmatpush1.msra.mxu0 0.0
      %558 = vmatprep.subr.mxu0 0.0
      %559 = vmatpush1.msra.mxu0 0.0
      %560 = vmatprep.subr.mxu0 0.0
      %561 = vmatpush1.msra.mxu0 0.0
      %562 = vmatprep.subr.mxu0 0.0
      %563 = vmatpush1.msra.mxu0 0.0
      %564 = vmatprep.subr.mxu0 0.0
      %565 = vmatpush1.msra.mxu0 0.0
      %566 = vmatprep.subr.mxu0 0.0
      %567 = vmatpush1.msra.mxu0 0.0
      %568 = vmatprep.subr.mxu0 0.0
      %569 = vmatpush1.msra.mxu0 0.0
      %570 = vmatprep.subr.mxu0 0.0
      %571 = vmatpush1.msra.mxu0 0.0
      %572 = vmatprep.subr.mxu0 0.0
      %573 = vmatpush1.msra.mxu0 0.0
      %574 = vmatprep.subr.mxu0 0.0
      %575 = vmatpush1.msra.mxu0 0.0
      %576 = vmatprep.subr.mxu0 0.0
      %577 = vmatpush1.msra.mxu0 0.0
      %578 = vmatprep.mubr.f32.mxu0 0.0
      %579 = vmatmul.mubr.f32.gmra.mrb[0].mxu0 %v482
      %v580 = vpop.f32.mrb[0].mxu0
      %v581 = vadd.f32 0.0, %v580
      %v582 = vpop.f32.mrb[0].mxu0
      %583 = vmatprep.mubr.f32.mxu0 0.0
      %584 = vmatmul.mubr.f32.gmra.mrb[0].mxu0 %v483
      %v585 = vpop.f32.mrb[0].mxu0
      %v586 = vadd.f32 0.0, %v585
      %v587 = vpop.f32.mrb[0].mxu0
      %588 = vmatprep.mubr.f32.mxu0 0.0
      %589 = vmatmul.mubr.f32.gmra.mrb[0].mxu0 %v484
      %v590 = vpop.f32.mrb[0].mxu0
      %v591 = vadd.f32 0.0, %v590
      %v592 = vpop.f32.mrb[0].mxu0
      %593 = vmatprep.mubr.f32.mxu0 0.0
      %594 = vmatmul.mubr.f32.gmra.mrb[0].mxu0 %v485
      %v595 = vpop.f32.mrb[0].mxu0
      %v596 = vadd.f32 0.0, %v595
      %v597 = vpop.f32.mrb[0].mxu0
      %598 = vmatprep.mubr.f32.mxu0 0.0
      %599 = vmatmul.mubr.f32.gmra.mrb[0].mxu0 %v486
      %v600 = vpop.f32.mrb[0].mxu0
      %v601 = vadd.f32 0.0, %v600
      %v602 = vpop.f32.mrb[0].mxu0
      %603 = vmatprep.mubr.f32.mxu0 0.0
      %604 = vmatmul.mubr.f32.gmra.mrb[0].mxu0 %v487
      %v605 = vpop.f32.mrb[0].mxu0
      %v606 = vadd.f32 0.0, %v605
      %v607 = vpop.f32.mrb[0].mxu0
      %608 = vmatprep.mubr.f32.mxu0 0.0
      %609 = vmatmul.mubr.f32.gmra.mrb[0].mxu0 %v488
      %v610 = vpop.f32.mrb[0].mxu0
      %v611 = vadd.f32 0.0, %v610
      %v612 = vpop.f32.mrb[0].mxu0
      %613 = vmatprep.mubr.f32.mxu0 0.0
      %614 = vmatmul.mubr.f32.gmra.mrb[0].mxu0 %v489
      %v615 = vpop.f32.mrb[0].mxu0
      %v616 = vadd.f32 0.0, %v615
      %v617 = vpop.f32.mrb[0].mxu0
      %618 = vmatprep.mubr.f32.mxu0 0.0
      %619 = vmatmul.mubr.f32.gmra.mrb[0].mxu0 %v490
      %v620 = vpop.f32.mrb[0].mxu0
      %v621 = vadd.f32 0.0, %v620
      %v622 = vpop.f32.mrb[0].mxu0
      %623 = vmatprep.mubr.f32.mxu0 0.0
      %624 = vmatmul.mubr.f32.gmra.mrb[0].mxu0 %v491
      %v625 = vpop.f32.mrb[0].mxu0
      %v626 = vadd.f32 0.0, %v625
      %v627 = vpop.f32.mrb[0].mxu0
      %628 = vmatprep.mubr.f32.mxu0 0.0
      %629 = vmatmul.mubr.f32.gmra.mrb[0].mxu0 %v492
      %v630 = vpop.f32.mrb[0].mxu0
      %v631 = vadd.f32 0.0, %v630
      %v632 = vpop.f32.mrb[0].mxu0
      %633 = vmatprep.mubr.f32.mxu0 0.0
      %634 = vmatmul.mubr.f32.gmra.mrb[0].mxu0 %v493
      %v635 = vpop.f32.mrb[0].mxu0
      %v636 = vadd.f32 0.0, %v635
      %v637 = vpop.f32.mrb[0].mxu0
      %638 = vmatprep.mubr.f32.mxu0 0.0
      %639 = vmatmul.mubr.f32.gmra.mrb[0].mxu0 %v494
      %v640 = vpop.f32.mrb[0].mxu0
      %v641 = vadd.f32 0.0, %v640
      %v642 = vpop.f32.mrb[0].mxu0
      %643 = vmatprep.mubr.f32.mxu0 0.0
      %644 = vmatmul.mubr.f32.gmra.mrb[0].mxu0 %v495
      %v645 = vpop.f32.mrb[0].mxu0
      %v646 = vadd.f32 0.0, %v645
      %v647 = vpop.f32.mrb[0].mxu0
      %648 = vmatprep.mubr.f32.mxu0 0.0
      %649 = vmatmul.mubr.f32.gmra.mrb[0].mxu0 %v496
      %v650 = vpop.f32.mrb[0].mxu0
      %v651 = vadd.f32 0.0, %v650
      %v652 = vpop.f32.mrb[0].mxu0
      %653 = vmatprep.mubr.f32.mxu0 0.0
      %654 = vmatmul.mubr.f32.gmra.mrb[0].mxu0 %v497
      %v655 = vpop.f32.mrb[0].mxu0
      %v656 = vadd.f32 0.0, %v655
      %v657 = vpop.f32.mrb[0].mxu0
      %658 = vdwg.mxu0
      %659 = vst [vmem:[%s273] sm:$0xff] %v581
      %660 = vst [vmem:[%s273 + $0x8] sm:$0xff] %v586
      %661 = vst [vmem:[%s273 + $0x10] sm:$0xff] %v591
      %662 = vst [vmem:[%s273 + $0x18] sm:$0xff] %v596
      %663 = vst [vmem:[%s273 + $0x20] sm:$0xff] %v601
      %664 = vst [vmem:[%s273 + $0x28] sm:$0xff] %v606
      %665 = vst [vmem:[%s273 + $0x30] sm:$0xff] %v611
      %666 = vst [vmem:[%s273 + $0x38] sm:$0xff] %v616
      %667 = vst [vmem:[%s273 + $0x40] sm:$0xff] %v621
      %668 = vst [vmem:[%s273 + $0x48] sm:$0xff] %v626
      %669 = vst [vmem:[%s273 + $0x50] sm:$0xff] %v631
      %670 = vst [vmem:[%s273 + $0x58] sm:$0xff] %v636
      %671 = vst [vmem:[%s273 + $0x60] sm:$0xff] %v641
      %672 = vst [vmem:[%s273 + $0x68] sm:$0xff] %v646
      %673 = vst [vmem:[%s273 + $0x70] sm:$0xff] %v651
      %674 = vst [vmem:[%s273 + $0x78] sm:$0xff] %v656
      %v675 = vld [vmem:[%s273] sm:$0xff]
      %v676 = vld [vmem:[%s273 + $0x8] sm:$0xff]
      %v677 = vld [vmem:[%s273 + $0x10] sm:$0xff]
      %v678 = vld [vmem:[%s273 + $0x18] sm:$0xff]
      %v679 = vld [vmem:[%s273 + $0x20] sm:$0xff]
      %v680 = vld [vmem:[%s273 + $0x28] sm:$0xff]
      %v681 = vld [vmem:[%s273 + $0x30] sm:$0xff]
      %v682 = vld [vmem:[%s273 + $0x38] sm:$0xff]
      %v683 = vld [vmem:[%s273 + $0x40] sm:$0xff]
      %v684 = vld [vmem:[%s273 + $0x48] sm:$0xff]
      %v685 = vld [vmem:[%s273 + $0x50] sm:$0xff]
      %v686 = vld [vmem:[%s273 + $0x58] sm:$0xff]
      %v687 = vld [vmem:[%s273 + $0x60] sm:$0xff]
      %v688 = vld [vmem:[%s273 + $0x68] sm:$0xff]
      %v689 = vld [vmem:[%s273 + $0x70] sm:$0xff]
      %v690 = vld [vmem:[%s273 + $0x78] sm:$0xff]
      %v691 = vld [vmem:[#allocation2 + $0x1] sm:$0xff]
      %v692 = vld [vmem:[#allocation2 + $0x9] sm:$0xff]
      %v693 = vld [vmem:[#allocation2 + $0x19] sm:$0xff]
      %v694 = vld [vmem:[#allocation2 + $0x21] sm:$0xff]
      %v695 = vld [vmem:[#allocation2 + $0x31] sm:$0xff]
      %v696 = vld [vmem:[#allocation2 + $0x39] sm:$0xff]
      %v697 = vld [vmem:[#allocation2 + $0x49] sm:$0xff]
      %v698 = vld [vmem:[#allocation2 + $0x51] sm:$0xff]
      %v699 = vld [vmem:[#allocation2 + $0x61] sm:$0xff]
      %v700 = vld [vmem:[#allocation2 + $0x69] sm:$0xff]
      %v701 = vld [vmem:[#allocation2 + $0x79] sm:$0xff]
      %v702 = vld [vmem:[#allocation2 + $0x81] sm:$0xff]
      %v703 = vld [vmem:[#allocation2 + $0x91] sm:$0xff]
      %v704 = vld [vmem:[#allocation2 + $0x99] sm:$0xff]
      %v705 = vld [vmem:[#allocation2 + $0xa9] sm:$0xff]
      %v706 = vld [vmem:[#allocation2 + $0xb1] sm:$0xff]
      %s707 = scalar_lea.vmem %s1, 128
      %v708 = vld [vmem:[%s707] sm:$0xff]
      %v709 = vld [vmem:[%s707 + $0x8] sm:$0xff]
      %v710 = vld [vmem:[%s707 + $0x10] sm:$0xff]
      %v711 = vld [vmem:[%s707 + $0x18] sm:$0xff]
      %v712 = vld [vmem:[%s707 + $0x20] sm:$0xff]
      %v713 = vld [vmem:[%s707 + $0x28] sm:$0xff]
      %v714 = vld [vmem:[%s707 + $0x30] sm:$0xff]
      %v715 = vld [vmem:[%s707 + $0x38] sm:$0xff]
      %v716 = vld [vmem:[%s707 + $0x40] sm:$0xff]
      %v717 = vld [vmem:[%s707 + $0x48] sm:$0xff]
      %v718 = vld [vmem:[%s707 + $0x50] sm:$0xff]
      %v719 = vld [vmem:[%s707 + $0x58] sm:$0xff]
      %v720 = vld [vmem:[%s707 + $0x60] sm:$0xff]
      %v721 = vld [vmem:[%s707 + $0x68] sm:$0xff]
      %v722 = vld [vmem:[%s707 + $0x70] sm:$0xff]
      %v723 = vld [vmem:[%s707 + $0x78] sm:$0xff]
      %724 = vmatprep.subr.mxu0 0.0
      %725 = vmatpush1.msra.mxu0 %v708
      %726 = vmatprep.subr.mxu0 0.0
      %727 = vmatpush1.msra.mxu0 %v709
      %728 = vmatprep.subr.mxu0 0.0
      %729 = vmatpush1.msra.mxu0 %v710
      %730 = vmatprep.subr.mxu0 0.0
      %731 = vmatpush1.msra.mxu0 %v711
      %732 = vmatprep.subr.mxu0 0.0
      %733 = vmatpush1.msra.mxu0 %v712
      %734 = vmatprep.subr.mxu0 0.0
      %735 = vmatpush1.msra.mxu0 %v713
      %736 = vmatprep.subr.mxu0 0.0
      %737 = vmatpush1.msra.mxu0 %v714
      %738 = vmatprep.subr.mxu0 0.0
      %739 = vmatpush1.msra.mxu0 %v715
      %740 = vmatprep.subr.mxu0 0.0
      %741 = vmatpush1.msra.mxu0 %v716
      %742 = vmatprep.subr.mxu0 0.0
      %743 = vmatpush1.msra.mxu0 %v717
      %744 = vmatprep.subr.mxu0 0.0
      %745 = vmatpush1.msra.mxu0 %v718
      %746 = vmatprep.subr.mxu0 0.0
      %747 = vmatpush1.msra.mxu0 %v719
      %748 = vmatprep.subr.mxu0 0.0
      %749 = vmatpush1.msra.mxu0 %v720
      %750 = vmatprep.subr.mxu0 0.0
      %751 = vmatpush1.msra.mxu0 %v721
      %752 = vmatprep.subr.mxu0 0.0
      %753 = vmatpush1.msra.mxu0 %v722
      %754 = vmatprep.subr.mxu0 0.0
      %755 = vmatpush1.msra.mxu0 %v723
      %756 = vmatprep.subr.mxu0 0.0
      %757 = vmatpush1.msra.mxu0 0.0
      %758 = vmatprep.subr.mxu0 0.0
      %759 = vmatpush1.msra.mxu0 0.0
      %760 = vmatprep.subr.mxu0 0.0
      %761 = vmatpush1.msra.mxu0 0.0
      %762 = vmatprep.subr.mxu0 0.0
      %763 = vmatpush1.msra.mxu0 0.0
      %764 = vmatprep.subr.mxu0 0.0
      %765 = vmatpush1.msra.mxu0 0.0
      %766 = vmatprep.subr.mxu0 0.0
      %767 = vmatpush1.msra.mxu0 0.0
      %768 = vmatprep.subr.mxu0 0.0
      %769 = vmatpush1.msra.mxu0 0.0
      %770 = vmatprep.subr.mxu0 0.0
      %771 = vmatpush1.msra.mxu0 0.0
      %772 = vmatprep.subr.mxu0 0.0
      %773 = vmatpush1.msra.mxu0 0.0
      %774 = vmatprep.subr.mxu0 0.0
      %775 = vmatpush1.msra.mxu0 0.0
      %776 = vmatprep.subr.mxu0 0.0
      %777 = vmatpush1.msra.mxu0 0.0
      %778 = vmatprep.subr.mxu0 0.0
      %779 = vmatpush1.msra.mxu0 0.0
      %780 = vmatprep.subr.mxu0 0.0
      %781 = vmatpush1.msra.mxu0 0.0
      %782 = vmatprep.subr.mxu0 0.0
      %783 = vmatpush1.msra.mxu0 0.0
      %784 = vmatprep.subr.mxu0 0.0
      %785 = vmatpush1.msra.mxu0 0.0
      %786 = vmatprep.subr.mxu0 0.0
      %787 = vmatpush1.msra.mxu0 0.0
      %788 = vmatprep.mubr.f32.mxu0 0.0
      %789 = vmatmul.mubr.f32.gmra.mrb[0].mxu0 %v691
      %v790 = vpop.f32.mrb[0].mxu0
      %v791 = vadd.f32 0.0, %v790
      %v792 = vpop.f32.mrb[0].mxu0
      %793 = vmatprep.mubr.f32.mxu0 0.0
      %794 = vmatmul.mubr.f32.gmra.mrb[0].mxu0 %v692
      %v795 = vpop.f32.mrb[0].mxu0
      %v796 = vadd.f32 0.0, %v795
      %v797 = vpop.f32.mrb[0].mxu0
      %798 = vmatprep.mubr.f32.mxu0 0.0
      %799 = vmatmul.mubr.f32.gmra.mrb[0].mxu0 %v693
      %v800 = vpop.f32.mrb[0].mxu0
      %v801 = vadd.f32 0.0, %v800
      %v802 = vpop.f32.mrb[0].mxu0
      %803 = vmatprep.mubr.f32.mxu0 0.0
      %804 = vmatmul.mubr.f32.gmra.mrb[0].mxu0 %v694
      %v805 = vpop.f32.mrb[0].mxu0
      %v806 = vadd.f32 0.0, %v805
      %v807 = vpop.f32.mrb[0].mxu0
      %808 = vmatprep.mubr.f32.mxu0 0.0
      %809 = vmatmul.mubr.f32.gmra.mrb[0].mxu0 %v695
      %v810 = vpop.f32.mrb[0].mxu0
      %v811 = vadd.f32 0.0, %v810
      %v812 = vpop.f32.mrb[0].mxu0
      %813 = vmatprep.mubr.f32.mxu0 0.0
      %814 = vmatmul.mubr.f32.gmra.mrb[0].mxu0 %v696
      %v815 = vpop.f32.mrb[0].mxu0
      %v816 = vadd.f32 0.0, %v815
      %v817 = vpop.f32.mrb[0].mxu0
      %818 = vmatprep.mubr.f32.mxu0 0.0
      %819 = vmatmul.mubr.f32.gmra.mrb[0].mxu0 %v697
      %v820 = vpop.f32.mrb[0].mxu0
      %v821 = vadd.f32 0.0, %v820
      %v822 = vpop.f32.mrb[0].mxu0
      %823 = vmatprep.mubr.f32.mxu0 0.0
      %824 = vmatmul.mubr.f32.gmra.mrb[0].mxu0 %v698
      %v825 = vpop.f32.mrb[0].mxu0
      %v826 = vadd.f32 0.0, %v825
      %v827 = vpop.f32.mrb[0].mxu0
      %828 = vmatprep.mubr.f32.mxu0 0.0
      %829 = vmatmul.mubr.f32.gmra.mrb[0].mxu0 %v699
      %v830 = vpop.f32.mrb[0].mxu0
      %v831 = vadd.f32 0.0, %v830
      %v832 = vpop.f32.mrb[0].mxu0
      %833 = vmatprep.mubr.f32.mxu0 0.0
      %834 = vmatmul.mubr.f32.gmra.mrb[0].mxu0 %v700
      %v835 = vpop.f32.mrb[0].mxu0
      %v836 = vadd.f32 0.0, %v835
      %v837 = vpop.f32.mrb[0].mxu0
      %838 = vmatprep.mubr.f32.mxu0 0.0
      %839 = vmatmul.mubr.f32.gmra.mrb[0].mxu0 %v701
      %v840 = vpop.f32.mrb[0].mxu0
      %v841 = vadd.f32 0.0, %v840
      %v842 = vpop.f32.mrb[0].mxu0
      %843 = vmatprep.mubr.f32.mxu0 0.0
      %844 = vmatmul.mubr.f32.gmra.mrb[0].mxu0 %v702
      %v845 = vpop.f32.mrb[0].mxu0
      %v846 = vadd.f32 0.0, %v845
      %v847 = vpop.f32.mrb[0].mxu0
      %848 = vmatprep.mubr.f32.mxu0 0.0
      %849 = vmatmul.mubr.f32.gmra.mrb[0].mxu0 %v703
      %v850 = vpop.f32.mrb[0].mxu0
      %v851 = vadd.f32 0.0, %v850
      %v852 = vpop.f32.mrb[0].mxu0
      %853 = vmatprep.mubr.f32.mxu0 0.0
      %854 = vmatmul.mubr.f32.gmra.mrb[0].mxu0 %v704
      %v855 = vpop.f32.mrb[0].mxu0
      %v856 = vadd.f32 0.0, %v855
      %v857 = vpop.f32.mrb[0].mxu0
      %858 = vmatprep.mubr.f32.mxu0 0.0
      %859 = vmatmul.mubr.f32.gmra.mrb[0].mxu0 %v705
      %v860 = vpop.f32.mrb[0].mxu0
      %v861 = vadd.f32 0.0, %v860
      %v862 = vpop.f32.mrb[0].mxu0
      %863 = vmatprep.mubr.f32.mxu0 0.0
      %864 = vmatmul.mubr.f32.gmra.mrb[0].mxu0 %v706
      %v865 = vpop.f32.mrb[0].mxu0
      %v866 = vadd.f32 0.0, %v865
      %v867 = vpop.f32.mrb[0].mxu0
      %868 = vdwg.mxu0
      %v869 = vadd.f32 %v675, %v791
      %v870 = vadd.f32 %v676, %v796
      %v871 = vadd.f32 %v677, %v801
      %v872 = vadd.f32 %v678, %v806
      %v873 = vadd.f32 %v679, %v811
      %v874 = vadd.f32 %v680, %v816
      %v875 = vadd.f32 %v681, %v821
      %v876 = vadd.f32 %v682, %v826
      %v877 = vadd.f32 %v683, %v831
      %v878 = vadd.f32 %v684, %v836
      %v879 = vadd.f32 %v685, %v841
      %v880 = vadd.f32 %v686, %v846
      %v881 = vadd.f32 %v687, %v851
      %v882 = vadd.f32 %v688, %v856
      %v883 = vadd.f32 %v689, %v861
      %v884 = vadd.f32 %v690, %v866
      %885 = vst [vmem:[%s273] sm:$0xff] %v869
      %886 = vst [vmem:[%s273 + $0x8] sm:$0xff] %v870
      %887 = vst [vmem:[%s273 + $0x10] sm:$0xff] %v871
      %888 = vst [vmem:[%s273 + $0x18] sm:$0xff] %v872
      %889 = vst [vmem:[%s273 + $0x20] sm:$0xff] %v873
      %890 = vst [vmem:[%s273 + $0x28] sm:$0xff] %v874
      %891 = vst [vmem:[%s273 + $0x30] sm:$0xff] %v875
      %892 = vst [vmem:[%s273 + $0x38] sm:$0xff] %v876
      %893 = vst [vmem:[%s273 + $0x40] sm:$0xff] %v877
      %894 = vst [vmem:[%s273 + $0x48] sm:$0xff] %v878
      %895 = vst [vmem:[%s273 + $0x50] sm:$0xff] %v879
      %896 = vst [vmem:[%s273 + $0x58] sm:$0xff] %v880
      %897 = vst [vmem:[%s273 + $0x60] sm:$0xff] %v881
      %898 = vst [vmem:[%s273 + $0x68] sm:$0xff] %v882
      %899 = vst [vmem:[%s273 + $0x70] sm:$0xff] %v883
      %900 = vst [vmem:[%s273 + $0x78] sm:$0xff] %v884
      %v901 = vld [vmem:[%s273] sm:$0xff]
      %v902 = vld [vmem:[%s273 + $0x8] sm:$0xff]
      %v903 = vld [vmem:[%s273 + $0x10] sm:$0xff]
      %v904 = vld [vmem:[%s273 + $0x18] sm:$0xff]
      %v905 = vld [vmem:[%s273 + $0x20] sm:$0xff]
      %v906 = vld [vmem:[%s273 + $0x28] sm:$0xff]
      %v907 = vld [vmem:[%s273 + $0x30] sm:$0xff]
      %v908 = vld [vmem:[%s273 + $0x38] sm:$0xff]
      %v909 = vld [vmem:[%s273 + $0x40] sm:$0xff]
      %v910 = vld [vmem:[%s273 + $0x48] sm:$0xff]
      %v911 = vld [vmem:[%s273 + $0x50] sm:$0xff]
      %v912 = vld [vmem:[%s273 + $0x58] sm:$0xff]
      %v913 = vld [vmem:[%s273 + $0x60] sm:$0xff]
      %v914 = vld [vmem:[%s273 + $0x68] sm:$0xff]
      %v915 = vld [vmem:[%s273 + $0x70] sm:$0xff]
      %v916 = vld [vmem:[%s273 + $0x78] sm:$0xff]
      %v917 = vld [vmem:[#allocation2 + $0x2] sm:$0xff]
      %v918 = vld [vmem:[#allocation2 + $0xa] sm:$0xff]
      %v919 = vld [vmem:[#allocation2 + $0x1a] sm:$0xff]
      %v920 = vld [vmem:[#allocation2 + $0x22] sm:$0xff]
      %v921 = vld [vmem:[#allocation2 + $0x32] sm:$0xff]
      %v922 = vld [vmem:[#allocation2 + $0x3a] sm:$0xff]
      %v923 = vld [vmem:[#allocation2 + $0x4a] sm:$0xff]
      %v924 = vld [vmem:[#allocation2 + $0x52] sm:$0xff]
      %v925 = vld [vmem:[#allocation2 + $0x62] sm:$0xff]
      %v926 = vld [vmem:[#allocation2 + $0x6a] sm:$0xff]
      %v927 = vld [vmem:[#allocation2 + $0x7a] sm:$0xff]
      %v928 = vld [vmem:[#allocation2 + $0x82] sm:$0xff]
      %v929 = vld [vmem:[#allocation2 + $0x92] sm:$0xff]
      %v930 = vld [vmem:[#allocation2 + $0x9a] sm:$0xff]
      %v931 = vld [vmem:[#allocation2 + $0xaa] sm:$0xff]
      %v932 = vld [vmem:[#allocation2 + $0xb2] sm:$0xff]
      %s933 = scalar_lea.vmem %s1, 256
      %v934 = vld [vmem:[%s933] sm:$0xff]
      %v935 = vld [vmem:[%s933 + $0x8] sm:$0xff]
      %v936 = vld [vmem:[%s933 + $0x10] sm:$0xff]
      %v937 = vld [vmem:[%s933 + $0x18] sm:$0xff]
      %v938 = vld [vmem:[%s933 + $0x20] sm:$0xff]
      %v939 = vld [vmem:[%s933 + $0x28] sm:$0xff]
      %v940 = vld [vmem:[%s933 + $0x30] sm:$0xff]
      %v941 = vld [vmem:[%s933 + $0x38] sm:$0xff]
      %v942 = vld [vmem:[%s933 + $0x40] sm:$0xff]
      %v943 = vld [vmem:[%s933 + $0x48] sm:$0xff]
      %v944 = vld [vmem:[%s933 + $0x50] sm:$0xff]
      %v945 = vld [vmem:[%s933 + $0x58] sm:$0xff]
      %v946 = vld [vmem:[%s933 + $0x60] sm:$0xff]
      %v947 = vld [vmem:[%s933 + $0x68] sm:$0xff]
      %v948 = vld [vmem:[%s933 + $0x70] sm:$0xff]
      %v949 = vld [vmem:[%s933 + $0x78] sm:$0xff]
      %950 = vmatprep.subr.mxu0 0.0
      %951 = vmatpush1.msra.mxu0 %v934
      %952 = vmatprep.subr.mxu0 0.0
      %953 = vmatpush1.msra.mxu0 %v935
      %954 = vmatprep.subr.mxu0 0.0
      %955 = vmatpush1.msra.mxu0 %v936
      %956 = vmatprep.subr.mxu0 0.0
      %957 = vmatpush1.msra.mxu0 %v937
      %958 = vmatprep.subr.mxu0 0.0
      %959 = vmatpush1.msra.mxu0 %v938
      %960 = vmatprep.subr.mxu0 0.0
      %961 = vmatpush1.msra.mxu0 %v939
      %962 = vmatprep.subr.mxu0 0.0
      %963 = vmatpush1.msra.mxu0 %v940
      %964 = vmatprep.subr.mxu0 0.0
      %965 = vmatpush1.msra.mxu0 %v941
      %966 = vmatprep.subr.mxu0 0.0
      %967 = vmatpush1.msra.mxu0 %v942
      %968 = vmatprep.subr.mxu0 0.0
      %969 = vmatpush1.msra.mxu0 %v943
      %970 = vmatprep.subr.mxu0 0.0
      %971 = vmatpush1.msra.mxu0 %v944
      %972 = vmatprep.subr.mxu0 0.0
      %973 = vmatpush1.msra.mxu0 %v945
      %974 = vmatprep.subr.mxu0 0.0
      %975 = vmatpush1.msra.mxu0 %v946
      %976 = vmatprep.subr.mxu0 0.0
      %977 = vmatpush1.msra.mxu0 %v947
      %978 = vmatprep.subr.mxu0 0.0
      %979 = vmatpush1.msra.mxu0 %v948
      %980 = vmatprep.subr.mxu0 0.0
      %981 = vmatpush1.msra.mxu0 %v949
      %982 = vmatprep.subr.mxu0 0.0
      %983 = vmatpush1.msra.mxu0 0.0
      %984 = vmatprep.subr.mxu0 0.0
      %985 = vmatpush1.msra.mxu0 0.0
      %986 = vmatprep.subr.mxu0 0.0
      %987 = vmatpush1.msra.mxu0 0.0
      %988 = vmatprep.subr.mxu0 0.0
      %989 = vmatpush1.msra.mxu0 0.0
      %990 = vmatprep.subr.mxu0 0.0
      %991 = vmatpush1.msra.mxu0 0.0
      %992 = vmatprep.subr.mxu0 0.0
      %993 = vmatpush1.msra.mxu0 0.0
      %994 = vmatprep.subr.mxu0 0.0
      %995 = vmatpush1.msra.mxu0 0.0
      %996 = vmatprep.subr.mxu0 0.0
      %997 = vmatpush1.msra.mxu0 0.0
      %998 = vmatprep.subr.mxu0 0.0
      %999 = vmatpush1.msra.mxu0 0.0
      %1000 = vmatprep.subr.mxu0 0.0
      %1001 = vmatpush1.msra.mxu0 0.0
      %1002 = vmatprep.subr.mxu0 0.0
      %1003 = vmatpush1.msra.mxu0 0.0
      %1004 = vmatprep.subr.mxu0 0.0
      %1005 = vmatpush1.msra.mxu0 0.0
      %1006 = vmatprep.subr.mxu0 0.0
      %1007 = vmatpush1.msra.mxu0 0.0
      %1008 = vmatprep.subr.mxu0 0.0
      %1009 = vmatpush1.msra.mxu0 0.0
      %1010 = vmatprep.subr.mxu0 0.0
      %1011 = vmatpush1.msra.mxu0 0.0
      %1012 = vmatprep.subr.mxu0 0.0
      %1013 = vmatpush1.msra.mxu0 0.0
      %1014 = vmatprep.mubr.f32.mxu0 0.0
      %1015 = vmatmul.mubr.f32.gmra.mrb[0].mxu0 %v917
      %v1016 = vpop.f32.mrb[0].mxu0
      %v1017 = vadd.f32 0.0, %v1016
      %v1018 = vpop.f32.mrb[0].mxu0
      %1019 = vmatprep.mubr.f32.mxu0 0.0
      %1020 = vmatmul.mubr.f32.gmra.mrb[0].mxu0 %v918
      %v1021 = vpop.f32.mrb[0].mxu0
      %v1022 = vadd.f32 0.0, %v1021
      %v1023 = vpop.f32.mrb[0].mxu0
      %1024 = vmatprep.mubr.f32.mxu0 0.0
      %1025 = vmatmul.mubr.f32.gmra.mrb[0].mxu0 %v919
      %v1026 = vpop.f32.mrb[0].mxu0
      %v1027 = vadd.f32 0.0, %v1026
      %v1028 = vpop.f32.mrb[0].mxu0
      %1029 = vmatprep.mubr.f32.mxu0 0.0
      %1030 = vmatmul.mubr.f32.gmra.mrb[0].mxu0 %v920
      %v1031 = vpop.f32.mrb[0].mxu0
      %v1032 = vadd.f32 0.0, %v1031
      %v1033 = vpop.f32.mrb[0].mxu0
      %1034 = vmatprep.mubr.f32.mxu0 0.0
      %1035 = vmatmul.mubr.f32.gmra.mrb[0].mxu0 %v921
      %v1036 = vpop.f32.mrb[0].mxu0
      %v1037 = vadd.f32 0.0, %v1036
      %v1038 = vpop.f32.mrb[0].mxu0
      %1039 = vmatprep.mubr.f32.mxu0 0.0
      %1040 = vmatmul.mubr.f32.gmra.mrb[0].mxu0 %v922
      %v1041 = vpop.f32.mrb[0].mxu0
      %v1042 = vadd.f32 0.0, %v1041
      %v1043 = vpop.f32.mrb[0].mxu0
      %1044 = vmatprep.mubr.f32.mxu0 0.0
      %1045 = vmatmul.mubr.f32.gmra.mrb[0].mxu0 %v923
      %v1046 = vpop.f32.mrb[0].mxu0
      %v1047 = vadd.f32 0.0, %v1046
      %v1048 = vpop.f32.mrb[0].mxu0
      %1049 = vmatprep.mubr.f32.mxu0 0.0
      %1050 = vmatmul.mubr.f32.gmra.mrb[0].mxu0 %v924
      %v1051 = vpop.f32.mrb[0].mxu0
      %v1052 = vadd.f32 0.0, %v1051
      %v1053 = vpop.f32.mrb[0].mxu0
      %1054 = vmatprep.mubr.f32.mxu0 0.0
      %1055 = vmatmul.mubr.f32.gmra.mrb[0].mxu0 %v925
      %v1056 = vpop.f32.mrb[0].mxu0
      %v1057 = vadd.f32 0.0, %v1056
      %v1058 = vpop.f32.mrb[0].mxu0
      %1059 = vmatprep.mubr.f32.mxu0 0.0
      %1060 = vmatmul.mubr.f32.gmra.mrb[0].mxu0 %v926
      %v1061 = vpop.f32.mrb[0].mxu0
      %v1062 = vadd.f32 0.0, %v1061
      %v1063 = vpop.f32.mrb[0].mxu0
      %1064 = vmatprep.mubr.f32.mxu0 0.0
      %1065 = vmatmul.mubr.f32.gmra.mrb[0].mxu0 %v927
      %v1066 = vpop.f32.mrb[0].mxu0
      %v1067 = vadd.f32 0.0, %v1066
      %v1068 = vpop.f32.mrb[0].mxu0
      %1069 = vmatprep.mubr.f32.mxu0 0.0
      %1070 = vmatmul.mubr.f32.gmra.mrb[0].mxu0 %v928
      %v1071 = vpop.f32.mrb[0].mxu0
      %v1072 = vadd.f32 0.0, %v1071
      %v1073 = vpop.f32.mrb[0].mxu0
      %1074 = vmatprep.mubr.f32.mxu0 0.0
      %1075 = vmatmul.mubr.f32.gmra.mrb[0].mxu0 %v929
      %v1076 = vpop.f32.mrb[0].mxu0
      %v1077 = vadd.f32 0.0, %v1076
      %v1078 = vpop.f32.mrb[0].mxu0
      %1079 = vmatprep.mubr.f32.mxu0 0.0
      %1080 = vmatmul.mubr.f32.gmra.mrb[0].mxu0 %v930
      %v1081 = vpop.f32.mrb[0].mxu0
      %v1082 = vadd.f32 0.0, %v1081
      %v1083 = vpop.f32.mrb[0].mxu0
      %1084 = vmatprep.mubr.f32.mxu0 0.0
      %1085 = vmatmul.mubr.f32.gmra.mrb[0].mxu0 %v931
      %v1086 = vpop.f32.mrb[0].mxu0
      %v1087 = vadd.f32 0.0, %v1086
      %v1088 = vpop.f32.mrb[0].mxu0
      %1089 = vmatprep.mubr.f32.mxu0 0.0
      %1090 = vmatmul.mubr.f32.gmra.mrb[0].mxu0 %v932
      %v1091 = vpop.f32.mrb[0].mxu0
      %v1092 = vadd.f32 0.0, %v1091
      %v1093 = vpop.f32.mrb[0].mxu0
      %1094 = vdwg.mxu0
      %v1095 = vadd.f32 %v901, %v1017
      %v1096 = vadd.f32 %v902, %v1022
      %v1097 = vadd.f32 %v903, %v1027
      %v1098 = vadd.f32 %v904, %v1032
      %v1099 = vadd.f32 %v905, %v1037
      %v1100 = vadd.f32 %v906, %v1042
      %v1101 = vadd.f32 %v907, %v1047
      %v1102 = vadd.f32 %v908, %v1052
      %v1103 = vadd.f32 %v909, %v1057
      %v1104 = vadd.f32 %v910, %v1062
      %v1105 = vadd.f32 %v911, %v1067
      %v1106 = vadd.f32 %v912, %v1072
      %v1107 = vadd.f32 %v913, %v1077
      %v1108 = vadd.f32 %v914, %v1082
      %v1109 = vadd.f32 %v915, %v1087
      %v1110 = vadd.f32 %v916, %v1092
      %1111 = vst [vmem:[%s273] sm:$0xff] %v1095
      %1112 = vst [vmem:[%s273 + $0x8] sm:$0xff] %v1096
      %1113 = vst [vmem:[%s273 + $0x10] sm:$0xff] %v1097
      %1114 = vst [vmem:[%s273 + $0x18] sm:$0xff] %v1098
      %1115 = vst [vmem:[%s273 + $0x20] sm:$0xff] %v1099
      %1116 = vst [vmem:[%s273 + $0x28] sm:$0xff] %v1100
      %1117 = vst [vmem:[%s273 + $0x30] sm:$0xff] %v1101
      %1118 = vst [vmem:[%s273 + $0x38] sm:$0xff] %v1102
      %1119 = vst [vmem:[%s273 + $0x40] sm:$0xff] %v1103
      %1120 = vst [vmem:[%s273 + $0x48] sm:$0xff] %v1104
      %1121 = vst [vmem:[%s273 + $0x50] sm:$0xff] %v1105
      %1122 = vst [vmem:[%s273 + $0x58] sm:$0xff] %v1106
      %1123 = vst [vmem:[%s273 + $0x60] sm:$0xff] %v1107
      %1124 = vst [vmem:[%s273 + $0x68] sm:$0xff] %v1108
      %1125 = vst [vmem:[%s273 + $0x70] sm:$0xff] %v1109
      %1126 = vst [vmem:[%s273 + $0x78] sm:$0xff] %v1110
      %v1127 = vld [vmem:[%s273] sm:$0xff]
      %v1128 = vld [vmem:[%s273 + $0x8] sm:$0xff]
      %v1129 = vld [vmem:[%s273 + $0x10] sm:$0xff]
      %v1130 = vld [vmem:[%s273 + $0x18] sm:$0xff]
      %v1131 = vld [vmem:[%s273 + $0x20] sm:$0xff]
      %v1132 = vld [vmem:[%s273 + $0x28] sm:$0xff]
      %v1133 = vld [vmem:[%s273 + $0x30] sm:$0xff]
      %v1134 = vld [vmem:[%s273 + $0x38] sm:$0xff]
      %v1135 = vld [vmem:[%s273 + $0x40] sm:$0xff]
      %v1136 = vld [vmem:[%s273 + $0x48] sm:$0xff]
      %v1137 = vld [vmem:[%s273 + $0x50] sm:$0xff]
      %v1138 = vld [vmem:[%s273 + $0x58] sm:$0xff]
      %v1139 = vld [vmem:[%s273 + $0x60] sm:$0xff]
      %v1140 = vld [vmem:[%s273 + $0x68] sm:$0xff]
      %v1141 = vld [vmem:[%s273 + $0x70] sm:$0xff]
      %v1142 = vld [vmem:[%s273 + $0x78] sm:$0xff]
      %s1143 = scalar_lea.vmem [#allocation2], 24
      %v1144 = vld [vmem:[%s1143] sm:$0xff]
      %v1145 = vld [vmem:[%s1143 + $0x8] sm:$0xff]
      %v1146 = vld [vmem:[%s1143 + $0x18] sm:$0xff]
      %v1147 = vld [vmem:[%s1143 + $0x20] sm:$0xff]
      %v1148 = vld [vmem:[%s1143 + $0x30] sm:$0xff]
      %v1149 = vld [vmem:[%s1143 + $0x38] sm:$0xff]
      %v1150 = vld [vmem:[%s1143 + $0x48] sm:$0xff]
      %v1151 = vld [vmem:[%s1143 + $0x50] sm:$0xff]
      %v1152 = vld [vmem:[%s1143 + $0x60] sm:$0xff]
      %v1153 = vld [vmem:[%s1143 + $0x68] sm:$0xff]
      %v1154 = vld [vmem:[%s1143 + $0x78] sm:$0xff]
      %v1155 = vld [vmem:[%s1143 + $0x80] sm:$0xff]
      %v1156 = vld [vmem:[%s1143 + $0x90] sm:$0xff]
      %v1157 = vld [vmem:[%s1143 + $0x98] sm:$0xff]
      %v1158 = vld [vmem:[%s1143 + $0xa8] sm:$0xff]
      %v1159 = vld [vmem:[%s1143 + $0xb0] sm:$0xff]
      %s1160 = scalar_lea.vmem %s1, 384
      %v1161 = vld [vmem:[%s1160] sm:$0xff]
      %v1162 = vld [vmem:[%s1160 + $0x8] sm:$0xff]
      %v1163 = vld [vmem:[%s1160 + $0x10] sm:$0xff]
      %v1164 = vld [vmem:[%s1160 + $0x18] sm:$0xff]
      %v1165 = vld [vmem:[%s1160 + $0x20] sm:$0xff]
      %v1166 = vld [vmem:[%s1160 + $0x28] sm:$0xff]
      %v1167 = vld [vmem:[%s1160 + $0x30] sm:$0xff]
      %v1168 = vld [vmem:[%s1160 + $0x38] sm:$0xff]
      %v1169 = vld [vmem:[%s1160 + $0x40] sm:$0xff]
      %v1170 = vld [vmem:[%s1160 + $0x48] sm:$0xff]
      %v1171 = vld [vmem:[%s1160 + $0x50] sm:$0xff]
      %v1172 = vld [vmem:[%s1160 + $0x58] sm:$0xff]
      %v1173 = vld [vmem:[%s1160 + $0x60] sm:$0xff]
      %v1174 = vld [vmem:[%s1160 + $0x68] sm:$0xff]
      %v1175 = vld [vmem:[%s1160 + $0x70] sm:$0xff]
      %v1176 = vld [vmem:[%s1160 + $0x78] sm:$0xff]
      %1177 = vmatprep.subr.mxu0 0.0
      %1178 = vmatpush1.msra.mxu0 %v1161
      %1179 = vmatprep.subr.mxu0 0.0
      %1180 = vmatpush1.msra.mxu0 %v1162
      %1181 = vmatprep.subr.mxu0 0.0
      %1182 = vmatpush1.msra.mxu0 %v1163
      %1183 = vmatprep.subr.mxu0 0.0
      %1184 = vmatpush1.msra.mxu0 %v1164
      %1185 = vmatprep.subr.mxu0 0.0
      %1186 = vmatpush1.msra.mxu0 %v1165
      %1187 = vmatprep.subr.mxu0 0.0
      %1188 = vmatpush1.msra.mxu0 %v1166
      %1189 = vmatprep.subr.mxu0 0.0
      %1190 = vmatpush1.msra.mxu0 %v1167
      %1191 = vmatprep.subr.mxu0 0.0
      %1192 = vmatpush1.msra.mxu0 %v1168
      %1193 = vmatprep.subr.mxu0 0.0
      %1194 = vmatpush1.msra.mxu0 %v1169
      %1195 = vmatprep.subr.mxu0 0.0
      %1196 = vmatpush1.msra.mxu0 %v1170
      %1197 = vmatprep.subr.mxu0 0.0
      %1198 = vmatpush1.msra.mxu0 %v1171
      %1199 = vmatprep.subr.mxu0 0.0
      %1200 = vmatpush1.msra.mxu0 %v1172
      %1201 = vmatprep.subr.mxu0 0.0
      %1202 = vmatpush1.msra.mxu0 %v1173
      %1203 = vmatprep.subr.mxu0 0.0
      %1204 = vmatpush1.msra.mxu0 %v1174
      %1205 = vmatprep.subr.mxu0 0.0
      %1206 = vmatpush1.msra.mxu0 %v1175
      %1207 = vmatprep.subr.mxu0 0.0
      %1208 = vmatpush1.msra.mxu0 %v1176
      %1209 = vmatprep.subr.mxu0 0.0
      %1210 = vmatpush1.msra.mxu0 0.0
      %1211 = vmatprep.subr.mxu0 0.0
      %1212 = vmatpush1.msra.mxu0 0.0
      %1213 = vmatprep.subr.mxu0 0.0
      %1214 = vmatpush1.msra.mxu0 0.0
      %1215 = vmatprep.subr.mxu0 0.0
      %1216 = vmatpush1.msra.mxu0 0.0
      %1217 = vmatprep.subr.mxu0 0.0
      %1218 = vmatpush1.msra.mxu0 0.0
      %1219 = vmatprep.subr.mxu0 0.0
      %1220 = vmatpush1.msra.mxu0 0.0
      %1221 = vmatprep.subr.mxu0 0.0
      %1222 = vmatpush1.msra.mxu0 0.0
      %1223 = vmatprep.subr.mxu0 0.0
      %1224 = vmatpush1.msra.mxu0 0.0
      %1225 = vmatprep.subr.mxu0 0.0
      %1226 = vmatpush1.msra.mxu0 0.0
      %1227 = vmatprep.subr.mxu0 0.0
      %1228 = vmatpush1.msra.mxu0 0.0
      %1229 = vmatprep.subr.mxu0 0.0
      %1230 = vmatpush1.msra.mxu0 0.0
      %1231 = vmatprep.subr.mxu0 0.0
      %1232 = vmatpush1.msra.mxu0 0.0
      %1233 = vmatprep.subr.mxu0 0.0
      %1234 = vmatpush1.msra.mxu0 0.0
      %1235 = vmatprep.subr.mxu0 0.0
      %1236 = vmatpush1.msra.mxu0 0.0
      %1237 = vmatprep.subr.mxu0 0.0
      %1238 = vmatpush1.msra.mxu0 0.0
      %1239 = vmatprep.subr.mxu0 0.0
      %1240 = vmatpush1.msra.mxu0 0.0
      %1241 = vmatprep.mubr.f32.mxu0 0.0
      %1242 = vmatmul.mubr.f32.gmra.mrb[0].mxu0 %v1144
      %v1243 = vpop.f32.mrb[0].mxu0
      %v1244 = vadd.f32 0.0, %v1243
      %v1245 = vpop.f32.mrb[0].mxu0
      %1246 = vmatprep.mubr.f32.mxu0 0.0
      %1247 = vmatmul.mubr.f32.gmra.mrb[0].mxu0 %v1145
      %v1248 = vpop.f32.mrb[0].mxu0
      %v1249 = vadd.f32 0.0, %v1248
      %v1250 = vpop.f32.mrb[0].mxu0
      %1251 = vmatprep.mubr.f32.mxu0 0.0
      %1252 = vmatmul.mubr.f32.gmra.mrb[0].mxu0 %v1146
      %v1253 = vpop.f32.mrb[0].mxu0
      %v1254 = vadd.f32 0.0, %v1253
      %v1255 = vpop.f32.mrb[0].mxu0
      %1256 = vmatprep.mubr.f32.mxu0 0.0
      %1257 = vmatmul.mubr.f32.gmra.mrb[0].mxu0 %v1147
      %v1258 = vpop.f32.mrb[0].mxu0
      %v1259 = vadd.f32 0.0, %v1258
      %v1260 = vpop.f32.mrb[0].mxu0
      %1261 = vmatprep.mubr.f32.mxu0 0.0
      %1262 = vmatmul.mubr.f32.gmra.mrb[0].mxu0 %v1148
      %v1263 = vpop.f32.mrb[0].mxu0
      %v1264 = vadd.f32 0.0, %v1263
      %v1265 = vpop.f32.mrb[0].mxu0
      %1266 = vmatprep.mubr.f32.mxu0 0.0
      %1267 = vmatmul.mubr.f32.gmra.mrb[0].mxu0 %v1149
      %v1268 = vpop.f32.mrb[0].mxu0
      %v1269 = vadd.f32 0.0, %v1268
      %v1270 = vpop.f32.mrb[0].mxu0
      %1271 = vmatprep.mubr.f32.mxu0 0.0
      %1272 = vmatmul.mubr.f32.gmra.mrb[0].mxu0 %v1150
      %v1273 = vpop.f32.mrb[0].mxu0
      %v1274 = vadd.f32 0.0, %v1273
      %v1275 = vpop.f32.mrb[0].mxu0
      %1276 = vmatprep.mubr.f32.mxu0 0.0
      %1277 = vmatmul.mubr.f32.gmra.mrb[0].mxu0 %v1151
      %v1278 = vpop.f32.mrb[0].mxu0
      %v1279 = vadd.f32 0.0, %v1278
      %v1280 = vpop.f32.mrb[0].mxu0
      %1281 = vmatprep.mubr.f32.mxu0 0.0
      %1282 = vmatmul.mubr.f32.gmra.mrb[0].mxu0 %v1152
      %v1283 = vpop.f32.mrb[0].mxu0
      %v1284 = vadd.f32 0.0, %v1283
      %v1285 = vpop.f32.mrb[0].mxu0
      %1286 = vmatprep.mubr.f32.mxu0 0.0
      %1287 = vmatmul.mubr.f32.gmra.mrb[0].mxu0 %v1153
      %v1288 = vpop.f32.mrb[0].mxu0
      %v1289 = vadd.f32 0.0, %v1288
      %v1290 = vpop.f32.mrb[0].mxu0
      %1291 = vmatprep.mubr.f32.mxu0 0.0
      %1292 = vmatmul.mubr.f32.gmra.mrb[0].mxu0 %v1154
      %v1293 = vpop.f32.mrb[0].mxu0
      %v1294 = vadd.f32 0.0, %v1293
      %v1295 = vpop.f32.mrb[0].mxu0
      %1296 = vmatprep.mubr.f32.mxu0 0.0
      %1297 = vmatmul.mubr.f32.gmra.mrb[0].mxu0 %v1155
      %v1298 = vpop.f32.mrb[0].mxu0
      %v1299 = vadd.f32 0.0, %v1298
      %v1300 = vpop.f32.mrb[0].mxu0
      %1301 = vmatprep.mubr.f32.mxu0 0.0
      %1302 = vmatmul.mubr.f32.gmra.mrb[0].mxu0 %v1156
      %v1303 = vpop.f32.mrb[0].mxu0
      %v1304 = vadd.f32 0.0, %v1303
      %v1305 = vpop.f32.mrb[0].mxu0
      %1306 = vmatprep.mubr.f32.mxu0 0.0
      %1307 = vmatmul.mubr.f32.gmra.mrb[0].mxu0 %v1157
      %v1308 = vpop.f32.mrb[0].mxu0
      %v1309 = vadd.f32 0.0, %v1308
      %v1310 = vpop.f32.mrb[0].mxu0
      %1311 = vmatprep.mubr.f32.mxu0 0.0
      %1312 = vmatmul.mubr.f32.gmra.mrb[0].mxu0 %v1158
      %v1313 = vpop.f32.mrb[0].mxu0
      %v1314 = vadd.f32 0.0, %v1313
      %v1315 = vpop.f32.mrb[0].mxu0
      %1316 = vmatprep.mubr.f32.mxu0 0.0
      %1317 = vmatmul.mubr.f32.gmra.mrb[0].mxu0 %v1159
      %v1318 = vpop.f32.mrb[0].mxu0
      %v1319 = vadd.f32 0.0, %v1318
      %v1320 = vpop.f32.mrb[0].mxu0
      %1321 = vdwg.mxu0
      %v1322 = vadd.f32 %v1127, %v1244
      %v1323 = vadd.f32 %v1128, %v1249
      %v1324 = vadd.f32 %v1129, %v1254
      %v1325 = vadd.f32 %v1130, %v1259
      %v1326 = vadd.f32 %v1131, %v1264
      %v1327 = vadd.f32 %v1132, %v1269
      %v1328 = vadd.f32 %v1133, %v1274
      %v1329 = vadd.f32 %v1134, %v1279
      %v1330 = vadd.f32 %v1135, %v1284
      %v1331 = vadd.f32 %v1136, %v1289
      %v1332 = vadd.f32 %v1137, %v1294
      %v1333 = vadd.f32 %v1138, %v1299
      %v1334 = vadd.f32 %v1139, %v1304
      %v1335 = vadd.f32 %v1140, %v1309
      %v1336 = vadd.f32 %v1141, %v1314
      %v1337 = vadd.f32 %v1142, %v1319
      %1338 = vst [vmem:[%s273] sm:$0xff] %v1322
      %1339 = vst [vmem:[%s273 + $0x8] sm:$0xff] %v1323
      %1340 = vst [vmem:[%s273 + $0x10] sm:$0xff] %v1324
      %1341 = vst [vmem:[%s273 + $0x18] sm:$0xff] %v1325
      %1342 = vst [vmem:[%s273 + $0x20] sm:$0xff] %v1326
      %1343 = vst [vmem:[%s273 + $0x28] sm:$0xff] %v1327
      %1344 = vst [vmem:[%s273 + $0x30] sm:$0xff] %v1328
      %1345 = vst [vmem:[%s273 + $0x38] sm:$0xff] %v1329
      %1346 = vst [vmem:[%s273 + $0x40] sm:$0xff] %v1330
      %1347 = vst [vmem:[%s273 + $0x48] sm:$0xff] %v1331
      %1348 = vst [vmem:[%s273 + $0x50] sm:$0xff] %v1332
      %1349 = vst [vmem:[%s273 + $0x58] sm:$0xff] %v1333
      %1350 = vst [vmem:[%s273 + $0x60] sm:$0xff] %v1334
      %1351 = vst [vmem:[%s273 + $0x68] sm:$0xff] %v1335
      %1352 = vst [vmem:[%s273 + $0x70] sm:$0xff] %v1336
      %1353 = vst [vmem:[%s273 + $0x78] sm:$0xff] %v1337
      %v1354 = vld [vmem:[%s273] sm:$0xff]
      %v1355 = vld [vmem:[%s273 + $0x8] sm:$0xff]
      %v1356 = vld [vmem:[%s273 + $0x10] sm:$0xff]
      %v1357 = vld [vmem:[%s273 + $0x18] sm:$0xff]
      %v1358 = vld [vmem:[%s273 + $0x20] sm:$0xff]
      %v1359 = vld [vmem:[%s273 + $0x28] sm:$0xff]
      %v1360 = vld [vmem:[%s273 + $0x30] sm:$0xff]
      %v1361 = vld [vmem:[%s273 + $0x38] sm:$0xff]
      %v1362 = vld [vmem:[%s273 + $0x40] sm:$0xff]
      %v1363 = vld [vmem:[%s273 + $0x48] sm:$0xff]
      %v1364 = vld [vmem:[%s273 + $0x50] sm:$0xff]
      %v1365 = vld [vmem:[%s273 + $0x58] sm:$0xff]
      %v1366 = vld [vmem:[%s273 + $0x60] sm:$0xff]
      %v1367 = vld [vmem:[%s273 + $0x68] sm:$0xff]
      %v1368 = vld [vmem:[%s273 + $0x70] sm:$0xff]
      %v1369 = vld [vmem:[%s273 + $0x78] sm:$0xff]
      %v1370 = vld [vmem:[%s1143 + $0x1] sm:$0xff]
      %v1371 = vld [vmem:[%s1143 + $0x9] sm:$0xff]
      %v1372 = vld [vmem:[%s1143 + $0x19] sm:$0xff]
      %v1373 = vld [vmem:[%s1143 + $0x21] sm:$0xff]
      %v1374 = vld [vmem:[%s1143 + $0x31] sm:$0xff]
      %v1375 = vld [vmem:[%s1143 + $0x39] sm:$0xff]
      %v1376 = vld [vmem:[%s1143 + $0x49] sm:$0xff]
      %v1377 = vld [vmem:[%s1143 + $0x51] sm:$0xff]
      %v1378 = vld [vmem:[%s1143 + $0x61] sm:$0xff]
      %v1379 = vld [vmem:[%s1143 + $0x69] sm:$0xff]
      %v1380 = vld [vmem:[%s1143 + $0x79] sm:$0xff]
      %v1381 = vld [vmem:[%s1143 + $0x81] sm:$0xff]
      %v1382 = vld [vmem:[%s1143 + $0x91] sm:$0xff]
      %v1383 = vld [vmem:[%s1143 + $0x99] sm:$0xff]
      %v1384 = vld [vmem:[%s1143 + $0xa9] sm:$0xff]
      %v1385 = vld [vmem:[%s1143 + $0xb1] sm:$0xff]
      %s1386 = scalar_lea.vmem %s1, 512
      %v1387 = vld [vmem:[%s1386] sm:$0xff]
      %v1388 = vld [vmem:[%s1386 + $0x8] sm:$0xff]
      %v1389 = vld [vmem:[%s1386 + $0x10] sm:$0xff]
      %v1390 = vld [vmem:[%s1386 + $0x18] sm:$0xff]
      %v1391 = vld [vmem:[%s1386 + $0x20] sm:$0xff]
      %v1392 = vld [vmem:[%s1386 + $0x28] sm:$0xff]
      %v1393 = vld [vmem:[%s1386 + $0x30] sm:$0xff]
      %v1394 = vld [vmem:[%s1386 + $0x38] sm:$0xff]
      %v1395 = vld [vmem:[%s1386 + $0x40] sm:$0xff]
      %v1396 = vld [vmem:[%s1386 + $0x48] sm:$0xff]
      %v1397 = vld [vmem:[%s1386 + $0x50] sm:$0xff]
      %v1398 = vld [vmem:[%s1386 + $0x58] sm:$0xff]
      %v1399 = vld [vmem:[%s1386 + $0x60] sm:$0xff]
      %v1400 = vld [vmem:[%s1386 + $0x68] sm:$0xff]
      %v1401 = vld [vmem:[%s1386 + $0x70] sm:$0xff]
      %v1402 = vld [vmem:[%s1386 + $0x78] sm:$0xff]
      %1403 = vmatprep.subr.mxu0 0.0
      %1404 = vmatpush1.msra.mxu0 %v1387
      %1405 = vmatprep.subr.mxu0 0.0
      %1406 = vmatpush1.msra.mxu0 %v1388
      %1407 = vmatprep.subr.mxu0 0.0
      %1408 = vmatpush1.msra.mxu0 %v1389
      %1409 = vmatprep.subr.mxu0 0.0
      %1410 = vmatpush1.msra.mxu0 %v1390
      %1411 = vmatprep.subr.mxu0 0.0
      %1412 = vmatpush1.msra.mxu0 %v1391
      %1413 = vmatprep.subr.mxu0 0.0
      %1414 = vmatpush1.msra.mxu0 %v1392
      %1415 = vmatprep.subr.mxu0 0.0
      %1416 = vmatpush1.msra.mxu0 %v1393
      %1417 = vmatprep.subr.mxu0 0.0
      %1418 = vmatpush1.msra.mxu0 %v1394
      %1419 = vmatprep.subr.mxu0 0.0
      %1420 = vmatpush1.msra.mxu0 %v1395
      %1421 = vmatprep.subr.mxu0 0.0
      %1422 = vmatpush1.msra.mxu0 %v1396
      %1423 = vmatprep.subr.mxu0 0.0
      %1424 = vmatpush1.msra.mxu0 %v1397
      %1425 = vmatprep.subr.mxu0 0.0
      %1426 = vmatpush1.msra.mxu0 %v1398
      %1427 = vmatprep.subr.mxu0 0.0
      %1428 = vmatpush1.msra.mxu0 %v1399
      %1429 = vmatprep.subr.mxu0 0.0
      %1430 = vmatpush1.msra.mxu0 %v1400
      %1431 = vmatprep.subr.mxu0 0.0
      %1432 = vmatpush1.msra.mxu0 %v1401
      %1433 = vmatprep.subr.mxu0 0.0
      %1434 = vmatpush1.msra.mxu0 %v1402
      %1435 = vmatprep.subr.mxu0 0.0
      %1436 = vmatpush1.msra.mxu0 0.0
      %1437 = vmatprep.subr.mxu0 0.0
      %1438 = vmatpush1.msra.mxu0 0.0
      %1439 = vmatprep.subr.mxu0 0.0
      %1440 = vmatpush1.msra.mxu0 0.0
      %1441 = vmatprep.subr.mxu0 0.0
      %1442 = vmatpush1.msra.mxu0 0.0
      %1443 = vmatprep.subr.mxu0 0.0
      %1444 = vmatpush1.msra.mxu0 0.0
      %1445 = vmatprep.subr.mxu0 0.0
      %1446 = vmatpush1.msra.mxu0 0.0
      %1447 = vmatprep.subr.mxu0 0.0
      %1448 = vmatpush1.msra.mxu0 0.0
      %1449 = vmatprep.subr.mxu0 0.0
      %1450 = vmatpush1.msra.mxu0 0.0
      %1451 = vmatprep.subr.mxu0 0.0
      %1452 = vmatpush1.msra.mxu0 0.0
      %1453 = vmatprep.subr.mxu0 0.0
      %1454 = vmatpush1.msra.mxu0 0.0
      %1455 = vmatprep.subr.mxu0 0.0
      %1456 = vmatpush1.msra.mxu0 0.0
      %1457 = vmatprep.subr.mxu0 0.0
      %1458 = vmatpush1.msra.mxu0 0.0
      %1459 = vmatprep.subr.mxu0 0.0
      %1460 = vmatpush1.msra.mxu0 0.0
      %1461 = vmatprep.subr.mxu0 0.0
      %1462 = vmatpush1.msra.mxu0 0.0
      %1463 = vmatprep.subr.mxu0 0.0
      %1464 = vmatpush1.msra.mxu0 0.0
      %1465 = vmatprep.subr.mxu0 0.0
      %1466 = vmatpush1.msra.mxu0 0.0
      %1467 = vmatprep.mubr.f32.mxu0 0.0
      %1468 = vmatmul.mubr.f32.gmra.mrb[0].mxu0 %v1370
      %v1469 = vpop.f32.mrb[0].mxu0
      %v1470 = vadd.f32 0.0, %v1469
      %v1471 = vpop.f32.mrb[0].mxu0
      %1472 = vmatprep.mubr.f32.mxu0 0.0
      %1473 = vmatmul.mubr.f32.gmra.mrb[0].mxu0 %v1371
      %v1474 = vpop.f32.mrb[0].mxu0
      %v1475 = vadd.f32 0.0, %v1474
      %v1476 = vpop.f32.mrb[0].mxu0
      %1477 = vmatprep.mubr.f32.mxu0 0.0
      %1478 = vmatmul.mubr.f32.gmra.mrb[0].mxu0 %v1372
      %v1479 = vpop.f32.mrb[0].mxu0
      %v1480 = vadd.f32 0.0, %v1479
      %v1481 = vpop.f32.mrb[0].mxu0
      %1482 = vmatprep.mubr.f32.mxu0 0.0
      %1483 = vmatmul.mubr.f32.gmra.mrb[0].mxu0 %v1373
      %v1484 = vpop.f32.mrb[0].mxu0
      %v1485 = vadd.f32 0.0, %v1484
      %v1486 = vpop.f32.mrb[0].mxu0
      %1487 = vmatprep.mubr.f32.mxu0 0.0
      %1488 = vmatmul.mubr.f32.gmra.mrb[0].mxu0 %v1374
      %v1489 = vpop.f32.mrb[0].mxu0
      %v1490 = vadd.f32 0.0, %v1489
      %v1491 = vpop.f32.mrb[0].mxu0
      %1492 = vmatprep.mubr.f32.mxu0 0.0
      %1493 = vmatmul.mubr.f32.gmra.mrb[0].mxu0 %v1375
      %v1494 = vpop.f32.mrb[0].mxu0
      %v1495 = vadd.f32 0.0, %v1494
      %v1496 = vpop.f32.mrb[0].mxu0
      %1497 = vmatprep.mubr.f32.mxu0 0.0
      %1498 = vmatmul.mubr.f32.gmra.mrb[0].mxu0 %v1376
      %v1499 = vpop.f32.mrb[0].mxu0
      %v1500 = vadd.f32 0.0, %v1499
      %v1501 = vpop.f32.mrb[0].mxu0
      %1502 = vmatprep.mubr.f32.mxu0 0.0
      %1503 = vmatmul.mubr.f32.gmra.mrb[0].mxu0 %v1377
      %v1504 = vpop.f32.mrb[0].mxu0
      %v1505 = vadd.f32 0.0, %v1504
      %v1506 = vpop.f32.mrb[0].mxu0
      %1507 = vmatprep.mubr.f32.mxu0 0.0
      %1508 = vmatmul.mubr.f32.gmra.mrb[0].mxu0 %v1378
      %v1509 = vpop.f32.mrb[0].mxu0
      %v1510 = vadd.f32 0.0, %v1509
      %v1511 = vpop.f32.mrb[0].mxu0
      %1512 = vmatprep.mubr.f32.mxu0 0.0
      %1513 = vmatmul.mubr.f32.gmra.mrb[0].mxu0 %v1379
      %v1514 = vpop.f32.mrb[0].mxu0
      %v1515 = vadd.f32 0.0, %v1514
      %v1516 = vpop.f32.mrb[0].mxu0
      %1517 = vmatprep.mubr.f32.mxu0 0.0
      %1518 = vmatmul.mubr.f32.gmra.mrb[0].mxu0 %v1380
      %v1519 = vpop.f32.mrb[0].mxu0
      %v1520 = vadd.f32 0.0, %v1519
      %v1521 = vpop.f32.mrb[0].mxu0
      %1522 = vmatprep.mubr.f32.mxu0 0.0
      %1523 = vmatmul.mubr.f32.gmra.mrb[0].mxu0 %v1381
      %v1524 = vpop.f32.mrb[0].mxu0
      %v1525 = vadd.f32 0.0, %v1524
      %v1526 = vpop.f32.mrb[0].mxu0
      %1527 = vmatprep.mubr.f32.mxu0 0.0
      %1528 = vmatmul.mubr.f32.gmra.mrb[0].mxu0 %v1382
      %v1529 = vpop.f32.mrb[0].mxu0
      %v1530 = vadd.f32 0.0, %v1529
      %v1531 = vpop.f32.mrb[0].mxu0
      %1532 = vmatprep.mubr.f32.mxu0 0.0
      %1533 = vmatmul.mubr.f32.gmra.mrb[0].mxu0 %v1383
      %v1534 = vpop.f32.mrb[0].mxu0
      %v1535 = vadd.f32 0.0, %v1534
      %v1536 = vpop.f32.mrb[0].mxu0
      %1537 = vmatprep.mubr.f32.mxu0 0.0
      %1538 = vmatmul.mubr.f32.gmra.mrb[0].mxu0 %v1384
      %v1539 = vpop.f32.mrb[0].mxu0
      %v1540 = vadd.f32 0.0, %v1539
      %v1541 = vpop.f32.mrb[0].mxu0
      %1542 = vmatprep.mubr.f32.mxu0 0.0
      %1543 = vmatmul.mubr.f32.gmra.mrb[0].mxu0 %v1385
      %v1544 = vpop.f32.mrb[0].mxu0
      %v1545 = vadd.f32 0.0, %v1544
      %v1546 = vpop.f32.mrb[0].mxu0
      %1547 = vdwg.mxu0
      %v1548 = vadd.f32 %v1354, %v1470
      %v1549 = vadd.f32 %v1355, %v1475
      %v1550 = vadd.f32 %v1356, %v1480
      %v1551 = vadd.f32 %v1357, %v1485
      %v1552 = vadd.f32 %v1358, %v1490
      %v1553 = vadd.f32 %v1359, %v1495
      %v1554 = vadd.f32 %v1360, %v1500
      %v1555 = vadd.f32 %v1361, %v1505
      %v1556 = vadd.f32 %v1362, %v1510
      %v1557 = vadd.f32 %v1363, %v1515
      %v1558 = vadd.f32 %v1364, %v1520
      %v1559 = vadd.f32 %v1365, %v1525
      %v1560 = vadd.f32 %v1366, %v1530
      %v1561 = vadd.f32 %v1367, %v1535
      %v1562 = vadd.f32 %v1368, %v1540
      %v1563 = vadd.f32 %v1369, %v1545
      %1564 = vst [vmem:[%s273] sm:$0xff] %v1548
      %1565 = vst [vmem:[%s273 + $0x8] sm:$0xff] %v1549
      %1566 = vst [vmem:[%s273 + $0x10] sm:$0xff] %v1550
      %1567 = vst [vmem:[%s273 + $0x18] sm:$0xff] %v1551
      %1568 = vst [vmem:[%s273 + $0x20] sm:$0xff] %v1552
      %1569 = vst [vmem:[%s273 + $0x28] sm:$0xff] %v1553
      %1570 = vst [vmem:[%s273 + $0x30] sm:$0xff] %v1554
      %1571 = vst [vmem:[%s273 + $0x38] sm:$0xff] %v1555
      %1572 = vst [vmem:[%s273 + $0x40] sm:$0xff] %v1556
      %1573 = vst [vmem:[%s273 + $0x48] sm:$0xff] %v1557
      %1574 = vst [vmem:[%s273 + $0x50] sm:$0xff] %v1558
      %1575 = vst [vmem:[%s273 + $0x58] sm:$0xff] %v1559
      %1576 = vst [vmem:[%s273 + $0x60] sm:$0xff] %v1560
      %1577 = vst [vmem:[%s273 + $0x68] sm:$0xff] %v1561
      %1578 = vst [vmem:[%s273 + $0x70] sm:$0xff] %v1562
      %1579 = vst [vmem:[%s273 + $0x78] sm:$0xff] %v1563
      %v1580 = vld [vmem:[%s273] sm:$0xff]
      %v1581 = vld [vmem:[%s273 + $0x8] sm:$0xff]
      %v1582 = vld [vmem:[%s273 + $0x10] sm:$0xff]
      %v1583 = vld [vmem:[%s273 + $0x18] sm:$0xff]
      %v1584 = vld [vmem:[%s273 + $0x20] sm:$0xff]
      %v1585 = vld [vmem:[%s273 + $0x28] sm:$0xff]
      %v1586 = vld [vmem:[%s273 + $0x30] sm:$0xff]
      %v1587 = vld [vmem:[%s273 + $0x38] sm:$0xff]
      %v1588 = vld [vmem:[%s273 + $0x40] sm:$0xff]
      %v1589 = vld [vmem:[%s273 + $0x48] sm:$0xff]
      %v1590 = vld [vmem:[%s273 + $0x50] sm:$0xff]
      %v1591 = vld [vmem:[%s273 + $0x58] sm:$0xff]
      %v1592 = vld [vmem:[%s273 + $0x60] sm:$0xff]
      %v1593 = vld [vmem:[%s273 + $0x68] sm:$0xff]
      %v1594 = vld [vmem:[%s273 + $0x70] sm:$0xff]
      %v1595 = vld [vmem:[%s273 + $0x78] sm:$0xff]
      %v1596 = vld [vmem:[%s1143 + $0x2] sm:$0xff]
      %v1597 = vld [vmem:[%s1143 + $0xa] sm:$0xff]
      %v1598 = vld [vmem:[%s1143 + $0x1a] sm:$0xff]
      %v1599 = vld [vmem:[%s1143 + $0x22] sm:$0xff]
      %v1600 = vld [vmem:[%s1143 + $0x32] sm:$0xff]
      %v1601 = vld [vmem:[%s1143 + $0x3a] sm:$0xff]
      %v1602 = vld [vmem:[%s1143 + $0x4a] sm:$0xff]
      %v1603 = vld [vmem:[%s1143 + $0x52] sm:$0xff]
      %v1604 = vld [vmem:[%s1143 + $0x62] sm:$0xff]
      %v1605 = vld [vmem:[%s1143 + $0x6a] sm:$0xff]
      %v1606 = vld [vmem:[%s1143 + $0x7a] sm:$0xff]
      %v1607 = vld [vmem:[%s1143 + $0x82] sm:$0xff]
      %v1608 = vld [vmem:[%s1143 + $0x92] sm:$0xff]
      %v1609 = vld [vmem:[%s1143 + $0x9a] sm:$0xff]
      %v1610 = vld [vmem:[%s1143 + $0xaa] sm:$0xff]
      %v1611 = vld [vmem:[%s1143 + $0xb2] sm:$0xff]
      %s1612 = scalar_lea.vmem %s1, 640
      %v1613 = vld [vmem:[%s1612] sm:$0xff]
      %v1614 = vld [vmem:[%s1612 + $0x8] sm:$0xff]
      %v1615 = vld [vmem:[%s1612 + $0x10] sm:$0xff]
      %v1616 = vld [vmem:[%s1612 + $0x18] sm:$0xff]
      %v1617 = vld [vmem:[%s1612 + $0x20] sm:$0xff]
      %v1618 = vld [vmem:[%s1612 + $0x28] sm:$0xff]
      %v1619 = vld [vmem:[%s1612 + $0x30] sm:$0xff]
      %v1620 = vld [vmem:[%s1612 + $0x38] sm:$0xff]
      %v1621 = vld [vmem:[%s1612 + $0x40] sm:$0xff]
      %v1622 = vld [vmem:[%s1612 + $0x48] sm:$0xff]
      %v1623 = vld [vmem:[%s1612 + $0x50] sm:$0xff]
      %v1624 = vld [vmem:[%s1612 + $0x58] sm:$0xff]
      %v1625 = vld [vmem:[%s1612 + $0x60] sm:$0xff]
      %v1626 = vld [vmem:[%s1612 + $0x68] sm:$0xff]
      %v1627 = vld [vmem:[%s1612 + $0x70] sm:$0xff]
      %v1628 = vld [vmem:[%s1612 + $0x78] sm:$0xff]
      %1629 = vmatprep.subr.mxu0 0.0
      %1630 = vmatpush1.msra.mxu0 %v1613
      %1631 = vmatprep.subr.mxu0 0.0
      %1632 = vmatpush1.msra.mxu0 %v1614
      %1633 = vmatprep.subr.mxu0 0.0
      %1634 = vmatpush1.msra.mxu0 %v1615
      %1635 = vmatprep.subr.mxu0 0.0
      %1636 = vmatpush1.msra.mxu0 %v1616
      %1637 = vmatprep.subr.mxu0 0.0
      %1638 = vmatpush1.msra.mxu0 %v1617
      %1639 = vmatprep.subr.mxu0 0.0
      %1640 = vmatpush1.msra.mxu0 %v1618
      %1641 = vmatprep.subr.mxu0 0.0
      %1642 = vmatpush1.msra.mxu0 %v1619
      %1643 = vmatprep.subr.mxu0 0.0
      %1644 = vmatpush1.msra.mxu0 %v1620
      %1645 = vmatprep.subr.mxu0 0.0
      %1646 = vmatpush1.msra.mxu0 %v1621
      %1647 = vmatprep.subr.mxu0 0.0
      %1648 = vmatpush1.msra.mxu0 %v1622
      %1649 = vmatprep.subr.mxu0 0.0
      %1650 = vmatpush1.msra.mxu0 %v1623
      %1651 = vmatprep.subr.mxu0 0.0
      %1652 = vmatpush1.msra.mxu0 %v1624
      %1653 = vmatprep.subr.mxu0 0.0
      %1654 = vmatpush1.msra.mxu0 %v1625
      %1655 = vmatprep.subr.mxu0 0.0
      %1656 = vmatpush1.msra.mxu0 %v1626
      %1657 = vmatprep.subr.mxu0 0.0
      %1658 = vmatpush1.msra.mxu0 %v1627
      %1659 = vmatprep.subr.mxu0 0.0
      %1660 = vmatpush1.msra.mxu0 %v1628
      %1661 = vmatprep.subr.mxu0 0.0
      %1662 = vmatpush1.msra.mxu0 0.0
      %1663 = vmatprep.subr.mxu0 0.0
      %1664 = vmatpush1.msra.mxu0 0.0
      %1665 = vmatprep.subr.mxu0 0.0
      %1666 = vmatpush1.msra.mxu0 0.0
      %1667 = vmatprep.subr.mxu0 0.0
      %1668 = vmatpush1.msra.mxu0 0.0
      %1669 = vmatprep.subr.mxu0 0.0
      %1670 = vmatpush1.msra.mxu0 0.0
      %1671 = vmatprep.subr.mxu0 0.0
      %1672 = vmatpush1.msra.mxu0 0.0
      %1673 = vmatprep.subr.mxu0 0.0
      %1674 = vmatpush1.msra.mxu0 0.0
      %1675 = vmatprep.subr.mxu0 0.0
      %1676 = vmatpush1.msra.mxu0 0.0
      %1677 = vmatprep.subr.mxu0 0.0
      %1678 = vmatpush1.msra.mxu0 0.0
      %1679 = vmatprep.subr.mxu0 0.0
      %1680 = vmatpush1.msra.mxu0 0.0
      %1681 = vmatprep.subr.mxu0 0.0
      %1682 = vmatpush1.msra.mxu0 0.0
      %1683 = vmatprep.subr.mxu0 0.0
      %1684 = vmatpush1.msra.mxu0 0.0
      %1685 = vmatprep.subr.mxu0 0.0
      %1686 = vmatpush1.msra.mxu0 0.0
      %1687 = vmatprep.subr.mxu0 0.0
      %1688 = vmatpush1.msra.mxu0 0.0
      %1689 = vmatprep.subr.mxu0 0.0
      %1690 = vmatpush1.msra.mxu0 0.0
      %1691 = vmatprep.subr.mxu0 0.0
      %1692 = vmatpush1.msra.mxu0 0.0
      %1693 = vmatprep.mubr.f32.mxu0 0.0
      %1694 = vmatmul.mubr.f32.gmra.mrb[0].mxu0 %v1596
      %v1695 = vpop.f32.mrb[0].mxu0
      %v1696 = vadd.f32 0.0, %v1695
      %v1697 = vpop.f32.mrb[0].mxu0
      %1698 = vmatprep.mubr.f32.mxu0 0.0
      %1699 = vmatmul.mubr.f32.gmra.mrb[0].mxu0 %v1597
      %v1700 = vpop.f32.mrb[0].mxu0
      %v1701 = vadd.f32 0.0, %v1700
      %v1702 = vpop.f32.mrb[0].mxu0
      %1703 = vmatprep.mubr.f32.mxu0 0.0
      %1704 = vmatmul.mubr.f32.gmra.mrb[0].mxu0 %v1598
      %v1705 = vpop.f32.mrb[0].mxu0
      %v1706 = vadd.f32 0.0, %v1705
      %v1707 = vpop.f32.mrb[0].mxu0
      %1708 = vmatprep.mubr.f32.mxu0 0.0
      %1709 = vmatmul.mubr.f32.gmra.mrb[0].mxu0 %v1599
      %v1710 = vpop.f32.mrb[0].mxu0
      %v1711 = vadd.f32 0.0, %v1710
      %v1712 = vpop.f32.mrb[0].mxu0
      %1713 = vmatprep.mubr.f32.mxu0 0.0
      %1714 = vmatmul.mubr.f32.gmra.mrb[0].mxu0 %v1600
      %v1715 = vpop.f32.mrb[0].mxu0
      %v1716 = vadd.f32 0.0, %v1715
      %v1717 = vpop.f32.mrb[0].mxu0
      %1718 = vmatprep.mubr.f32.mxu0 0.0
      %1719 = vmatmul.mubr.f32.gmra.mrb[0].mxu0 %v1601
      %v1720 = vpop.f32.mrb[0].mxu0
      %v1721 = vadd.f32 0.0, %v1720
      %v1722 = vpop.f32.mrb[0].mxu0
      %1723 = vmatprep.mubr.f32.mxu0 0.0
      %1724 = vmatmul.mubr.f32.gmra.mrb[0].mxu0 %v1602
      %v1725 = vpop.f32.mrb[0].mxu0
      %v1726 = vadd.f32 0.0, %v1725
      %v1727 = vpop.f32.mrb[0].mxu0
      %1728 = vmatprep.mubr.f32.mxu0 0.0
      %1729 = vmatmul.mubr.f32.gmra.mrb[0].mxu0 %v1603
      %v1730 = vpop.f32.mrb[0].mxu0
      %v1731 = vadd.f32 0.0, %v1730
      %v1732 = vpop.f32.mrb[0].mxu0
      %1733 = vmatprep.mubr.f32.mxu0 0.0
      %1734 = vmatmul.mubr.f32.gmra.mrb[0].mxu0 %v1604
      %v1735 = vpop.f32.mrb[0].mxu0
      %v1736 = vadd.f32 0.0, %v1735
      %v1737 = vpop.f32.mrb[0].mxu0
      %1738 = vmatprep.mubr.f32.mxu0 0.0
      %1739 = vmatmul.mubr.f32.gmra.mrb[0].mxu0 %v1605
      %v1740 = vpop.f32.mrb[0].mxu0
      %v1741 = vadd.f32 0.0, %v1740
      %v1742 = vpop.f32.mrb[0].mxu0
      %1743 = vmatprep.mubr.f32.mxu0 0.0
      %1744 = vmatmul.mubr.f32.gmra.mrb[0].mxu0 %v1606
      %v1745 = vpop.f32.mrb[0].mxu0
      %v1746 = vadd.f32 0.0, %v1745
      %v1747 = vpop.f32.mrb[0].mxu0
      %1748 = vmatprep.mubr.f32.mxu0 0.0
      %1749 = vmatmul.mubr.f32.gmra.mrb[0].mxu0 %v1607
      %v1750 = vpop.f32.mrb[0].mxu0
      %v1751 = vadd.f32 0.0, %v1750
      %v1752 = vpop.f32.mrb[0].mxu0
      %1753 = vmatprep.mubr.f32.mxu0 0.0
      %1754 = vmatmul.mubr.f32.gmra.mrb[0].mxu0 %v1608
      %v1755 = vpop.f32.mrb[0].mxu0
      %v1756 = vadd.f32 0.0, %v1755
      %v1757 = vpop.f32.mrb[0].mxu0
      %1758 = vmatprep.mubr.f32.mxu0 0.0
      %1759 = vmatmul.mubr.f32.gmra.mrb[0].mxu0 %v1609
      %v1760 = vpop.f32.mrb[0].mxu0
      %v1761 = vadd.f32 0.0, %v1760
      %v1762 = vpop.f32.mrb[0].mxu0
      %1763 = vmatprep.mubr.f32.mxu0 0.0
      %1764 = vmatmul.mubr.f32.gmra.mrb[0].mxu0 %v1610
      %v1765 = vpop.f32.mrb[0].mxu0
      %v1766 = vadd.f32 0.0, %v1765
      %v1767 = vpop.f32.mrb[0].mxu0
      %1768 = vmatprep.mubr.f32.mxu0 0.0
      %1769 = vmatmul.mubr.f32.gmra.mrb[0].mxu0 %v1611
      %v1770 = vpop.f32.mrb[0].mxu0
      %v1771 = vadd.f32 0.0, %v1770
      %v1772 = vpop.f32.mrb[0].mxu0
      %1773 = vdwg.mxu0
      %v1774 = vadd.f32 %v1580, %v1696
      %v1775 = vadd.f32 %v1581, %v1701
      %v1776 = vadd.f32 %v1582, %v1706
      %v1777 = vadd.f32 %v1583, %v1711
      %v1778 = vadd.f32 %v1584, %v1716
      %v1779 = vadd.f32 %v1585, %v1721
      %v1780 = vadd.f32 %v1586, %v1726
      %v1781 = vadd.f32 %v1587, %v1731
      %v1782 = vadd.f32 %v1588, %v1736
      %v1783 = vadd.f32 %v1589, %v1741
      %v1784 = vadd.f32 %v1590, %v1746
      %v1785 = vadd.f32 %v1591, %v1751
      %v1786 = vadd.f32 %v1592, %v1756
      %v1787 = vadd.f32 %v1593, %v1761
      %v1788 = vadd.f32 %v1594, %v1766
      %v1789 = vadd.f32 %v1595, %v1771
      %1790 = vst [vmem:[%s273] sm:$0xff] %v1774
      %1791 = vst [vmem:[%s273 + $0x8] sm:$0xff] %v1775
      %1792 = vst [vmem:[%s273 + $0x10] sm:$0xff] %v1776
      %1793 = vst [vmem:[%s273 + $0x18] sm:$0xff] %v1777
      %1794 = vst [vmem:[%s273 + $0x20] sm:$0xff] %v1778
      %1795 = vst [vmem:[%s273 + $0x28] sm:$0xff] %v1779
      %1796 = vst [vmem:[%s273 + $0x30] sm:$0xff] %v1780
      %1797 = vst [vmem:[%s273 + $0x38] sm:$0xff] %v1781
      %1798 = vst [vmem:[%s273 + $0x40] sm:$0xff] %v1782
      %1799 = vst [vmem:[%s273 + $0x48] sm:$0xff] %v1783
      %1800 = vst [vmem:[%s273 + $0x50] sm:$0xff] %v1784
      %1801 = vst [vmem:[%s273 + $0x58] sm:$0xff] %v1785
      %1802 = vst [vmem:[%s273 + $0x60] sm:$0xff] %v1786
      %1803 = vst [vmem:[%s273 + $0x68] sm:$0xff] %v1787
      %1804 = vst [vmem:[%s273 + $0x70] sm:$0xff] %v1788
      %1805 = vst [vmem:[%s273 + $0x78] sm:$0xff] %v1789
      %v1806 = vld [vmem:[%s273] sm:$0xff]
      %v1807 = vld [vmem:[%s273 + $0x8] sm:$0xff]
      %v1808 = vld [vmem:[%s273 + $0x10] sm:$0xff]
      %v1809 = vld [vmem:[%s273 + $0x18] sm:$0xff]
      %v1810 = vld [vmem:[%s273 + $0x20] sm:$0xff]
      %v1811 = vld [vmem:[%s273 + $0x28] sm:$0xff]
      %v1812 = vld [vmem:[%s273 + $0x30] sm:$0xff]
      %v1813 = vld [vmem:[%s273 + $0x38] sm:$0xff]
      %v1814 = vld [vmem:[%s273 + $0x40] sm:$0xff]
      %v1815 = vld [vmem:[%s273 + $0x48] sm:$0xff]
      %v1816 = vld [vmem:[%s273 + $0x50] sm:$0xff]
      %v1817 = vld [vmem:[%s273 + $0x58] sm:$0xff]
      %v1818 = vld [vmem:[%s273 + $0x60] sm:$0xff]
      %v1819 = vld [vmem:[%s273 + $0x68] sm:$0xff]
      %v1820 = vld [vmem:[%s273 + $0x70] sm:$0xff]
      %v1821 = vld [vmem:[%s273 + $0x78] sm:$0xff]
      %s1822 = scalar_lea.vmem [#allocation2], 48
      %v1823 = vld [vmem:[%s1822] sm:$0xff]
      %v1824 = vld [vmem:[%s1822 + $0x8] sm:$0xff]
      %v1825 = vld [vmem:[%s1822 + $0x18] sm:$0xff]
      %v1826 = vld [vmem:[%s1822 + $0x20] sm:$0xff]
      %v1827 = vld [vmem:[%s1822 + $0x30] sm:$0xff]
      %v1828 = vld [vmem:[%s1822 + $0x38] sm:$0xff]
      %v1829 = vld [vmem:[%s1822 + $0x48] sm:$0xff]
      %v1830 = vld [vmem:[%s1822 + $0x50] sm:$0xff]
      %v1831 = vld [vmem:[%s1822 + $0x60] sm:$0xff]
      %v1832 = vld [vmem:[%s1822 + $0x68] sm:$0xff]
      %v1833 = vld [vmem:[%s1822 + $0x78] sm:$0xff]
      %v1834 = vld [vmem:[%s1822 + $0x80] sm:$0xff]
      %v1835 = vld [vmem:[%s1822 + $0x90] sm:$0xff]
      %v1836 = vld [vmem:[%s1822 + $0x98] sm:$0xff]
      %v1837 = vld [vmem:[%s1822 + $0xa8] sm:$0xff]
      %v1838 = vld [vmem:[%s1822 + $0xb0] sm:$0xff]
      %s1839 = scalar_lea.vmem %s1, 768
      %v1840 = vld [vmem:[%s1839] sm:$0xff]
      %v1841 = vld [vmem:[%s1839 + $0x8] sm:$0xff]
      %v1842 = vld [vmem:[%s1839 + $0x10] sm:$0xff]
      %v1843 = vld [vmem:[%s1839 + $0x18] sm:$0xff]
      %v1844 = vld [vmem:[%s1839 + $0x20] sm:$0xff]
      %v1845 = vld [vmem:[%s1839 + $0x28] sm:$0xff]
      %v1846 = vld [vmem:[%s1839 + $0x30] sm:$0xff]
      %v1847 = vld [vmem:[%s1839 + $0x38] sm:$0xff]
      %v1848 = vld [vmem:[%s1839 + $0x40] sm:$0xff]
      %v1849 = vld [vmem:[%s1839 + $0x48] sm:$0xff]
      %v1850 = vld [vmem:[%s1839 + $0x50] sm:$0xff]
      %v1851 = vld [vmem:[%s1839 + $0x58] sm:$0xff]
      %v1852 = vld [vmem:[%s1839 + $0x60] sm:$0xff]
      %v1853 = vld [vmem:[%s1839 + $0x68] sm:$0xff]
      %v1854 = vld [vmem:[%s1839 + $0x70] sm:$0xff]
      %v1855 = vld [vmem:[%s1839 + $0x78] sm:$0xff]
      %1856 = vmatprep.subr.mxu0 0.0
      %1857 = vmatpush1.msra.mxu0 %v1840
      %1858 = vmatprep.subr.mxu0 0.0
      %1859 = vmatpush1.msra.mxu0 %v1841
      %1860 = vmatprep.subr.mxu0 0.0
      %1861 = vmatpush1.msra.mxu0 %v1842
      %1862 = vmatprep.subr.mxu0 0.0
      %1863 = vmatpush1.msra.mxu0 %v1843
      %1864 = vmatprep.subr.mxu0 0.0
      %1865 = vmatpush1.msra.mxu0 %v1844
      %1866 = vmatprep.subr.mxu0 0.0
      %1867 = vmatpush1.msra.mxu0 %v1845
      %1868 = vmatprep.subr.mxu0 0.0
      %1869 = vmatpush1.msra.mxu0 %v1846
      %1870 = vmatprep.subr.mxu0 0.0
      %1871 = vmatpush1.msra.mxu0 %v1847
      %1872 = vmatprep.subr.mxu0 0.0
      %1873 = vmatpush1.msra.mxu0 %v1848
      %1874 = vmatprep.subr.mxu0 0.0
      %1875 = vmatpush1.msra.mxu0 %v1849
      %1876 = vmatprep.subr.mxu0 0.0
      %1877 = vmatpush1.msra.mxu0 %v1850
      %1878 = vmatprep.subr.mxu0 0.0
      %1879 = vmatpush1.msra.mxu0 %v1851
      %1880 = vmatprep.subr.mxu0 0.0
      %1881 = vmatpush1.msra.mxu0 %v1852
      %1882 = vmatprep.subr.mxu0 0.0
      %1883 = vmatpush1.msra.mxu0 %v1853
      %1884 = vmatprep.subr.mxu0 0.0
      %1885 = vmatpush1.msra.mxu0 %v1854
      %1886 = vmatprep.subr.mxu0 0.0
      %1887 = vmatpush1.msra.mxu0 %v1855
      %1888 = vmatprep.subr.mxu0 0.0
      %1889 = vmatpush1.msra.mxu0 0.0
      %1890 = vmatprep.subr.mxu0 0.0
      %1891 = vmatpush1.msra.mxu0 0.0
      %1892 = vmatprep.subr.mxu0 0.0
      %1893 = vmatpush1.msra.mxu0 0.0
      %1894 = vmatprep.subr.mxu0 0.0
      %1895 = vmatpush1.msra.mxu0 0.0
      %1896 = vmatprep.subr.mxu0 0.0
      %1897 = vmatpush1.msra.mxu0 0.0
      %1898 = vmatprep.subr.mxu0 0.0
      %1899 = vmatpush1.msra.mxu0 0.0
      %1900 = vmatprep.subr.mxu0 0.0
      %1901 = vmatpush1.msra.mxu0 0.0
      %1902 = vmatprep.subr.mxu0 0.0
      %1903 = vmatpush1.msra.mxu0 0.0
      %1904 = vmatprep.subr.mxu0 0.0
      %1905 = vmatpush1.msra.mxu0 0.0
      %1906 = vmatprep.subr.mxu0 0.0
      %1907 = vmatpush1.msra.mxu0 0.0
      %1908 = vmatprep.subr.mxu0 0.0
      %1909 = vmatpush1.msra.mxu0 0.0
      %1910 = vmatprep.subr.mxu0 0.0
      %1911 = vmatpush1.msra.mxu0 0.0
      %1912 = vmatprep.subr.mxu0 0.0
      %1913 = vmatpush1.msra.mxu0 0.0
      %1914 = vmatprep.subr.mxu0 0.0
      %1915 = vmatpush1.msra.mxu0 0.0
      %1916 = vmatprep.subr.mxu0 0.0
      %1917 = vmatpush1.msra.mxu0 0.0
      %1918 = vmatprep.subr.mxu0 0.0
      %1919 = vmatpush1.msra.mxu0 0.0
      %1920 = vmatprep.mubr.f32.mxu0 0.0
      %1921 = vmatmul.mubr.f32.gmra.mrb[0].mxu0 %v1823
      %v1922 = vpop.f32.mrb[0].mxu0
      %v1923 = vadd.f32 0.0, %v1922
      %v1924 = vpop.f32.mrb[0].mxu0
      %1925 = vmatprep.mubr.f32.mxu0 0.0
      %1926 = vmatmul.mubr.f32.gmra.mrb[0].mxu0 %v1824
      %v1927 = vpop.f32.mrb[0].mxu0
      %v1928 = vadd.f32 0.0, %v1927
      %v1929 = vpop.f32.mrb[0].mxu0
      %1930 = vmatprep.mubr.f32.mxu0 0.0
      %1931 = vmatmul.mubr.f32.gmra.mrb[0].mxu0 %v1825
      %v1932 = vpop.f32.mrb[0].mxu0
      %v1933 = vadd.f32 0.0, %v1932
      %v1934 = vpop.f32.mrb[0].mxu0
      %1935 = vmatprep.mubr.f32.mxu0 0.0
      %1936 = vmatmul.mubr.f32.gmra.mrb[0].mxu0 %v1826
      %v1937 = vpop.f32.mrb[0].mxu0
      %v1938 = vadd.f32 0.0, %v1937
      %v1939 = vpop.f32.mrb[0].mxu0
      %1940 = vmatprep.mubr.f32.mxu0 0.0
      %1941 = vmatmul.mubr.f32.gmra.mrb[0].mxu0 %v1827
      %v1942 = vpop.f32.mrb[0].mxu0
      %v1943 = vadd.f32 0.0, %v1942
      %v1944 = vpop.f32.mrb[0].mxu0
      %1945 = vmatprep.mubr.f32.mxu0 0.0
      %1946 = vmatmul.mubr.f32.gmra.mrb[0].mxu0 %v1828
      %v1947 = vpop.f32.mrb[0].mxu0
      %v1948 = vadd.f32 0.0, %v1947
      %v1949 = vpop.f32.mrb[0].mxu0
      %1950 = vmatprep.mubr.f32.mxu0 0.0
      %1951 = vmatmul.mubr.f32.gmra.mrb[0].mxu0 %v1829
      %v1952 = vpop.f32.mrb[0].mxu0
      %v1953 = vadd.f32 0.0, %v1952
      %v1954 = vpop.f32.mrb[0].mxu0
      %1955 = vmatprep.mubr.f32.mxu0 0.0
      %1956 = vmatmul.mubr.f32.gmra.mrb[0].mxu0 %v1830
      %v1957 = vpop.f32.mrb[0].mxu0
      %v1958 = vadd.f32 0.0, %v1957
      %v1959 = vpop.f32.mrb[0].mxu0
      %1960 = vmatprep.mubr.f32.mxu0 0.0
      %1961 = vmatmul.mubr.f32.gmra.mrb[0].mxu0 %v1831
      %v1962 = vpop.f32.mrb[0].mxu0
      %v1963 = vadd.f32 0.0, %v1962
      %v1964 = vpop.f32.mrb[0].mxu0
      %1965 = vmatprep.mubr.f32.mxu0 0.0
      %1966 = vmatmul.mubr.f32.gmra.mrb[0].mxu0 %v1832
      %v1967 = vpop.f32.mrb[0].mxu0
      %v1968 = vadd.f32 0.0, %v1967
      %v1969 = vpop.f32.mrb[0].mxu0
      %1970 = vmatprep.mubr.f32.mxu0 0.0
      %1971 = vmatmul.mubr.f32.gmra.mrb[0].mxu0 %v1833
      %v1972 = vpop.f32.mrb[0].mxu0
      %v1973 = vadd.f32 0.0, %v1972
      %v1974 = vpop.f32.mrb[0].mxu0
      %1975 = vmatprep.mubr.f32.mxu0 0.0
      %1976 = vmatmul.mubr.f32.gmra.mrb[0].mxu0 %v1834
      %v1977 = vpop.f32.mrb[0].mxu0
      %v1978 = vadd.f32 0.0, %v1977
      %v1979 = vpop.f32.mrb[0].mxu0
      %1980 = vmatprep.mubr.f32.mxu0 0.0
      %1981 = vmatmul.mubr.f32.gmra.mrb[0].mxu0 %v1835
      %v1982 = vpop.f32.mrb[0].mxu0
      %v1983 = vadd.f32 0.0, %v1982
      %v1984 = vpop.f32.mrb[0].mxu0
      %1985 = vmatprep.mubr.f32.mxu0 0.0
      %1986 = vmatmul.mubr.f32.gmra.mrb[0].mxu0 %v1836
      %v1987 = vpop.f32.mrb[0].mxu0
      %v1988 = vadd.f32 0.0, %v1987
      %v1989 = vpop.f32.mrb[0].mxu0
      %1990 = vmatprep.mubr.f32.mxu0 0.0
      %1991 = vmatmul.mubr.f32.gmra.mrb[0].mxu0 %v1837
      %v1992 = vpop.f32.mrb[0].mxu0
      %v1993 = vadd.f32 0.0, %v1992
      %v1994 = vpop.f32.mrb[0].mxu0
      %1995 = vmatprep.mubr.f32.mxu0 0.0
      %1996 = vmatmul.mubr.f32.gmra.mrb[0].mxu0 %v1838
      %v1997 = vpop.f32.mrb[0].mxu0
      %v1998 = vadd.f32 0.0, %v1997
      %v1999 = vpop.f32.mrb[0].mxu0
      %2000 = vdwg.mxu0
      %v2001 = vadd.f32 %v1806, %v1923
      %v2002 = vadd.f32 %v1807, %v1928
      %v2003 = vadd.f32 %v1808, %v1933
      %v2004 = vadd.f32 %v1809, %v1938
      %v2005 = vadd.f32 %v1810, %v1943
      %v2006 = vadd.f32 %v1811, %v1948
      %v2007 = vadd.f32 %v1812, %v1953
      %v2008 = vadd.f32 %v1813, %v1958
      %v2009 = vadd.f32 %v1814, %v1963
      %v2010 = vadd.f32 %v1815, %v1968
      %v2011 = vadd.f32 %v1816, %v1973
      %v2012 = vadd.f32 %v1817, %v1978
      %v2013 = vadd.f32 %v1818, %v1983
      %v2014 = vadd.f32 %v1819, %v1988
      %v2015 = vadd.f32 %v1820, %v1993
      %v2016 = vadd.f32 %v1821, %v1998
      %2017 = vst [vmem:[%s273] sm:$0xff] %v2001
      %2018 = vst [vmem:[%s273 + $0x8] sm:$0xff] %v2002
      %2019 = vst [vmem:[%s273 + $0x10] sm:$0xff] %v2003
      %2020 = vst [vmem:[%s273 + $0x18] sm:$0xff] %v2004
      %2021 = vst [vmem:[%s273 + $0x20] sm:$0xff] %v2005
      %2022 = vst [vmem:[%s273 + $0x28] sm:$0xff] %v2006
      %2023 = vst [vmem:[%s273 + $0x30] sm:$0xff] %v2007
      %2024 = vst [vmem:[%s273 + $0x38] sm:$0xff] %v2008
      %2025 = vst [vmem:[%s273 + $0x40] sm:$0xff] %v2009
      %2026 = vst [vmem:[%s273 + $0x48] sm:$0xff] %v2010
      %2027 = vst [vmem:[%s273 + $0x50] sm:$0xff] %v2011
      %2028 = vst [vmem:[%s273 + $0x58] sm:$0xff] %v2012
      %2029 = vst [vmem:[%s273 + $0x60] sm:$0xff] %v2013
      %2030 = vst [vmem:[%s273 + $0x68] sm:$0xff] %v2014
      %2031 = vst [vmem:[%s273 + $0x70] sm:$0xff] %v2015
      %2032 = vst [vmem:[%s273 + $0x78] sm:$0xff] %v2016
      %v2033 = vld [vmem:[%s273] sm:$0xff]
      %v2034 = vld [vmem:[%s273 + $0x8] sm:$0xff]
      %v2035 = vld [vmem:[%s273 + $0x10] sm:$0xff]
      %v2036 = vld [vmem:[%s273 + $0x18] sm:$0xff]
      %v2037 = vld [vmem:[%s273 + $0x20] sm:$0xff]
      %v2038 = vld [vmem:[%s273 + $0x28] sm:$0xff]
      %v2039 = vld [vmem:[%s273 + $0x30] sm:$0xff]
      %v2040 = vld [vmem:[%s273 + $0x38] sm:$0xff]
      %v2041 = vld [vmem:[%s273 + $0x40] sm:$0xff]
      %v2042 = vld [vmem:[%s273 + $0x48] sm:$0xff]
      %v2043 = vld [vmem:[%s273 + $0x50] sm:$0xff]
      %v2044 = vld [vmem:[%s273 + $0x58] sm:$0xff]
      %v2045 = vld [vmem:[%s273 + $0x60] sm:$0xff]
      %v2046 = vld [vmem:[%s273 + $0x68] sm:$0xff]
      %v2047 = vld [vmem:[%s273 + $0x70] sm:$0xff]
      %v2048 = vld [vmem:[%s273 + $0x78] sm:$0xff]
      %v2049 = vld [vmem:[%s1822 + $0x1] sm:$0xff]
      %v2050 = vld [vmem:[%s1822 + $0x9] sm:$0xff]
      %v2051 = vld [vmem:[%s1822 + $0x19] sm:$0xff]
      %v2052 = vld [vmem:[%s1822 + $0x21] sm:$0xff]
      %v2053 = vld [vmem:[%s1822 + $0x31] sm:$0xff]
      %v2054 = vld [vmem:[%s1822 + $0x39] sm:$0xff]
      %v2055 = vld [vmem:[%s1822 + $0x49] sm:$0xff]
      %v2056 = vld [vmem:[%s1822 + $0x51] sm:$0xff]
      %v2057 = vld [vmem:[%s1822 + $0x61] sm:$0xff]
      %v2058 = vld [vmem:[%s1822 + $0x69] sm:$0xff]
      %v2059 = vld [vmem:[%s1822 + $0x79] sm:$0xff]
      %v2060 = vld [vmem:[%s1822 + $0x81] sm:$0xff]
      %v2061 = vld [vmem:[%s1822 + $0x91] sm:$0xff]
      %v2062 = vld [vmem:[%s1822 + $0x99] sm:$0xff]
      %v2063 = vld [vmem:[%s1822 + $0xa9] sm:$0xff]
      %v2064 = vld [vmem:[%s1822 + $0xb1] sm:$0xff]
      %s2065 = scalar_lea.vmem %s1, 896
      %v2066 = vld [vmem:[%s2065] sm:$0xff]
      %v2067 = vld [vmem:[%s2065 + $0x8] sm:$0xff]
      %v2068 = vld [vmem:[%s2065 + $0x10] sm:$0xff]
      %v2069 = vld [vmem:[%s2065 + $0x18] sm:$0xff]
      %v2070 = vld [vmem:[%s2065 + $0x20] sm:$0xff]
      %v2071 = vld [vmem:[%s2065 + $0x28] sm:$0xff]
      %v2072 = vld [vmem:[%s2065 + $0x30] sm:$0xff]
      %v2073 = vld [vmem:[%s2065 + $0x38] sm:$0xff]
      %v2074 = vld [vmem:[%s2065 + $0x40] sm:$0xff]
      %v2075 = vld [vmem:[%s2065 + $0x48] sm:$0xff]
      %v2076 = vld [vmem:[%s2065 + $0x50] sm:$0xff]
      %v2077 = vld [vmem:[%s2065 + $0x58] sm:$0xff]
      %v2078 = vld [vmem:[%s2065 + $0x60] sm:$0xff]
      %v2079 = vld [vmem:[%s2065 + $0x68] sm:$0xff]
      %v2080 = vld [vmem:[%s2065 + $0x70] sm:$0xff]
      %v2081 = vld [vmem:[%s2065 + $0x78] sm:$0xff]
      %2082 = vmatprep.subr.mxu0 0.0
      %2083 = vmatpush1.msra.mxu0 %v2066
      %2084 = vmatprep.subr.mxu0 0.0
      %2085 = vmatpush1.msra.mxu0 %v2067
      %2086 = vmatprep.subr.mxu0 0.0
      %2087 = vmatpush1.msra.mxu0 %v2068
      %2088 = vmatprep.subr.mxu0 0.0
      %2089 = vmatpush1.msra.mxu0 %v2069
      %2090 = vmatprep.subr.mxu0 0.0
      %2091 = vmatpush1.msra.mxu0 %v2070
      %2092 = vmatprep.subr.mxu0 0.0
      %2093 = vmatpush1.msra.mxu0 %v2071
      %2094 = vmatprep.subr.mxu0 0.0
      %2095 = vmatpush1.msra.mxu0 %v2072
      %2096 = vmatprep.subr.mxu0 0.0
      %2097 = vmatpush1.msra.mxu0 %v2073
      %2098 = vmatprep.subr.mxu0 0.0
      %2099 = vmatpush1.msra.mxu0 %v2074
      %2100 = vmatprep.subr.mxu0 0.0
      %2101 = vmatpush1.msra.mxu0 %v2075
      %2102 = vmatprep.subr.mxu0 0.0
      %2103 = vmatpush1.msra.mxu0 %v2076
      %2104 = vmatprep.subr.mxu0 0.0
      %2105 = vmatpush1.msra.mxu0 %v2077
      %2106 = vmatprep.subr.mxu0 0.0
      %2107 = vmatpush1.msra.mxu0 %v2078
      %2108 = vmatprep.subr.mxu0 0.0
      %2109 = vmatpush1.msra.mxu0 %v2079
      %2110 = vmatprep.subr.mxu0 0.0
      %2111 = vmatpush1.msra.mxu0 %v2080
      %2112 = vmatprep.subr.mxu0 0.0
      %2113 = vmatpush1.msra.mxu0 %v2081
      %2114 = vmatprep.subr.mxu0 0.0
      %2115 = vmatpush1.msra.mxu0 0.0
      %2116 = vmatprep.subr.mxu0 0.0
      %2117 = vmatpush1.msra.mxu0 0.0
      %2118 = vmatprep.subr.mxu0 0.0
      %2119 = vmatpush1.msra.mxu0 0.0
      %2120 = vmatprep.subr.mxu0 0.0
      %2121 = vmatpush1.msra.mxu0 0.0
      %2122 = vmatprep.subr.mxu0 0.0
      %2123 = vmatpush1.msra.mxu0 0.0
      %2124 = vmatprep.subr.mxu0 0.0
      %2125 = vmatpush1.msra.mxu0 0.0
      %2126 = vmatprep.subr.mxu0 0.0
      %2127 = vmatpush1.msra.mxu0 0.0
      %2128 = vmatprep.subr.mxu0 0.0
      %2129 = vmatpush1.msra.mxu0 0.0
      %2130 = vmatprep.subr.mxu0 0.0
      %2131 = vmatpush1.msra.mxu0 0.0
      %2132 = vmatprep.subr.mxu0 0.0
      %2133 = vmatpush1.msra.mxu0 0.0
      %2134 = vmatprep.subr.mxu0 0.0
      %2135 = vmatpush1.msra.mxu0 0.0
      %2136 = vmatprep.subr.mxu0 0.0
      %2137 = vmatpush1.msra.mxu0 0.0
      %2138 = vmatprep.subr.mxu0 0.0
      %2139 = vmatpush1.msra.mxu0 0.0
      %2140 = vmatprep.subr.mxu0 0.0
      %2141 = vmatpush1.msra.mxu0 0.0
      %2142 = vmatprep.subr.mxu0 0.0
      %2143 = vmatpush1.msra.mxu0 0.0
      %2144 = vmatprep.subr.mxu0 0.0
      %2145 = vmatpush1.msra.mxu0 0.0
      %2146 = vmatprep.mubr.f32.mxu0 0.0
      %2147 = vmatmul.mubr.f32.gmra.mrb[0].mxu0 %v2049
      %v2148 = vpop.f32.mrb[0].mxu0
      %v2149 = vadd.f32 0.0, %v2148
      %v2150 = vpop.f32.mrb[0].mxu0
      %2151 = vmatprep.mubr.f32.mxu0 0.0
      %2152 = vmatmul.mubr.f32.gmra.mrb[0].mxu0 %v2050
      %v2153 = vpop.f32.mrb[0].mxu0
      %v2154 = vadd.f32 0.0, %v2153
      %v2155 = vpop.f32.mrb[0].mxu0
      %2156 = vmatprep.mubr.f32.mxu0 0.0
      %2157 = vmatmul.mubr.f32.gmra.mrb[0].mxu0 %v2051
      %v2158 = vpop.f32.mrb[0].mxu0
      %v2159 = vadd.f32 0.0, %v2158
      %v2160 = vpop.f32.mrb[0].mxu0
      %2161 = vmatprep.mubr.f32.mxu0 0.0
      %2162 = vmatmul.mubr.f32.gmra.mrb[0].mxu0 %v2052
      %v2163 = vpop.f32.mrb[0].mxu0
      %v2164 = vadd.f32 0.0, %v2163
      %v2165 = vpop.f32.mrb[0].mxu0
      %2166 = vmatprep.mubr.f32.mxu0 0.0
      %2167 = vmatmul.mubr.f32.gmra.mrb[0].mxu0 %v2053
      %v2168 = vpop.f32.mrb[0].mxu0
      %v2169 = vadd.f32 0.0, %v2168
      %v2170 = vpop.f32.mrb[0].mxu0
      %2171 = vmatprep.mubr.f32.mxu0 0.0
      %2172 = vmatmul.mubr.f32.gmra.mrb[0].mxu0 %v2054
      %v2173 = vpop.f32.mrb[0].mxu0
      %v2174 = vadd.f32 0.0, %v2173
      %v2175 = vpop.f32.mrb[0].mxu0
      %2176 = vmatprep.mubr.f32.mxu0 0.0
      %2177 = vmatmul.mubr.f32.gmra.mrb[0].mxu0 %v2055
      %v2178 = vpop.f32.mrb[0].mxu0
      %v2179 = vadd.f32 0.0, %v2178
      %v2180 = vpop.f32.mrb[0].mxu0
      %2181 = vmatprep.mubr.f32.mxu0 0.0
      %2182 = vmatmul.mubr.f32.gmra.mrb[0].mxu0 %v2056
      %v2183 = vpop.f32.mrb[0].mxu0
      %v2184 = vadd.f32 0.0, %v2183
      %v2185 = vpop.f32.mrb[0].mxu0
      %2186 = vmatprep.mubr.f32.mxu0 0.0
      %2187 = vmatmul.mubr.f32.gmra.mrb[0].mxu0 %v2057
      %v2188 = vpop.f32.mrb[0].mxu0
      %v2189 = vadd.f32 0.0, %v2188
      %v2190 = vpop.f32.mrb[0].mxu0
      %2191 = vmatprep.mubr.f32.mxu0 0.0
      %2192 = vmatmul.mubr.f32.gmra.mrb[0].mxu0 %v2058
      %v2193 = vpop.f32.mrb[0].mxu0
      %v2194 = vadd.f32 0.0, %v2193
      %v2195 = vpop.f32.mrb[0].mxu0
      %2196 = vmatprep.mubr.f32.mxu0 0.0
      %2197 = vmatmul.mubr.f32.gmra.mrb[0].mxu0 %v2059
      %v2198 = vpop.f32.mrb[0].mxu0
      %v2199 = vadd.f32 0.0, %v2198
      %v2200 = vpop.f32.mrb[0].mxu0
      %2201 = vmatprep.mubr.f32.mxu0 0.0
      %2202 = vmatmul.mubr.f32.gmra.mrb[0].mxu0 %v2060
      %v2203 = vpop.f32.mrb[0].mxu0
      %v2204 = vadd.f32 0.0, %v2203
      %v2205 = vpop.f32.mrb[0].mxu0
      %2206 = vmatprep.mubr.f32.mxu0 0.0
      %2207 = vmatmul.mubr.f32.gmra.mrb[0].mxu0 %v2061
      %v2208 = vpop.f32.mrb[0].mxu0
      %v2209 = vadd.f32 0.0, %v2208
      %v2210 = vpop.f32.mrb[0].mxu0
      %2211 = vmatprep.mubr.f32.mxu0 0.0
      %2212 = vmatmul.mubr.f32.gmra.mrb[0].mxu0 %v2062
      %v2213 = vpop.f32.mrb[0].mxu0
      %v2214 = vadd.f32 0.0, %v2213
      %v2215 = vpop.f32.mrb[0].mxu0
      %2216 = vmatprep.mubr.f32.mxu0 0.0
      %2217 = vmatmul.mubr.f32.gmra.mrb[0].mxu0 %v2063
      %v2218 = vpop.f32.mrb[0].mxu0
      %v2219 = vadd.f32 0.0, %v2218
      %v2220 = vpop.f32.mrb[0].mxu0
      %2221 = vmatprep.mubr.f32.mxu0 0.0
      %2222 = vmatmul.mubr.f32.gmra.mrb[0].mxu0 %v2064
      %v2223 = vpop.f32.mrb[0].mxu0
      %v2224 = vadd.f32 0.0, %v2223
      %v2225 = vpop.f32.mrb[0].mxu0
      %2226 = vdwg.mxu0
      %v2227 = vadd.f32 %v2033, %v2149
      %v2228 = vadd.f32 %v2034, %v2154
      %v2229 = vadd.f32 %v2035, %v2159
      %v2230 = vadd.f32 %v2036, %v2164
      %v2231 = vadd.f32 %v2037, %v2169
      %v2232 = vadd.f32 %v2038, %v2174
      %v2233 = vadd.f32 %v2039, %v2179
      %v2234 = vadd.f32 %v2040, %v2184
      %v2235 = vadd.f32 %v2041, %v2189
      %v2236 = vadd.f32 %v2042, %v2194
      %v2237 = vadd.f32 %v2043, %v2199
      %v2238 = vadd.f32 %v2044, %v2204
      %v2239 = vadd.f32 %v2045, %v2209
      %v2240 = vadd.f32 %v2046, %v2214
      %v2241 = vadd.f32 %v2047, %v2219
      %v2242 = vadd.f32 %v2048, %v2224
      %2243 = vst [vmem:[%s273] sm:$0xff] %v2227
      %2244 = vst [vmem:[%s273 + $0x8] sm:$0xff] %v2228
      %2245 = vst [vmem:[%s273 + $0x10] sm:$0xff] %v2229
      %2246 = vst [vmem:[%s273 + $0x18] sm:$0xff] %v2230
      %2247 = vst [vmem:[%s273 + $0x20] sm:$0xff] %v2231
      %2248 = vst [vmem:[%s273 + $0x28] sm:$0xff] %v2232
      %2249 = vst [vmem:[%s273 + $0x30] sm:$0xff] %v2233
      %2250 = vst [vmem:[%s273 + $0x38] sm:$0xff] %v2234
      %2251 = vst [vmem:[%s273 + $0x40] sm:$0xff] %v2235
      %2252 = vst [vmem:[%s273 + $0x48] sm:$0xff] %v2236
      %2253 = vst [vmem:[%s273 + $0x50] sm:$0xff] %v2237
      %2254 = vst [vmem:[%s273 + $0x58] sm:$0xff] %v2238
      %2255 = vst [vmem:[%s273 + $0x60] sm:$0xff] %v2239
      %2256 = vst [vmem:[%s273 + $0x68] sm:$0xff] %v2240
      %2257 = vst [vmem:[%s273 + $0x70] sm:$0xff] %v2241
      %2258 = vst [vmem:[%s273 + $0x78] sm:$0xff] %v2242
      %v2259 = vld [vmem:[%s273] sm:$0xff]
      %v2260 = vld [vmem:[%s273 + $0x8] sm:$0xff]
      %v2261 = vld [vmem:[%s273 + $0x10] sm:$0xff]
      %v2262 = vld [vmem:[%s273 + $0x18] sm:$0xff]
      %v2263 = vld [vmem:[%s273 + $0x20] sm:$0xff]
      %v2264 = vld [vmem:[%s273 + $0x28] sm:$0xff]
      %v2265 = vld [vmem:[%s273 + $0x30] sm:$0xff]
      %v2266 = vld [vmem:[%s273 + $0x38] sm:$0xff]
      %v2267 = vld [vmem:[%s273 + $0x40] sm:$0xff]
      %v2268 = vld [vmem:[%s273 + $0x48] sm:$0xff]
      %v2269 = vld [vmem:[%s273 + $0x50] sm:$0xff]
      %v2270 = vld [vmem:[%s273 + $0x58] sm:$0xff]
      %v2271 = vld [vmem:[%s273 + $0x60] sm:$0xff]
      %v2272 = vld [vmem:[%s273 + $0x68] sm:$0xff]
      %v2273 = vld [vmem:[%s273 + $0x70] sm:$0xff]
      %v2274 = vld [vmem:[%s273 + $0x78] sm:$0xff]
      %v2275 = vld [vmem:[%s1822 + $0x2] sm:$0xff]
      %v2276 = vld [vmem:[%s1822 + $0xa] sm:$0xff]
      %v2277 = vld [vmem:[%s1822 + $0x1a] sm:$0xff]
      %v2278 = vld [vmem:[%s1822 + $0x22] sm:$0xff]
      %v2279 = vld [vmem:[%s1822 + $0x32] sm:$0xff]
      %v2280 = vld [vmem:[%s1822 + $0x3a] sm:$0xff]
      %v2281 = vld [vmem:[%s1822 + $0x4a] sm:$0xff]
      %v2282 = vld [vmem:[%s1822 + $0x52] sm:$0xff]
      %v2283 = vld [vmem:[%s1822 + $0x62] sm:$0xff]
      %v2284 = vld [vmem:[%s1822 + $0x6a] sm:$0xff]
      %v2285 = vld [vmem:[%s1822 + $0x7a] sm:$0xff]
      %v2286 = vld [vmem:[%s1822 + $0x82] sm:$0xff]
      %v2287 = vld [vmem:[%s1822 + $0x92] sm:$0xff]
      %v2288 = vld [vmem:[%s1822 + $0x9a] sm:$0xff]
      %v2289 = vld [vmem:[%s1822 + $0xaa] sm:$0xff]
      %v2290 = vld [vmem:[%s1822 + $0xb2] sm:$0xff]
      %s2291 = scalar_lea.vmem %s1, 1024
      %v2292 = vld [vmem:[%s2291] sm:$0xff]
      %v2293 = vld [vmem:[%s2291 + $0x8] sm:$0xff]
      %v2294 = vld [vmem:[%s2291 + $0x10] sm:$0xff]
      %v2295 = vld [vmem:[%s2291 + $0x18] sm:$0xff]
      %v2296 = vld [vmem:[%s2291 + $0x20] sm:$0xff]
      %v2297 = vld [vmem:[%s2291 + $0x28] sm:$0xff]
      %v2298 = vld [vmem:[%s2291 + $0x30] sm:$0xff]
      %v2299 = vld [vmem:[%s2291 + $0x38] sm:$0xff]
      %v2300 = vld [vmem:[%s2291 + $0x40] sm:$0xff]
      %v2301 = vld [vmem:[%s2291 + $0x48] sm:$0xff]
      %v2302 = vld [vmem:[%s2291 + $0x50] sm:$0xff]
      %v2303 = vld [vmem:[%s2291 + $0x58] sm:$0xff]
      %v2304 = vld [vmem:[%s2291 + $0x60] sm:$0xff]
      %v2305 = vld [vmem:[%s2291 + $0x68] sm:$0xff]
      %v2306 = vld [vmem:[%s2291 + $0x70] sm:$0xff]
      %v2307 = vld [vmem:[%s2291 + $0x78] sm:$0xff]
      %2308 = vmatprep.subr.mxu0 0.0
      %2309 = vmatpush1.msra.mxu0 %v2292
      %2310 = vmatprep.subr.mxu0 0.0
      %2311 = vmatpush1.msra.mxu0 %v2293
      %2312 = vmatprep.subr.mxu0 0.0
      %2313 = vmatpush1.msra.mxu0 %v2294
      %2314 = vmatprep.subr.mxu0 0.0
      %2315 = vmatpush1.msra.mxu0 %v2295
      %2316 = vmatprep.subr.mxu0 0.0
      %2317 = vmatpush1.msra.mxu0 %v2296
      %2318 = vmatprep.subr.mxu0 0.0
      %2319 = vmatpush1.msra.mxu0 %v2297
      %2320 = vmatprep.subr.mxu0 0.0
      %2321 = vmatpush1.msra.mxu0 %v2298
      %2322 = vmatprep.subr.mxu0 0.0
      %2323 = vmatpush1.msra.mxu0 %v2299
      %2324 = vmatprep.subr.mxu0 0.0
      %2325 = vmatpush1.msra.mxu0 %v2300
      %2326 = vmatprep.subr.mxu0 0.0
      %2327 = vmatpush1.msra.mxu0 %v2301
      %2328 = vmatprep.subr.mxu0 0.0
      %2329 = vmatpush1.msra.mxu0 %v2302
      %2330 = vmatprep.subr.mxu0 0.0
      %2331 = vmatpush1.msra.mxu0 %v2303
      %2332 = vmatprep.subr.mxu0 0.0
      %2333 = vmatpush1.msra.mxu0 %v2304
      %2334 = vmatprep.subr.mxu0 0.0
      %2335 = vmatpush1.msra.mxu0 %v2305
      %2336 = vmatprep.subr.mxu0 0.0
      %2337 = vmatpush1.msra.mxu0 %v2306
      %2338 = vmatprep.subr.mxu0 0.0
      %2339 = vmatpush1.msra.mxu0 %v2307
      %2340 = vmatprep.subr.mxu0 0.0
      %2341 = vmatpush1.msra.mxu0 0.0
      %2342 = vmatprep.subr.mxu0 0.0
      %2343 = vmatpush1.msra.mxu0 0.0
      %2344 = vmatprep.subr.mxu0 0.0
      %2345 = vmatpush1.msra.mxu0 0.0
      %2346 = vmatprep.subr.mxu0 0.0
      %2347 = vmatpush1.msra.mxu0 0.0
      %2348 = vmatprep.subr.mxu0 0.0
      %2349 = vmatpush1.msra.mxu0 0.0
      %2350 = vmatprep.subr.mxu0 0.0
      %2351 = vmatpush1.msra.mxu0 0.0
      %2352 = vmatprep.subr.mxu0 0.0
      %2353 = vmatpush1.msra.mxu0 0.0
      %2354 = vmatprep.subr.mxu0 0.0
      %2355 = vmatpush1.msra.mxu0 0.0
      %2356 = vmatprep.subr.mxu0 0.0
      %2357 = vmatpush1.msra.mxu0 0.0
      %2358 = vmatprep.subr.mxu0 0.0
      %2359 = vmatpush1.msra.mxu0 0.0
      %2360 = vmatprep.subr.mxu0 0.0
      %2361 = vmatpush1.msra.mxu0 0.0
      %2362 = vmatprep.subr.mxu0 0.0
      %2363 = vmatpush1.msra.mxu0 0.0
      %2364 = vmatprep.subr.mxu0 0.0
      %2365 = vmatpush1.msra.mxu0 0.0
      %2366 = vmatprep.subr.mxu0 0.0
      %2367 = vmatpush1.msra.mxu0 0.0
      %2368 = vmatprep.subr.mxu0 0.0
      %2369 = vmatpush1.msra.mxu0 0.0
      %2370 = vmatprep.subr.mxu0 0.0
      %2371 = vmatpush1.msra.mxu0 0.0
      %2372 = vmatprep.mubr.f32.mxu0 0.0
      %2373 = vmatmul.mubr.f32.gmra.mrb[0].mxu0 %v2275
      %v2374 = vpop.f32.mrb[0].mxu0
      %v2375 = vadd.f32 0.0, %v2374
      %v2376 = vpop.f32.mrb[0].mxu0
      %2377 = vmatprep.mubr.f32.mxu0 0.0
      %2378 = vmatmul.mubr.f32.gmra.mrb[0].mxu0 %v2276
      %v2379 = vpop.f32.mrb[0].mxu0
      %v2380 = vadd.f32 0.0, %v2379
      %v2381 = vpop.f32.mrb[0].mxu0
      %2382 = vmatprep.mubr.f32.mxu0 0.0
      %2383 = vmatmul.mubr.f32.gmra.mrb[0].mxu0 %v2277
      %v2384 = vpop.f32.mrb[0].mxu0
      %v2385 = vadd.f32 0.0, %v2384
      %v2386 = vpop.f32.mrb[0].mxu0
      %2387 = vmatprep.mubr.f32.mxu0 0.0
      %2388 = vmatmul.mubr.f32.gmra.mrb[0].mxu0 %v2278
      %v2389 = vpop.f32.mrb[0].mxu0
      %v2390 = vadd.f32 0.0, %v2389
      %v2391 = vpop.f32.mrb[0].mxu0
      %2392 = vmatprep.mubr.f32.mxu0 0.0
      %2393 = vmatmul.mubr.f32.gmra.mrb[0].mxu0 %v2279
      %v2394 = vpop.f32.mrb[0].mxu0
      %v2395 = vadd.f32 0.0, %v2394
      %v2396 = vpop.f32.mrb[0].mxu0
      %2397 = vmatprep.mubr.f32.mxu0 0.0
      %2398 = vmatmul.mubr.f32.gmra.mrb[0].mxu0 %v2280
      %v2399 = vpop.f32.mrb[0].mxu0
      %v2400 = vadd.f32 0.0, %v2399
      %v2401 = vpop.f32.mrb[0].mxu0
      %2402 = vmatprep.mubr.f32.mxu0 0.0
      %2403 = vmatmul.mubr.f32.gmra.mrb[0].mxu0 %v2281
      %v2404 = vpop.f32.mrb[0].mxu0
      %v2405 = vadd.f32 0.0, %v2404
      %v2406 = vpop.f32.mrb[0].mxu0
      %2407 = vmatprep.mubr.f32.mxu0 0.0
      %2408 = vmatmul.mubr.f32.gmra.mrb[0].mxu0 %v2282
      %v2409 = vpop.f32.mrb[0].mxu0
      %v2410 = vadd.f32 0.0, %v2409
      %v2411 = vpop.f32.mrb[0].mxu0
      %2412 = vmatprep.mubr.f32.mxu0 0.0
      %2413 = vmatmul.mubr.f32.gmra.mrb[0].mxu0 %v2283
      %v2414 = vpop.f32.mrb[0].mxu0
      %v2415 = vadd.f32 0.0, %v2414
      %v2416 = vpop.f32.mrb[0].mxu0
      %2417 = vmatprep.mubr.f32.mxu0 0.0
      %2418 = vmatmul.mubr.f32.gmra.mrb[0].mxu0 %v2284
      %v2419 = vpop.f32.mrb[0].mxu0
      %v2420 = vadd.f32 0.0, %v2419
      %v2421 = vpop.f32.mrb[0].mxu0
      %2422 = vmatprep.mubr.f32.mxu0 0.0
      %2423 = vmatmul.mubr.f32.gmra.mrb[0].mxu0 %v2285
      %v2424 = vpop.f32.mrb[0].mxu0
      %v2425 = vadd.f32 0.0, %v2424
      %v2426 = vpop.f32.mrb[0].mxu0
      %2427 = vmatprep.mubr.f32.mxu0 0.0
      %2428 = vmatmul.mubr.f32.gmra.mrb[0].mxu0 %v2286
      %v2429 = vpop.f32.mrb[0].mxu0
      %v2430 = vadd.f32 0.0, %v2429
      %v2431 = vpop.f32.mrb[0].mxu0
      %2432 = vmatprep.mubr.f32.mxu0 0.0
      %2433 = vmatmul.mubr.f32.gmra.mrb[0].mxu0 %v2287
      %v2434 = vpop.f32.mrb[0].mxu0
      %v2435 = vadd.f32 0.0, %v2434
      %v2436 = vpop.f32.mrb[0].mxu0
      %2437 = vmatprep.mubr.f32.mxu0 0.0
      %2438 = vmatmul.mubr.f32.gmra.mrb[0].mxu0 %v2288
      %v2439 = vpop.f32.mrb[0].mxu0
      %v2440 = vadd.f32 0.0, %v2439
      %v2441 = vpop.f32.mrb[0].mxu0
      %2442 = vmatprep.mubr.f32.mxu0 0.0
      %2443 = vmatmul.mubr.f32.gmra.mrb[0].mxu0 %v2289
      %v2444 = vpop.f32.mrb[0].mxu0
      %v2445 = vadd.f32 0.0, %v2444
      %v2446 = vpop.f32.mrb[0].mxu0
      %2447 = vmatprep.mubr.f32.mxu0 0.0
      %2448 = vmatmul.mubr.f32.gmra.mrb[0].mxu0 %v2290
      %v2449 = vpop.f32.mrb[0].mxu0
      %v2450 = vadd.f32 0.0, %v2449
      %v2451 = vpop.f32.mrb[0].mxu0
      %2452 = vdwg.mxu0
      %v2453 = vadd.f32 %v2259, %v2375
      %v2454 = vadd.f32 %v2260, %v2380
      %v2455 = vadd.f32 %v2261, %v2385
      %v2456 = vadd.f32 %v2262, %v2390
      %v2457 = vadd.f32 %v2263, %v2395
      %v2458 = vadd.f32 %v2264, %v2400
      %v2459 = vadd.f32 %v2265, %v2405
      %v2460 = vadd.f32 %v2266, %v2410
      %v2461 = vadd.f32 %v2267, %v2415
      %v2462 = vadd.f32 %v2268, %v2420
      %v2463 = vadd.f32 %v2269, %v2425
      %v2464 = vadd.f32 %v2270, %v2430
      %v2465 = vadd.f32 %v2271, %v2435
      %v2466 = vadd.f32 %v2272, %v2440
      %v2467 = vadd.f32 %v2273, %v2445
      %v2468 = vadd.f32 %v2274, %v2450
      %2469 = vst [vmem:[%s273] sm:$0xff] %v2453
      %2470 = vst [vmem:[%s273 + $0x8] sm:$0xff] %v2454
      %2471 = vst [vmem:[%s273 + $0x10] sm:$0xff] %v2455
      %2472 = vst [vmem:[%s273 + $0x18] sm:$0xff] %v2456
      %2473 = vst [vmem:[%s273 + $0x20] sm:$0xff] %v2457
      %2474 = vst [vmem:[%s273 + $0x28] sm:$0xff] %v2458
      %2475 = vst [vmem:[%s273 + $0x30] sm:$0xff] %v2459
      %2476 = vst [vmem:[%s273 + $0x38] sm:$0xff] %v2460
      %2477 = vst [vmem:[%s273 + $0x40] sm:$0xff] %v2461
      %2478 = vst [vmem:[%s273 + $0x48] sm:$0xff] %v2462
      %2479 = vst [vmem:[%s273 + $0x50] sm:$0xff] %v2463
      %2480 = vst [vmem:[%s273 + $0x58] sm:$0xff] %v2464
      %2481 = vst [vmem:[%s273 + $0x60] sm:$0xff] %v2465
      %2482 = vst [vmem:[%s273 + $0x68] sm:$0xff] %v2466
      %2483 = vst [vmem:[%s273 + $0x70] sm:$0xff] %v2467
      %2484 = vst [vmem:[%s273 + $0x78] sm:$0xff] %v2468
      %v2485 = vadd.f32 %v2453, %v2454
      %v2486 = vadd.f32 %v2485, %v2455
      %v2487 = vadd.f32 %v2486, %v2456
      %v2488 = vadd.f32 %v2487, %v2457
      %v2489 = vadd.f32 %v2488, %v2458
      %v2490 = vadd.f32 %v2489, %v2459
      %v2491 = vadd.f32 %v2490, %v2460
      %v2492 = vadd.f32 %v2491, %v2461
      %v2493 = vadd.f32 %v2492, %v2462
      %v2494 = vadd.f32 %v2493, %v2463
      %v2495 = vadd.f32 %v2494, %v2464
      %v2496 = vadd.f32 %v2495, %v2465
      %v2497 = vadd.f32 %v2496, %v2466
      %v2498 = vadd.f32 %v2497, %v2467
      %v2499 = vadd.f32 %v2498, %v2468
      %v2500 = vrot.slane %v2499, 4
      %v2501 = vadd.f32 %v2499, %v2500
      %v2502 = vrot.slane %v2501, 2
      %v2503 = vadd.f32 %v2501, %v2502
      %v2504 = vrot.slane %v2503, 1
      %v2505 = vadd.f32 %v2503, %v2504
      %v2506 = vmul.f32 %v2453, %v2453
      %v2507 = vmul.f32 %v2454, %v2454
      %v2508 = vmul.f32 %v2455, %v2455
      %v2509 = vmul.f32 %v2456, %v2456
      %v2510 = vmul.f32 %v2457, %v2457
      %v2511 = vmul.f32 %v2458, %v2458
      %v2512 = vmul.f32 %v2459, %v2459
      %v2513 = vmul.f32 %v2460, %v2460
      %v2514 = vmul.f32 %v2461, %v2461
      %v2515 = vmul.f32 %v2462, %v2462
      %v2516 = vmul.f32 %v2463, %v2463
      %v2517 = vmul.f32 %v2464, %v2464
      %v2518 = vmul.f32 %v2465, %v2465
      %v2519 = vmul.f32 %v2466, %v2466
      %v2520 = vmul.f32 %v2467, %v2467
      %v2521 = vmul.f32 %v2468, %v2468
      %v2522 = vadd.f32 %v2506, %v2507
      %v2523 = vadd.f32 %v2522, %v2508
      %v2524 = vadd.f32 %v2523, %v2509
      %v2525 = vadd.f32 %v2524, %v2510
      %v2526 = vadd.f32 %v2525, %v2511
      %v2527 = vadd.f32 %v2526, %v2512
      %v2528 = vadd.f32 %v2527, %v2513
      %v2529 = vadd.f32 %v2528, %v2514
      %v2530 = vadd.f32 %v2529, %v2515
      %v2531 = vadd.f32 %v2530, %v2516
      %v2532 = vadd.f32 %v2531, %v2517
      %v2533 = vadd.f32 %v2532, %v2518
      %v2534 = vadd.f32 %v2533, %v2519
      %v2535 = vadd.f32 %v2534, %v2520
      %v2536 = vadd.f32 %v2535, %v2521
      %v2537 = vrot.slane %v2536, 4
      %v2538 = vadd.f32 %v2536, %v2537
      %v2539 = vrot.slane %v2538, 2
      %v2540 = vadd.f32 %v2538, %v2539
      %v2541 = vrot.slane %v2540, 1
      %v2542 = vadd.f32 %v2540, %v2541
      %vm2543 = vcmask 1040384
      %v2544 = vsel %vm2543, %v2505, %v2542
      %2545 = vst [vmem:[%s282] sm:$0x3] %v2544
      %s2546 = smul.u32 16, %s22
      %p2547 = scmp.lt.s32.totalorder %s21, 1
      %s2548 = scalar_select %p2547, %s21, 1
      %p2549 = scmp.lt.s32.totalorder %s2546, 31
      %s2550 = scalar_select %p2549, %s2546, 31
      %s2551 = smul.addr %s2548, 32
      %s2552 = sadd.s32 %s2550, %s2551
      %s2553 = smul.addr %s2552, 8
      %s2554 = scalar_lea.vmem %s4, %s2553
      %p2555 = scmp.lt.s32.totalorder %s21, 1
      %s2556 = scalar_select %p2555, %s21, 1
      %p2557 = scmp.lt.s32.totalorder %s22, 1
      %s2558 = scalar_select %p2557, %s22, 1
      %s2559 = smul.addr %s2556, 2
      %s2560 = sadd.s32 %s2558, %s2559
      %s2561 = smul.addr %s2560, 2
      %s2562 = scalar_lea.vmem %s5, %s2561
      // Predicated region
      $region45: #{_encoder_block_impl.4} parent=35 // pred_check
        %p2563 = pneg %p140
      $region46: #{_encoder_block_impl.4} parent=35 // pred_check_branch
        %2565 = sbr.rel (%p2563) target = $region48
      $region47: #{_encoder_block_impl.4} parent=35 // pred_region
        %s2566 = smul.u32 16, %s22
      $region48: #{_encoder_block_impl.4} parent=35 // pred_fallthru
        _
      // Predicated region
      $region49: #{_encoder_block_impl.4} parent=35 // pred_check
        %p2567 = pneg %p168
      $region50: #{_encoder_block_impl.4} parent=35 // pred_check_branch
        %2569 = sbr.rel (%p2567) target = $region52
      $region51: #{_encoder_block_impl.4} parent=35 // pred_region
        _
      $region52: #{_encoder_block_impl.4} parent=35 // pred_fallthru
        _
    $region36: #{_encoder_block_impl.4} parent=5 // pred_fallthru
      _
    %p2570 = scmp.le.s32.totalorder 2, %s12
    // Predicated region
    $region53: #{_encoder_block_impl.4} parent=5 // pred_check
      %p2571 = pneg %p2570
    $region54: #{_encoder_block_impl.4} parent=5 // pred_check_branch
      %2573 = sbr.rel (%p2571) target = $region56
    $region55: #{_encoder_block_impl.4} parent=5 // pred_region
      %s2574 = ssub.s32 %s12, 2
      // Predicated region
      $region57: #{_encoder_block_impl.4} parent=55 // pred_check
        %p2575 = pneg %p146
      $region58: #{_encoder_block_impl.4} parent=55 // pred_check_branch
        %2577 = sbr.rel (%p2575) target = $region60
      $region59: #{_encoder_block_impl.4} parent=55 // pred_region
        %s2578 = smul.u32 16, %s24
        %p2579 = scmp.lt.s32.totalorder %s23, 1
        %s2580 = scalar_select %p2579, %s23, 1
        %p2581 = scmp.lt.s32.totalorder %s2578, 31
        %s2582 = scalar_select %p2581, %s2578, 31
        %s2583 = smul.addr %s2580, 32
        %s2584 = sadd.s32 %s2582, %s2583
        %s2585 = smul.addr %s2584, 8
        %s2586 = scalar_lea.vmem %s4, %s2585
      $region60: #{_encoder_block_impl.4} parent=55 // pred_fallthru
        _
      // Predicated region
      $region61: #{_encoder_block_impl.4} parent=55 // pred_check
        %p2587 = pneg %p174
      $region62: #{_encoder_block_impl.4} parent=55 // pred_check_branch
        %2589 = sbr.rel (%p2587) target = $region64
      $region63: #{_encoder_block_impl.4} parent=55 // pred_region
        %p2590 = scmp.lt.s32.totalorder %s23, 1
        %s2591 = scalar_select %p2590, %s23, 1
        %p2592 = scmp.lt.s32.totalorder %s24, 1
        %s2593 = scalar_select %p2592, %s24, 1
        %s2594 = smul.addr %s2591, 2
        %s2595 = sadd.s32 %s2593, %s2594
        %s2596 = smul.addr %s2595, 2
        %s2597 = scalar_lea.vmem %s5, %s2596
      $region64: #{_encoder_block_impl.4} parent=55 // pred_fallthru
        _
    $region56: #{_encoder_block_impl.4} parent=5 // pred_fallthru
      _
  $region6: #{_encoder_block_impl.4} parent=0 // loop_footer
    %s16 = sadd.s32 1, %s12
  $region7: #{_encoder_block_impl.4} parent=0 // loop_footer_branch
    %11 = sbr.rel target = $region3
  $region8: #{_encoder_block_impl.4} parent=0 // loop_exit
    _

</llo_original>
